<compile_context>
chip_gen: v7x
topology: tpu7x:2x2x1
jax: 0.10.0
libtpu: 0.0.40
codegen_flags: <defaults>
</compile_context>

<pallas_src>
import functools

import jax
import jax.numpy as jnp
from jax import lax
from jax.experimental import pallas as pl
from jax.experimental.pallas import tpu as pltpu

EPS = 1e-6
SEQ_ALIGN = 128                     # pad token count to a multiple of 128
MLP_HIDDEN_TILE = 256               # H-chunk size for the MLP reduction axis
VMEM_LIMIT_BYTES = 32 * 1024 * 1024  # sized well above the toy tile footprint


# ----------------------------- small math helpers -------------------------- #

def _layernorm(v, w, b):
    """f32 LayerNorm over the last dim (eps=1e-6, matches PyTorch)."""
    mu = jnp.mean(v, axis=-1, keepdims=True)
    var = jnp.mean((v - mu) ** 2, axis=-1, keepdims=True)
    return (v - mu) * lax.rsqrt(var + EPS) * w + b


def _erf(x):
    # Abramowitz & Stegun 7.1.26 polynomial (|abs err| <= 1.5e-7):
    # built only from exp / mul / add / div so it always lowers on TPU.
    z = jnp.abs(x)
    t = 1.0 / (1.0 + 0.3275911 * z)
    poly = t * (0.254829592
                + t * (-0.284496736
                       + t * (1.421413741
                              + t * (-1.453152027 + t * 1.061405429))))
    y = 1.0 - poly * jnp.exp(-z * z)
    return jnp.where(x >= 0.0, y, -y)


def _gelu_exact(x):
    # PyTorch nn.GELU() default = exact erf form.
    return 0.5 * x * (1.0 + _erf(x * 0.7071067811865476))


# ------------------------ single-buffer weight canary ----------------------- #

@functools.lru_cache(maxsize=None)
def _single_buffer_supported() -> bool:
    """Probe whether pl.Buffered(1) on a block-invariant input lowers cleanly."""
    try:
        def _k(w_ref, o_ref):
            o_ref[...] = w_ref[...] * 2.0

        w = jnp.zeros((8, 128), jnp.float32)
        out = pl.pallas_call(
            _k,
            out_shape=jax.ShapeDtypeStruct((16, 128), jnp.float32),
            grid=(2,),
            in_specs=[pl.BlockSpec((8, 128), lambda i: (0, 0),
                                   pipeline_mode=pl.Buffered(1))],
            out_specs=pl.BlockSpec((8, 128), lambda i: (i, 0)),
        )(w)
        jax.block_until_ready(out)
        return True
    except Exception:
        return False


def _const_spec(shape):
    """BlockSpec for a block-invariant (weight) input; single-buffer if possible."""
    imap = lambda *_: (0,) * len(shape)
    if _single_buffer_supported():
        return pl.BlockSpec(shape, imap, pipeline_mode=pl.Buffered(1))
    return pl.BlockSpec(shape, imap)


def _cparams(*sem):
    return pltpu.CompilerParams(dimension_semantics=sem,
                                vmem_limit_bytes=VMEM_LIMIT_BYTES)


# ----------------------------- Pallas kernels ------------------------------ #

def patch_embed_kernel(p_ref, w_ref, b_ref, o_ref):
    # p_ref: (1, N, P) f32   w_ref: (P, D) bf16   b_ref: (1, D) f32
    p = p_ref[0].astype(jnp.bfloat16)
    o_ref[0] = (jnp.dot(p, w_ref[...], preferred_element_type=jnp.float32)
                + b_ref[...])


def attn_kernel(x_ref, n1w_ref, n1b_ref, qw_ref, qb_ref, kw_ref, kb_ref,
                vw_ref, vb_ref, pw_ref, pb_ref, g1_ref, o_ref, acc_scr,
                *, num_heads, head_dim, s_real):
    """Pre-LN MHSA + LayerScale residual for one batch element.

    Weights are head-major:  qw/kw/vw (nh, D, Dh), biases (nh, 1, Dh),
    proj weight (nh, Dh, D).  A fori_loop over heads keeps only one head's
    (S, S) score matrix live at a time and accumulates the projected context
    directly into a VMEM f32 scratch (no concat, no lane-misaligned slicing).
    """
    x = x_ref[0]                                    # (S_pad, D) f32
    s_pad = x.shape[0]
    scale = head_dim ** -0.5

    h = _layernorm(x, n1w_ref[...], n1b_ref[...]).astype(jnp.bfloat16)
    acc_scr[...] = jnp.zeros_like(acc_scr)

    # key-padding mask (padded tokens never receive attention weight)
    kmask = lax.broadcasted_iota(jnp.int32, (1, s_pad), 1) < s_real

    def head_body(hh, carry):
        qh = (jnp.dot(h, qw_ref[hh], preferred_element_type=jnp.float32)
              + qb_ref[hh])                          # (S, Dh) f32
        kh = (jnp.dot(h, kw_ref[hh], preferred_element_type=jnp.float32)
              + kb_ref[hh])
        vh = (jnp.dot(h, vw_ref[hh], preferred_element_type=jnp.float32)
              + vb_ref[hh])

        s = lax.dot_general((qh * scale).astype(jnp.bfloat16),
                            kh.astype(jnp.bfloat16),
                            (((1,), (1,)), ((), ())),
                            preferred_element_type=jnp.float32)   # (S, S) f32
        s = jnp.where(kmask, s, -1e30)
        m = jnp.max(s, axis=-1, keepdims=True)
        p = jnp.exp(s - m)
        denom = jnp.sum(p, axis=-1, keepdims=True)
        p = p * pl.reciprocal(denom, approx=True)                 # EUP divide

        ctx = jnp.dot(p.astype(jnp.bfloat16), vh.astype(jnp.bfloat16),
                      preferred_element_type=jnp.float32)         # (S, Dh)
        acc_scr[...] += jnp.dot(ctx.astype(jnp.bfloat16), pw_ref[hh],
                                preferred_element_type=jnp.float32)
        return carry

    lax.fori_loop(0, num_heads, head_body, 0)

    o_ref[0] = x + g1_ref[...] * (acc_scr[...] + pb_ref[...])


def mlp_kernel(x_ref, n2w_ref, n2b_ref, f1w_ref, f1b_ref, f2w_ref, f2b_ref,
               g2_ref, *rest, fuse_norm):
    """Pre-LN MLP + LayerScale residual, tiled over the hidden dim (grid axis 1).

    Grid = (B, H // TH).  f1w/f1b/f2w are tiled per H-chunk; the f2 partial
    products are accumulated into a VMEM f32 scratch (init at j==0, finalized
    at the last chunk).  Optionally fuses the model's final LayerNorm as a
    second output (saves one full HBM round trip for collected layers).
    """
    if fuse_norm:
        nw_ref, nb_ref, o_ref, on_ref, h_scr, acc_scr = rest
    else:
        o_ref, h_scr, acc_scr = rest

    j = pl.program_id(1)

    @pl.when(j == 0)
    def _():
        h_scr[...] = _layernorm(x_ref[0], n2w_ref[...],
                                n2b_ref[...]).astype(jnp.bfloat16)
        acc_scr[...] = jnp.zeros_like(acc_scr)

    m = (jnp.dot(h_scr[...], f1w_ref[...], preferred_element_type=jnp.float32)
         + f1b_ref[...])
    m = _gelu_exact(m).astype(jnp.bfloat16)
    acc_scr[...] += jnp.dot(m, f2w_ref[...], preferred_element_type=jnp.float32)

    @pl.when(j == pl.num_programs(1) - 1)
    def _():
        y = x_ref[0] + g2_ref[...] * (acc_scr[...] + f2b_ref[...])
        o_ref[0] = y
        if fuse_norm:
            on_ref[0] = _layernorm(y, nw_ref[...], nb_ref[...])


# ----------------------------- pallas_call wrappers ------------------------ #

def patch_embed_call(patches, w, b):
    B, N, P = patches.shape
    D = w.shape[1]
    return pl.pallas_call(
        patch_embed_kernel,
        out_shape=jax.ShapeDtypeStruct((B, N, D), jnp.float32),
        grid=(B,),
        in_specs=[pl.BlockSpec((1, N, P), lambda i: (i, 0, 0)),
                  _const_spec(w.shape),
                  _const_spec(b.shape)],
        out_specs=pl.BlockSpec((1, N, D), lambda i: (i, 0, 0)),
        compiler_params=_cparams("parallel"),
    )(patches, w, b)


def attn_call(x, blk, *, num_heads, s_real):
    B, S_pad, D = x.shape
    Dh = D // num_heads
    weights = (blk["n1w"], blk["n1b"], blk["qw"], blk["qb"], blk["kw"],
               blk["kb"], blk["vw"], blk["vb"], blk["projw"], blk["projb"],
               blk["g1"])
    in_specs = [pl.BlockSpec((1, S_pad, D), lambda i: (i, 0, 0))] + [
        _const_spec(w.shape) for w in weights]
    kern = functools.partial(attn_kernel, num_heads=num_heads, head_dim=Dh,
                             s_real=s_real)
    return pl.pallas_call(
        kern,
        out_shape=jax.ShapeDtypeStruct((B, S_pad, D), jnp.float32),
        grid=(B,),
        in_specs=in_specs,
        out_specs=pl.BlockSpec((1, S_pad, D), lambda i: (i, 0, 0)),
        scratch_shapes=[pltpu.VMEM((S_pad, D), jnp.float32)],
        input_output_aliases={0: 0},
        compiler_params=_cparams("parallel"),
    )(x, *weights)


def mlp_call(x, blk, *, hidden_tile, final_norm=None):
    B, S_pad, D = x.shape
    Hm = blk["f1w"].shape[1]
    th = hidden_tile if Hm % hidden_tile == 0 else Hm
    nj = Hm // th
    fuse = final_norm is not None

    weights = [blk["n2w"], blk["n2b"], blk["f1w"], blk["f1b"], blk["f2w"],
               blk["f2b"], blk["g2"]]
    in_specs = [
        pl.BlockSpec((1, S_pad, D), lambda b, j: (b, 0, 0)),   # x (revisited)
        _const_spec(blk["n2w"].shape),
        _const_spec(blk["n2b"].shape),
        pl.BlockSpec((D, th), lambda b, j: (0, j)),            # f1w chunk
        pl.BlockSpec((1, th), lambda b, j: (0, j)),            # f1b chunk
        pl.BlockSpec((th, D), lambda b, j: (j, 0)),            # f2w chunk
        _const_spec(blk["f2b"].shape),
        _const_spec(blk["g2"].shape),
    ]
    if fuse:
        nw, nb = final_norm
        weights += [nw, nb]
        in_specs += [_const_spec(nw.shape), _const_spec(nb.shape)]
        out_shape = (jax.ShapeDtypeStruct((B, S_pad, D), jnp.float32),
                     jax.ShapeDtypeStruct((B, S_pad, D), jnp.float32))
        out_specs = (pl.BlockSpec((1, S_pad, D), lambda b, j: (b, 0, 0)),
                     pl.BlockSpec((1, S_pad, D), lambda b, j: (b, 0, 0)))
    else:
        out_shape = jax.ShapeDtypeStruct((B, S_pad, D), jnp.float32)
        out_specs = pl.BlockSpec((1, S_pad, D), lambda b, j: (b, 0, 0))

    return pl.pallas_call(
        functools.partial(mlp_kernel, fuse_norm=fuse),
        out_shape=out_shape,
        grid=(B, nj),
        in_specs=in_specs,
        out_specs=out_specs,
        scratch_shapes=[pltpu.VMEM((S_pad, D), jnp.bfloat16),   # LN(x) cache
                        pltpu.VMEM((S_pad, D), jnp.float32)],   # f2 accumulator
        input_output_aliases={0: 0},
        compiler_params=_cparams("parallel", "arbitrary"),
    )(x, *weights)


# ----------------------------- parameter init ------------------------------ #

def init_params(key, *, embed_dim, depth, num_heads, mlp_ratio, in_chans,
                patch_size, num_patches, num_register_tokens, init_values):
    D = embed_dim
    Hm = int(mlp_ratio * D)
    Dh = D // num_heads
    P = in_chans * patch_size * patch_size
    keys = iter(jax.random.split(key, 4 + depth * 6 + 2))

    def nrm(shape, std=0.02, dtype=jnp.bfloat16):
        return (std * jax.random.normal(next(keys), shape, jnp.float32)
                ).astype(dtype)

    params = {
        # Conv2d(in_chans, D, k=stride=patch) flattened to (C*ph*pw, D), bf16.
        "patch_w": nrm((P, D)),
        "patch_b": jnp.zeros((1, D), jnp.float32),
        "cls_token": nrm((1, 1, D), dtype=jnp.float32),
        "pos_embed": nrm((1, 1 + num_patches, D), dtype=jnp.float32),
        "register_tokens": nrm((1, num_register_tokens, D), std=1e-6,
                               dtype=jnp.float32),
        "norm_w": jnp.ones((1, D), jnp.float32),
        "norm_b": jnp.zeros((1, D), jnp.float32),
        "blocks": [],
    }
    for _ in range(depth):
        blk = {
            "n1w": jnp.ones((1, D), jnp.float32),
            "n1b": jnp.zeros((1, D), jnp.float32),
            # torch qkv weight (3D, D) / bias would be re-laid-out head-major:
            # qw[h, d, e] = W_qkv[h*Dh + e, d]   (and similarly k, v, proj).
            "qw": nrm((num_heads, D, Dh)),
            "qb": jnp.zeros((num_heads, 1, Dh), jnp.float32),
            "kw": nrm((num_heads, D, Dh)),
            "kb": jnp.zeros((num_heads, 1, Dh), jnp.float32),
            "vw": nrm((num_heads, D, Dh)),
            "vb": jnp.zeros((num_heads, 1, Dh), jnp.float32),
            "projw": nrm((num_heads, Dh, D)),
            "projb": jnp.zeros((1, D), jnp.float32),
            "g1": init_values * jnp.ones((1, D), jnp.float32),   # LayerScale
            "n2w": jnp.ones((1, D), jnp.float32),
            "n2b": jnp.zeros((1, D), jnp.float32),
            "f1w": nrm((D, Hm)),
            "f1b": jnp.zeros((1, Hm), jnp.float32),
            "f2w": nrm((Hm, D)),
            "f2b": jnp.zeros((1, D), jnp.float32),
            "g2": init_values * jnp.ones((1, D), jnp.float32),
        }
        params["blocks"].append(blk)
    return params


# ----------------------------- forward ------------------------------------- #

def dinov2_reg_forward(params, x, *, patch_size, num_heads,
                       num_register_tokens, n=1,
                       mlp_hidden_tile=MLP_HIDDEN_TILE):
    B, C, Himg, Wimg = x.shape
    gh, gw = Himg // patch_size, Wimg // patch_size
    D = params["patch_w"].shape[1]

    # patchify (glue): NCHW -> (B, N, C*ph*pw), channel-major within a patch.
    patches = x.reshape(B, C, gh, patch_size, gw, patch_size)
    patches = patches.transpose(0, 2, 4, 1, 3, 5).reshape(
        B, gh * gw, C * patch_size * patch_size)

    tok = patch_embed_call(patches, params["patch_w"], params["patch_b"])

    cls = jnp.broadcast_to(params["cls_token"], (B, 1, D))
    # grid matches pos_embed exactly -> interpolate_pos_encoding is identity.
    tok = jnp.concatenate([cls, tok], axis=1) + params["pos_embed"]
    reg = jnp.broadcast_to(params["register_tokens"],
                           (B, num_register_tokens, D))
    tok = jnp.concatenate([tok[:, :1], reg, tok[:, 1:]], axis=1)   # (B, S, D)

    S = tok.shape[1]
    S_pad = ((S + SEQ_ALIGN - 1) // SEQ_ALIGN) * SEQ_ALIGN
    tok = jnp.pad(tok, ((0, 0), (0, S_pad - S), (0, 0)))

    depth = len(params["blocks"])
    outs = []
    for i, blk in enumerate(params["blocks"]):
        tok = attn_call(tok, blk, num_heads=num_heads, s_real=S)
        if i >= depth - n:
            # collected layer: fuse the model's final LayerNorm into the MLP
            # kernel epilogue (second output) -> no extra HBM round trip.
            tok, normed = mlp_call(tok, blk, hidden_tile=mlp_hidden_tile,
                                   final_norm=(params["norm_w"],
                                               params["norm_b"]))
            outs.append(normed[:, 1 + num_register_tokens:S, :])  # patch tokens
        else:
            tok = mlp_call(tok, blk, hidden_tile=mlp_hidden_tile)
    return tuple(outs)


# ----------------------------- main ----------------------------------------- #

if __name__ == "__main__":
    # decide single vs double buffering for weights eagerly (tiny probe kernel)
    _single_buffer_supported()

    # small synthetic config consistent with dinov2_vit*_reg structure
    # (embed dim kept at a lane-dense multiple of 128).
    cfg = dict(
        embed_dim=128,
        depth=2,
        num_heads=4,
        mlp_ratio=4,
        in_chans=3,
        patch_size=4,
        num_register_tokens=4,
        init_values=1.0,
    )
    B, C, Himg, Wimg = 2, cfg["in_chans"], 16, 16
    num_patches = (Himg // cfg["patch_size"]) * (Wimg // cfg["patch_size"])

    kp, kx = jax.random.split(jax.random.PRNGKey(0))
    params = init_params(kp, num_patches=num_patches, **cfg)
    x = jax.random.normal(kx, (B, C, Himg, Wimg), jnp.float32)

    fwd = jax.jit(functools.partial(
        dinov2_reg_forward,
        patch_size=cfg["patch_size"],
        num_heads=cfg["num_heads"],
        num_register_tokens=cfg["num_register_tokens"],
        n=1,
    ))
    rets = fwd(params, x)
    jax.block_until_ready(rets)

    r0 = rets[0]
    assert r0.shape == (B, num_patches, cfg["embed_dim"]), r0.shape
    assert bool(jnp.all(jnp.isfinite(r0)))
    print("KERNEL_OK")
</pallas_src>

<mosaic_0001>
module attributes {stable_mosaic.version = 11 : i64} {
  func.func @_k(%arg0: i32, %arg1: memref<8x128xf32, #tpu.memory_space<vmem>>, %arg2: memref<8x128xf32, #tpu.memory_space<vmem>>) attributes {dimension_semantics = [#tpu.dimension_semantics<arbitrary>], iteration_bounds = array<i64: 2>, scalar_prefetch = 0 : i64, scratch_operands = 0 : i64, tpu.core_type = #tpu.core_type<tc>, window_params = [{pipeline_mode = #tpu.pipeline_mode<synchronous>, transform_indices = @transform_0, window_bounds = array<i64: 8, 128>}, {transform_indices = @transform_1, window_bounds = array<i64: 8, 128>}]} {
    %c0 = arith.constant 0 : index
    %c0_0 = arith.constant 0 : index
    %0 = vector.load %arg1[%c0, %c0_0] : memref<8x128xf32, #tpu.memory_space<vmem>>, vector<8x128xf32>
    %cst = arith.constant 2.000000e+00 : f32
    %1 = vector.broadcast %cst : f32 to vector<8x128xf32>
    %2 = arith.mulf %0, %1 : vector<8x128xf32>
    %c0_1 = arith.constant 0 : index
    %c0_2 = arith.constant 0 : index
    %3 = vector.load %arg2[%c0_1, %c0_2] : memref<8x128xf32, #tpu.memory_space<vmem>>, vector<8x128xf32>
    tpu.vector_store %arg2[%c0_1, %c0_2], %2 {strides = array<i32>} : memref<8x128xf32, #tpu.memory_space<vmem>>, vector<8x128xf32>,
    return
  }
  func.func @transform_0(%arg0: i32) -> (i32, i32) {
    %c0_i32 = arith.constant 0 : i32
    %c0_i32_0 = arith.constant 0 : i32
    %c0_i32_1 = arith.constant 0 : i32
    return %c0_i32, %c0_i32_0 : i32, i32
  }
  func.func @transform_1(%arg0: i32) -> (i32, i32) {
    %c0_i32 = arith.constant 0 : i32
    %c0_i32_0 = arith.constant 0 : i32
    return %arg0, %c0_i32 : i32, i32
  }
}

module attributes {stable_mosaic.version = 11 : i64} {
  func.func @patch_embed_kernel(%arg0: i32, %arg1: memref<1x16x48xf32, #tpu.memory_space<vmem>>, %arg2: memref<48x128xbf16, #tpu.memory_space<vmem>>, %arg3: memref<1x128xf32, #tpu.memory_space<vmem>>, %arg4: memref<1x16x128xf32, #tpu.memory_space<vmem>>) attributes {dimension_semantics = [#tpu.dimension_semantics<parallel>], iteration_bounds = array<i64: 2>, scalar_prefetch = 0 : i64, scratch_operands = 0 : i64, tpu.core_type = #tpu.core_type<tc>, window_params = [{transform_indices = @transform_0, window_bounds = array<i64: 1, 16, 48>}, {pipeline_mode = #tpu.pipeline_mode<synchronous>, transform_indices = @transform_1, window_bounds = array<i64: 48, 128>}, {pipeline_mode = #tpu.pipeline_mode<synchronous>, transform_indices = @transform_2, window_bounds = array<i64: 1, 128>}, {transform_indices = @transform_3, window_bounds = array<i64: 1, 16, 128>}]} {
    %c0 = arith.constant 0 : index
    %c0_0 = arith.constant 0 : index
    %c0_1 = arith.constant 0 : index
    %0 = vector.load %arg1[%c0, %c0_0, %c0_1] : memref<1x16x48xf32, #tpu.memory_space<vmem>>, vector<1x16x48xf32>
    %1 = vector.shape_cast %0 : vector<1x16x48xf32> to vector<16x48xf32>
    %2 = arith.truncf %1 : vector<16x48xf32> to vector<16x48xbf16>
    %c0_2 = arith.constant 0 : index
    %c0_3 = arith.constant 0 : index
    %3 = vector.load %arg2[%c0_2, %c0_3] : memref<48x128xbf16, #tpu.memory_space<vmem>>, vector<48x128xbf16>
    %cst = arith.constant dense<0.000000e+00> : vector<16x128xf32>
    %4 = tpu.matmul %2, %3, %cst {dimension_numbers = #tpu.dot_dimension_numbers<[1], [0], [0], [1], [0, 0, 1, 1], [], []>} : vector<16x48xbf16>, vector<48x128xbf16>, vector<16x128xf32> -> vector<16x128xf32>
    %c0_4 = arith.constant 0 : index
    %c0_5 = arith.constant 0 : index
    %5 = vector.load %arg3[%c0_4, %c0_5] : memref<1x128xf32, #tpu.memory_space<vmem>>, vector<1x128xf32>
    %6 = vector.broadcast %5 : vector<1x128xf32> to vector<16x128xf32>
    %7 = arith.addf %4, %6 : vector<16x128xf32>
    %c0_6 = arith.constant 0 : index
    %c0_7 = arith.constant 0 : index
    %c0_8 = arith.constant 0 : index
    %8 = vector.load %arg4[%c0_6, %c0_7, %c0_8] : memref<1x16x128xf32, #tpu.memory_space<vmem>>, vector<1x16x128xf32>
    %9 = vector.shape_cast %8 : vector<1x16x128xf32> to vector<16x128xf32>
    %10 = vector.shape_cast %7 : vector<16x128xf32> to vector<1x16x128xf32>
    tpu.vector_store %arg4[%c0_6, %c0_7, %c0_8], %10 {strides = array<i32>} : memref<1x16x128xf32, #tpu.memory_space<vmem>>, vector<1x16x128xf32>,
    return
  }
  func.func @transform_0(%arg0: i32) -> (i32, i32, i32) {
    %c0_i32 = arith.constant 0 : i32
    %c0_i32_0 = arith.constant 0 : i32
    %c0_i32_1 = arith.constant 0 : i32
    return %arg0, %c0_i32, %c0_i32_0 : i32, i32, i32
  }
  func.func @transform_1(%arg0: i32) -> (i32, i32) {
    %c0_i32 = arith.constant 0 : i32
    %c0_i32_0 = arith.constant 0 : i32
    %c0_i32_1 = arith.constant 0 : i32
    return %c0_i32, %c0_i32_0 : i32, i32
  }
  func.func @transform_2(%arg0: i32) -> (i32, i32) {
    %c0_i32 = arith.constant 0 : i32
    %c0_i32_0 = arith.constant 0 : i32
    %c0_i32_1 = arith.constant 0 : i32
    return %c0_i32, %c0_i32_0 : i32, i32
  }
  func.func @transform_3(%arg0: i32) -> (i32, i32, i32) {
    %c0_i32 = arith.constant 0 : i32
    %c0_i32_0 = arith.constant 0 : i32
    %c0_i32_1 = arith.constant 0 : i32
    return %arg0, %c0_i32, %c0_i32_0 : i32, i32, i32
  }
}

module attributes {stable_mosaic.version = 11 : i64} {
  func.func @attn_kernel(%arg0: i32, %arg1: memref<1x128x128xf32, #tpu.memory_space<vmem>>, %arg2: memref<1x128xf32, #tpu.memory_space<vmem>>, %arg3: memref<1x128xf32, #tpu.memory_space<vmem>>, %arg4: memref<4x128x32xbf16, #tpu.memory_space<vmem>>, %arg5: memref<4x1x32xf32, #tpu.memory_space<vmem>>, %arg6: memref<4x128x32xbf16, #tpu.memory_space<vmem>>, %arg7: memref<4x1x32xf32, #tpu.memory_space<vmem>>, %arg8: memref<4x128x32xbf16, #tpu.memory_space<vmem>>, %arg9: memref<4x1x32xf32, #tpu.memory_space<vmem>>, %arg10: memref<4x32x128xbf16, #tpu.memory_space<vmem>>, %arg11: memref<1x128xf32, #tpu.memory_space<vmem>>, %arg12: memref<1x128xf32, #tpu.memory_space<vmem>>, %arg13: memref<1x128x128xf32, #tpu.memory_space<vmem>>, %arg14: memref<128x128xf32, #tpu.memory_space<vmem>>) attributes {dimension_semantics = [#tpu.dimension_semantics<parallel>], iteration_bounds = array<i64: 2>, scalar_prefetch = 0 : i64, scratch_operands = 1 : i64, tpu.core_type = #tpu.core_type<tc>, window_params = [{transform_indices = @transform_0, window_bounds = array<i64: 1, 128, 128>}, {pipeline_mode = #tpu.pipeline_mode<synchronous>, transform_indices = @transform_1, window_bounds = array<i64: 1, 128>}, {pipeline_mode = #tpu.pipeline_mode<synchronous>, transform_indices = @transform_2, window_bounds = array<i64: 1, 128>}, {pipeline_mode = #tpu.pipeline_mode<synchronous>, transform_indices = @transform_3, window_bounds = array<i64: 4, 128, 32>}, {pipeline_mode = #tpu.pipeline_mode<synchronous>, transform_indices = @transform_4, window_bounds = array<i64: 4, 1, 32>}, {pipeline_mode = #tpu.pipeline_mode<synchronous>, transform_indices = @transform_5, window_bounds = array<i64: 4, 128, 32>}, {pipeline_mode = #tpu.pipeline_mode<synchronous>, transform_indices = @transform_6, window_bounds = array<i64: 4, 1, 32>}, {pipeline_mode = #tpu.pipeline_mode<synchronous>, transform_indices = @transform_7, window_bounds = array<i64: 4, 128, 32>}, {pipeline_mode = #tpu.pipeline_mode<synchronous>, transform_indices = @transform_8, window_bounds = array<i64: 4, 1, 32>}, {pipeline_mode = #tpu.pipeline_mode<synchronous>, transform_indices = @transform_9, window_bounds = array<i64: 4, 32, 128>}, {pipeline_mode = #tpu.pipeline_mode<synchronous>, transform_indices = @transform_10, window_bounds = array<i64: 1, 128>}, {pipeline_mode = #tpu.pipeline_mode<synchronous>, transform_indices = @transform_11, window_bounds = array<i64: 1, 128>}, {transform_indices = @transform_12, window_bounds = array<i64: 1, 128, 128>}]} {
    %c0 = arith.constant 0 : index
    %c0_0 = arith.constant 0 : index
    %c0_1 = arith.constant 0 : index
    %0 = vector.load %arg1[%c0, %c0_0, %c0_1] : memref<1x128x128xf32, #tpu.memory_space<vmem>>, vector<1x128x128xf32>
    %1 = vector.shape_cast %0 : vector<1x128x128xf32> to vector<128x128xf32>
    %c0_2 = arith.constant 0 : index
    %c0_3 = arith.constant 0 : index
    %2 = vector.load %arg2[%c0_2, %c0_3] : memref<1x128xf32, #tpu.memory_space<vmem>>, vector<1x128xf32>
    %c0_4 = arith.constant 0 : index
    %c0_5 = arith.constant 0 : index
    %3 = vector.load %arg3[%c0_4, %c0_5] : memref<1x128xf32, #tpu.memory_space<vmem>>, vector<1x128xf32>
    %cst = arith.constant dense<0.000000e+00> : vector<128xf32>
    %4 = vector.multi_reduction <add>, %1, %cst [1] : vector<128x128xf32> to vector<128xf32>
    %5 = vector.shape_cast %4 : vector<128xf32> to vector<128x1xf32>
    %cst_6 = arith.constant 1.280000e+02 : f32
    %6 = vector.broadcast %cst_6 : f32 to vector<128x1xf32>
    %7 = arith.divf %5, %6 : vector<128x1xf32>
    %8 = vector.broadcast %7 : vector<128x1xf32> to vector<128x128xf32>
    %9 = arith.subf %1, %8 : vector<128x128xf32>
    %10 = arith.mulf %9, %9 : vector<128x128xf32>
    %cst_7 = arith.constant dense<0.000000e+00> : vector<128xf32>
    %11 = vector.multi_reduction <add>, %10, %cst_7 [1] : vector<128x128xf32> to vector<128xf32>
    %12 = vector.shape_cast %11 : vector<128xf32> to vector<128x1xf32>
    %cst_8 = arith.constant 1.280000e+02 : f32
    %13 = vector.broadcast %cst_8 : f32 to vector<128x1xf32>
    %14 = arith.divf %12, %13 : vector<128x1xf32>
    %15 = vector.broadcast %7 : vector<128x1xf32> to vector<128x128xf32>
    %16 = arith.subf %1, %15 : vector<128x128xf32>
    %cst_9 = arith.constant 9.99999997E-7 : f32
    %17 = vector.broadcast %cst_9 : f32 to vector<128x1xf32>
    %18 = arith.addf %14, %17 : vector<128x1xf32>
    %19 = math.rsqrt %18 : vector<128x1xf32>
    %20 = vector.broadcast %19 : vector<128x1xf32> to vector<128x128xf32>
    %21 = arith.mulf %16, %20 : vector<128x128xf32>
    %22 = vector.broadcast %2 : vector<1x128xf32> to vector<128x128xf32>
    %23 = arith.mulf %21, %22 : vector<128x128xf32>
    %24 = vector.broadcast %3 : vector<1x128xf32> to vector<128x128xf32>
    %25 = arith.addf %23, %24 : vector<128x128xf32>
    %26 = arith.truncf %25 : vector<128x128xf32> to vector<128x128xbf16>
    %cst_10 = arith.constant 0.000000e+00 : f32
    %27 = vector.broadcast %cst_10 : f32 to vector<128x128xf32>
    %c0_11 = arith.constant 0 : index
    %c0_12 = arith.constant 0 : index
    %28 = vector.load %arg14[%c0_11, %c0_12] : memref<128x128xf32, #tpu.memory_space<vmem>>, vector<128x128xf32>
    tpu.vector_store %arg14[%c0_11, %c0_12], %27 {strides = array<i32>} : memref<128x128xf32, #tpu.memory_space<vmem>>, vector<128x128xf32>,
    %29 = tpu.iota {dimensions = array<i32: 1>} : vector<1x128xi32>
    %c21_i32 = arith.constant 21 : i32
    %30 = vector.broadcast %c21_i32 : i32 to vector<1x128xi32>
    %31 = arith.cmpi slt, %29, %30 : vector<1x128xi32>
    %c0_i32 = arith.constant 0 : i32
    %c4_i32 = arith.constant 4 : i32
    %32 = arith.addi %c0_i32, %c4_i32 : i32
    %c1_i32 = arith.constant 1 : i32
    scf.for %arg15 = %c0_i32 to %32 step %c1_i32  : i32 {
      %44 = arith.index_cast %arg15 : i32 to index
      %c0_23 = arith.constant 0 : index
      %c0_24 = arith.constant 0 : index
      %45 = vector.load %arg4[%44, %c0_23, %c0_24] : memref<4x128x32xbf16, #tpu.memory_space<vmem>>, vector<1x128x32xbf16>
      %46 = vector.shape_cast %45 : vector<1x128x32xbf16> to vector<128x32xbf16>
      %cst_25 = arith.constant dense<0.000000e+00> : vector<128x32xf32>
      %47 = tpu.matmul %26, %46, %cst_25 {dimension_numbers = #tpu.dot_dimension_numbers<[1], [0], [0], [1], [0, 0, 1, 1], [], []>} : vector<128x128xbf16>, vector<128x32xbf16>, vector<128x32xf32> -> vector<128x32xf32>
      %48 = arith.index_cast %arg15 : i32 to index
      %c0_26 = arith.constant 0 : index
      %c0_27 = arith.constant 0 : index
      %49 = vector.load %arg5[%48, %c0_26, %c0_27] : memref<4x1x32xf32, #tpu.memory_space<vmem>>, vector<1x1x32xf32>
      %50 = vector.shape_cast %49 : vector<1x1x32xf32> to vector<1x32xf32>
      %51 = vector.broadcast %50 : vector<1x32xf32> to vector<128x32xf32>
      %52 = arith.addf %47, %51 : vector<128x32xf32>
      %53 = arith.index_cast %arg15 : i32 to index
      %c0_28 = arith.constant 0 : index
      %c0_29 = arith.constant 0 : index
      %54 = vector.load %arg6[%53, %c0_28, %c0_29] : memref<4x128x32xbf16, #tpu.memory_space<vmem>>, vector<1x128x32xbf16>
      %55 = vector.shape_cast %54 : vector<1x128x32xbf16> to vector<128x32xbf16>
      %cst_30 = arith.constant dense<0.000000e+00> : vector<128x32xf32>
      %56 = tpu.matmul %26, %55, %cst_30 {dimension_numbers = #tpu.dot_dimension_numbers<[1], [0], [0], [1], [0, 0, 1, 1], [], []>} : vector<128x128xbf16>, vector<128x32xbf16>, vector<128x32xf32> -> vector<128x32xf32>
      %57 = arith.index_cast %arg15 : i32 to index
      %c0_31 = arith.constant 0 : index
      %c0_32 = arith.constant 0 : index
      %58 = vector.load %arg7[%57, %c0_31, %c0_32] : memref<4x1x32xf32, #tpu.memory_space<vmem>>, vector<1x1x32xf32>
      %59 = vector.shape_cast %58 : vector<1x1x32xf32> to vector<1x32xf32>
      %60 = vector.broadcast %59 : vector<1x32xf32> to vector<128x32xf32>
      %61 = arith.addf %56, %60 : vector<128x32xf32>
      %62 = arith.index_cast %arg15 : i32 to index
      %c0_33 = arith.constant 0 : index
      %c0_34 = arith.constant 0 : index
      %63 = vector.load %arg8[%62, %c0_33, %c0_34] : memref<4x128x32xbf16, #tpu.memory_space<vmem>>, vector<1x128x32xbf16>
      %64 = vector.shape_cast %63 : vector<1x128x32xbf16> to vector<128x32xbf16>
      %cst_35 = arith.constant dense<0.000000e+00> : vector<128x32xf32>
      %65 = tpu.matmul %26, %64, %cst_35 {dimension_numbers = #tpu.dot_dimension_numbers<[1], [0], [0], [1], [0, 0, 1, 1], [], []>} : vector<128x128xbf16>, vector<128x32xbf16>, vector<128x32xf32> -> vector<128x32xf32>
      %66 = arith.index_cast %arg15 : i32 to index
      %c0_36 = arith.constant 0 : index
      %c0_37 = arith.constant 0 : index
      %67 = vector.load %arg9[%66, %c0_36, %c0_37] : memref<4x1x32xf32, #tpu.memory_space<vmem>>, vector<1x1x32xf32>
      %68 = vector.shape_cast %67 : vector<1x1x32xf32> to vector<1x32xf32>
      %69 = vector.broadcast %68 : vector<1x32xf32> to vector<128x32xf32>
      %70 = arith.addf %65, %69 : vector<128x32xf32>
      %cst_38 = arith.constant 0.176776692 : f32
      %71 = vector.broadcast %cst_38 : f32 to vector<128x32xf32>
      %72 = arith.mulf %52, %71 : vector<128x32xf32>
      %73 = arith.truncf %72 : vector<128x32xf32> to vector<128x32xbf16>
      %74 = arith.truncf %61 : vector<128x32xf32> to vector<128x32xbf16>
      %cst_39 = arith.constant dense<0.000000e+00> : vector<128x128xf32>
      %75 = tpu.matmul %73, %74, %cst_39 {dimension_numbers = #tpu.dot_dimension_numbers<[1], [1], [0], [0], [0, 0, 1, 0], [], []>} : vector<128x32xbf16>, vector<128x32xbf16>, vector<128x128xf32> -> vector<128x128xf32>
      %cst_40 = arith.constant -1.000000e+30 : f32
      %76 = vector.shape_cast %31 : vector<1x128xi1> to vector<1x128xi1>
      %77 = vector.broadcast %76 : vector<1x128xi1> to vector<128x128xi1>
      %78 = vector.broadcast %cst_40 : f32 to vector<128x128xf32>
      %79 = arith.select %77, %75, %78 : vector<128x128xi1>, vector<128x128xf32>
      %cst_41 = arith.constant dense<0xFF800000> : vector<128xf32>
      %80 = vector.multi_reduction <maximumf>, %79, %cst_41 [1] : vector<128x128xf32> to vector<128xf32>
      %81 = vector.shape_cast %80 : vector<128xf32> to vector<128x1xf32>
      %82 = vector.broadcast %81 : vector<128x1xf32> to vector<128x128xf32>
      %83 = arith.subf %79, %82 : vector<128x128xf32>
      %84 = math.exp %83 : vector<128x128xf32>
      %cst_42 = arith.constant dense<0.000000e+00> : vector<128xf32>
      %85 = vector.multi_reduction <add>, %84, %cst_42 [1] : vector<128x128xf32> to vector<128xf32>
      %86 = vector.shape_cast %85 : vector<128xf32> to vector<128x1xf32>
      %87 = tpu.reciprocal %86 {approx = true} : vector<128x1xf32> -> vector<128x1xf32>
      %88 = vector.broadcast %87 : vector<128x1xf32> to vector<128x128xf32>
      %89 = arith.mulf %84, %88 : vector<128x128xf32>
      %90 = arith.truncf %89 : vector<128x128xf32> to vector<128x128xbf16>
      %91 = arith.truncf %70 : vector<128x32xf32> to vector<128x32xbf16>
      %cst_43 = arith.constant dense<0.000000e+00> : vector<128x32xf32>
      %92 = tpu.matmul %90, %91, %cst_43 {dimension_numbers = #tpu.dot_dimension_numbers<[1], [0], [0], [1], [0, 0, 1, 1], [], []>} : vector<128x128xbf16>, vector<128x32xbf16>, vector<128x32xf32> -> vector<128x32xf32>
      %c0_44 = arith.constant 0 : index
      %c0_45 = arith.constant 0 : index
      %93 = vector.load %arg14[%c0_44, %c0_45] : memref<128x128xf32, #tpu.memory_space<vmem>>, vector<128x128xf32>
      %94 = arith.truncf %92 : vector<128x32xf32> to vector<128x32xbf16>
      %95 = arith.index_cast %arg15 : i32 to index
      %c0_46 = arith.constant 0 : index
      %c0_47 = arith.constant 0 : index
      %96 = vector.load %arg10[%95, %c0_46, %c0_47] : memref<4x32x128xbf16, #tpu.memory_space<vmem>>, vector<1x32x128xbf16>
      %97 = vector.shape_cast %96 : vector<1x32x128xbf16> to vector<32x128xbf16>
      %cst_48 = arith.constant dense<0.000000e+00> : vector<128x128xf32>
      %98 = tpu.matmul %94, %97, %cst_48 {dimension_numbers = #tpu.dot_dimension_numbers<[1], [0], [0], [1], [0, 0, 1, 1], [], []>} : vector<128x32xbf16>, vector<32x128xbf16>, vector<128x128xf32> -> vector<128x128xf32>
      %99 = arith.addf %93, %98 : vector<128x128xf32>
      %c0_49 = arith.constant 0 : index
      %c0_50 = arith.constant 0 : index
      %100 = vector.load %arg14[%c0_49, %c0_50] : memref<128x128xf32, #tpu.memory_space<vmem>>, vector<128x128xf32>
      tpu.vector_store %arg14[%c0_49, %c0_50], %99 {strides = array<i32>} : memref<128x128xf32, #tpu.memory_space<vmem>>, vector<128x128xf32>,
    }
    %c4_i32_13 = arith.constant 4 : i32
    %c0_14 = arith.constant 0 : index
    %c0_15 = arith.constant 0 : index
    %33 = vector.load %arg12[%c0_14, %c0_15] : memref<1x128xf32, #tpu.memory_space<vmem>>, vector<1x128xf32>
    %c0_16 = arith.constant 0 : index
    %c0_17 = arith.constant 0 : index
    %34 = vector.load %arg14[%c0_16, %c0_17] : memref<128x128xf32, #tpu.memory_space<vmem>>, vector<128x128xf32>
    %c0_18 = arith.constant 0 : index
    %c0_19 = arith.constant 0 : index
    %35 = vector.load %arg11[%c0_18, %c0_19] : memref<1x128xf32, #tpu.memory_space<vmem>>, vector<1x128xf32>
    %36 = vector.broadcast %35 : vector<1x128xf32> to vector<128x128xf32>
    %37 = arith.addf %34, %36 : vector<128x128xf32>
    %38 = vector.broadcast %33 : vector<1x128xf32> to vector<128x128xf32>
    %39 = arith.mulf %38, %37 : vector<128x128xf32>
    %40 = arith.addf %1, %39 : vector<128x128xf32>
    %c0_20 = arith.constant 0 : index
    %c0_21 = arith.constant 0 : index
    %c0_22 = arith.constant 0 : index
    %41 = vector.load %arg13[%c0_20, %c0_21, %c0_22] : memref<1x128x128xf32, #tpu.memory_space<vmem>>, vector<1x128x128xf32>
    %42 = vector.shape_cast %41 : vector<1x128x128xf32> to vector<128x128xf32>
    %43 = vector.shape_cast %40 : vector<128x128xf32> to vector<1x128x128xf32>
    tpu.vector_store %arg13[%c0_20, %c0_21, %c0_22], %43 {strides = array<i32>} : memref<1x128x128xf32, #tpu.memory_space<vmem>>, vector<1x128x128xf32>,
    return
  }
  func.func @transform_0(%arg0: i32) -> (i32, i32, i32) {
    %c0_i32 = arith.constant 0 : i32
    %c0_i32_0 = arith.constant 0 : i32
    %c0_i32_1 = arith.constant 0 : i32
    return %arg0, %c0_i32, %c0_i32_0 : i32, i32, i32
  }
  func.func @transform_1(%arg0: i32) -> (i32, i32) {
    %c0_i32 = arith.constant 0 : i32
    %c0_i32_0 = arith.constant 0 : i32
    %c0_i32_1 = arith.constant 0 : i32
    return %c0_i32, %c0_i32_0 : i32, i32
  }
  func.func @transform_2(%arg0: i32) -> (i32, i32) {
    %c0_i32 = arith.constant 0 : i32
    %c0_i32_0 = arith.constant 0 : i32
    %c0_i32_1 = arith.constant 0 : i32
    return %c0_i32, %c0_i32_0 : i32, i32
  }
  func.func @transform_3(%arg0: i32) -> (i32, i32, i32) {
    %c0_i32 = arith.constant 0 : i32
    %c0_i32_0 = arith.constant 0 : i32
    %c0_i32_1 = arith.constant 0 : i32
    %c0_i32_2 = arith.constant 0 : i32
    return %c0_i32, %c0_i32_0, %c0_i32_1 : i32, i32, i32
  }
  func.func @transform_4(%arg0: i32) -> (i32, i32, i32) {
    %c0_i32 = arith.constant 0 : i32
    %c0_i32_0 = arith.constant 0 : i32
    %c0_i32_1 = arith.constant 0 : i32
    %c0_i32_2 = arith.constant 0 : i32
    return %c0_i32, %c0_i32_0, %c0_i32_1 : i32, i32, i32
  }
  func.func @transform_5(%arg0: i32) -> (i32, i32, i32) {
    %c0_i32 = arith.constant 0 : i32
    %c0_i32_0 = arith.constant 0 : i32
    %c0_i32_1 = arith.constant 0 : i32
    %c0_i32_2 = arith.constant 0 : i32
    return %c0_i32, %c0_i32_0, %c0_i32_1 : i32, i32, i32
  }
  func.func @transform_6(%arg0: i32) -> (i32, i32, i32) {
    %c0_i32 = arith.constant 0 : i32
    %c0_i32_0 = arith.constant 0 : i32
    %c0_i32_1 = arith.constant 0 : i32
    %c0_i32_2 = arith.constant 0 : i32
    return %c0_i32, %c0_i32_0, %c0_i32_1 : i32, i32, i32
  }
  func.func @transform_7(%arg0: i32) -> (i32, i32, i32) {
    %c0_i32 = arith.constant 0 : i32
    %c0_i32_0 = arith.constant 0 : i32
    %c0_i32_1 = arith.constant 0 : i32
    %c0_i32_2 = arith.constant 0 : i32
    return %c0_i32, %c0_i32_0, %c0_i32_1 : i32, i32, i32
  }
  func.func @transform_8(%arg0: i32) -> (i32, i32, i32) {
    %c0_i32 = arith.constant 0 : i32
    %c0_i32_0 = arith.constant 0 : i32
    %c0_i32_1 = arith.constant 0 : i32
    %c0_i32_2 = arith.constant 0 : i32
    return %c0_i32, %c0_i32_0, %c0_i32_1 : i32, i32, i32
  }
  func.func @transform_9(%arg0: i32) -> (i32, i32, i32) {
    %c0_i32 = arith.constant 0 : i32
    %c0_i32_0 = arith.constant 0 : i32
    %c0_i32_1 = arith.constant 0 : i32
    %c0_i32_2 = arith.constant 0 : i32
    return %c0_i32, %c0_i32_0, %c0_i32_1 : i32, i32, i32
  }
  func.func @transform_10(%arg0: i32) -> (i32, i32) {
    %c0_i32 = arith.constant 0 : i32
    %c0_i32_0 = arith.constant 0 : i32
    %c0_i32_1 = arith.constant 0 : i32
    return %c0_i32, %c0_i32_0 : i32, i32
  }
  func.func @transform_11(%arg0: i32) -> (i32, i32) {
    %c0_i32 = arith.constant 0 : i32
    %c0_i32_0 = arith.constant 0 : i32
    %c0_i32_1 = arith.constant 0 : i32
    return %c0_i32, %c0_i32_0 : i32, i32
  }
  func.func @transform_12(%arg0: i32) -> (i32, i32, i32) {
    %c0_i32 = arith.constant 0 : i32
    %c0_i32_0 = arith.constant 0 : i32
    %c0_i32_1 = arith.constant 0 : i32
    return %arg0, %c0_i32, %c0_i32_0 : i32, i32, i32
  }
}

module attributes {stable_mosaic.version = 11 : i64} {
  func.func @mlp_kernel(%arg0: i32, %arg1: i32, %arg2: memref<1x128x128xf32, #tpu.memory_space<vmem>>, %arg3: memref<1x128xf32, #tpu.memory_space<vmem>>, %arg4: memref<1x128xf32, #tpu.memory_space<vmem>>, %arg5: memref<128x256xbf16, #tpu.memory_space<vmem>>, %arg6: memref<1x256xf32, #tpu.memory_space<vmem>>, %arg7: memref<256x128xbf16, #tpu.memory_space<vmem>>, %arg8: memref<1x128xf32, #tpu.memory_space<vmem>>, %arg9: memref<1x128xf32, #tpu.memory_space<vmem>>, %arg10: memref<1x128xf32, #tpu.memory_space<vmem>>, %arg11: memref<1x128xf32, #tpu.memory_space<vmem>>, %arg12: memref<1x128x128xf32, #tpu.memory_space<vmem>>, %arg13: memref<1x128x128xf32, #tpu.memory_space<vmem>>, %arg14: memref<128x128xbf16, #tpu.memory_space<vmem>>, %arg15: memref<128x128xf32, #tpu.memory_space<vmem>>) attributes {dimension_semantics = [#tpu.dimension_semantics<parallel>, #tpu.dimension_semantics<arbitrary>], iteration_bounds = array<i64: 2, 2>, scalar_prefetch = 0 : i64, scratch_operands = 2 : i64, tpu.core_type = #tpu.core_type<tc>, window_params = [{transform_indices = @transform_0, window_bounds = array<i64: 1, 128, 128>}, {pipeline_mode = #tpu.pipeline_mode<synchronous>, transform_indices = @transform_1, window_bounds = array<i64: 1, 128>}, {pipeline_mode = #tpu.pipeline_mode<synchronous>, transform_indices = @transform_2, window_bounds = array<i64: 1, 128>}, {transform_indices = @transform_3, window_bounds = array<i64: 128, 256>}, {transform_indices = @transform_4, window_bounds = array<i64: 1, 256>}, {transform_indices = @transform_5, window_bounds = array<i64: 256, 128>}, {pipeline_mode = #tpu.pipeline_mode<synchronous>, transform_indices = @transform_6, window_bounds = array<i64: 1, 128>}, {pipeline_mode = #tpu.pipeline_mode<synchronous>, transform_indices = @transform_7, window_bounds = array<i64: 1, 128>}, {pipeline_mode = #tpu.pipeline_mode<synchronous>, transform_indices = @transform_8, window_bounds = array<i64: 1, 128>}, {pipeline_mode = #tpu.pipeline_mode<synchronous>, transform_indices = @transform_9, window_bounds = array<i64: 1, 128>}, {transform_indices = @transform_10, window_bounds = array<i64: 1, 128, 128>}, {transform_indices = @transform_11, window_bounds = array<i64: 1, 128, 128>}]} {
    %c0_i32 = arith.constant 0 : i32
    %0 = arith.cmpi eq, %arg1, %c0_i32 : i32
    %1 = arith.extui %0 : i1 to i32
    %c0_i32_0 = arith.constant 0 : i32
    %2 = arith.cmpi ne, %1, %c0_i32_0 : i32
    scf.if %2 {
      %c0_29 = arith.constant 0 : index
      %c0_30 = arith.constant 0 : index
      %c0_31 = arith.constant 0 : index
      %58 = vector.load %arg2[%c0_29, %c0_30, %c0_31] : memref<1x128x128xf32, #tpu.memory_space<vmem>>, vector<1x128x128xf32>
      %59 = vector.shape_cast %58 : vector<1x128x128xf32> to vector<128x128xf32>
      %c0_32 = arith.constant 0 : index
      %c0_33 = arith.constant 0 : index
      %60 = vector.load %arg3[%c0_32, %c0_33] : memref<1x128xf32, #tpu.memory_space<vmem>>, vector<1x128xf32>
      %c0_34 = arith.constant 0 : index
      %c0_35 = arith.constant 0 : index
      %61 = vector.load %arg4[%c0_34, %c0_35] : memref<1x128xf32, #tpu.memory_space<vmem>>, vector<1x128xf32>
      %cst_36 = arith.constant dense<0.000000e+00> : vector<128xf32>
      %62 = vector.multi_reduction <add>, %59, %cst_36 [1] : vector<128x128xf32> to vector<128xf32>
      %63 = vector.shape_cast %62 : vector<128xf32> to vector<128x1xf32>
      %cst_37 = arith.constant 1.280000e+02 : f32
      %64 = vector.broadcast %cst_37 : f32 to vector<128x1xf32>
      %65 = arith.divf %63, %64 : vector<128x1xf32>
      %66 = vector.broadcast %65 : vector<128x1xf32> to vector<128x128xf32>
      %67 = arith.subf %59, %66 : vector<128x128xf32>
      %68 = arith.mulf %67, %67 : vector<128x128xf32>
      %cst_38 = arith.constant dense<0.000000e+00> : vector<128xf32>
      %69 = vector.multi_reduction <add>, %68, %cst_38 [1] : vector<128x128xf32> to vector<128xf32>
      %70 = vector.shape_cast %69 : vector<128xf32> to vector<128x1xf32>
      %cst_39 = arith.constant 1.280000e+02 : f32
      %71 = vector.broadcast %cst_39 : f32 to vector<128x1xf32>
      %72 = arith.divf %70, %71 : vector<128x1xf32>
      %73 = vector.broadcast %65 : vector<128x1xf32> to vector<128x128xf32>
      %74 = arith.subf %59, %73 : vector<128x128xf32>
      %cst_40 = arith.constant 9.99999997E-7 : f32
      %75 = vector.broadcast %cst_40 : f32 to vector<128x1xf32>
      %76 = arith.addf %72, %75 : vector<128x1xf32>
      %77 = math.rsqrt %76 : vector<128x1xf32>
      %78 = vector.broadcast %77 : vector<128x1xf32> to vector<128x128xf32>
      %79 = arith.mulf %74, %78 : vector<128x128xf32>
      %80 = vector.broadcast %60 : vector<1x128xf32> to vector<128x128xf32>
      %81 = arith.mulf %79, %80 : vector<128x128xf32>
      %82 = vector.broadcast %61 : vector<1x128xf32> to vector<128x128xf32>
      %83 = arith.addf %81, %82 : vector<128x128xf32>
      %84 = arith.truncf %83 : vector<128x128xf32> to vector<128x128xbf16>
      %c0_41 = arith.constant 0 : index
      %c0_42 = arith.constant 0 : index
      %85 = vector.load %arg14[%c0_41, %c0_42] : memref<128x128xbf16, #tpu.memory_space<vmem>>, vector<128x128xbf16>
      tpu.vector_store %arg14[%c0_41, %c0_42], %84 {strides = array<i32>} : memref<128x128xbf16, #tpu.memory_space<vmem>>, vector<128x128xbf16>,
      %cst_43 = arith.constant 0.000000e+00 : f32
      %86 = vector.broadcast %cst_43 : f32 to vector<128x128xf32>
      %c0_44 = arith.constant 0 : index
      %c0_45 = arith.constant 0 : index
      %87 = vector.load %arg15[%c0_44, %c0_45] : memref<128x128xf32, #tpu.memory_space<vmem>>, vector<128x128xf32>
      tpu.vector_store %arg15[%c0_44, %c0_45], %86 {strides = array<i32>} : memref<128x128xf32, #tpu.memory_space<vmem>>, vector<128x128xf32>,
    } else {
    }
    %c0 = arith.constant 0 : index
    %c0_1 = arith.constant 0 : index
    %3 = vector.load %arg14[%c0, %c0_1] : memref<128x128xbf16, #tpu.memory_space<vmem>>, vector<128x128xbf16>
    %c0_2 = arith.constant 0 : index
    %c0_3 = arith.constant 0 : index
    %4 = vector.load %arg5[%c0_2, %c0_3] : memref<128x256xbf16, #tpu.memory_space<vmem>>, vector<128x256xbf16>
    %cst = arith.constant dense<0.000000e+00> : vector<128x256xf32>
    %5 = tpu.matmul %3, %4, %cst {dimension_numbers = #tpu.dot_dimension_numbers<[1], [0], [0], [1], [0, 0, 1, 1], [], []>} : vector<128x128xbf16>, vector<128x256xbf16>, vector<128x256xf32> -> vector<128x256xf32>
    %c0_4 = arith.constant 0 : index
    %c0_5 = arith.constant 0 : index
    %6 = vector.load %arg6[%c0_4, %c0_5] : memref<1x256xf32, #tpu.memory_space<vmem>>, vector<1x256xf32>
    %7 = vector.broadcast %6 : vector<1x256xf32> to vector<128x256xf32>
    %8 = arith.addf %5, %7 : vector<128x256xf32>
    %cst_6 = arith.constant 5.000000e-01 : f32
    %9 = vector.broadcast %cst_6 : f32 to vector<128x256xf32>
    %10 = arith.mulf %9, %8 : vector<128x256xf32>
    %cst_7 = arith.constant 0.707106769 : f32
    %11 = vector.broadcast %cst_7 : f32 to vector<128x256xf32>
    %12 = arith.mulf %8, %11 : vector<128x256xf32>
    %13 = math.absf %12 : vector<128x256xf32>
    %cst_8 = arith.constant 0.327591091 : f32
    %14 = vector.broadcast %cst_8 : f32 to vector<128x256xf32>
    %15 = arith.mulf %14, %13 : vector<128x256xf32>
    %cst_9 = arith.constant 1.000000e+00 : f32
    %16 = vector.broadcast %cst_9 : f32 to vector<128x256xf32>
    %17 = arith.addf %16, %15 : vector<128x256xf32>
    %cst_10 = arith.constant 1.000000e+00 : f32
    %18 = vector.broadcast %cst_10 : f32 to vector<128x256xf32>
    %19 = arith.divf %18, %17 : vector<128x256xf32>
    %cst_11 = arith.constant 1.06140542 : f32
    %20 = vector.broadcast %cst_11 : f32 to vector<128x256xf32>
    %21 = arith.mulf %19, %20 : vector<128x256xf32>
    %cst_12 = arith.constant -1.45315206 : f32
    %22 = vector.broadcast %cst_12 : f32 to vector<128x256xf32>
    %23 = arith.addf %22, %21 : vector<128x256xf32>
    %24 = arith.mulf %19, %23 : vector<128x256xf32>
    %cst_13 = arith.constant 1.42141378 : f32
    %25 = vector.broadcast %cst_13 : f32 to vector<128x256xf32>
    %26 = arith.addf %25, %24 : vector<128x256xf32>
    %27 = arith.mulf %19, %26 : vector<128x256xf32>
    %cst_14 = arith.constant -0.284496725 : f32
    %28 = vector.broadcast %cst_14 : f32 to vector<128x256xf32>
    %29 = arith.addf %28, %27 : vector<128x256xf32>
    %30 = arith.mulf %19, %29 : vector<128x256xf32>
    %cst_15 = arith.constant 0.254829586 : f32
    %31 = vector.broadcast %cst_15 : f32 to vector<128x256xf32>
    %32 = arith.addf %31, %30 : vector<128x256xf32>
    %33 = arith.mulf %19, %32 : vector<128x256xf32>
    %cst_16 = arith.constant 0.000000e+00 : f32
    %34 = vector.broadcast %cst_16 : f32 to vector<128x256xf32>
    %35 = arith.subf %34, %13 : vector<128x256xf32>
    %36 = arith.mulf %35, %13 : vector<128x256xf32>
    %37 = math.exp %36 : vector<128x256xf32>
    %38 = arith.mulf %33, %37 : vector<128x256xf32>
    %cst_17 = arith.constant 1.000000e+00 : f32
    %39 = vector.broadcast %cst_17 : f32 to vector<128x256xf32>
    %40 = arith.subf %39, %38 : vector<128x256xf32>
    %cst_18 = arith.constant 0.000000e+00 : f32
    %41 = vector.broadcast %cst_18 : f32 to vector<128x256xf32>
    %42 = arith.cmpf oge, %12, %41 : vector<128x256xf32>
    %cst_19 = arith.constant 0.000000e+00 : f32
    %43 = vector.broadcast %cst_19 : f32 to vector<128x256xf32>
    %44 = arith.subf %43, %40 : vector<128x256xf32>
    %45 = arith.select %42, %40, %44 : vector<128x256xi1>, vector<128x256xf32>
    %cst_20 = arith.constant 1.000000e+00 : f32
    %46 = vector.broadcast %cst_20 : f32 to vector<128x256xf32>
    %47 = arith.addf %46, %45 : vector<128x256xf32>
    %48 = arith.mulf %10, %47 : vector<128x256xf32>
    %49 = arith.truncf %48 : vector<128x256xf32> to vector<128x256xbf16>
    %c0_21 = arith.constant 0 : index
    %c0_22 = arith.constant 0 : index
    %50 = vector.load %arg15[%c0_21, %c0_22] : memref<128x128xf32, #tpu.memory_space<vmem>>, vector<128x128xf32>
    %c0_23 = arith.constant 0 : index
    %c0_24 = arith.constant 0 : index
    %51 = vector.load %arg7[%c0_23, %c0_24] : memref<256x128xbf16, #tpu.memory_space<vmem>>, vector<256x128xbf16>
    %cst_25 = arith.constant dense<0.000000e+00> : vector<128x128xf32>
    %52 = tpu.matmul %49, %51, %cst_25 {dimension_numbers = #tpu.dot_dimension_numbers<[1], [0], [0], [1], [0, 0, 1, 1], [], []>} : vector<128x256xbf16>, vector<256x128xbf16>, vector<128x128xf32> -> vector<128x128xf32>
    %53 = arith.addf %50, %52 : vector<128x128xf32>
    %c0_26 = arith.constant 0 : index
    %c0_27 = arith.constant 0 : index
    %54 = vector.load %arg15[%c0_26, %c0_27] : memref<128x128xf32, #tpu.memory_space<vmem>>, vector<128x128xf32>
    tpu.vector_store %arg15[%c0_26, %c0_27], %53 {strides = array<i32>} : memref<128x128xf32, #tpu.memory_space<vmem>>, vector<128x128xf32>,
    %c1_i32 = arith.constant 1 : i32
    %55 = arith.cmpi eq, %arg1, %c1_i32 : i32
    %56 = arith.extui %55 : i1 to i32
    %c0_i32_28 = arith.constant 0 : i32
    %57 = arith.cmpi ne, %56, %c0_i32_28 : i32
    scf.if %57 {
      %c0_29 = arith.constant 0 : index
      %c0_30 = arith.constant 0 : index
      %c0_31 = arith.constant 0 : index
      %58 = vector.load %arg2[%c0_29, %c0_30, %c0_31] : memref<1x128x128xf32, #tpu.memory_space<vmem>>, vector<1x128x128xf32>
      %59 = vector.shape_cast %58 : vector<1x128x128xf32> to vector<128x128xf32>
      %c0_32 = arith.constant 0 : index
      %c0_33 = arith.constant 0 : index
      %60 = vector.load %arg9[%c0_32, %c0_33] : memref<1x128xf32, #tpu.memory_space<vmem>>, vector<1x128xf32>
      %c0_34 = arith.constant 0 : index
      %c0_35 = arith.constant 0 : index
      %61 = vector.load %arg15[%c0_34, %c0_35] : memref<128x128xf32, #tpu.memory_space<vmem>>, vector<128x128xf32>
      %c0_36 = arith.constant 0 : index
      %c0_37 = arith.constant 0 : index
      %62 = vector.load %arg8[%c0_36, %c0_37] : memref<1x128xf32, #tpu.memory_space<vmem>>, vector<1x128xf32>
      %63 = vector.broadcast %62 : vector<1x128xf32> to vector<128x128xf32>
      %64 = arith.addf %61, %63 : vector<128x128xf32>
      %65 = vector.broadcast %60 : vector<1x128xf32> to vector<128x128xf32>
      %66 = arith.mulf %65, %64 : vector<128x128xf32>
      %67 = arith.addf %59, %66 : vector<128x128xf32>
      %c0_38 = arith.constant 0 : index
      %c0_39 = arith.constant 0 : index
      %c0_40 = arith.constant 0 : index
      %68 = vector.load %arg12[%c0_38, %c0_39, %c0_40] : memref<1x128x128xf32, #tpu.memory_space<vmem>>, vector<1x128x128xf32>
      %69 = vector.shape_cast %68 : vector<1x128x128xf32> to vector<128x128xf32>
      %70 = vector.shape_cast %67 : vector<128x128xf32> to vector<1x128x128xf32>
      tpu.vector_store %arg12[%c0_38, %c0_39, %c0_40], %70 {strides = array<i32>} : memref<1x128x128xf32, #tpu.memory_space<vmem>>, vector<1x128x128xf32>,
      %c0_41 = arith.constant 0 : index
      %c0_42 = arith.constant 0 : index
      %71 = vector.load %arg10[%c0_41, %c0_42] : memref<1x128xf32, #tpu.memory_space<vmem>>, vector<1x128xf32>
      %c0_43 = arith.constant 0 : index
      %c0_44 = arith.constant 0 : index
      %72 = vector.load %arg11[%c0_43, %c0_44] : memref<1x128xf32, #tpu.memory_space<vmem>>, vector<1x128xf32>
      %cst_45 = arith.constant dense<0.000000e+00> : vector<128xf32>
      %73 = vector.multi_reduction <add>, %67, %cst_45 [1] : vector<128x128xf32> to vector<128xf32>
      %74 = vector.shape_cast %73 : vector<128xf32> to vector<128x1xf32>
      %cst_46 = arith.constant 1.280000e+02 : f32
      %75 = vector.broadcast %cst_46 : f32 to vector<128x1xf32>
      %76 = arith.divf %74, %75 : vector<128x1xf32>
      %77 = vector.broadcast %76 : vector<128x1xf32> to vector<128x128xf32>
      %78 = arith.subf %67, %77 : vector<128x128xf32>
      %79 = arith.mulf %78, %78 : vector<128x128xf32>
      %cst_47 = arith.constant dense<0.000000e+00> : vector<128xf32>
      %80 = vector.multi_reduction <add>, %79, %cst_47 [1] : vector<128x128xf32> to vector<128xf32>
      %81 = vector.shape_cast %80 : vector<128xf32> to vector<128x1xf32>
      %cst_48 = arith.constant 1.280000e+02 : f32
      %82 = vector.broadcast %cst_48 : f32 to vector<128x1xf32>
      %83 = arith.divf %81, %82 : vector<128x1xf32>
      %84 = vector.broadcast %76 : vector<128x1xf32> to vector<128x128xf32>
      %85 = arith.subf %67, %84 : vector<128x128xf32>
      %cst_49 = arith.constant 9.99999997E-7 : f32
      %86 = vector.broadcast %cst_49 : f32 to vector<128x1xf32>
      %87 = arith.addf %83, %86 : vector<128x1xf32>
      %88 = math.rsqrt %87 : vector<128x1xf32>
      %89 = vector.broadcast %88 : vector<128x1xf32> to vector<128x128xf32>
      %90 = arith.mulf %85, %89 : vector<128x128xf32>
      %91 = vector.broadcast %71 : vector<1x128xf32> to vector<128x128xf32>
      %92 = arith.mulf %90, %91 : vector<128x128xf32>
      %93 = vector.broadcast %72 : vector<1x128xf32> to vector<128x128xf32>
      %94 = arith.addf %92, %93 : vector<128x128xf32>
      %c0_50 = arith.constant 0 : index
      %c0_51 = arith.constant 0 : index
      %c0_52 = arith.constant 0 : index
      %95 = vector.load %arg13[%c0_50, %c0_51, %c0_52] : memref<1x128x128xf32, #tpu.memory_space<vmem>>, vector<1x128x128xf32>
      %96 = vector.shape_cast %95 : vector<1x128x128xf32> to vector<128x128xf32>
      %97 = vector.shape_cast %94 : vector<128x128xf32> to vector<1x128x128xf32>
      tpu.vector_store %arg13[%c0_50, %c0_51, %c0_52], %97 {strides = array<i32>} : memref<1x128x128xf32, #tpu.memory_space<vmem>>, vector<1x128x128xf32>,
    } else {
    }
    return
  }
  func.func @transform_0(%arg0: i32, %arg1: i32) -> (i32, i32, i32) {
    %c0_i32 = arith.constant 0 : i32
    %c0_i32_0 = arith.constant 0 : i32
    %c0_i32_1 = arith.constant 0 : i32
    return %arg0, %c0_i32, %c0_i32_0 : i32, i32, i32
  }
  func.func @transform_1(%arg0: i32, %arg1: i32) -> (i32, i32) {
    %c0_i32 = arith.constant 0 : i32
    %c0_i32_0 = arith.constant 0 : i32
    %c0_i32_1 = arith.constant 0 : i32
    return %c0_i32, %c0_i32_0 : i32, i32
  }
  func.func @transform_2(%arg0: i32, %arg1: i32) -> (i32, i32) {
    %c0_i32 = arith.constant 0 : i32
    %c0_i32_0 = arith.constant 0 : i32
    %c0_i32_1 = arith.constant 0 : i32
    return %c0_i32, %c0_i32_0 : i32, i32
  }
  func.func @transform_3(%arg0: i32, %arg1: i32) -> (i32, i32) {
    %c0_i32 = arith.constant 0 : i32
    %c0_i32_0 = arith.constant 0 : i32
    return %c0_i32, %arg1 : i32, i32
  }
  func.func @transform_4(%arg0: i32, %arg1: i32) -> (i32, i32) {
    %c0_i32 = arith.constant 0 : i32
    %c0_i32_0 = arith.constant 0 : i32
    return %c0_i32, %arg1 : i32, i32
  }
  func.func @transform_5(%arg0: i32, %arg1: i32) -> (i32, i32) {
    %c0_i32 = arith.constant 0 : i32
    %c0_i32_0 = arith.constant 0 : i32
    return %arg1, %c0_i32 : i32, i32
  }
  func.func @transform_6(%arg0: i32, %arg1: i32) -> (i32, i32) {
    %c0_i32 = arith.constant 0 : i32
    %c0_i32_0 = arith.constant 0 : i32
    %c0_i32_1 = arith.constant 0 : i32
    return %c0_i32, %c0_i32_0 : i32, i32
  }
  func.func @transform_7(%arg0: i32, %arg1: i32) -> (i32, i32) {
    %c0_i32 = arith.constant 0 : i32
    %c0_i32_0 = arith.constant 0 : i32
    %c0_i32_1 = arith.constant 0 : i32
    return %c0_i32, %c0_i32_0 : i32, i32
  }
  func.func @transform_8(%arg0: i32, %arg1: i32) -> (i32, i32) {
    %c0_i32 = arith.constant 0 : i32
    %c0_i32_0 = arith.constant 0 : i32
    %c0_i32_1 = arith.constant 0 : i32
    return %c0_i32, %c0_i32_0 : i32, i32
  }
  func.func @transform_9(%arg0: i32, %arg1: i32) -> (i32, i32) {
    %c0_i32 = arith.constant 0 : i32
    %c0_i32_0 = arith.constant 0 : i32
    %c0_i32_1 = arith.constant 0 : i32
    return %c0_i32, %c0_i32_0 : i32, i32
  }
  func.func @transform_10(%arg0: i32, %arg1: i32) -> (i32, i32, i32) {
    %c0_i32 = arith.constant 0 : i32
    %c0_i32_0 = arith.constant 0 : i32
    %c0_i32_1 = arith.constant 0 : i32
    return %arg0, %c0_i32, %c0_i32_0 : i32, i32, i32
  }
  func.func @transform_11(%arg0: i32, %arg1: i32) -> (i32, i32, i32) {
    %c0_i32 = arith.constant 0 : i32
    %c0_i32_0 = arith.constant 0 : i32
    %c0_i32_1 = arith.constant 0 : i32
    return %arg0, %c0_i32, %c0_i32_0 : i32, i32, i32
  }
}

module attributes {stable_mosaic.version = 11 : i64} {
  func.func @mlp_kernel(%arg0: i32, %arg1: i32, %arg2: memref<1x128x128xf32, #tpu.memory_space<vmem>>, %arg3: memref<1x128xf32, #tpu.memory_space<vmem>>, %arg4: memref<1x128xf32, #tpu.memory_space<vmem>>, %arg5: memref<128x256xbf16, #tpu.memory_space<vmem>>, %arg6: memref<1x256xf32, #tpu.memory_space<vmem>>, %arg7: memref<256x128xbf16, #tpu.memory_space<vmem>>, %arg8: memref<1x128xf32, #tpu.memory_space<vmem>>, %arg9: memref<1x128xf32, #tpu.memory_space<vmem>>, %arg10: memref<1x128x128xf32, #tpu.memory_space<vmem>>, %arg11: memref<128x128xbf16, #tpu.memory_space<vmem>>, %arg12: memref<128x128xf32, #tpu.memory_space<vmem>>) attributes {dimension_semantics = [#tpu.dimension_semantics<parallel>, #tpu.dimension_semantics<arbitrary>], iteration_bounds = array<i64: 2, 2>, scalar_prefetch = 0 : i64, scratch_operands = 2 : i64, tpu.core_type = #tpu.core_type<tc>, window_params = [{transform_indices = @transform_0, window_bounds = array<i64: 1, 128, 128>}, {pipeline_mode = #tpu.pipeline_mode<synchronous>, transform_indices = @transform_1, window_bounds = array<i64: 1, 128>}, {pipeline_mode = #tpu.pipeline_mode<synchronous>, transform_indices = @transform_2, window_bounds = array<i64: 1, 128>}, {transform_indices = @transform_3, window_bounds = array<i64: 128, 256>}, {transform_indices = @transform_4, window_bounds = array<i64: 1, 256>}, {transform_indices = @transform_5, window_bounds = array<i64: 256, 128>}, {pipeline_mode = #tpu.pipeline_mode<synchronous>, transform_indices = @transform_6, window_bounds = array<i64: 1, 128>}, {pipeline_mode = #tpu.pipeline_mode<synchronous>, transform_indices = @transform_7, window_bounds = array<i64: 1, 128>}, {transform_indices = @transform_8, window_bounds = array<i64: 1, 128, 128>}]} {
    %c0_i32 = arith.constant 0 : i32
    %0 = arith.cmpi eq, %arg1, %c0_i32 : i32
    %1 = arith.extui %0 : i1 to i32
    %c0_i32_0 = arith.constant 0 : i32
    %2 = arith.cmpi ne, %1, %c0_i32_0 : i32
    scf.if %2 {
      %c0_29 = arith.constant 0 : index
      %c0_30 = arith.constant 0 : index
      %c0_31 = arith.constant 0 : index
      %58 = vector.load %arg2[%c0_29, %c0_30, %c0_31] : memref<1x128x128xf32, #tpu.memory_space<vmem>>, vector<1x128x128xf32>
      %59 = vector.shape_cast %58 : vector<1x128x128xf32> to vector<128x128xf32>
      %c0_32 = arith.constant 0 : index
      %c0_33 = arith.constant 0 : index
      %60 = vector.load %arg3[%c0_32, %c0_33] : memref<1x128xf32, #tpu.memory_space<vmem>>, vector<1x128xf32>
      %c0_34 = arith.constant 0 : index
      %c0_35 = arith.constant 0 : index
      %61 = vector.load %arg4[%c0_34, %c0_35] : memref<1x128xf32, #tpu.memory_space<vmem>>, vector<1x128xf32>
      %cst_36 = arith.constant dense<0.000000e+00> : vector<128xf32>
      %62 = vector.multi_reduction <add>, %59, %cst_36 [1] : vector<128x128xf32> to vector<128xf32>
      %63 = vector.shape_cast %62 : vector<128xf32> to vector<128x1xf32>
      %cst_37 = arith.constant 1.280000e+02 : f32
      %64 = vector.broadcast %cst_37 : f32 to vector<128x1xf32>
      %65 = arith.divf %63, %64 : vector<128x1xf32>
      %66 = vector.broadcast %65 : vector<128x1xf32> to vector<128x128xf32>
      %67 = arith.subf %59, %66 : vector<128x128xf32>
      %68 = arith.mulf %67, %67 : vector<128x128xf32>
      %cst_38 = arith.constant dense<0.000000e+00> : vector<128xf32>
      %69 = vector.multi_reduction <add>, %68, %cst_38 [1] : vector<128x128xf32> to vector<128xf32>
      %70 = vector.shape_cast %69 : vector<128xf32> to vector<128x1xf32>
      %cst_39 = arith.constant 1.280000e+02 : f32
      %71 = vector.broadcast %cst_39 : f32 to vector<128x1xf32>
      %72 = arith.divf %70, %71 : vector<128x1xf32>
      %73 = vector.broadcast %65 : vector<128x1xf32> to vector<128x128xf32>
      %74 = arith.subf %59, %73 : vector<128x128xf32>
      %cst_40 = arith.constant 9.99999997E-7 : f32
      %75 = vector.broadcast %cst_40 : f32 to vector<128x1xf32>
      %76 = arith.addf %72, %75 : vector<128x1xf32>
      %77 = math.rsqrt %76 : vector<128x1xf32>
      %78 = vector.broadcast %77 : vector<128x1xf32> to vector<128x128xf32>
      %79 = arith.mulf %74, %78 : vector<128x128xf32>
      %80 = vector.broadcast %60 : vector<1x128xf32> to vector<128x128xf32>
      %81 = arith.mulf %79, %80 : vector<128x128xf32>
      %82 = vector.broadcast %61 : vector<1x128xf32> to vector<128x128xf32>
      %83 = arith.addf %81, %82 : vector<128x128xf32>
      %84 = arith.truncf %83 : vector<128x128xf32> to vector<128x128xbf16>
      %c0_41 = arith.constant 0 : index
      %c0_42 = arith.constant 0 : index
      %85 = vector.load %arg11[%c0_41, %c0_42] : memref<128x128xbf16, #tpu.memory_space<vmem>>, vector<128x128xbf16>
      tpu.vector_store %arg11[%c0_41, %c0_42], %84 {strides = array<i32>} : memref<128x128xbf16, #tpu.memory_space<vmem>>, vector<128x128xbf16>,
      %cst_43 = arith.constant 0.000000e+00 : f32
      %86 = vector.broadcast %cst_43 : f32 to vector<128x128xf32>
      %c0_44 = arith.constant 0 : index
      %c0_45 = arith.constant 0 : index
      %87 = vector.load %arg12[%c0_44, %c0_45] : memref<128x128xf32, #tpu.memory_space<vmem>>, vector<128x128xf32>
      tpu.vector_store %arg12[%c0_44, %c0_45], %86 {strides = array<i32>} : memref<128x128xf32, #tpu.memory_space<vmem>>, vector<128x128xf32>,
    } else {
    }
    %c0 = arith.constant 0 : index
    %c0_1 = arith.constant 0 : index
    %3 = vector.load %arg11[%c0, %c0_1] : memref<128x128xbf16, #tpu.memory_space<vmem>>, vector<128x128xbf16>
    %c0_2 = arith.constant 0 : index
    %c0_3 = arith.constant 0 : index
    %4 = vector.load %arg5[%c0_2, %c0_3] : memref<128x256xbf16, #tpu.memory_space<vmem>>, vector<128x256xbf16>
    %cst = arith.constant dense<0.000000e+00> : vector<128x256xf32>
    %5 = tpu.matmul %3, %4, %cst {dimension_numbers = #tpu.dot_dimension_numbers<[1], [0], [0], [1], [0, 0, 1, 1], [], []>} : vector<128x128xbf16>, vector<128x256xbf16>, vector<128x256xf32> -> vector<128x256xf32>
    %c0_4 = arith.constant 0 : index
    %c0_5 = arith.constant 0 : index
    %6 = vector.load %arg6[%c0_4, %c0_5] : memref<1x256xf32, #tpu.memory_space<vmem>>, vector<1x256xf32>
    %7 = vector.broadcast %6 : vector<1x256xf32> to vector<128x256xf32>
    %8 = arith.addf %5, %7 : vector<128x256xf32>
    %cst_6 = arith.constant 5.000000e-01 : f32
    %9 = vector.broadcast %cst_6 : f32 to vector<128x256xf32>
    %10 = arith.mulf %9, %8 : vector<128x256xf32>
    %cst_7 = arith.constant 0.707106769 : f32
    %11 = vector.broadcast %cst_7 : f32 to vector<128x256xf32>
    %12 = arith.mulf %8, %11 : vector<128x256xf32>
    %13 = math.absf %12 : vector<128x256xf32>
    %cst_8 = arith.constant 0.327591091 : f32
    %14 = vector.broadcast %cst_8 : f32 to vector<128x256xf32>
    %15 = arith.mulf %14, %13 : vector<128x256xf32>
    %cst_9 = arith.constant 1.000000e+00 : f32
    %16 = vector.broadcast %cst_9 : f32 to vector<128x256xf32>
    %17 = arith.addf %16, %15 : vector<128x256xf32>
    %cst_10 = arith.constant 1.000000e+00 : f32
    %18 = vector.broadcast %cst_10 : f32 to vector<128x256xf32>
    %19 = arith.divf %18, %17 : vector<128x256xf32>
    %cst_11 = arith.constant 1.06140542 : f32
    %20 = vector.broadcast %cst_11 : f32 to vector<128x256xf32>
    %21 = arith.mulf %19, %20 : vector<128x256xf32>
    %cst_12 = arith.constant -1.45315206 : f32
    %22 = vector.broadcast %cst_12 : f32 to vector<128x256xf32>
    %23 = arith.addf %22, %21 : vector<128x256xf32>
    %24 = arith.mulf %19, %23 : vector<128x256xf32>
    %cst_13 = arith.constant 1.42141378 : f32
    %25 = vector.broadcast %cst_13 : f32 to vector<128x256xf32>
    %26 = arith.addf %25, %24 : vector<128x256xf32>
    %27 = arith.mulf %19, %26 : vector<128x256xf32>
    %cst_14 = arith.constant -0.284496725 : f32
    %28 = vector.broadcast %cst_14 : f32 to vector<128x256xf32>
    %29 = arith.addf %28, %27 : vector<128x256xf32>
    %30 = arith.mulf %19, %29 : vector<128x256xf32>
    %cst_15 = arith.constant 0.254829586 : f32
    %31 = vector.broadcast %cst_15 : f32 to vector<128x256xf32>
    %32 = arith.addf %31, %30 : vector<128x256xf32>
    %33 = arith.mulf %19, %32 : vector<128x256xf32>
    %cst_16 = arith.constant 0.000000e+00 : f32
    %34 = vector.broadcast %cst_16 : f32 to vector<128x256xf32>
    %35 = arith.subf %34, %13 : vector<128x256xf32>
    %36 = arith.mulf %35, %13 : vector<128x256xf32>
    %37 = math.exp %36 : vector<128x256xf32>
    %38 = arith.mulf %33, %37 : vector<128x256xf32>
    %cst_17 = arith.constant 1.000000e+00 : f32
    %39 = vector.broadcast %cst_17 : f32 to vector<128x256xf32>
    %40 = arith.subf %39, %38 : vector<128x256xf32>
    %cst_18 = arith.constant 0.000000e+00 : f32
    %41 = vector.broadcast %cst_18 : f32 to vector<128x256xf32>
    %42 = arith.cmpf oge, %12, %41 : vector<128x256xf32>
    %cst_19 = arith.constant 0.000000e+00 : f32
    %43 = vector.broadcast %cst_19 : f32 to vector<128x256xf32>
    %44 = arith.subf %43, %40 : vector<128x256xf32>
    %45 = arith.select %42, %40, %44 : vector<128x256xi1>, vector<128x256xf32>
    %cst_20 = arith.constant 1.000000e+00 : f32
    %46 = vector.broadcast %cst_20 : f32 to vector<128x256xf32>
    %47 = arith.addf %46, %45 : vector<128x256xf32>
    %48 = arith.mulf %10, %47 : vector<128x256xf32>
    %49 = arith.truncf %48 : vector<128x256xf32> to vector<128x256xbf16>
    %c0_21 = arith.constant 0 : index
    %c0_22 = arith.constant 0 : index
    %50 = vector.load %arg12[%c0_21, %c0_22] : memref<128x128xf32, #tpu.memory_space<vmem>>, vector<128x128xf32>
    %c0_23 = arith.constant 0 : index
    %c0_24 = arith.constant 0 : index
    %51 = vector.load %arg7[%c0_23, %c0_24] : memref<256x128xbf16, #tpu.memory_space<vmem>>, vector<256x128xbf16>
    %cst_25 = arith.constant dense<0.000000e+00> : vector<128x128xf32>
    %52 = tpu.matmul %49, %51, %cst_25 {dimension_numbers = #tpu.dot_dimension_numbers<[1], [0], [0], [1], [0, 0, 1, 1], [], []>} : vector<128x256xbf16>, vector<256x128xbf16>, vector<128x128xf32> -> vector<128x128xf32>
    %53 = arith.addf %50, %52 : vector<128x128xf32>
    %c0_26 = arith.constant 0 : index
    %c0_27 = arith.constant 0 : index
    %54 = vector.load %arg12[%c0_26, %c0_27] : memref<128x128xf32, #tpu.memory_space<vmem>>, vector<128x128xf32>
    tpu.vector_store %arg12[%c0_26, %c0_27], %53 {strides = array<i32>} : memref<128x128xf32, #tpu.memory_space<vmem>>, vector<128x128xf32>,
    %c1_i32 = arith.constant 1 : i32
    %55 = arith.cmpi eq, %arg1, %c1_i32 : i32
    %56 = arith.extui %55 : i1 to i32
    %c0_i32_28 = arith.constant 0 : i32
    %57 = arith.cmpi ne, %56, %c0_i32_28 : i32
    scf.if %57 {
      %c0_29 = arith.constant 0 : index
      %c0_30 = arith.constant 0 : index
      %c0_31 = arith.constant 0 : index
      %58 = vector.load %arg2[%c0_29, %c0_30, %c0_31] : memref<1x128x128xf32, #tpu.memory_space<vmem>>, vector<1x128x128xf32>
      %59 = vector.shape_cast %58 : vector<1x128x128xf32> to vector<128x128xf32>
      %c0_32 = arith.constant 0 : index
      %c0_33 = arith.constant 0 : index
      %60 = vector.load %arg9[%c0_32, %c0_33] : memref<1x128xf32, #tpu.memory_space<vmem>>, vector<1x128xf32>
      %c0_34 = arith.constant 0 : index
      %c0_35 = arith.constant 0 : index
      %61 = vector.load %arg12[%c0_34, %c0_35] : memref<128x128xf32, #tpu.memory_space<vmem>>, vector<128x128xf32>
      %c0_36 = arith.constant 0 : index
      %c0_37 = arith.constant 0 : index
      %62 = vector.load %arg8[%c0_36, %c0_37] : memref<1x128xf32, #tpu.memory_space<vmem>>, vector<1x128xf32>
      %63 = vector.broadcast %62 : vector<1x128xf32> to vector<128x128xf32>
      %64 = arith.addf %61, %63 : vector<128x128xf32>
      %65 = vector.broadcast %60 : vector<1x128xf32> to vector<128x128xf32>
      %66 = arith.mulf %65, %64 : vector<128x128xf32>
      %67 = arith.addf %59, %66 : vector<128x128xf32>
      %c0_38 = arith.constant 0 : index
      %c0_39 = arith.constant 0 : index
      %c0_40 = arith.constant 0 : index
      %68 = vector.load %arg10[%c0_38, %c0_39, %c0_40] : memref<1x128x128xf32, #tpu.memory_space<vmem>>, vector<1x128x128xf32>
      %69 = vector.shape_cast %68 : vector<1x128x128xf32> to vector<128x128xf32>
      %70 = vector.shape_cast %67 : vector<128x128xf32> to vector<1x128x128xf32>
      tpu.vector_store %arg10[%c0_38, %c0_39, %c0_40], %70 {strides = array<i32>} : memref<1x128x128xf32, #tpu.memory_space<vmem>>, vector<1x128x128xf32>,
    } else {
    }
    return
  }
  func.func @transform_0(%arg0: i32, %arg1: i32) -> (i32, i32, i32) {
    %c0_i32 = arith.constant 0 : i32
    %c0_i32_0 = arith.constant 0 : i32
    %c0_i32_1 = arith.constant 0 : i32
    return %arg0, %c0_i32, %c0_i32_0 : i32, i32, i32
  }
  func.func @transform_1(%arg0: i32, %arg1: i32) -> (i32, i32) {
    %c0_i32 = arith.constant 0 : i32
    %c0_i32_0 = arith.constant 0 : i32
    %c0_i32_1 = arith.constant 0 : i32
    return %c0_i32, %c0_i32_0 : i32, i32
  }
  func.func @transform_2(%arg0: i32, %arg1: i32) -> (i32, i32) {
    %c0_i32 = arith.constant 0 : i32
    %c0_i32_0 = arith.constant 0 : i32
    %c0_i32_1 = arith.constant 0 : i32
    return %c0_i32, %c0_i32_0 : i32, i32
  }
  func.func @transform_3(%arg0: i32, %arg1: i32) -> (i32, i32) {
    %c0_i32 = arith.constant 0 : i32
    %c0_i32_0 = arith.constant 0 : i32
    return %c0_i32, %arg1 : i32, i32
  }
  func.func @transform_4(%arg0: i32, %arg1: i32) -> (i32, i32) {
    %c0_i32 = arith.constant 0 : i32
    %c0_i32_0 = arith.constant 0 : i32
    return %c0_i32, %arg1 : i32, i32
  }
  func.func @transform_5(%arg0: i32, %arg1: i32) -> (i32, i32) {
    %c0_i32 = arith.constant 0 : i32
    %c0_i32_0 = arith.constant 0 : i32
    return %arg1, %c0_i32 : i32, i32
  }
  func.func @transform_6(%arg0: i32, %arg1: i32) -> (i32, i32) {
    %c0_i32 = arith.constant 0 : i32
    %c0_i32_0 = arith.constant 0 : i32
    %c0_i32_1 = arith.constant 0 : i32
    return %c0_i32, %c0_i32_0 : i32, i32
  }
  func.func @transform_7(%arg0: i32, %arg1: i32) -> (i32, i32) {
    %c0_i32 = arith.constant 0 : i32
    %c0_i32_0 = arith.constant 0 : i32
    %c0_i32_1 = arith.constant 0 : i32
    return %c0_i32, %c0_i32_0 : i32, i32
  }
  func.func @transform_8(%arg0: i32, %arg1: i32) -> (i32, i32, i32) {
    %c0_i32 = arith.constant 0 : i32
    %c0_i32_0 = arith.constant 0 : i32
    %c0_i32_1 = arith.constant 0 : i32
    return %arg0, %c0_i32, %c0_i32_0 : i32, i32, i32
  }
}

</mosaic_0001>

<llo_original>
// kernel: tpu_custom_call.1
$region0: #{tpu_custom_call.1}
  #allocation0 [shape = 'u32[]', space=smem, size = 0x4, offset = 0x4, fixed_abs, tag = 'smem constant byte address 0x4 - core index']
  #allocation1 [shape = 'u32[144,128]{1,0:T(1,128)}', space=vmem, size = 0x12000, scoped, tag = 'internal scratch']
  %s0 = inlined_call_operand.hbm [shape: f32[8,128], index: 0, kind: input, shape index: {}]
  %s1 = inlined_call_operand.hbm [shape: f32[16,128], index: 1, kind: output, shape index: {}]
  %s2 = sld [smem:[#allocation0]]
  $region41: #{tpu_custom_call.1} parent=0
    _
  %s4 = ssub.s32 1, %s2
  %s5 = scalar_select 0, %s4, %s2
  $region1: #{tpu_custom_call.1} parent=0
    #allocation2 [shape = 'u8[4096]{0}', space=vmem, size = 0x1000, scoped, tag = 'input window, operand 0, single buffered']
    #allocation3 [shape = 's32[2]{0}', space=sflag, size = 0x8, scoped, tag = 'scoped memory for tpu_custom_call.1']
    #allocation4 [shape = 's32[2]{0}', space=sflag, size = 0x8, scoped, tag = 'scoped memory for tpu_custom_call.1']
    #allocation5 [shape = 'u8[8192]{0}', space=vmem, size = 0x2000, scoped, tag = 'output window, operand 0']
    %6 = vsyncpa [#allocation3], 0
    %7 = vsyncpa [#allocation4], 0
    %s8 = scalar_lea.sflag [#allocation4], 1
    %9 = vsyncpa %s8, 0
    loop: start=0, step=1, limit=4
    $region2: #{tpu_custom_call.1} parent=1 // loop_pre_header
      _
    $region3: #{tpu_custom_call.1} parent=1 // loop_header
      %s11 = sphi 0, %s15
      %p12 = scmp.ge.s32.totalorder %s11, 4
      %s19 = sphi 0, %s19
      %s21 = sphi 0, %s19
      %s22 = sphi 0, %s21
      %s36 = sphi 0, %s22
      %s42 = sphi 0, %s44
      %s45 = sphi 0, %s42
      %s46 = sphi 0, %s45
      %s62 = sphi 0, %s46
    $region4: #{tpu_custom_call.1} parent=1 // loop_header_branch
      %14 = sbr.rel (%p12) target = $region8
    $region5: #{tpu_custom_call.1} parent=1 // loop_body
      %s16 = ssub.s32 %s11, 1
      %s17 = ssub.s32 %s11, 2
      %s18 = sadd.s32 %s11, 1
      %s20 = sadd.s32 %s19, 1
      %p23 = scmp.eq.s32.totalorder %s11, 1
      %p24 = scmp.ne.s32.totalorder %s19, %s21
      %p25 = scmp.eq.s32.totalorder %s11, 0
      %p26 = por %p24, %p25
      %p27 = scmp.ne.s32.totalorder %s19, %s21
      %p28 = scmp.eq.s32.totalorder %s16, 1
      %p29 = por %p27, %p28
      %p30 = scmp.ne.s32.totalorder %s21, %s22
      %p31 = scmp.eq.s32.totalorder %s16, 0
      %p32 = por %p30, %p31
      %p33 = scmp.ne.s32.totalorder %s21, %s22
      %p34 = scmp.eq.s32.totalorder %s17, 1
      %p35 = por %p33, %p34
      %p37 = scmp.ne.s32.totalorder %s22, %s36
      %p38 = scmp.eq.s32.totalorder %s17, 0
      %p39 = por %p37, %p38
      %s40 = ssub.s32 %s11, %s18
      %p41 = scmp.eq.s32.totalorder %s40, 0
      %s43 = sadd.s32 %s42, 1
      %s44 = scalar_select %p41, %s42, %s43
      %p47 = pneg %p41
      %p48 = scmp.eq.s32.totalorder %s11, 1
      %p49 = por %p47, %p48
      %p50 = scmp.ne.s32.totalorder %s42, %s45
      %p51 = scmp.eq.s32.totalorder %s11, 0
      %p52 = por %p50, %p51
      %p53 = scmp.ne.s32.totalorder %s42, %s45
      %p54 = scmp.eq.s32.totalorder %s16, 1
      %p55 = por %p53, %p54
      %p56 = scmp.ne.s32.totalorder %s45, %s46
      %p57 = scmp.eq.s32.totalorder %s16, 0
      %p58 = por %p56, %p57
      %p59 = scmp.ne.s32.totalorder %s45, %s46
      %p60 = scmp.eq.s32.totalorder %s17, 1
      %p61 = por %p59, %p60
      %p63 = scmp.ne.s32.totalorder %s46, %s62
      %p64 = scmp.eq.s32.totalorder %s17, 0
      %p65 = por %p63, %p64
      %p66 = scmp.le.s32.totalorder 1, %s11
      %p67 = scmp.lt.s32.totalorder %s11, 3
      %p68 = pnand %p66, %p67
      %p69 = pneg %p68
      // Predicated region
      $region9: #{tpu_custom_call.1} parent=5 // pred_check
        _
      $region10: #{tpu_custom_call.1} parent=5 // pred_check_branch
        %71 = sbr.rel (%p68) target = $region12
      $region11: #{tpu_custom_call.1} parent=5 // pred_region
        %s72 = ssub.s32 %s11, 1
        // Predicated region
        $region13: #{tpu_custom_call.1} parent=11 // pred_check
          %p73 = pneg %p32
        $region14: #{tpu_custom_call.1} parent=11 // pred_check_branch
          %75 = sbr.rel (%p73) target = $region16
        $region15: #{tpu_custom_call.1} parent=11 // pred_region
          %s77 = ssub.s32 128, 128
          %78 = vsyncadd [#allocation3], %s77
          %s80 = sshll.u32 [#allocation2], 4
          %s81 = int_to_ptr.vmem [resolvable:$true] %s80
          %83 = dma.hbm_to_vmem [thread:$0]  %s0, 128, %s81, [#allocation3]
        $region16: #{tpu_custom_call.1} parent=11 // pred_fallthru
          _
      $region12: #{tpu_custom_call.1} parent=5 // pred_fallthru
        _
      %p84 = scmp.lt.s32.totalorder %s11, 2
      // Predicated region
      $region17: #{tpu_custom_call.1} parent=5 // pred_check
        %p85 = pneg %p84
      $region18: #{tpu_custom_call.1} parent=5 // pred_check_branch
        %87 = sbr.rel (%p85) target = $region20
      $region19: #{tpu_custom_call.1} parent=5 // pred_region
        _
      $region20: #{tpu_custom_call.1} parent=5 // pred_fallthru
        _
      %p88 = scmp.le.s32.totalorder 1, %s11
      %p89 = scmp.lt.s32.totalorder %s11, 3
      %p90 = pnand %p88, %p89
      %p91 = pneg %p90
      // Predicated region
      $region21: #{tpu_custom_call.1} parent=5 // pred_check
        _
      $region22: #{tpu_custom_call.1} parent=5 // pred_check_branch
        %93 = sbr.rel (%p90) target = $region24
      $region23: #{tpu_custom_call.1} parent=5 // pred_region
        %s94 = ssub.s32 %s11, 1
        // Predicated region
        $region25: #{tpu_custom_call.1} parent=23 // pred_check
          %p95 = pneg %p32
        $region26: #{tpu_custom_call.1} parent=23 // pred_check_branch
          %97 = sbr.rel (%p95) target = $region28
        $region27: #{tpu_custom_call.1} parent=23 // pred_region
          %98 = dma.done [#allocation3], 128
        $region28: #{tpu_custom_call.1} parent=23 // pred_fallthru
          _
        %p99 = pneg %p32
        %p100 = pneg %p29
        %p101 = pneg %p58
        %p102 = pneg %p55
        %s103 = sand.u32 %s45, 1
        %s104 = scalar_lea.sflag [#allocation4], %s103
        %s105 = sand.u32 %s45, 1
        %s106 = smul.addr %s105, 8
        %s107 = scalar_lea.vmem [#allocation5], %s106
        %v108 = vld [vmem:[#allocation2] sm:$0xff]
        %v109 = vmul.f32 %v108, 2.0
        %110 = vst [vmem:[%s107] sm:$0xff] %v109
        %s111 = sand.u32 %s45, 1
        %s112 = scalar_lea.sflag [#allocation4], %s111
        %s113 = sand.u32 %s45, 1
        %s114 = smul.addr %s113, 8
        %s115 = scalar_lea.vmem [#allocation5], %s114
        // Predicated region
        $region29: #{tpu_custom_call.1} parent=23 // pred_check
          %p116 = pneg %p55
        $region30: #{tpu_custom_call.1} parent=23 // pred_check_branch
          %118 = sbr.rel (%p116) target = $region32
        $region31: #{tpu_custom_call.1} parent=23 // pred_region
          %s120 = ssub.s32 128, 128
          %121 = vsyncadd %s112, %s120
          %s122 = smul.addr %s16, 128
          %s123 = scalar_lea.hbm %s1, %s122
          %s125 = sshll.u32 %s115, 4
          %s126 = int_to_ptr.vmem [resolvable:$true] %s125
          %128 = dma.vmem_to_hbm [thread:$0]  %s126, 128, %s123, %s112
        $region32: #{tpu_custom_call.1} parent=23 // pred_fallthru
          _
      $region24: #{tpu_custom_call.1} parent=5 // pred_fallthru
        _
      %p129 = scmp.le.s32.totalorder 2, %s11
      // Predicated region
      $region33: #{tpu_custom_call.1} parent=5 // pred_check
        %p130 = pneg %p129
      $region34: #{tpu_custom_call.1} parent=5 // pred_check_branch
        %132 = sbr.rel (%p130) target = $region36
      $region35: #{tpu_custom_call.1} parent=5 // pred_region
        %s133 = ssub.s32 %s11, 2
        // Predicated region
        $region37: #{tpu_custom_call.1} parent=35 // pred_check
          %p134 = pneg %p61
        $region38: #{tpu_custom_call.1} parent=35 // pred_check_branch
          %136 = sbr.rel (%p134) target = $region40
        $region39: #{tpu_custom_call.1} parent=35 // pred_region
          %s137 = sand.u32 %s46, 1
          %s138 = scalar_lea.sflag [#allocation4], %s137
          %s139 = sand.u32 %s46, 1
          %s140 = smul.addr %s139, 8
          %s141 = scalar_lea.vmem [#allocation5], %s140
          %142 = dma.done %s138, 128
        $region40: #{tpu_custom_call.1} parent=35 // pred_fallthru
          _
      $region36: #{tpu_custom_call.1} parent=5 // pred_fallthru
        _
    $region6: #{tpu_custom_call.1} parent=1 // loop_footer
      %s15 = sadd.s32 1, %s11
    $region7: #{tpu_custom_call.1} parent=1 // loop_footer_branch
      %10 = sbr.rel target = $region3
    $region8: #{tpu_custom_call.1} parent=1 // loop_exit
      _
    %143 = vsyncpa [#allocation3], 1
    %s144 = scalar_lea.sflag [#allocation3], 1
    %145 = vsyncpa %s144, 1
    %146 = vsyncpa [#allocation4], 1
    %s147 = scalar_lea.sflag [#allocation4], 1
    %148 = vsyncpa %s147, 1

// kernel: dinov2_reg_forward.5
$region0: #{dinov2_reg_forward.5}
  #allocation0 [shape = 'u32[]', space=smem, size = 0x4, offset = 0x4, fixed_abs, tag = 'smem constant byte address 0x4 - core index']
  #allocation1 [shape = 'u32[144,128]{1,0:T(1,128)}', space=vmem, size = 0x12000, scoped, tag = 'internal scratch']
  %s0 = inlined_call_operand.vmem [shape: f32[2,16,48], index: 0, kind: input, shape index: {}]
  %s1 = inlined_call_operand.vmem [shape: bf16[48,128], index: 1, kind: input, shape index: {}]
  %s2 = inlined_call_operand.vmem [shape: f32[1,128], index: 2, kind: input, shape index: {}]
  %s3 = inlined_call_operand.vmem [shape: f32[2,16,128], index: 3, kind: output, shape index: {}]
  %s4 = sld [smem:[#allocation0]]
  $region45: #{dinov2_reg_forward.5} parent=0
    _
  %s6 = ssub.s32 1, %s4
  %s7 = scalar_select 0, %s6, %s4
  loop: start=0, step=1, limit=4
  $region2: #{dinov2_reg_forward.5} parent=0 // loop_pre_header
    _
  $region3: #{dinov2_reg_forward.5} parent=0 // loop_header
    %s9 = sphi 0, %s13
    %p10 = scmp.ge.s32.totalorder %s9, 4
    %s19 = sphi 0, %s21
    %s22 = sphi 0, %s19
    %s23 = sphi 0, %s22
    %s39 = sphi 0, %s23
    %s43 = sphi 0, %s43
    %s45 = sphi 0, %s43
    %s46 = sphi 0, %s45
    %s60 = sphi 0, %s46
    %s64 = sphi 0, %s64
    %s66 = sphi 0, %s64
    %s67 = sphi 0, %s66
    %s81 = sphi 0, %s67
    %s87 = sphi 0, %s89
    %s90 = sphi 0, %s87
    %s91 = sphi 0, %s90
    %s107 = sphi 0, %s91
  $region4: #{dinov2_reg_forward.5} parent=0 // loop_header_branch
    %12 = sbr.rel (%p10) target = $region8
  $region5: #{dinov2_reg_forward.5} parent=0 // loop_body
    %s14 = ssub.s32 %s9, 1
    %s15 = ssub.s32 %s9, 2
    %s16 = sadd.s32 %s9, 1
    %s17 = ssub.s32 %s9, %s16
    %p18 = scmp.eq.s32.totalorder %s17, 0
    %s20 = sadd.s32 %s19, 1
    %s21 = scalar_select %p18, %s19, %s20
    %p24 = pneg %p18
    %p25 = scmp.eq.s32.totalorder %s9, 1
    %p26 = por %p24, %p25
    %p27 = scmp.ne.s32.totalorder %s19, %s22
    %p28 = scmp.eq.s32.totalorder %s9, 0
    %p29 = por %p27, %p28
    %p30 = scmp.ne.s32.totalorder %s19, %s22
    %p31 = scmp.eq.s32.totalorder %s14, 1
    %p32 = por %p30, %p31
    %p33 = scmp.ne.s32.totalorder %s22, %s23
    %p34 = scmp.eq.s32.totalorder %s14, 0
    %p35 = por %p33, %p34
    %p36 = scmp.ne.s32.totalorder %s22, %s23
    %p37 = scmp.eq.s32.totalorder %s15, 1
    %p38 = por %p36, %p37
    %p40 = scmp.ne.s32.totalorder %s23, %s39
    %p41 = scmp.eq.s32.totalorder %s15, 0
    %p42 = por %p40, %p41
    %s44 = sadd.s32 %s43, 1
    %p47 = scmp.eq.s32.totalorder %s9, 1
    %p48 = scmp.ne.s32.totalorder %s43, %s45
    %p49 = scmp.eq.s32.totalorder %s9, 0
    %p50 = por %p48, %p49
    %p51 = scmp.ne.s32.totalorder %s43, %s45
    %p52 = scmp.eq.s32.totalorder %s14, 1
    %p53 = por %p51, %p52
    %p54 = scmp.ne.s32.totalorder %s45, %s46
    %p55 = scmp.eq.s32.totalorder %s14, 0
    %p56 = por %p54, %p55
    %p57 = scmp.ne.s32.totalorder %s45, %s46
    %p58 = scmp.eq.s32.totalorder %s15, 1
    %p59 = por %p57, %p58
    %p61 = scmp.ne.s32.totalorder %s46, %s60
    %p62 = scmp.eq.s32.totalorder %s15, 0
    %p63 = por %p61, %p62
    %s65 = sadd.s32 %s64, 1
    %p68 = scmp.eq.s32.totalorder %s9, 1
    %p69 = scmp.ne.s32.totalorder %s64, %s66
    %p70 = scmp.eq.s32.totalorder %s9, 0
    %p71 = por %p69, %p70
    %p72 = scmp.ne.s32.totalorder %s64, %s66
    %p73 = scmp.eq.s32.totalorder %s14, 1
    %p74 = por %p72, %p73
    %p75 = scmp.ne.s32.totalorder %s66, %s67
    %p76 = scmp.eq.s32.totalorder %s14, 0
    %p77 = por %p75, %p76
    %p78 = scmp.ne.s32.totalorder %s66, %s67
    %p79 = scmp.eq.s32.totalorder %s15, 1
    %p80 = por %p78, %p79
    %p82 = scmp.ne.s32.totalorder %s67, %s81
    %p83 = scmp.eq.s32.totalorder %s15, 0
    %p84 = por %p82, %p83
    %s85 = ssub.s32 %s9, %s16
    %p86 = scmp.eq.s32.totalorder %s85, 0
    %s88 = sadd.s32 %s87, 1
    %s89 = scalar_select %p86, %s87, %s88
    %p92 = pneg %p86
    %p93 = scmp.eq.s32.totalorder %s9, 1
    %p94 = por %p92, %p93
    %p95 = scmp.ne.s32.totalorder %s87, %s90
    %p96 = scmp.eq.s32.totalorder %s9, 0
    %p97 = por %p95, %p96
    %p98 = scmp.ne.s32.totalorder %s87, %s90
    %p99 = scmp.eq.s32.totalorder %s14, 1
    %p100 = por %p98, %p99
    %p101 = scmp.ne.s32.totalorder %s90, %s91
    %p102 = scmp.eq.s32.totalorder %s14, 0
    %p103 = por %p101, %p102
    %p104 = scmp.ne.s32.totalorder %s90, %s91
    %p105 = scmp.eq.s32.totalorder %s15, 1
    %p106 = por %p104, %p105
    %p108 = scmp.ne.s32.totalorder %s91, %s107
    %p109 = scmp.eq.s32.totalorder %s15, 0
    %p110 = por %p108, %p109
    %p111 = scmp.le.s32.totalorder 1, %s9
    %p112 = scmp.lt.s32.totalorder %s9, 3
    %p113 = pnand %p111, %p112
    %p114 = pneg %p113
    // Predicated region
    $region9: #{dinov2_reg_forward.5} parent=5 // pred_check
      _
    $region10: #{dinov2_reg_forward.5} parent=5 // pred_check_branch
      %116 = sbr.rel (%p113) target = $region12
    $region11: #{dinov2_reg_forward.5} parent=5 // pred_region
      %s117 = ssub.s32 %s9, 1
      // Predicated region
      $region13: #{dinov2_reg_forward.5} parent=11 // pred_check
        %p118 = pneg %p56
      $region14: #{dinov2_reg_forward.5} parent=11 // pred_check_branch
        %120 = sbr.rel (%p118) target = $region16
      $region15: #{dinov2_reg_forward.5} parent=11 // pred_region
        _
      $region16: #{dinov2_reg_forward.5} parent=11 // pred_fallthru
        _
      // Predicated region
      $region17: #{dinov2_reg_forward.5} parent=11 // pred_check
        %p121 = pneg %p77
      $region18: #{dinov2_reg_forward.5} parent=11 // pred_check_branch
        %123 = sbr.rel (%p121) target = $region20
      $region19: #{dinov2_reg_forward.5} parent=11 // pred_region
        _
      $region20: #{dinov2_reg_forward.5} parent=11 // pred_fallthru
        _
    $region12: #{dinov2_reg_forward.5} parent=5 // pred_fallthru
      _
    %p124 = scmp.lt.s32.totalorder %s9, 2
    // Predicated region
    $region21: #{dinov2_reg_forward.5} parent=5 // pred_check
      %p125 = pneg %p124
    $region22: #{dinov2_reg_forward.5} parent=5 // pred_check_branch
      %127 = sbr.rel (%p125) target = $region24
    $region23: #{dinov2_reg_forward.5} parent=5 // pred_region
      // Predicated region
      $region25: #{dinov2_reg_forward.5} parent=23 // pred_check
        %p128 = pneg %p29
      $region26: #{dinov2_reg_forward.5} parent=23 // pred_check_branch
        %130 = sbr.rel (%p128) target = $region28
      $region27: #{dinov2_reg_forward.5} parent=23 // pred_region
        %p131 = scmp.lt.s32.totalorder %s9, 1
        %s132 = scalar_select %p131, %s9, 1
        %s133 = smul.addr %s132, 2
        %s134 = smul.addr %s133, 8
        %s135 = scalar_lea.vmem %s0, %s134
      $region28: #{dinov2_reg_forward.5} parent=23 // pred_fallthru
        _
    $region24: #{dinov2_reg_forward.5} parent=5 // pred_fallthru
      _
    %p136 = scmp.le.s32.totalorder 1, %s9
    %p137 = scmp.lt.s32.totalorder %s9, 3
    %p138 = pnand %p136, %p137
    %p139 = pneg %p138
    // Predicated region
    $region29: #{dinov2_reg_forward.5} parent=5 // pred_check
      _
    $region30: #{dinov2_reg_forward.5} parent=5 // pred_check_branch
      %141 = sbr.rel (%p138) target = $region32
    $region31: #{dinov2_reg_forward.5} parent=5 // pred_region
      %s142 = ssub.s32 %s9, 1
      %p143 = scmp.lt.s32.totalorder %s14, 1
      %s144 = scalar_select %p143, %s14, 1
      %s145 = smul.addr %s144, 2
      %s146 = smul.addr %s145, 8
      %s147 = scalar_lea.vmem %s0, %s146
      %p148 = pneg %p35
      %p149 = pneg %p32
      %p150 = pneg %p56
      %p151 = pneg %p53
      %p152 = pneg %p77
      %p153 = pneg %p74
      %p154 = pneg %p103
      %p155 = pneg %p100
      %p156 = scmp.lt.s32.totalorder %s14, 1
      %s157 = scalar_select %p156, %s14, 1
      %s158 = smul.addr %s157, 2
      %s159 = smul.addr %s158, 8
      %s160 = scalar_lea.vmem %s3, %s159
      %p161 = scmp.lt.s32.totalorder %s14, 1
      %s162 = scalar_select %p161, %s14, 1
      %s163 = smul.addr %s162, 2
      %s164 = smul.addr %s163, 8
      %s165 = scalar_lea.vmem %s0, %s164
      %p166 = scmp.lt.s32.totalorder %s14, 1
      %s167 = scalar_select %p166, %s14, 1
      %s168 = smul.addr %s167, 2
      %s169 = smul.addr %s168, 8
      %s170 = scalar_lea.vmem %s3, %s169
      %v172 = vld [vmem:[%s165] sm:$0xff]
      %v173 = vld [vmem:[%s165 + $0x8] sm:$0xff]
      %v174 = vpack.c.bf16 %v173, %v172
      %v175 = vld [vmem:[%s1] sm:$0xf]
      %v176 = vld [vmem:[%s1 + $0x4] sm:$0xf]
      %v177 = vld [vmem:[%s1 + $0x8] sm:$0xf]
      %v178 = vld [vmem:[%s1 + $0xc] sm:$0xf]
      %v179 = vld [vmem:[%s1 + $0x10] sm:$0xf]
      %v180 = vld [vmem:[%s1 + $0x14] sm:$0xf]
      %v181 = vld [vmem:[%s2] sm:$0x1]
      %v183 = vlaneseq
      %v184 = vshrl.u32 %v183, 7
      %v185 = vsub.s32 0, %v184
      %v186 = vrot.slane %v181, %v185
      %v194 = vunpack.c.l.b16 %v175
      %v195 = vunpack.c.l.b16 %v176
      %v196 = vunpack.c.l.b16 %v177
      %v197 = vunpack.c.l.b16 %v178
      %v198 = vunpack.c.l.b16 %v179
      %v199 = vunpack.c.l.b16 %v180
      %v200 = vpack.c.b16 %v195, %v194
      %v201 = vpack.c.b16 %v197, %v196
      %v202 = vpack.c.b16 %v199, %v198
      %vm206 = vcmask 392192
      %v208 = vsel %vm206, %v174, 0
      %210 = vmatprep.subr.bf16.mxu0 0
      %211 = vmatpush1.bf16.msra.mxu0 %v200
      %212 = vmatprep.subr.bf16.mxu0 0
      %213 = vmatpush1.bf16.msra.mxu0 %v201
      %214 = vmatprep.subr.bf16.mxu0 0
      %215 = vmatpush1.bf16.msra.mxu0 %v202
      %216 = vmatprep.subr.bf16.mxu0 0
      %217 = vmatpush1.bf16.msra.mxu0 0
      %218 = vmatprep.subr.bf16.mxu0 0
      %219 = vmatpush1.bf16.msra.mxu0 0
      %220 = vmatprep.subr.bf16.mxu0 0
      %221 = vmatpush1.bf16.msra.mxu0 0
      %222 = vmatprep.subr.bf16.mxu0 0
      %223 = vmatpush1.bf16.msra.mxu0 0
      %224 = vmatprep.subr.bf16.mxu0 0
      %225 = vmatpush1.bf16.msra.mxu0 0
      %226 = vmatprep.subr.bf16.mxu0 0
      %227 = vmatpush1.bf16.msra.mxu0 0
      %228 = vmatprep.subr.bf16.mxu0 0
      %229 = vmatpush1.bf16.msra.mxu0 0
      %230 = vmatprep.subr.bf16.mxu0 0
      %231 = vmatpush1.bf16.msra.mxu0 0
      %232 = vmatprep.subr.bf16.mxu0 0
      %233 = vmatpush1.bf16.msra.mxu0 0
      %234 = vmatprep.subr.bf16.mxu0 0
      %235 = vmatpush1.bf16.msra.mxu0 0
      %236 = vmatprep.subr.bf16.mxu0 0
      %237 = vmatpush1.bf16.msra.mxu0 0
      %238 = vmatprep.subr.bf16.mxu0 0
      %239 = vmatpush1.bf16.msra.mxu0 0
      %240 = vmatprep.subr.bf16.mxu0 0
      %241 = vmatpush1.bf16.msra.mxu0 0
      %242 = vmatprep.mubr.bf16.mxu0 0
      %243 = vmatmul.mubr.bf16.gmra.mrb[0].mxu0 %v208
      %v244 = vpop.f32.mrb[0].mxu0
      %v245 = vadd.f32 %v186, %v244
      %v246 = vpop.f32.mrb[0].mxu0
      %v247 = vpop.f32.mrb[0].mxu0
      %v248 = vadd.f32 %v186, %v247
      %v249 = vpop.f32.mrb[0].mxu0
      %250 = vdwg.mxu0
      %251 = vst [vmem:[%s170] sm:$0xff] %v245
      %252 = vst [vmem:[%s170 + $0x8] sm:$0xff] %v248
      %p253 = scmp.lt.s32.totalorder %s14, 1
      %s254 = scalar_select %p253, %s14, 1
      %s255 = smul.addr %s254, 2
      %s256 = smul.addr %s255, 8
      %s257 = scalar_lea.vmem %s3, %s256
      // Predicated region
      $region33: #{dinov2_reg_forward.5} parent=31 // pred_check
        %p258 = pneg %p100
      $region34: #{dinov2_reg_forward.5} parent=31 // pred_check_branch
        %260 = sbr.rel (%p258) target = $region36
      $region35: #{dinov2_reg_forward.5} parent=31 // pred_region
        _
      $region36: #{dinov2_reg_forward.5} parent=31 // pred_fallthru
        _
    $region32: #{dinov2_reg_forward.5} parent=5 // pred_fallthru
      _
    %p261 = scmp.le.s32.totalorder 2, %s9
    // Predicated region
    $region37: #{dinov2_reg_forward.5} parent=5 // pred_check
      %p262 = pneg %p261
    $region38: #{dinov2_reg_forward.5} parent=5 // pred_check_branch
      %264 = sbr.rel (%p262) target = $region40
    $region39: #{dinov2_reg_forward.5} parent=5 // pred_region
      %s265 = ssub.s32 %s9, 2
      // Predicated region
      $region41: #{dinov2_reg_forward.5} parent=39 // pred_check
        %p266 = pneg %p106
      $region42: #{dinov2_reg_forward.5} parent=39 // pred_check_branch
        %268 = sbr.rel (%p266) target = $region44
      $region43: #{dinov2_reg_forward.5} parent=39 // pred_region
        %p269 = scmp.lt.s32.totalorder %s15, 1
        %s270 = scalar_select %p269, %s15, 1
        %s271 = smul.addr %s270, 2
        %s272 = smul.addr %s271, 8
        %s273 = scalar_lea.vmem %s3, %s272
      $region44: #{dinov2_reg_forward.5} parent=39 // pred_fallthru
        _
    $region40: #{dinov2_reg_forward.5} parent=5 // pred_fallthru
      _
  $region6: #{dinov2_reg_forward.5} parent=0 // loop_footer
    %s13 = sadd.s32 1, %s9
  $region7: #{dinov2_reg_forward.5} parent=0 // loop_footer_branch
    %8 = sbr.rel target = $region3
  $region8: #{dinov2_reg_forward.5} parent=0 // loop_exit
    _

// kernel: dinov2_reg_forward.6
$region0: #{dinov2_reg_forward.6}
  #allocation0 [shape = 'u32[]', space=smem, size = 0x4, offset = 0x4, fixed_abs, tag = 'smem constant byte address 0x4 - core index']
  #allocation1 [shape = 'u32[144,128]{1,0:T(1,128)}', space=vmem, size = 0x12000, scoped, tag = 'internal scratch']
  #allocation2 [shape = 'f32[128,128]{1,0:T(8,128)}', space=vmem, size = 0x10000, scoped, tag = 'scratch operand']
  %s0 = inlined_call_operand.vmem [shape: f32[2,128,128], index: 0, kind: input, shape index: {}, may-alias: {0,12}]
  %s1 = inlined_call_operand.vmem [shape: f32[1,128], index: 1, kind: input, shape index: {}]
  %s2 = inlined_call_operand.vmem [shape: f32[1,128], index: 2, kind: input, shape index: {}]
  %s3 = inlined_call_operand.vmem [shape: bf16[4,128,32], index: 3, kind: input, shape index: {}]
  %s4 = inlined_call_operand.vmem [shape: f32[4,1,32], index: 4, kind: input, shape index: {}]
  %s5 = inlined_call_operand.vmem [shape: bf16[4,128,32], index: 5, kind: input, shape index: {}]
  %s6 = inlined_call_operand.vmem [shape: f32[4,1,32], index: 6, kind: input, shape index: {}]
  %s7 = inlined_call_operand.vmem [shape: bf16[4,128,32], index: 7, kind: input, shape index: {}]
  %s8 = inlined_call_operand.vmem [shape: f32[4,1,32], index: 8, kind: input, shape index: {}]
  %s9 = inlined_call_operand.vmem [shape: bf16[4,32,128], index: 9, kind: input, shape index: {}]
  %s10 = inlined_call_operand.vmem [shape: f32[1,128], index: 10, kind: input, shape index: {}]
  %s11 = inlined_call_operand.vmem [shape: f32[1,128], index: 11, kind: input, shape index: {}]
  %s12 = inlined_call_operand.vmem [shape: f32[2,128,128], index: 12, kind: output, shape index: {}, may-alias: {0,12}]
  %s13 = sld [smem:[#allocation0]]
  $region88: #{dinov2_reg_forward.6} parent=0
    _
  %s15 = ssub.s32 1, %s13
  %s16 = scalar_select 0, %s15, %s13
  loop: start=0, step=1, limit=4
  $region2: #{dinov2_reg_forward.6} parent=0 // loop_pre_header
    _
  $region3: #{dinov2_reg_forward.6} parent=0 // loop_header
    %s18 = sphi 0, %s22
    %p19 = scmp.ge.s32.totalorder %s18, 4
    %s28 = sphi 0, %s30
    %s31 = sphi 0, %s28
    %s32 = sphi 0, %s31
    %s48 = sphi 0, %s32
    %s52 = sphi 0, %s52
    %s54 = sphi 0, %s52
    %s55 = sphi 0, %s54
    %s69 = sphi 0, %s55
    %s73 = sphi 0, %s73
    %s75 = sphi 0, %s73
    %s76 = sphi 0, %s75
    %s90 = sphi 0, %s76
    %s94 = sphi 0, %s94
    %s96 = sphi 0, %s94
    %s97 = sphi 0, %s96
    %s111 = sphi 0, %s97
    %s115 = sphi 0, %s115
    %s117 = sphi 0, %s115
    %s118 = sphi 0, %s117
    %s132 = sphi 0, %s118
    %s136 = sphi 0, %s136
    %s138 = sphi 0, %s136
    %s139 = sphi 0, %s138
    %s153 = sphi 0, %s139
    %s157 = sphi 0, %s157
    %s159 = sphi 0, %s157
    %s160 = sphi 0, %s159
    %s174 = sphi 0, %s160
    %s178 = sphi 0, %s178
    %s180 = sphi 0, %s178
    %s181 = sphi 0, %s180
    %s195 = sphi 0, %s181
    %s199 = sphi 0, %s199
    %s201 = sphi 0, %s199
    %s202 = sphi 0, %s201
    %s216 = sphi 0, %s202
    %s220 = sphi 0, %s220
    %s222 = sphi 0, %s220
    %s223 = sphi 0, %s222
    %s237 = sphi 0, %s223
    %s241 = sphi 0, %s241
    %s243 = sphi 0, %s241
    %s244 = sphi 0, %s243
    %s258 = sphi 0, %s244
    %s262 = sphi 0, %s262
    %s264 = sphi 0, %s262
    %s265 = sphi 0, %s264
    %s279 = sphi 0, %s265
    %s285 = sphi 0, %s287
    %s288 = sphi 0, %s285
    %s289 = sphi 0, %s288
    %s305 = sphi 0, %s289
  $region4: #{dinov2_reg_forward.6} parent=0 // loop_header_branch
    %21 = sbr.rel (%p19) target = $region8
  $region5: #{dinov2_reg_forward.6} parent=0 // loop_body
    %s23 = ssub.s32 %s18, 1
    %s24 = ssub.s32 %s18, 2
    %s25 = sadd.s32 %s18, 1
    %s26 = ssub.s32 %s18, %s25
    %p27 = scmp.eq.s32.totalorder %s26, 0
    %s29 = sadd.s32 %s28, 1
    %s30 = scalar_select %p27, %s28, %s29
    %p33 = pneg %p27
    %p34 = scmp.eq.s32.totalorder %s18, 1
    %p35 = por %p33, %p34
    %p36 = scmp.ne.s32.totalorder %s28, %s31
    %p37 = scmp.eq.s32.totalorder %s18, 0
    %p38 = por %p36, %p37
    %p39 = scmp.ne.s32.totalorder %s28, %s31
    %p40 = scmp.eq.s32.totalorder %s23, 1
    %p41 = por %p39, %p40
    %p42 = scmp.ne.s32.totalorder %s31, %s32
    %p43 = scmp.eq.s32.totalorder %s23, 0
    %p44 = por %p42, %p43
    %p45 = scmp.ne.s32.totalorder %s31, %s32
    %p46 = scmp.eq.s32.totalorder %s24, 1
    %p47 = por %p45, %p46
    %p49 = scmp.ne.s32.totalorder %s32, %s48
    %p50 = scmp.eq.s32.totalorder %s24, 0
    %p51 = por %p49, %p50
    %s53 = sadd.s32 %s52, 1
    %p56 = scmp.eq.s32.totalorder %s18, 1
    %p57 = scmp.ne.s32.totalorder %s52, %s54
    %p58 = scmp.eq.s32.totalorder %s18, 0
    %p59 = por %p57, %p58
    %p60 = scmp.ne.s32.totalorder %s52, %s54
    %p61 = scmp.eq.s32.totalorder %s23, 1
    %p62 = por %p60, %p61
    %p63 = scmp.ne.s32.totalorder %s54, %s55
    %p64 = scmp.eq.s32.totalorder %s23, 0
    %p65 = por %p63, %p64
    %p66 = scmp.ne.s32.totalorder %s54, %s55
    %p67 = scmp.eq.s32.totalorder %s24, 1
    %p68 = por %p66, %p67
    %p70 = scmp.ne.s32.totalorder %s55, %s69
    %p71 = scmp.eq.s32.totalorder %s24, 0
    %p72 = por %p70, %p71
    %s74 = sadd.s32 %s73, 1
    %p77 = scmp.eq.s32.totalorder %s18, 1
    %p78 = scmp.ne.s32.totalorder %s73, %s75
    %p79 = scmp.eq.s32.totalorder %s18, 0
    %p80 = por %p78, %p79
    %p81 = scmp.ne.s32.totalorder %s73, %s75
    %p82 = scmp.eq.s32.totalorder %s23, 1
    %p83 = por %p81, %p82
    %p84 = scmp.ne.s32.totalorder %s75, %s76
    %p85 = scmp.eq.s32.totalorder %s23, 0
    %p86 = por %p84, %p85
    %p87 = scmp.ne.s32.totalorder %s75, %s76
    %p88 = scmp.eq.s32.totalorder %s24, 1
    %p89 = por %p87, %p88
    %p91 = scmp.ne.s32.totalorder %s76, %s90
    %p92 = scmp.eq.s32.totalorder %s24, 0
    %p93 = por %p91, %p92
    %s95 = sadd.s32 %s94, 1
    %p98 = scmp.eq.s32.totalorder %s18, 1
    %p99 = scmp.ne.s32.totalorder %s94, %s96
    %p100 = scmp.eq.s32.totalorder %s18, 0
    %p101 = por %p99, %p100
    %p102 = scmp.ne.s32.totalorder %s94, %s96
    %p103 = scmp.eq.s32.totalorder %s23, 1
    %p104 = por %p102, %p103
    %p105 = scmp.ne.s32.totalorder %s96, %s97
    %p106 = scmp.eq.s32.totalorder %s23, 0
    %p107 = por %p105, %p106
    %p108 = scmp.ne.s32.totalorder %s96, %s97
    %p109 = scmp.eq.s32.totalorder %s24, 1
    %p110 = por %p108, %p109
    %p112 = scmp.ne.s32.totalorder %s97, %s111
    %p113 = scmp.eq.s32.totalorder %s24, 0
    %p114 = por %p112, %p113
    %s116 = sadd.s32 %s115, 1
    %p119 = scmp.eq.s32.totalorder %s18, 1
    %p120 = scmp.ne.s32.totalorder %s115, %s117
    %p121 = scmp.eq.s32.totalorder %s18, 0
    %p122 = por %p120, %p121
    %p123 = scmp.ne.s32.totalorder %s115, %s117
    %p124 = scmp.eq.s32.totalorder %s23, 1
    %p125 = por %p123, %p124
    %p126 = scmp.ne.s32.totalorder %s117, %s118
    %p127 = scmp.eq.s32.totalorder %s23, 0
    %p128 = por %p126, %p127
    %p129 = scmp.ne.s32.totalorder %s117, %s118
    %p130 = scmp.eq.s32.totalorder %s24, 1
    %p131 = por %p129, %p130
    %p133 = scmp.ne.s32.totalorder %s118, %s132
    %p134 = scmp.eq.s32.totalorder %s24, 0
    %p135 = por %p133, %p134
    %s137 = sadd.s32 %s136, 1
    %p140 = scmp.eq.s32.totalorder %s18, 1
    %p141 = scmp.ne.s32.totalorder %s136, %s138
    %p142 = scmp.eq.s32.totalorder %s18, 0
    %p143 = por %p141, %p142
    %p144 = scmp.ne.s32.totalorder %s136, %s138
    %p145 = scmp.eq.s32.totalorder %s23, 1
    %p146 = por %p144, %p145
    %p147 = scmp.ne.s32.totalorder %s138, %s139
    %p148 = scmp.eq.s32.totalorder %s23, 0
    %p149 = por %p147, %p148
    %p150 = scmp.ne.s32.totalorder %s138, %s139
    %p151 = scmp.eq.s32.totalorder %s24, 1
    %p152 = por %p150, %p151
    %p154 = scmp.ne.s32.totalorder %s139, %s153
    %p155 = scmp.eq.s32.totalorder %s24, 0
    %p156 = por %p154, %p155
    %s158 = sadd.s32 %s157, 1
    %p161 = scmp.eq.s32.totalorder %s18, 1
    %p162 = scmp.ne.s32.totalorder %s157, %s159
    %p163 = scmp.eq.s32.totalorder %s18, 0
    %p164 = por %p162, %p163
    %p165 = scmp.ne.s32.totalorder %s157, %s159
    %p166 = scmp.eq.s32.totalorder %s23, 1
    %p167 = por %p165, %p166
    %p168 = scmp.ne.s32.totalorder %s159, %s160
    %p169 = scmp.eq.s32.totalorder %s23, 0
    %p170 = por %p168, %p169
    %p171 = scmp.ne.s32.totalorder %s159, %s160
    %p172 = scmp.eq.s32.totalorder %s24, 1
    %p173 = por %p171, %p172
    %p175 = scmp.ne.s32.totalorder %s160, %s174
    %p176 = scmp.eq.s32.totalorder %s24, 0
    %p177 = por %p175, %p176
    %s179 = sadd.s32 %s178, 1
    %p182 = scmp.eq.s32.totalorder %s18, 1
    %p183 = scmp.ne.s32.totalorder %s178, %s180
    %p184 = scmp.eq.s32.totalorder %s18, 0
    %p185 = por %p183, %p184
    %p186 = scmp.ne.s32.totalorder %s178, %s180
    %p187 = scmp.eq.s32.totalorder %s23, 1
    %p188 = por %p186, %p187
    %p189 = scmp.ne.s32.totalorder %s180, %s181
    %p190 = scmp.eq.s32.totalorder %s23, 0
    %p191 = por %p189, %p190
    %p192 = scmp.ne.s32.totalorder %s180, %s181
    %p193 = scmp.eq.s32.totalorder %s24, 1
    %p194 = por %p192, %p193
    %p196 = scmp.ne.s32.totalorder %s181, %s195
    %p197 = scmp.eq.s32.totalorder %s24, 0
    %p198 = por %p196, %p197
    %s200 = sadd.s32 %s199, 1
    %p203 = scmp.eq.s32.totalorder %s18, 1
    %p204 = scmp.ne.s32.totalorder %s199, %s201
    %p205 = scmp.eq.s32.totalorder %s18, 0
    %p206 = por %p204, %p205
    %p207 = scmp.ne.s32.totalorder %s199, %s201
    %p208 = scmp.eq.s32.totalorder %s23, 1
    %p209 = por %p207, %p208
    %p210 = scmp.ne.s32.totalorder %s201, %s202
    %p211 = scmp.eq.s32.totalorder %s23, 0
    %p212 = por %p210, %p211
    %p213 = scmp.ne.s32.totalorder %s201, %s202
    %p214 = scmp.eq.s32.totalorder %s24, 1
    %p215 = por %p213, %p214
    %p217 = scmp.ne.s32.totalorder %s202, %s216
    %p218 = scmp.eq.s32.totalorder %s24, 0
    %p219 = por %p217, %p218
    %s221 = sadd.s32 %s220, 1
    %p224 = scmp.eq.s32.totalorder %s18, 1
    %p225 = scmp.ne.s32.totalorder %s220, %s222
    %p226 = scmp.eq.s32.totalorder %s18, 0
    %p227 = por %p225, %p226
    %p228 = scmp.ne.s32.totalorder %s220, %s222
    %p229 = scmp.eq.s32.totalorder %s23, 1
    %p230 = por %p228, %p229
    %p231 = scmp.ne.s32.totalorder %s222, %s223
    %p232 = scmp.eq.s32.totalorder %s23, 0
    %p233 = por %p231, %p232
    %p234 = scmp.ne.s32.totalorder %s222, %s223
    %p235 = scmp.eq.s32.totalorder %s24, 1
    %p236 = por %p234, %p235
    %p238 = scmp.ne.s32.totalorder %s223, %s237
    %p239 = scmp.eq.s32.totalorder %s24, 0
    %p240 = por %p238, %p239
    %s242 = sadd.s32 %s241, 1
    %p245 = scmp.eq.s32.totalorder %s18, 1
    %p246 = scmp.ne.s32.totalorder %s241, %s243
    %p247 = scmp.eq.s32.totalorder %s18, 0
    %p248 = por %p246, %p247
    %p249 = scmp.ne.s32.totalorder %s241, %s243
    %p250 = scmp.eq.s32.totalorder %s23, 1
    %p251 = por %p249, %p250
    %p252 = scmp.ne.s32.totalorder %s243, %s244
    %p253 = scmp.eq.s32.totalorder %s23, 0
    %p254 = por %p252, %p253
    %p255 = scmp.ne.s32.totalorder %s243, %s244
    %p256 = scmp.eq.s32.totalorder %s24, 1
    %p257 = por %p255, %p256
    %p259 = scmp.ne.s32.totalorder %s244, %s258
    %p260 = scmp.eq.s32.totalorder %s24, 0
    %p261 = por %p259, %p260
    %s263 = sadd.s32 %s262, 1
    %p266 = scmp.eq.s32.totalorder %s18, 1
    %p267 = scmp.ne.s32.totalorder %s262, %s264
    %p268 = scmp.eq.s32.totalorder %s18, 0
    %p269 = por %p267, %p268
    %p270 = scmp.ne.s32.totalorder %s262, %s264
    %p271 = scmp.eq.s32.totalorder %s23, 1
    %p272 = por %p270, %p271
    %p273 = scmp.ne.s32.totalorder %s264, %s265
    %p274 = scmp.eq.s32.totalorder %s23, 0
    %p275 = por %p273, %p274
    %p276 = scmp.ne.s32.totalorder %s264, %s265
    %p277 = scmp.eq.s32.totalorder %s24, 1
    %p278 = por %p276, %p277
    %p280 = scmp.ne.s32.totalorder %s265, %s279
    %p281 = scmp.eq.s32.totalorder %s24, 0
    %p282 = por %p280, %p281
    %s283 = ssub.s32 %s18, %s25
    %p284 = scmp.eq.s32.totalorder %s283, 0
    %s286 = sadd.s32 %s285, 1
    %s287 = scalar_select %p284, %s285, %s286
    %p290 = pneg %p284
    %p291 = scmp.eq.s32.totalorder %s18, 1
    %p292 = por %p290, %p291
    %p293 = scmp.ne.s32.totalorder %s285, %s288
    %p294 = scmp.eq.s32.totalorder %s18, 0
    %p295 = por %p293, %p294
    %p296 = scmp.ne.s32.totalorder %s285, %s288
    %p297 = scmp.eq.s32.totalorder %s23, 1
    %p298 = por %p296, %p297
    %p299 = scmp.ne.s32.totalorder %s288, %s289
    %p300 = scmp.eq.s32.totalorder %s23, 0
    %p301 = por %p299, %p300
    %p302 = scmp.ne.s32.totalorder %s288, %s289
    %p303 = scmp.eq.s32.totalorder %s24, 1
    %p304 = por %p302, %p303
    %p306 = scmp.ne.s32.totalorder %s289, %s305
    %p307 = scmp.eq.s32.totalorder %s24, 0
    %p308 = por %p306, %p307
    %p309 = scmp.le.s32.totalorder 1, %s18
    %p310 = scmp.lt.s32.totalorder %s18, 3
    %p311 = pnand %p309, %p310
    %p312 = pneg %p311
    // Predicated region
    $region9: #{dinov2_reg_forward.6} parent=5 // pred_check
      _
    $region10: #{dinov2_reg_forward.6} parent=5 // pred_check_branch
      %314 = sbr.rel (%p311) target = $region12
    $region11: #{dinov2_reg_forward.6} parent=5 // pred_region
      %s315 = ssub.s32 %s18, 1
      // Predicated region
      $region13: #{dinov2_reg_forward.6} parent=11 // pred_check
        %p316 = pneg %p65
      $region14: #{dinov2_reg_forward.6} parent=11 // pred_check_branch
        %318 = sbr.rel (%p316) target = $region16
      $region15: #{dinov2_reg_forward.6} parent=11 // pred_region
        _
      $region16: #{dinov2_reg_forward.6} parent=11 // pred_fallthru
        _
      // Predicated region
      $region17: #{dinov2_reg_forward.6} parent=11 // pred_check
        %p319 = pneg %p86
      $region18: #{dinov2_reg_forward.6} parent=11 // pred_check_branch
        %321 = sbr.rel (%p319) target = $region20
      $region19: #{dinov2_reg_forward.6} parent=11 // pred_region
        _
      $region20: #{dinov2_reg_forward.6} parent=11 // pred_fallthru
        _
      // Predicated region
      $region21: #{dinov2_reg_forward.6} parent=11 // pred_check
        %p322 = pneg %p107
      $region22: #{dinov2_reg_forward.6} parent=11 // pred_check_branch
        %324 = sbr.rel (%p322) target = $region24
      $region23: #{dinov2_reg_forward.6} parent=11 // pred_region
        _
      $region24: #{dinov2_reg_forward.6} parent=11 // pred_fallthru
        _
      // Predicated region
      $region25: #{dinov2_reg_forward.6} parent=11 // pred_check
        %p325 = pneg %p128
      $region26: #{dinov2_reg_forward.6} parent=11 // pred_check_branch
        %327 = sbr.rel (%p325) target = $region28
      $region27: #{dinov2_reg_forward.6} parent=11 // pred_region
        _
      $region28: #{dinov2_reg_forward.6} parent=11 // pred_fallthru
        _
      // Predicated region
      $region29: #{dinov2_reg_forward.6} parent=11 // pred_check
        %p328 = pneg %p149
      $region30: #{dinov2_reg_forward.6} parent=11 // pred_check_branch
        %330 = sbr.rel (%p328) target = $region32
      $region31: #{dinov2_reg_forward.6} parent=11 // pred_region
        _
      $region32: #{dinov2_reg_forward.6} parent=11 // pred_fallthru
        _
      // Predicated region
      $region33: #{dinov2_reg_forward.6} parent=11 // pred_check
        %p331 = pneg %p170
      $region34: #{dinov2_reg_forward.6} parent=11 // pred_check_branch
        %333 = sbr.rel (%p331) target = $region36
      $region35: #{dinov2_reg_forward.6} parent=11 // pred_region
        _
      $region36: #{dinov2_reg_forward.6} parent=11 // pred_fallthru
        _
      // Predicated region
      $region37: #{dinov2_reg_forward.6} parent=11 // pred_check
        %p334 = pneg %p191
      $region38: #{dinov2_reg_forward.6} parent=11 // pred_check_branch
        %336 = sbr.rel (%p334) target = $region40
      $region39: #{dinov2_reg_forward.6} parent=11 // pred_region
        _
      $region40: #{dinov2_reg_forward.6} parent=11 // pred_fallthru
        _
      // Predicated region
      $region41: #{dinov2_reg_forward.6} parent=11 // pred_check
        %p337 = pneg %p212
      $region42: #{dinov2_reg_forward.6} parent=11 // pred_check_branch
        %339 = sbr.rel (%p337) target = $region44
      $region43: #{dinov2_reg_forward.6} parent=11 // pred_region
        _
      $region44: #{dinov2_reg_forward.6} parent=11 // pred_fallthru
        _
      // Predicated region
      $region45: #{dinov2_reg_forward.6} parent=11 // pred_check
        %p340 = pneg %p233
      $region46: #{dinov2_reg_forward.6} parent=11 // pred_check_branch
        %342 = sbr.rel (%p340) target = $region48
      $region47: #{dinov2_reg_forward.6} parent=11 // pred_region
        _
      $region48: #{dinov2_reg_forward.6} parent=11 // pred_fallthru
        _
      // Predicated region
      $region49: #{dinov2_reg_forward.6} parent=11 // pred_check
        %p343 = pneg %p254
      $region50: #{dinov2_reg_forward.6} parent=11 // pred_check_branch
        %345 = sbr.rel (%p343) target = $region52
      $region51: #{dinov2_reg_forward.6} parent=11 // pred_region
        _
      $region52: #{dinov2_reg_forward.6} parent=11 // pred_fallthru
        _
      // Predicated region
      $region53: #{dinov2_reg_forward.6} parent=11 // pred_check
        %p346 = pneg %p275
      $region54: #{dinov2_reg_forward.6} parent=11 // pred_check_branch
        %348 = sbr.rel (%p346) target = $region56
      $region55: #{dinov2_reg_forward.6} parent=11 // pred_region
        _
      $region56: #{dinov2_reg_forward.6} parent=11 // pred_fallthru
        _
    $region12: #{dinov2_reg_forward.6} parent=5 // pred_fallthru
      _
    %p349 = scmp.lt.s32.totalorder %s18, 2
    // Predicated region
    $region57: #{dinov2_reg_forward.6} parent=5 // pred_check
      %p350 = pneg %p349
    $region58: #{dinov2_reg_forward.6} parent=5 // pred_check_branch
      %352 = sbr.rel (%p350) target = $region60
    $region59: #{dinov2_reg_forward.6} parent=5 // pred_region
      // Predicated region
      $region61: #{dinov2_reg_forward.6} parent=59 // pred_check
        %p353 = pneg %p38
      $region62: #{dinov2_reg_forward.6} parent=59 // pred_check_branch
        %355 = sbr.rel (%p353) target = $region64
      $region63: #{dinov2_reg_forward.6} parent=59 // pred_region
        %p356 = scmp.lt.s32.totalorder %s18, 1
        %s357 = scalar_select %p356, %s18, 1
        %s358 = smul.addr %s357, 16
        %s359 = smul.addr %s358, 8
        %s360 = scalar_lea.vmem %s0, %s359
      $region64: #{dinov2_reg_forward.6} parent=59 // pred_fallthru
        _
    $region60: #{dinov2_reg_forward.6} parent=5 // pred_fallthru
      _
    %p361 = scmp.le.s32.totalorder 1, %s18
    %p362 = scmp.lt.s32.totalorder %s18, 3
    %p363 = pnand %p361, %p362
    %p364 = pneg %p363
    // Predicated region
    $region65: #{dinov2_reg_forward.6} parent=5 // pred_check
      _
    $region66: #{dinov2_reg_forward.6} parent=5 // pred_check_branch
      %366 = sbr.rel (%p363) target = $region68
    $region67: #{dinov2_reg_forward.6} parent=5 // pred_region
      %s367 = ssub.s32 %s18, 1
      %p368 = scmp.lt.s32.totalorder %s23, 1
      %s369 = scalar_select %p368, %s23, 1
      %s370 = smul.addr %s369, 16
      %s371 = smul.addr %s370, 8
      %s372 = scalar_lea.vmem %s0, %s371
      %p373 = pneg %p44
      %p374 = pneg %p41
      %p375 = pneg %p65
      %p376 = pneg %p62
      %p377 = pneg %p86
      %p378 = pneg %p83
      %p379 = pneg %p107
      %p380 = pneg %p104
      %p381 = pneg %p128
      %p382 = pneg %p125
      %p383 = pneg %p149
      %p384 = pneg %p146
      %p385 = pneg %p170
      %p386 = pneg %p167
      %p387 = pneg %p191
      %p388 = pneg %p188
      %p389 = pneg %p212
      %p390 = pneg %p209
      %p391 = pneg %p233
      %p392 = pneg %p230
      %p393 = pneg %p254
      %p394 = pneg %p251
      %p395 = pneg %p275
      %p396 = pneg %p272
      %p397 = pneg %p301
      %p398 = pneg %p298
      %p399 = scmp.lt.s32.totalorder %s23, 1
      %s400 = scalar_select %p399, %s23, 1
      %s401 = smul.addr %s400, 16
      %s402 = smul.addr %s401, 8
      %s403 = scalar_lea.vmem %s12, %s402
      %p404 = scmp.lt.s32.totalorder %s23, 1
      %s405 = scalar_select %p404, %s23, 1
      %s406 = smul.addr %s405, 16
      %s407 = smul.addr %s406, 8
      %s408 = scalar_lea.vmem %s0, %s407
      %p409 = scmp.lt.s32.totalorder %s23, 1
      %s410 = scalar_select %p409, %s23, 1
      %s411 = smul.addr %s410, 16
      %s412 = smul.addr %s411, 8
      %s413 = scalar_lea.vmem %s12, %s412
      %v415 = vld [vmem:[%s408] sm:$0xff]
      %v416 = vld [vmem:[%s408 + $0x8] sm:$0xff]
      %v417 = vld [vmem:[%s408 + $0x10] sm:$0xff]
      %v418 = vld [vmem:[%s408 + $0x18] sm:$0xff]
      %v419 = vld [vmem:[%s408 + $0x20] sm:$0xff]
      %v420 = vld [vmem:[%s408 + $0x28] sm:$0xff]
      %v421 = vld [vmem:[%s408 + $0x30] sm:$0xff]
      %v422 = vld [vmem:[%s408 + $0x38] sm:$0xff]
      %v423 = vld [vmem:[%s408 + $0x40] sm:$0xff]
      %v424 = vld [vmem:[%s408 + $0x48] sm:$0xff]
      %v425 = vld [vmem:[%s408 + $0x50] sm:$0xff]
      %v426 = vld [vmem:[%s408 + $0x58] sm:$0xff]
      %v427 = vld [vmem:[%s408 + $0x60] sm:$0xff]
      %v428 = vld [vmem:[%s408 + $0x68] sm:$0xff]
      %v429 = vld [vmem:[%s408 + $0x70] sm:$0xff]
      %v430 = vld [vmem:[%s408 + $0x78] sm:$0xff]
      %v431 = vld [vmem:[%s1] sm:$0x1]
      %v432 = vld [vmem:[%s2] sm:$0x1]
      %433 = vadd.xlane.f32.xlu0 %v415
      %v434 = vpop.xlane.xlu0 %433
      %435 = vadd.xlane.f32.xlu0 %v416
      %v436 = vpop.xlane.xlu0 %435
      %437 = vadd.xlane.f32.xlu0 %v417
      %v438 = vpop.xlane.xlu0 %437
      %439 = vadd.xlane.f32.xlu0 %v418
      %v440 = vpop.xlane.xlu0 %439
      %441 = vadd.xlane.f32.xlu0 %v419
      %v442 = vpop.xlane.xlu0 %441
      %443 = vadd.xlane.f32.xlu0 %v420
      %v444 = vpop.xlane.xlu0 %443
      %445 = vadd.xlane.f32.xlu0 %v421
      %v446 = vpop.xlane.xlu0 %445
      %447 = vadd.xlane.f32.xlu0 %v422
      %v448 = vpop.xlane.xlu0 %447
      %449 = vadd.xlane.f32.xlu0 %v423
      %v450 = vpop.xlane.xlu0 %449
      %451 = vadd.xlane.f32.xlu0 %v424
      %v452 = vpop.xlane.xlu0 %451
      %453 = vadd.xlane.f32.xlu0 %v425
      %v454 = vpop.xlane.xlu0 %453
      %455 = vadd.xlane.f32.xlu0 %v426
      %v456 = vpop.xlane.xlu0 %455
      %457 = vadd.xlane.f32.xlu0 %v427
      %v458 = vpop.xlane.xlu0 %457
      %459 = vadd.xlane.f32.xlu0 %v428
      %v460 = vpop.xlane.xlu0 %459
      %461 = vadd.xlane.f32.xlu0 %v429
      %v462 = vpop.xlane.xlu0 %461
      %463 = vadd.xlane.f32.xlu0 %v430
      %v464 = vpop.xlane.xlu0 %463
      %v465 = vrcp.pop 128.0
      %v466 = vmul.f32 %v434, %v465
      %v467 = vmul.f32 %v436, %v465
      %v468 = vmul.f32 %v438, %v465
      %v469 = vmul.f32 %v440, %v465
      %v470 = vmul.f32 %v442, %v465
      %v471 = vmul.f32 %v444, %v465
      %v472 = vmul.f32 %v446, %v465
      %v473 = vmul.f32 %v448, %v465
      %v474 = vmul.f32 %v450, %v465
      %v475 = vmul.f32 %v452, %v465
      %v476 = vmul.f32 %v454, %v465
      %v477 = vmul.f32 %v456, %v465
      %v478 = vmul.f32 %v458, %v465
      %v479 = vmul.f32 %v460, %v465
      %v480 = vmul.f32 %v462, %v465
      %v481 = vmul.f32 %v464, %v465
      %v482 = vsub.f32 %v415, %v466
      %v483 = vsub.f32 %v416, %v467
      %v484 = vsub.f32 %v417, %v468
      %v485 = vsub.f32 %v418, %v469
      %v486 = vsub.f32 %v419, %v470
      %v487 = vsub.f32 %v420, %v471
      %v488 = vsub.f32 %v421, %v472
      %v489 = vsub.f32 %v422, %v473
      %v490 = vsub.f32 %v423, %v474
      %v491 = vsub.f32 %v424, %v475
      %v492 = vsub.f32 %v425, %v476
      %v493 = vsub.f32 %v426, %v477
      %v494 = vsub.f32 %v427, %v478
      %v495 = vsub.f32 %v428, %v479
      %v496 = vsub.f32 %v429, %v480
      %v497 = vsub.f32 %v430, %v481
      %v498 = vmul.f32 %v482, %v482
      %v499 = vmul.f32 %v483, %v483
      %v500 = vmul.f32 %v484, %v484
      %v501 = vmul.f32 %v485, %v485
      %v502 = vmul.f32 %v486, %v486
      %v503 = vmul.f32 %v487, %v487
      %v504 = vmul.f32 %v488, %v488
      %v505 = vmul.f32 %v489, %v489
      %v506 = vmul.f32 %v490, %v490
      %v507 = vmul.f32 %v491, %v491
      %v508 = vmul.f32 %v492, %v492
      %v509 = vmul.f32 %v493, %v493
      %v510 = vmul.f32 %v494, %v494
      %v511 = vmul.f32 %v495, %v495
      %v512 = vmul.f32 %v496, %v496
      %v513 = vmul.f32 %v497, %v497
      %514 = vadd.xlane.f32.xlu0 %v498
      %v515 = vpop.xlane.xlu0 %514
      %516 = vadd.xlane.f32.xlu0 %v499
      %v517 = vpop.xlane.xlu0 %516
      %518 = vadd.xlane.f32.xlu0 %v500
      %v519 = vpop.xlane.xlu0 %518
      %520 = vadd.xlane.f32.xlu0 %v501
      %v521 = vpop.xlane.xlu0 %520
      %522 = vadd.xlane.f32.xlu0 %v502
      %v523 = vpop.xlane.xlu0 %522
      %524 = vadd.xlane.f32.xlu0 %v503
      %v525 = vpop.xlane.xlu0 %524
      %526 = vadd.xlane.f32.xlu0 %v504
      %v527 = vpop.xlane.xlu0 %526
      %528 = vadd.xlane.f32.xlu0 %v505
      %v529 = vpop.xlane.xlu0 %528
      %530 = vadd.xlane.f32.xlu0 %v506
      %v531 = vpop.xlane.xlu0 %530
      %532 = vadd.xlane.f32.xlu0 %v507
      %v533 = vpop.xlane.xlu0 %532
      %534 = vadd.xlane.f32.xlu0 %v508
      %v535 = vpop.xlane.xlu0 %534
      %536 = vadd.xlane.f32.xlu0 %v509
      %v537 = vpop.xlane.xlu0 %536
      %538 = vadd.xlane.f32.xlu0 %v510
      %v539 = vpop.xlane.xlu0 %538
      %540 = vadd.xlane.f32.xlu0 %v511
      %v541 = vpop.xlane.xlu0 %540
      %542 = vadd.xlane.f32.xlu0 %v512
      %v543 = vpop.xlane.xlu0 %542
      %544 = vadd.xlane.f32.xlu0 %v513
      %v545 = vpop.xlane.xlu0 %544
      %v546 = vmul.f32 %v515, %v465
      %v547 = vmul.f32 %v517, %v465
      %v548 = vmul.f32 %v519, %v465
      %v549 = vmul.f32 %v521, %v465
      %v550 = vmul.f32 %v523, %v465
      %v551 = vmul.f32 %v525, %v465
      %v552 = vmul.f32 %v527, %v465
      %v553 = vmul.f32 %v529, %v465
      %v554 = vmul.f32 %v531, %v465
      %v555 = vmul.f32 %v533, %v465
      %v556 = vmul.f32 %v535, %v465
      %v557 = vmul.f32 %v537, %v465
      %v558 = vmul.f32 %v539, %v465
      %v559 = vmul.f32 %v541, %v465
      %v560 = vmul.f32 %v543, %v465
      %v561 = vmul.f32 %v545, %v465
      %v562 = vadd.f32 %v546, 1e-06
      %v563 = vadd.f32 %v547, 1e-06
      %v564 = vadd.f32 %v548, 1e-06
      %v565 = vadd.f32 %v549, 1e-06
      %v566 = vadd.f32 %v550, 1e-06
      %v567 = vadd.f32 %v551, 1e-06
      %v568 = vadd.f32 %v552, 1e-06
      %v569 = vadd.f32 %v553, 1e-06
      %v570 = vadd.f32 %v554, 1e-06
      %v571 = vadd.f32 %v555, 1e-06
      %v572 = vadd.f32 %v556, 1e-06
      %v573 = vadd.f32 %v557, 1e-06
      %v574 = vadd.f32 %v558, 1e-06
      %v575 = vadd.f32 %v559, 1e-06
      %v576 = vadd.f32 %v560, 1e-06
      %v577 = vadd.f32 %v561, 1e-06
      %v578 = vrsqrt.pop %v562
      %v579 = vrsqrt.pop %v563
      %v580 = vrsqrt.pop %v564
      %v581 = vrsqrt.pop %v565
      %v582 = vrsqrt.pop %v566
      %v583 = vrsqrt.pop %v567
      %v584 = vrsqrt.pop %v568
      %v585 = vrsqrt.pop %v569
      %v586 = vrsqrt.pop %v570
      %v587 = vrsqrt.pop %v571
      %v588 = vrsqrt.pop %v572
      %v589 = vrsqrt.pop %v573
      %v590 = vrsqrt.pop %v574
      %v591 = vrsqrt.pop %v575
      %v592 = vrsqrt.pop %v576
      %v593 = vrsqrt.pop %v577
      %v594 = vmul.f32 %v482, %v578
      %v595 = vmul.f32 %v483, %v579
      %v596 = vmul.f32 %v484, %v580
      %v597 = vmul.f32 %v485, %v581
      %v598 = vmul.f32 %v486, %v582
      %v599 = vmul.f32 %v487, %v583
      %v600 = vmul.f32 %v488, %v584
      %v601 = vmul.f32 %v489, %v585
      %v602 = vmul.f32 %v490, %v586
      %v603 = vmul.f32 %v491, %v587
      %v604 = vmul.f32 %v492, %v588
      %v605 = vmul.f32 %v493, %v589
      %v606 = vmul.f32 %v494, %v590
      %v607 = vmul.f32 %v495, %v591
      %v608 = vmul.f32 %v496, %v592
      %v609 = vmul.f32 %v497, %v593
      %v611 = vlaneseq
      %v612 = vshrl.u32 %v611, 7
      %v613 = vsub.s32 0, %v612
      %v614 = vrot.slane %v431, %v613
      %v616 = vmul.f32 %v594, %v614
      %v617 = vmul.f32 %v595, %v614
      %v618 = vmul.f32 %v596, %v614
      %v619 = vmul.f32 %v597, %v614
      %v620 = vmul.f32 %v598, %v614
      %v621 = vmul.f32 %v599, %v614
      %v622 = vmul.f32 %v600, %v614
      %v623 = vmul.f32 %v601, %v614
      %v624 = vmul.f32 %v602, %v614
      %v625 = vmul.f32 %v603, %v614
      %v626 = vmul.f32 %v604, %v614
      %v627 = vmul.f32 %v605, %v614
      %v628 = vmul.f32 %v606, %v614
      %v629 = vmul.f32 %v607, %v614
      %v630 = vmul.f32 %v608, %v614
      %v631 = vmul.f32 %v609, %v614
      %v633 = vlaneseq
      %v634 = vshrl.u32 %v633, 7
      %v635 = vsub.s32 0, %v634
      %v636 = vrot.slane %v432, %v635
      %v638 = vadd.f32 %v616, %v636
      %v639 = vadd.f32 %v617, %v636
      %v640 = vadd.f32 %v618, %v636
      %v641 = vadd.f32 %v619, %v636
      %v642 = vadd.f32 %v620, %v636
      %v643 = vadd.f32 %v621, %v636
      %v644 = vadd.f32 %v622, %v636
      %v645 = vadd.f32 %v623, %v636
      %v646 = vadd.f32 %v624, %v636
      %v647 = vadd.f32 %v625, %v636
      %v648 = vadd.f32 %v626, %v636
      %v649 = vadd.f32 %v627, %v636
      %v650 = vadd.f32 %v628, %v636
      %v651 = vadd.f32 %v629, %v636
      %v652 = vadd.f32 %v630, %v636
      %v653 = vadd.f32 %v631, %v636
      %v654 = vpack.c.bf16 %v639, %v638
      %v655 = vpack.c.bf16 %v641, %v640
      %v656 = vpack.c.bf16 %v643, %v642
      %v657 = vpack.c.bf16 %v645, %v644
      %v658 = vpack.c.bf16 %v647, %v646
      %v659 = vpack.c.bf16 %v649, %v648
      %v660 = vpack.c.bf16 %v651, %v650
      %v661 = vpack.c.bf16 %v653, %v652
      %662 = vst [vmem:[#allocation2] sm:$0xff] 0.0
      %663 = vst [vmem:[#allocation2 + $0x8] sm:$0xff] 0.0
      %664 = vst [vmem:[#allocation2 + $0x10] sm:$0xff] 0.0
      %665 = vst [vmem:[#allocation2 + $0x18] sm:$0xff] 0.0
      %666 = vst [vmem:[#allocation2 + $0x20] sm:$0xff] 0.0
      %667 = vst [vmem:[#allocation2 + $0x28] sm:$0xff] 0.0
      %668 = vst [vmem:[#allocation2 + $0x30] sm:$0xff] 0.0
      %669 = vst [vmem:[#allocation2 + $0x38] sm:$0xff] 0.0
      %670 = vst [vmem:[#allocation2 + $0x40] sm:$0xff] 0.0
      %671 = vst [vmem:[#allocation2 + $0x48] sm:$0xff] 0.0
      %672 = vst [vmem:[#allocation2 + $0x50] sm:$0xff] 0.0
      %673 = vst [vmem:[#allocation2 + $0x58] sm:$0xff] 0.0
      %674 = vst [vmem:[#allocation2 + $0x60] sm:$0xff] 0.0
      %675 = vst [vmem:[#allocation2 + $0x68] sm:$0xff] 0.0
      %676 = vst [vmem:[#allocation2 + $0x70] sm:$0xff] 0.0
      %677 = vst [vmem:[#allocation2 + $0x78] sm:$0xff] 0.0
      %v678 = vlaneseq
      %v679 = vand.u32 %v678, 127
      %vm680 = vcmp.lt.s32.totalorder %v679, 21
      loop: start=0, step=1, limit=4
      $region69: #{dinov2_reg_forward.6} parent=67 // loop_pre_header
        _
      $region70: #{dinov2_reg_forward.6} parent=67 // loop_header
        %s682 = sphi 0, %s686
        %p683 = scmp.ge.s32.totalorder %s682, 4
      $region71: #{dinov2_reg_forward.6} parent=67 // loop_header_branch
        %685 = sbr.rel (%p683) target = $region75
      $region72: #{dinov2_reg_forward.6} parent=67 // loop_body
        %s687 = smul.u32 %s682, 16
        %s688 = smul.addr %s687, 4
        %s689 = scalar_lea.vmem %s3, %s688
        %v690 = vld [vmem:[%s689] sm:$0xf]
        %v691 = vld [vmem:[%s689 + $0x4] sm:$0xf]
        %v692 = vld [vmem:[%s689 + $0x8] sm:$0xf]
        %v693 = vld [vmem:[%s689 + $0xc] sm:$0xf]
        %v694 = vld [vmem:[%s689 + $0x10] sm:$0xf]
        %v695 = vld [vmem:[%s689 + $0x14] sm:$0xf]
        %v696 = vld [vmem:[%s689 + $0x18] sm:$0xf]
        %v697 = vld [vmem:[%s689 + $0x1c] sm:$0xf]
        %v698 = vld [vmem:[%s689 + $0x20] sm:$0xf]
        %v699 = vld [vmem:[%s689 + $0x24] sm:$0xf]
        %v700 = vld [vmem:[%s689 + $0x28] sm:$0xf]
        %v701 = vld [vmem:[%s689 + $0x2c] sm:$0xf]
        %v702 = vld [vmem:[%s689 + $0x30] sm:$0xf]
        %v703 = vld [vmem:[%s689 + $0x34] sm:$0xf]
        %v704 = vld [vmem:[%s689 + $0x38] sm:$0xf]
        %v705 = vld [vmem:[%s689 + $0x3c] sm:$0xf]
        %s706 = scalar_lea.vmem %s4, %s682
        %v707 = vld [vmem:[%s706] sm:$0x1]
        %v709 = vlaneseq
        %v710 = vshrl.u32 %v709, 7
        %v711 = vsub.s32 0, %v710
        %v712 = vrot.slane %v707, %v711
        %v730 = vunpack.c.l.b16 %v690
        %v731 = vunpack.c.l.b16 %v691
        %v732 = vunpack.c.l.b16 %v692
        %v733 = vunpack.c.l.b16 %v693
        %v734 = vunpack.c.l.b16 %v694
        %v735 = vunpack.c.l.b16 %v695
        %v736 = vunpack.c.l.b16 %v696
        %v737 = vunpack.c.l.b16 %v697
        %v738 = vunpack.c.l.b16 %v698
        %v739 = vunpack.c.l.b16 %v699
        %v740 = vunpack.c.l.b16 %v700
        %v741 = vunpack.c.l.b16 %v701
        %v742 = vunpack.c.l.b16 %v702
        %v743 = vunpack.c.l.b16 %v703
        %v744 = vunpack.c.l.b16 %v704
        %v745 = vunpack.c.l.b16 %v705
        %v746 = vpack.c.b16 %v731, %v730
        %v747 = vpack.c.b16 %v733, %v732
        %v748 = vpack.c.b16 %v735, %v734
        %v749 = vpack.c.b16 %v737, %v736
        %v750 = vpack.c.b16 %v739, %v738
        %v751 = vpack.c.b16 %v741, %v740
        %v752 = vpack.c.b16 %v743, %v742
        %v753 = vpack.c.b16 %v745, %v744
        %762 = vmatprep.subr.bf16.mxu0 0
        %763 = vmatpush1.bf16.msra.mxu0 %v746
        %764 = vmatprep.subr.bf16.mxu0 0
        %765 = vmatpush1.bf16.msra.mxu0 %v747
        %766 = vmatprep.subr.bf16.mxu0 0
        %767 = vmatpush1.bf16.msra.mxu0 %v748
        %768 = vmatprep.subr.bf16.mxu0 0
        %769 = vmatpush1.bf16.msra.mxu0 %v749
        %770 = vmatprep.subr.bf16.mxu0 0
        %771 = vmatpush1.bf16.msra.mxu0 %v750
        %772 = vmatprep.subr.bf16.mxu0 0
        %773 = vmatpush1.bf16.msra.mxu0 %v751
        %774 = vmatprep.subr.bf16.mxu0 0
        %775 = vmatpush1.bf16.msra.mxu0 %v752
        %776 = vmatprep.subr.bf16.mxu0 0
        %777 = vmatpush1.bf16.msra.mxu0 %v753
        %778 = vmatprep.subr.bf16.mxu0 0
        %779 = vmatpush1.bf16.msra.mxu0 0
        %780 = vmatprep.subr.bf16.mxu0 0
        %781 = vmatpush1.bf16.msra.mxu0 0
        %782 = vmatprep.subr.bf16.mxu0 0
        %783 = vmatpush1.bf16.msra.mxu0 0
        %784 = vmatprep.subr.bf16.mxu0 0
        %785 = vmatpush1.bf16.msra.mxu0 0
        %786 = vmatprep.subr.bf16.mxu0 0
        %787 = vmatpush1.bf16.msra.mxu0 0
        %788 = vmatprep.subr.bf16.mxu0 0
        %789 = vmatpush1.bf16.msra.mxu0 0
        %790 = vmatprep.subr.bf16.mxu0 0
        %791 = vmatpush1.bf16.msra.mxu0 0
        %792 = vmatprep.subr.bf16.mxu0 0
        %793 = vmatpush1.bf16.msra.mxu0 0
        %794 = vmatprep.mubr.bf16.mxu0 0
        %795 = vmatmul.mubr.bf16.gmra.mrb[0].mxu0 %v654
        %v796 = vpop.f32.mrb[0].mxu0
        %v797 = vadd.f32 %v712, %v796
        %v798 = vpop.f32.mrb[0].mxu0
        %v799 = vpop.f32.mrb[0].mxu0
        %v800 = vadd.f32 %v712, %v799
        %v801 = vpop.f32.mrb[0].mxu0
        %802 = vmatprep.mubr.bf16.mxu0 0
        %803 = vmatmul.mubr.bf16.gmra.mrb[0].mxu0 %v655
        %v804 = vpop.f32.mrb[0].mxu0
        %v805 = vadd.f32 %v712, %v804
        %v806 = vpop.f32.mrb[0].mxu0
        %v807 = vpop.f32.mrb[0].mxu0
        %v808 = vadd.f32 %v712, %v807
        %v809 = vpop.f32.mrb[0].mxu0
        %810 = vmatprep.mubr.bf16.mxu0 0
        %811 = vmatmul.mubr.bf16.gmra.mrb[0].mxu0 %v656
        %v812 = vpop.f32.mrb[0].mxu0
        %v813 = vadd.f32 %v712, %v812
        %v814 = vpop.f32.mrb[0].mxu0
        %v815 = vpop.f32.mrb[0].mxu0
        %v816 = vadd.f32 %v712, %v815
        %v817 = vpop.f32.mrb[0].mxu0
        %818 = vmatprep.mubr.bf16.mxu0 0
        %819 = vmatmul.mubr.bf16.gmra.mrb[0].mxu0 %v657
        %v820 = vpop.f32.mrb[0].mxu0
        %v821 = vadd.f32 %v712, %v820
        %v822 = vpop.f32.mrb[0].mxu0
        %v823 = vpop.f32.mrb[0].mxu0
        %v824 = vadd.f32 %v712, %v823
        %v825 = vpop.f32.mrb[0].mxu0
        %826 = vmatprep.mubr.bf16.mxu0 0
        %827 = vmatmul.mubr.bf16.gmra.mrb[0].mxu0 %v658
        %v828 = vpop.f32.mrb[0].mxu0
        %v829 = vadd.f32 %v712, %v828
        %v830 = vpop.f32.mrb[0].mxu0
        %v831 = vpop.f32.mrb[0].mxu0
        %v832 = vadd.f32 %v712, %v831
        %v833 = vpop.f32.mrb[0].mxu0
        %834 = vmatprep.mubr.bf16.mxu0 0
        %835 = vmatmul.mubr.bf16.gmra.mrb[0].mxu0 %v659
        %v836 = vpop.f32.mrb[0].mxu0
        %v837 = vadd.f32 %v712, %v836
        %v838 = vpop.f32.mrb[0].mxu0
        %v839 = vpop.f32.mrb[0].mxu0
        %v840 = vadd.f32 %v712, %v839
        %v841 = vpop.f32.mrb[0].mxu0
        %842 = vmatprep.mubr.bf16.mxu0 0
        %843 = vmatmul.mubr.bf16.gmra.mrb[0].mxu0 %v660
        %v844 = vpop.f32.mrb[0].mxu0
        %v845 = vadd.f32 %v712, %v844
        %v846 = vpop.f32.mrb[0].mxu0
        %v847 = vpop.f32.mrb[0].mxu0
        %v848 = vadd.f32 %v712, %v847
        %v849 = vpop.f32.mrb[0].mxu0
        %850 = vmatprep.mubr.bf16.mxu0 0
        %851 = vmatmul.mubr.bf16.gmra.mrb[0].mxu0 %v661
        %v852 = vpop.f32.mrb[0].mxu0
        %v853 = vadd.f32 %v712, %v852
        %v854 = vpop.f32.mrb[0].mxu0
        %v855 = vpop.f32.mrb[0].mxu0
        %v856 = vadd.f32 %v712, %v855
        %v857 = vpop.f32.mrb[0].mxu0
        %858 = vdwg.mxu0
        %s859 = smul.addr %s687, 4
        %s860 = scalar_lea.vmem %s5, %s859
        %v861 = vld [vmem:[%s860] sm:$0xf]
        %v862 = vld [vmem:[%s860 + $0x4] sm:$0xf]
        %v863 = vld [vmem:[%s860 + $0x8] sm:$0xf]
        %v864 = vld [vmem:[%s860 + $0xc] sm:$0xf]
        %v865 = vld [vmem:[%s860 + $0x10] sm:$0xf]
        %v866 = vld [vmem:[%s860 + $0x14] sm:$0xf]
        %v867 = vld [vmem:[%s860 + $0x18] sm:$0xf]
        %v868 = vld [vmem:[%s860 + $0x1c] sm:$0xf]
        %v869 = vld [vmem:[%s860 + $0x20] sm:$0xf]
        %v870 = vld [vmem:[%s860 + $0x24] sm:$0xf]
        %v871 = vld [vmem:[%s860 + $0x28] sm:$0xf]
        %v872 = vld [vmem:[%s860 + $0x2c] sm:$0xf]
        %v873 = vld [vmem:[%s860 + $0x30] sm:$0xf]
        %v874 = vld [vmem:[%s860 + $0x34] sm:$0xf]
        %v875 = vld [vmem:[%s860 + $0x38] sm:$0xf]
        %v876 = vld [vmem:[%s860 + $0x3c] sm:$0xf]
        %s877 = scalar_lea.vmem %s6, %s682
        %v878 = vld [vmem:[%s877] sm:$0x1]
        %v880 = vlaneseq
        %v881 = vshrl.u32 %v880, 7
        %v882 = vsub.s32 0, %v881
        %v883 = vrot.slane %v878, %v882
        %v901 = vunpack.c.l.b16 %v861
        %v902 = vunpack.c.l.b16 %v862
        %v903 = vunpack.c.l.b16 %v863
        %v904 = vunpack.c.l.b16 %v864
        %v905 = vunpack.c.l.b16 %v865
        %v906 = vunpack.c.l.b16 %v866
        %v907 = vunpack.c.l.b16 %v867
        %v908 = vunpack.c.l.b16 %v868
        %v909 = vunpack.c.l.b16 %v869
        %v910 = vunpack.c.l.b16 %v870
        %v911 = vunpack.c.l.b16 %v871
        %v912 = vunpack.c.l.b16 %v872
        %v913 = vunpack.c.l.b16 %v873
        %v914 = vunpack.c.l.b16 %v874
        %v915 = vunpack.c.l.b16 %v875
        %v916 = vunpack.c.l.b16 %v876
        %v917 = vpack.c.b16 %v902, %v901
        %v918 = vpack.c.b16 %v904, %v903
        %v919 = vpack.c.b16 %v906, %v905
        %v920 = vpack.c.b16 %v908, %v907
        %v921 = vpack.c.b16 %v910, %v909
        %v922 = vpack.c.b16 %v912, %v911
        %v923 = vpack.c.b16 %v914, %v913
        %v924 = vpack.c.b16 %v916, %v915
        %933 = vmatprep.subr.bf16.mxu0 0
        %934 = vmatpush1.bf16.msra.mxu0 %v917
        %935 = vmatprep.subr.bf16.mxu0 0
        %936 = vmatpush1.bf16.msra.mxu0 %v918
        %937 = vmatprep.subr.bf16.mxu0 0
        %938 = vmatpush1.bf16.msra.mxu0 %v919
        %939 = vmatprep.subr.bf16.mxu0 0
        %940 = vmatpush1.bf16.msra.mxu0 %v920
        %941 = vmatprep.subr.bf16.mxu0 0
        %942 = vmatpush1.bf16.msra.mxu0 %v921
        %943 = vmatprep.subr.bf16.mxu0 0
        %944 = vmatpush1.bf16.msra.mxu0 %v922
        %945 = vmatprep.subr.bf16.mxu0 0
        %946 = vmatpush1.bf16.msra.mxu0 %v923
        %947 = vmatprep.subr.bf16.mxu0 0
        %948 = vmatpush1.bf16.msra.mxu0 %v924
        %949 = vmatprep.subr.bf16.mxu0 0
        %950 = vmatpush1.bf16.msra.mxu0 0
        %951 = vmatprep.subr.bf16.mxu0 0
        %952 = vmatpush1.bf16.msra.mxu0 0
        %953 = vmatprep.subr.bf16.mxu0 0
        %954 = vmatpush1.bf16.msra.mxu0 0
        %955 = vmatprep.subr.bf16.mxu0 0
        %956 = vmatpush1.bf16.msra.mxu0 0
        %957 = vmatprep.subr.bf16.mxu0 0
        %958 = vmatpush1.bf16.msra.mxu0 0
        %959 = vmatprep.subr.bf16.mxu0 0
        %960 = vmatpush1.bf16.msra.mxu0 0
        %961 = vmatprep.subr.bf16.mxu0 0
        %962 = vmatpush1.bf16.msra.mxu0 0
        %963 = vmatprep.subr.bf16.mxu0 0
        %964 = vmatpush1.bf16.msra.mxu0 0
        %965 = vmatprep.mubr.bf16.mxu0 0
        %966 = vmatmul.mubr.bf16.gmra.mrb[0].mxu0 %v654
        %v967 = vpop.f32.mrb[0].mxu0
        %v968 = vadd.f32 %v883, %v967
        %v969 = vpop.f32.mrb[0].mxu0
        %v970 = vpop.f32.mrb[0].mxu0
        %v971 = vadd.f32 %v883, %v970
        %v972 = vpop.f32.mrb[0].mxu0
        %973 = vmatprep.mubr.bf16.mxu0 0
        %974 = vmatmul.mubr.bf16.gmra.mrb[0].mxu0 %v655
        %v975 = vpop.f32.mrb[0].mxu0
        %v976 = vadd.f32 %v883, %v975
        %v977 = vpop.f32.mrb[0].mxu0
        %v978 = vpop.f32.mrb[0].mxu0
        %v979 = vadd.f32 %v883, %v978
        %v980 = vpop.f32.mrb[0].mxu0
        %981 = vmatprep.mubr.bf16.mxu0 0
        %982 = vmatmul.mubr.bf16.gmra.mrb[0].mxu0 %v656
        %v983 = vpop.f32.mrb[0].mxu0
        %v984 = vadd.f32 %v883, %v983
        %v985 = vpop.f32.mrb[0].mxu0
        %v986 = vpop.f32.mrb[0].mxu0
        %v987 = vadd.f32 %v883, %v986
        %v988 = vpop.f32.mrb[0].mxu0
        %989 = vmatprep.mubr.bf16.mxu0 0
        %990 = vmatmul.mubr.bf16.gmra.mrb[0].mxu0 %v657
        %v991 = vpop.f32.mrb[0].mxu0
        %v992 = vadd.f32 %v883, %v991
        %v993 = vpop.f32.mrb[0].mxu0
        %v994 = vpop.f32.mrb[0].mxu0
        %v995 = vadd.f32 %v883, %v994
        %v996 = vpop.f32.mrb[0].mxu0
        %997 = vmatprep.mubr.bf16.mxu0 0
        %998 = vmatmul.mubr.bf16.gmra.mrb[0].mxu0 %v658
        %v999 = vpop.f32.mrb[0].mxu0
        %v1000 = vadd.f32 %v883, %v999
        %v1001 = vpop.f32.mrb[0].mxu0
        %v1002 = vpop.f32.mrb[0].mxu0
        %v1003 = vadd.f32 %v883, %v1002
        %v1004 = vpop.f32.mrb[0].mxu0
        %1005 = vmatprep.mubr.bf16.mxu0 0
        %1006 = vmatmul.mubr.bf16.gmra.mrb[0].mxu0 %v659
        %v1007 = vpop.f32.mrb[0].mxu0
        %v1008 = vadd.f32 %v883, %v1007
        %v1009 = vpop.f32.mrb[0].mxu0
        %v1010 = vpop.f32.mrb[0].mxu0
        %v1011 = vadd.f32 %v883, %v1010
        %v1012 = vpop.f32.mrb[0].mxu0
        %1013 = vmatprep.mubr.bf16.mxu0 0
        %1014 = vmatmul.mubr.bf16.gmra.mrb[0].mxu0 %v660
        %v1015 = vpop.f32.mrb[0].mxu0
        %v1016 = vadd.f32 %v883, %v1015
        %v1017 = vpop.f32.mrb[0].mxu0
        %v1018 = vpop.f32.mrb[0].mxu0
        %v1019 = vadd.f32 %v883, %v1018
        %v1020 = vpop.f32.mrb[0].mxu0
        %1021 = vmatprep.mubr.bf16.mxu0 0
        %1022 = vmatmul.mubr.bf16.gmra.mrb[0].mxu0 %v661
        %v1023 = vpop.f32.mrb[0].mxu0
        %v1024 = vadd.f32 %v883, %v1023
        %v1025 = vpop.f32.mrb[0].mxu0
        %v1026 = vpop.f32.mrb[0].mxu0
        %v1027 = vadd.f32 %v883, %v1026
        %v1028 = vpop.f32.mrb[0].mxu0
        %1029 = vdwg.mxu0
        %s1030 = smul.addr %s687, 4
        %s1031 = scalar_lea.vmem %s7, %s1030
        %v1032 = vld [vmem:[%s1031] sm:$0xf]
        %v1033 = vld [vmem:[%s1031 + $0x4] sm:$0xf]
        %v1034 = vld [vmem:[%s1031 + $0x8] sm:$0xf]
        %v1035 = vld [vmem:[%s1031 + $0xc] sm:$0xf]
        %v1036 = vld [vmem:[%s1031 + $0x10] sm:$0xf]
        %v1037 = vld [vmem:[%s1031 + $0x14] sm:$0xf]
        %v1038 = vld [vmem:[%s1031 + $0x18] sm:$0xf]
        %v1039 = vld [vmem:[%s1031 + $0x1c] sm:$0xf]
        %v1040 = vld [vmem:[%s1031 + $0x20] sm:$0xf]
        %v1041 = vld [vmem:[%s1031 + $0x24] sm:$0xf]
        %v1042 = vld [vmem:[%s1031 + $0x28] sm:$0xf]
        %v1043 = vld [vmem:[%s1031 + $0x2c] sm:$0xf]
        %v1044 = vld [vmem:[%s1031 + $0x30] sm:$0xf]
        %v1045 = vld [vmem:[%s1031 + $0x34] sm:$0xf]
        %v1046 = vld [vmem:[%s1031 + $0x38] sm:$0xf]
        %v1047 = vld [vmem:[%s1031 + $0x3c] sm:$0xf]
        %s1048 = scalar_lea.vmem %s8, %s682
        %v1049 = vld [vmem:[%s1048] sm:$0x1]
        %v1051 = vlaneseq
        %v1052 = vshrl.u32 %v1051, 7
        %v1053 = vsub.s32 0, %v1052
        %v1054 = vrot.slane %v1049, %v1053
        %v1072 = vunpack.c.l.b16 %v1032
        %v1073 = vunpack.c.l.b16 %v1033
        %v1074 = vunpack.c.l.b16 %v1034
        %v1075 = vunpack.c.l.b16 %v1035
        %v1076 = vunpack.c.l.b16 %v1036
        %v1077 = vunpack.c.l.b16 %v1037
        %v1078 = vunpack.c.l.b16 %v1038
        %v1079 = vunpack.c.l.b16 %v1039
        %v1080 = vunpack.c.l.b16 %v1040
        %v1081 = vunpack.c.l.b16 %v1041
        %v1082 = vunpack.c.l.b16 %v1042
        %v1083 = vunpack.c.l.b16 %v1043
        %v1084 = vunpack.c.l.b16 %v1044
        %v1085 = vunpack.c.l.b16 %v1045
        %v1086 = vunpack.c.l.b16 %v1046
        %v1087 = vunpack.c.l.b16 %v1047
        %v1088 = vpack.c.b16 %v1073, %v1072
        %v1089 = vpack.c.b16 %v1075, %v1074
        %v1090 = vpack.c.b16 %v1077, %v1076
        %v1091 = vpack.c.b16 %v1079, %v1078
        %v1092 = vpack.c.b16 %v1081, %v1080
        %v1093 = vpack.c.b16 %v1083, %v1082
        %v1094 = vpack.c.b16 %v1085, %v1084
        %v1095 = vpack.c.b16 %v1087, %v1086
        %1104 = vmatprep.subr.bf16.mxu0 0
        %1105 = vmatpush1.bf16.msra.mxu0 %v1088
        %1106 = vmatprep.subr.bf16.mxu0 0
        %1107 = vmatpush1.bf16.msra.mxu0 %v1089
        %1108 = vmatprep.subr.bf16.mxu0 0
        %1109 = vmatpush1.bf16.msra.mxu0 %v1090
        %1110 = vmatprep.subr.bf16.mxu0 0
        %1111 = vmatpush1.bf16.msra.mxu0 %v1091
        %1112 = vmatprep.subr.bf16.mxu0 0
        %1113 = vmatpush1.bf16.msra.mxu0 %v1092
        %1114 = vmatprep.subr.bf16.mxu0 0
        %1115 = vmatpush1.bf16.msra.mxu0 %v1093
        %1116 = vmatprep.subr.bf16.mxu0 0
        %1117 = vmatpush1.bf16.msra.mxu0 %v1094
        %1118 = vmatprep.subr.bf16.mxu0 0
        %1119 = vmatpush1.bf16.msra.mxu0 %v1095
        %1120 = vmatprep.subr.bf16.mxu0 0
        %1121 = vmatpush1.bf16.msra.mxu0 0
        %1122 = vmatprep.subr.bf16.mxu0 0
        %1123 = vmatpush1.bf16.msra.mxu0 0
        %1124 = vmatprep.subr.bf16.mxu0 0
        %1125 = vmatpush1.bf16.msra.mxu0 0
        %1126 = vmatprep.subr.bf16.mxu0 0
        %1127 = vmatpush1.bf16.msra.mxu0 0
        %1128 = vmatprep.subr.bf16.mxu0 0
        %1129 = vmatpush1.bf16.msra.mxu0 0
        %1130 = vmatprep.subr.bf16.mxu0 0
        %1131 = vmatpush1.bf16.msra.mxu0 0
        %1132 = vmatprep.subr.bf16.mxu0 0
        %1133 = vmatpush1.bf16.msra.mxu0 0
        %1134 = vmatprep.subr.bf16.mxu0 0
        %1135 = vmatpush1.bf16.msra.mxu0 0
        %1136 = vmatprep.mubr.bf16.mxu0 0
        %1137 = vmatmul.mubr.bf16.gmra.mrb[0].mxu0 %v654
        %v1138 = vpop.f32.mrb[0].mxu0
        %v1139 = vadd.f32 %v1054, %v1138
        %v1140 = vpop.f32.mrb[0].mxu0
        %v1141 = vpop.f32.mrb[0].mxu0
        %v1142 = vadd.f32 %v1054, %v1141
        %v1143 = vpop.f32.mrb[0].mxu0
        %1144 = vmatprep.mubr.bf16.mxu0 0
        %1145 = vmatmul.mubr.bf16.gmra.mrb[0].mxu0 %v655
        %v1146 = vpop.f32.mrb[0].mxu0
        %v1147 = vadd.f32 %v1054, %v1146
        %v1148 = vpop.f32.mrb[0].mxu0
        %v1149 = vpop.f32.mrb[0].mxu0
        %v1150 = vadd.f32 %v1054, %v1149
        %v1151 = vpop.f32.mrb[0].mxu0
        %1152 = vmatprep.mubr.bf16.mxu0 0
        %1153 = vmatmul.mubr.bf16.gmra.mrb[0].mxu0 %v656
        %v1154 = vpop.f32.mrb[0].mxu0
        %v1155 = vadd.f32 %v1054, %v1154
        %v1156 = vpop.f32.mrb[0].mxu0
        %v1157 = vpop.f32.mrb[0].mxu0
        %v1158 = vadd.f32 %v1054, %v1157
        %v1159 = vpop.f32.mrb[0].mxu0
        %1160 = vmatprep.mubr.bf16.mxu0 0
        %1161 = vmatmul.mubr.bf16.gmra.mrb[0].mxu0 %v657
        %v1162 = vpop.f32.mrb[0].mxu0
        %v1163 = vadd.f32 %v1054, %v1162
        %v1164 = vpop.f32.mrb[0].mxu0
        %v1165 = vpop.f32.mrb[0].mxu0
        %v1166 = vadd.f32 %v1054, %v1165
        %v1167 = vpop.f32.mrb[0].mxu0
        %1168 = vmatprep.mubr.bf16.mxu0 0
        %1169 = vmatmul.mubr.bf16.gmra.mrb[0].mxu0 %v658
        %v1170 = vpop.f32.mrb[0].mxu0
        %v1171 = vadd.f32 %v1054, %v1170
        %v1172 = vpop.f32.mrb[0].mxu0
        %v1173 = vpop.f32.mrb[0].mxu0
        %v1174 = vadd.f32 %v1054, %v1173
        %v1175 = vpop.f32.mrb[0].mxu0
        %1176 = vmatprep.mubr.bf16.mxu0 0
        %1177 = vmatmul.mubr.bf16.gmra.mrb[0].mxu0 %v659
        %v1178 = vpop.f32.mrb[0].mxu0
        %v1179 = vadd.f32 %v1054, %v1178
        %v1180 = vpop.f32.mrb[0].mxu0
        %v1181 = vpop.f32.mrb[0].mxu0
        %v1182 = vadd.f32 %v1054, %v1181
        %v1183 = vpop.f32.mrb[0].mxu0
        %1184 = vmatprep.mubr.bf16.mxu0 0
        %1185 = vmatmul.mubr.bf16.gmra.mrb[0].mxu0 %v660
        %v1186 = vpop.f32.mrb[0].mxu0
        %v1187 = vadd.f32 %v1054, %v1186
        %v1188 = vpop.f32.mrb[0].mxu0
        %v1189 = vpop.f32.mrb[0].mxu0
        %v1190 = vadd.f32 %v1054, %v1189
        %v1191 = vpop.f32.mrb[0].mxu0
        %1192 = vmatprep.mubr.bf16.mxu0 0
        %1193 = vmatmul.mubr.bf16.gmra.mrb[0].mxu0 %v661
        %v1194 = vpop.f32.mrb[0].mxu0
        %v1195 = vadd.f32 %v1054, %v1194
        %v1196 = vpop.f32.mrb[0].mxu0
        %v1197 = vpop.f32.mrb[0].mxu0
        %v1198 = vadd.f32 %v1054, %v1197
        %v1199 = vpop.f32.mrb[0].mxu0
        %1200 = vdwg.mxu0
        %v1201 = vmul.f32 %v797, 0.17677669
        %v1202 = vmul.f32 %v800, 0.17677669
        %v1203 = vmul.f32 %v805, 0.17677669
        %v1204 = vmul.f32 %v808, 0.17677669
        %v1205 = vmul.f32 %v813, 0.17677669
        %v1206 = vmul.f32 %v816, 0.17677669
        %v1207 = vmul.f32 %v821, 0.17677669
        %v1208 = vmul.f32 %v824, 0.17677669
        %v1209 = vmul.f32 %v829, 0.17677669
        %v1210 = vmul.f32 %v832, 0.17677669
        %v1211 = vmul.f32 %v837, 0.17677669
        %v1212 = vmul.f32 %v840, 0.17677669
        %v1213 = vmul.f32 %v845, 0.17677669
        %v1214 = vmul.f32 %v848, 0.17677669
        %v1215 = vmul.f32 %v853, 0.17677669
        %v1216 = vmul.f32 %v856, 0.17677669
        %v1217 = vpack.c.bf16 %v1202, %v1201
        %v1218 = vpack.c.bf16 %v1204, %v1203
        %v1219 = vpack.c.bf16 %v1206, %v1205
        %v1220 = vpack.c.bf16 %v1208, %v1207
        %v1221 = vpack.c.bf16 %v1210, %v1209
        %v1222 = vpack.c.bf16 %v1212, %v1211
        %v1223 = vpack.c.bf16 %v1214, %v1213
        %v1224 = vpack.c.bf16 %v1216, %v1215
        %v1225 = vpack.c.bf16 %v971, %v968
        %v1226 = vpack.c.bf16 %v979, %v976
        %v1227 = vpack.c.bf16 %v987, %v984
        %v1228 = vpack.c.bf16 %v995, %v992
        %v1229 = vpack.c.bf16 %v1003, %v1000
        %v1230 = vpack.c.bf16 %v1011, %v1008
        %v1231 = vpack.c.bf16 %v1019, %v1016
        %v1232 = vpack.c.bf16 %v1027, %v1024
        %vm1233 = vcmask 261120
        %v1235 = vsel %vm1233, %v1217, 0
        %v1238 = vsel %vm1233, %v1218, 0
        %v1241 = vsel %vm1233, %v1219, 0
        %v1244 = vsel %vm1233, %v1220, 0
        %v1247 = vsel %vm1233, %v1221, 0
        %v1250 = vsel %vm1233, %v1222, 0
        %v1253 = vsel %vm1233, %v1223, 0
        %v1256 = vsel %vm1233, %v1224, 0
        %v1259 = vsel %vm1233, %v1225, 0
        %v1262 = vsel %vm1233, %v1226, 0
        %v1265 = vsel %vm1233, %v1227, 0
        %v1268 = vsel %vm1233, %v1228, 0
        %v1271 = vsel %vm1233, %v1229, 0
        %v1274 = vsel %vm1233, %v1230, 0
        %v1277 = vsel %vm1233, %v1231, 0
        %v1280 = vsel %vm1233, %v1232, 0
        %1282 = vmatprep.subr.bf16.mxu0 0
        %1283 = vmatpush1.bf16.xpose.msra.mxu0 %v1259
        %1284 = vmatprep.subr.bf16.mxu0 0
        %1285 = vmatpush1.bf16.xpose.msra.mxu0 %v1262
        %1286 = vmatprep.subr.bf16.mxu0 0
        %1287 = vmatpush1.bf16.xpose.msra.mxu0 %v1265
        %1288 = vmatprep.subr.bf16.mxu0 0
        %1289 = vmatpush1.bf16.xpose.msra.mxu0 %v1268
        %1290 = vmatprep.subr.bf16.mxu0 0
        %1291 = vmatpush1.bf16.xpose.msra.mxu0 %v1271
        %1292 = vmatprep.subr.bf16.mxu0 0
        %1293 = vmatpush1.bf16.xpose.msra.mxu0 %v1274
        %1294 = vmatprep.subr.bf16.mxu0 0
        %1295 = vmatpush1.bf16.xpose.msra.mxu0 %v1277
        %1296 = vmatprep.subr.bf16.mxu0 0
        %1297 = vmatpush1.bf16.xpose.msra.mxu0 %v1280
        %1298 = vmatprep.subr.bf16.mxu0 0
        %1299 = vmatpush1.bf16.xpose.msra.mxu0 0
        %1300 = vmatprep.subr.bf16.mxu0 0
        %1301 = vmatpush1.bf16.xpose.msra.mxu0 0
        %1302 = vmatprep.subr.bf16.mxu0 0
        %1303 = vmatpush1.bf16.xpose.msra.mxu0 0
        %1304 = vmatprep.subr.bf16.mxu0 0
        %1305 = vmatpush1.bf16.xpose.msra.mxu0 0
        %1306 = vmatprep.subr.bf16.mxu0 0
        %1307 = vmatpush1.bf16.xpose.msra.mxu0 0
        %1308 = vmatprep.subr.bf16.mxu0 0
        %1309 = vmatpush1.bf16.xpose.msra.mxu0 0
        %1310 = vmatprep.subr.bf16.mxu0 0
        %1311 = vmatpush1.bf16.xpose.msra.mxu0 0
        %1312 = vmatprep.subr.bf16.mxu0 0
        %1313 = vmatpush1.bf16.xpose.msra.mxu0 0
        %1314 = vmatprep.mubr.bf16.mxu0 0
        %1315 = vmatmul.mubr.bf16.gmra.mrb[0].mxu0 %v1235
        %v1316 = vpop.f32.mrb[0].mxu0
        %v1317 = vadd.f32 0.0, %v1316
        %v1318 = vpop.f32.mrb[0].mxu0
        %v1319 = vpop.f32.mrb[0].mxu0
        %v1320 = vadd.f32 0.0, %v1319
        %v1321 = vpop.f32.mrb[0].mxu0
        %1322 = vmatprep.mubr.bf16.mxu0 0
        %1323 = vmatmul.mubr.bf16.gmra.mrb[0].mxu0 %v1238
        %v1324 = vpop.f32.mrb[0].mxu0
        %v1325 = vadd.f32 0.0, %v1324
        %v1326 = vpop.f32.mrb[0].mxu0
        %v1327 = vpop.f32.mrb[0].mxu0
        %v1328 = vadd.f32 0.0, %v1327
        %v1329 = vpop.f32.mrb[0].mxu0
        %1330 = vmatprep.mubr.bf16.mxu0 0
        %1331 = vmatmul.mubr.bf16.gmra.mrb[0].mxu0 %v1241
        %v1332 = vpop.f32.mrb[0].mxu0
        %v1333 = vadd.f32 0.0, %v1332
        %v1334 = vpop.f32.mrb[0].mxu0
        %v1335 = vpop.f32.mrb[0].mxu0
        %v1336 = vadd.f32 0.0, %v1335
        %v1337 = vpop.f32.mrb[0].mxu0
        %1338 = vmatprep.mubr.bf16.mxu0 0
        %1339 = vmatmul.mubr.bf16.gmra.mrb[0].mxu0 %v1244
        %v1340 = vpop.f32.mrb[0].mxu0
        %v1341 = vadd.f32 0.0, %v1340
        %v1342 = vpop.f32.mrb[0].mxu0
        %v1343 = vpop.f32.mrb[0].mxu0
        %v1344 = vadd.f32 0.0, %v1343
        %v1345 = vpop.f32.mrb[0].mxu0
        %1346 = vmatprep.mubr.bf16.mxu0 0
        %1347 = vmatmul.mubr.bf16.gmra.mrb[0].mxu0 %v1247
        %v1348 = vpop.f32.mrb[0].mxu0
        %v1349 = vadd.f32 0.0, %v1348
        %v1350 = vpop.f32.mrb[0].mxu0
        %v1351 = vpop.f32.mrb[0].mxu0
        %v1352 = vadd.f32 0.0, %v1351
        %v1353 = vpop.f32.mrb[0].mxu0
        %1354 = vmatprep.mubr.bf16.mxu0 0
        %1355 = vmatmul.mubr.bf16.gmra.mrb[0].mxu0 %v1250
        %v1356 = vpop.f32.mrb[0].mxu0
        %v1357 = vadd.f32 0.0, %v1356
        %v1358 = vpop.f32.mrb[0].mxu0
        %v1359 = vpop.f32.mrb[0].mxu0
        %v1360 = vadd.f32 0.0, %v1359
        %v1361 = vpop.f32.mrb[0].mxu0
        %1362 = vmatprep.mubr.bf16.mxu0 0
        %1363 = vmatmul.mubr.bf16.gmra.mrb[0].mxu0 %v1253
        %v1364 = vpop.f32.mrb[0].mxu0
        %v1365 = vadd.f32 0.0, %v1364
        %v1366 = vpop.f32.mrb[0].mxu0
        %v1367 = vpop.f32.mrb[0].mxu0
        %v1368 = vadd.f32 0.0, %v1367
        %v1369 = vpop.f32.mrb[0].mxu0
        %1370 = vmatprep.mubr.bf16.mxu0 0
        %1371 = vmatmul.mubr.bf16.gmra.mrb[0].mxu0 %v1256
        %v1372 = vpop.f32.mrb[0].mxu0
        %v1373 = vadd.f32 0.0, %v1372
        %v1374 = vpop.f32.mrb[0].mxu0
        %v1375 = vpop.f32.mrb[0].mxu0
        %v1376 = vadd.f32 0.0, %v1375
        %v1377 = vpop.f32.mrb[0].mxu0
        %1378 = vdwg.mxu0
        %v1379 = vsel %vm680, 1, 0
        %vm1380 = vcmp.eq.s32.totalorder %v1379, 1
        %v1381 = vsel %vm1380, %v1317, -1e+30
        %v1382 = vsel %vm1380, %v1320, -1e+30
        %v1383 = vsel %vm1380, %v1325, -1e+30
        %v1384 = vsel %vm1380, %v1328, -1e+30
        %v1385 = vsel %vm1380, %v1333, -1e+30
        %v1386 = vsel %vm1380, %v1336, -1e+30
        %v1387 = vsel %vm1380, %v1341, -1e+30
        %v1388 = vsel %vm1380, %v1344, -1e+30
        %v1389 = vsel %vm1380, %v1349, -1e+30
        %v1390 = vsel %vm1380, %v1352, -1e+30
        %v1391 = vsel %vm1380, %v1357, -1e+30
        %v1392 = vsel %vm1380, %v1360, -1e+30
        %v1393 = vsel %vm1380, %v1365, -1e+30
        %v1394 = vsel %vm1380, %v1368, -1e+30
        %v1395 = vsel %vm1380, %v1373, -1e+30
        %v1396 = vsel %vm1380, %v1376, -1e+30
        %1397 = vmax.xlane.f32.xlu0 %v1381
        %v1398 = vpop.xlane.xlu0 %1397
        %1399 = vmax.xlane.f32.xlu0 %v1382
        %v1400 = vpop.xlane.xlu0 %1399
        %1401 = vmax.xlane.f32.xlu0 %v1383
        %v1402 = vpop.xlane.xlu0 %1401
        %1403 = vmax.xlane.f32.xlu0 %v1384
        %v1404 = vpop.xlane.xlu0 %1403
        %1405 = vmax.xlane.f32.xlu0 %v1385
        %v1406 = vpop.xlane.xlu0 %1405
        %1407 = vmax.xlane.f32.xlu0 %v1386
        %v1408 = vpop.xlane.xlu0 %1407
        %1409 = vmax.xlane.f32.xlu0 %v1387
        %v1410 = vpop.xlane.xlu0 %1409
        %1411 = vmax.xlane.f32.xlu0 %v1388
        %v1412 = vpop.xlane.xlu0 %1411
        %1413 = vmax.xlane.f32.xlu0 %v1389
        %v1414 = vpop.xlane.xlu0 %1413
        %1415 = vmax.xlane.f32.xlu0 %v1390
        %v1416 = vpop.xlane.xlu0 %1415
        %1417 = vmax.xlane.f32.xlu0 %v1391
        %v1418 = vpop.xlane.xlu0 %1417
        %1419 = vmax.xlane.f32.xlu0 %v1392
        %v1420 = vpop.xlane.xlu0 %1419
        %1421 = vmax.xlane.f32.xlu0 %v1393
        %v1422 = vpop.xlane.xlu0 %1421
        %1423 = vmax.xlane.f32.xlu0 %v1394
        %v1424 = vpop.xlane.xlu0 %1423
        %1425 = vmax.xlane.f32.xlu0 %v1395
        %v1426 = vpop.xlane.xlu0 %1425
        %1427 = vmax.xlane.f32.xlu0 %v1396
        %v1428 = vpop.xlane.xlu0 %1427
        %v1429 = vsub.f32 %v1381, %v1398
        %v1430 = vsub.f32 %v1382, %v1400
        %v1431 = vsub.f32 %v1383, %v1402
        %v1432 = vsub.f32 %v1384, %v1404
        %v1433 = vsub.f32 %v1385, %v1406
        %v1434 = vsub.f32 %v1386, %v1408
        %v1435 = vsub.f32 %v1387, %v1410
        %v1436 = vsub.f32 %v1388, %v1412
        %v1437 = vsub.f32 %v1389, %v1414
        %v1438 = vsub.f32 %v1390, %v1416
        %v1439 = vsub.f32 %v1391, %v1418
        %v1440 = vsub.f32 %v1392, %v1420
        %v1441 = vsub.f32 %v1393, %v1422
        %v1442 = vsub.f32 %v1394, %v1424
        %v1443 = vsub.f32 %v1395, %v1426
        %v1444 = vsub.f32 %v1396, %v1428
        %v1445 = vmul.f32 %v1429, 1.442695
        %v1446 = vpow.pop %v1445
        %v1447 = vmul.f32 %v1430, 1.442695
        %v1448 = vpow.pop %v1447
        %v1449 = vmul.f32 %v1431, 1.442695
        %v1450 = vpow.pop %v1449
        %v1451 = vmul.f32 %v1432, 1.442695
        %v1452 = vpow.pop %v1451
        %v1453 = vmul.f32 %v1433, 1.442695
        %v1454 = vpow.pop %v1453
        %v1455 = vmul.f32 %v1434, 1.442695
        %v1456 = vpow.pop %v1455
        %v1457 = vmul.f32 %v1435, 1.442695
        %v1458 = vpow.pop %v1457
        %v1459 = vmul.f32 %v1436, 1.442695
        %v1460 = vpow.pop %v1459
        %v1461 = vmul.f32 %v1437, 1.442695
        %v1462 = vpow.pop %v1461
        %v1463 = vmul.f32 %v1438, 1.442695
        %v1464 = vpow.pop %v1463
        %v1465 = vmul.f32 %v1439, 1.442695
        %v1466 = vpow.pop %v1465
        %v1467 = vmul.f32 %v1440, 1.442695
        %v1468 = vpow.pop %v1467
        %v1469 = vmul.f32 %v1441, 1.442695
        %v1470 = vpow.pop %v1469
        %v1471 = vmul.f32 %v1442, 1.442695
        %v1472 = vpow.pop %v1471
        %v1473 = vmul.f32 %v1443, 1.442695
        %v1474 = vpow.pop %v1473
        %v1475 = vmul.f32 %v1444, 1.442695
        %v1476 = vpow.pop %v1475
        %1477 = vadd.xlane.f32.xlu0 %v1446
        %v1478 = vpop.xlane.xlu0 %1477
        %1479 = vadd.xlane.f32.xlu0 %v1448
        %v1480 = vpop.xlane.xlu0 %1479
        %1481 = vadd.xlane.f32.xlu0 %v1450
        %v1482 = vpop.xlane.xlu0 %1481
        %1483 = vadd.xlane.f32.xlu0 %v1452
        %v1484 = vpop.xlane.xlu0 %1483
        %1485 = vadd.xlane.f32.xlu0 %v1454
        %v1486 = vpop.xlane.xlu0 %1485
        %1487 = vadd.xlane.f32.xlu0 %v1456
        %v1488 = vpop.xlane.xlu0 %1487
        %1489 = vadd.xlane.f32.xlu0 %v1458
        %v1490 = vpop.xlane.xlu0 %1489
        %1491 = vadd.xlane.f32.xlu0 %v1460
        %v1492 = vpop.xlane.xlu0 %1491
        %1493 = vadd.xlane.f32.xlu0 %v1462
        %v1494 = vpop.xlane.xlu0 %1493
        %1495 = vadd.xlane.f32.xlu0 %v1464
        %v1496 = vpop.xlane.xlu0 %1495
        %1497 = vadd.xlane.f32.xlu0 %v1466
        %v1498 = vpop.xlane.xlu0 %1497
        %1499 = vadd.xlane.f32.xlu0 %v1468
        %v1500 = vpop.xlane.xlu0 %1499
        %1501 = vadd.xlane.f32.xlu0 %v1470
        %v1502 = vpop.xlane.xlu0 %1501
        %1503 = vadd.xlane.f32.xlu0 %v1472
        %v1504 = vpop.xlane.xlu0 %1503
        %1505 = vadd.xlane.f32.xlu0 %v1474
        %v1506 = vpop.xlane.xlu0 %1505
        %1507 = vadd.xlane.f32.xlu0 %v1476
        %v1508 = vpop.xlane.xlu0 %1507
        %v1509 = vrcp.pop %v1478
        %v1510 = vrcp.pop %v1480
        %v1511 = vrcp.pop %v1482
        %v1512 = vrcp.pop %v1484
        %v1513 = vrcp.pop %v1486
        %v1514 = vrcp.pop %v1488
        %v1515 = vrcp.pop %v1490
        %v1516 = vrcp.pop %v1492
        %v1517 = vrcp.pop %v1494
        %v1518 = vrcp.pop %v1496
        %v1519 = vrcp.pop %v1498
        %v1520 = vrcp.pop %v1500
        %v1521 = vrcp.pop %v1502
        %v1522 = vrcp.pop %v1504
        %v1523 = vrcp.pop %v1506
        %v1524 = vrcp.pop %v1508
        %v1525 = vmul.f32 %v1446, %v1509
        %v1526 = vmul.f32 %v1448, %v1510
        %v1527 = vmul.f32 %v1450, %v1511
        %v1528 = vmul.f32 %v1452, %v1512
        %v1529 = vmul.f32 %v1454, %v1513
        %v1530 = vmul.f32 %v1456, %v1514
        %v1531 = vmul.f32 %v1458, %v1515
        %v1532 = vmul.f32 %v1460, %v1516
        %v1533 = vmul.f32 %v1462, %v1517
        %v1534 = vmul.f32 %v1464, %v1518
        %v1535 = vmul.f32 %v1466, %v1519
        %v1536 = vmul.f32 %v1468, %v1520
        %v1537 = vmul.f32 %v1470, %v1521
        %v1538 = vmul.f32 %v1472, %v1522
        %v1539 = vmul.f32 %v1474, %v1523
        %v1540 = vmul.f32 %v1476, %v1524
        %v1541 = vpack.c.bf16 %v1526, %v1525
        %v1542 = vpack.c.bf16 %v1528, %v1527
        %v1543 = vpack.c.bf16 %v1530, %v1529
        %v1544 = vpack.c.bf16 %v1532, %v1531
        %v1545 = vpack.c.bf16 %v1534, %v1533
        %v1546 = vpack.c.bf16 %v1536, %v1535
        %v1547 = vpack.c.bf16 %v1538, %v1537
        %v1548 = vpack.c.bf16 %v1540, %v1539
        %v1549 = vpack.c.bf16 %v1142, %v1139
        %v1550 = vpack.c.bf16 %v1150, %v1147
        %v1551 = vpack.c.bf16 %v1158, %v1155
        %v1552 = vpack.c.bf16 %v1166, %v1163
        %v1553 = vpack.c.bf16 %v1174, %v1171
        %v1554 = vpack.c.bf16 %v1182, %v1179
        %v1555 = vpack.c.bf16 %v1190, %v1187
        %v1556 = vpack.c.bf16 %v1198, %v1195
        %1557 = vmatprep.subr.bf16.mxu0 0
        %1558 = vmatpush1.bf16.msra.mxu0 %v1549
        %1559 = vmatprep.subr.bf16.mxu0 0
        %1560 = vmatpush1.bf16.msra.mxu0 %v1550
        %1561 = vmatprep.subr.bf16.mxu0 0
        %1562 = vmatpush1.bf16.msra.mxu0 %v1551
        %1563 = vmatprep.subr.bf16.mxu0 0
        %1564 = vmatpush1.bf16.msra.mxu0 %v1552
        %1565 = vmatprep.subr.bf16.mxu0 0
        %1566 = vmatpush1.bf16.msra.mxu0 %v1553
        %1567 = vmatprep.subr.bf16.mxu0 0
        %1568 = vmatpush1.bf16.msra.mxu0 %v1554
        %1569 = vmatprep.subr.bf16.mxu0 0
        %1570 = vmatpush1.bf16.msra.mxu0 %v1555
        %1571 = vmatprep.subr.bf16.mxu0 0
        %1572 = vmatpush1.bf16.msra.mxu0 %v1556
        %1573 = vmatprep.subr.bf16.mxu0 0
        %1574 = vmatpush1.bf16.msra.mxu0 0
        %1575 = vmatprep.subr.bf16.mxu0 0
        %1576 = vmatpush1.bf16.msra.mxu0 0
        %1577 = vmatprep.subr.bf16.mxu0 0
        %1578 = vmatpush1.bf16.msra.mxu0 0
        %1579 = vmatprep.subr.bf16.mxu0 0
        %1580 = vmatpush1.bf16.msra.mxu0 0
        %1581 = vmatprep.subr.bf16.mxu0 0
        %1582 = vmatpush1.bf16.msra.mxu0 0
        %1583 = vmatprep.subr.bf16.mxu0 0
        %1584 = vmatpush1.bf16.msra.mxu0 0
        %1585 = vmatprep.subr.bf16.mxu0 0
        %1586 = vmatpush1.bf16.msra.mxu0 0
        %1587 = vmatprep.subr.bf16.mxu0 0
        %1588 = vmatpush1.bf16.msra.mxu0 0
        %1589 = vmatprep.mubr.bf16.mxu0 0
        %1590 = vmatmul.mubr.bf16.gmra.mrb[0].mxu0 %v1541
        %v1591 = vpop.f32.mrb[0].mxu0
        %v1592 = vadd.f32 0.0, %v1591
        %v1593 = vpop.f32.mrb[0].mxu0
        %v1594 = vpop.f32.mrb[0].mxu0
        %v1595 = vadd.f32 0.0, %v1594
        %v1596 = vpop.f32.mrb[0].mxu0
        %1597 = vmatprep.mubr.bf16.mxu0 0
        %1598 = vmatmul.mubr.bf16.gmra.mrb[0].mxu0 %v1542
        %v1599 = vpop.f32.mrb[0].mxu0
        %v1600 = vadd.f32 0.0, %v1599
        %v1601 = vpop.f32.mrb[0].mxu0
        %v1602 = vpop.f32.mrb[0].mxu0
        %v1603 = vadd.f32 0.0, %v1602
        %v1604 = vpop.f32.mrb[0].mxu0
        %1605 = vmatprep.mubr.bf16.mxu0 0
        %1606 = vmatmul.mubr.bf16.gmra.mrb[0].mxu0 %v1543
        %v1607 = vpop.f32.mrb[0].mxu0
        %v1608 = vadd.f32 0.0, %v1607
        %v1609 = vpop.f32.mrb[0].mxu0
        %v1610 = vpop.f32.mrb[0].mxu0
        %v1611 = vadd.f32 0.0, %v1610
        %v1612 = vpop.f32.mrb[0].mxu0
        %1613 = vmatprep.mubr.bf16.mxu0 0
        %1614 = vmatmul.mubr.bf16.gmra.mrb[0].mxu0 %v1544
        %v1615 = vpop.f32.mrb[0].mxu0
        %v1616 = vadd.f32 0.0, %v1615
        %v1617 = vpop.f32.mrb[0].mxu0
        %v1618 = vpop.f32.mrb[0].mxu0
        %v1619 = vadd.f32 0.0, %v1618
        %v1620 = vpop.f32.mrb[0].mxu0
        %1621 = vmatprep.mubr.bf16.mxu0 0
        %1622 = vmatmul.mubr.bf16.gmra.mrb[0].mxu0 %v1545
        %v1623 = vpop.f32.mrb[0].mxu0
        %v1624 = vadd.f32 0.0, %v1623
        %v1625 = vpop.f32.mrb[0].mxu0
        %v1626 = vpop.f32.mrb[0].mxu0
        %v1627 = vadd.f32 0.0, %v1626
        %v1628 = vpop.f32.mrb[0].mxu0
        %1629 = vmatprep.mubr.bf16.mxu0 0
        %1630 = vmatmul.mubr.bf16.gmra.mrb[0].mxu0 %v1546
        %v1631 = vpop.f32.mrb[0].mxu0
        %v1632 = vadd.f32 0.0, %v1631
        %v1633 = vpop.f32.mrb[0].mxu0
        %v1634 = vpop.f32.mrb[0].mxu0
        %v1635 = vadd.f32 0.0, %v1634
        %v1636 = vpop.f32.mrb[0].mxu0
        %1637 = vmatprep.mubr.bf16.mxu0 0
        %1638 = vmatmul.mubr.bf16.gmra.mrb[0].mxu0 %v1547
        %v1639 = vpop.f32.mrb[0].mxu0
        %v1640 = vadd.f32 0.0, %v1639
        %v1641 = vpop.f32.mrb[0].mxu0
        %v1642 = vpop.f32.mrb[0].mxu0
        %v1643 = vadd.f32 0.0, %v1642
        %v1644 = vpop.f32.mrb[0].mxu0
        %1645 = vmatprep.mubr.bf16.mxu0 0
        %1646 = vmatmul.mubr.bf16.gmra.mrb[0].mxu0 %v1548
        %v1647 = vpop.f32.mrb[0].mxu0
        %v1648 = vadd.f32 0.0, %v1647
        %v1649 = vpop.f32.mrb[0].mxu0
        %v1650 = vpop.f32.mrb[0].mxu0
        %v1651 = vadd.f32 0.0, %v1650
        %v1652 = vpop.f32.mrb[0].mxu0
        %1653 = vdwg.mxu0
        %v1654 = vld [vmem:[#allocation2] sm:$0xff]
        %v1655 = vld [vmem:[#allocation2 + $0x8] sm:$0xff]
        %v1656 = vld [vmem:[#allocation2 + $0x10] sm:$0xff]
        %v1657 = vld [vmem:[#allocation2 + $0x18] sm:$0xff]
        %v1658 = vld [vmem:[#allocation2 + $0x20] sm:$0xff]
        %v1659 = vld [vmem:[#allocation2 + $0x28] sm:$0xff]
        %v1660 = vld [vmem:[#allocation2 + $0x30] sm:$0xff]
        %v1661 = vld [vmem:[#allocation2 + $0x38] sm:$0xff]
        %v1662 = vld [vmem:[#allocation2 + $0x40] sm:$0xff]
        %v1663 = vld [vmem:[#allocation2 + $0x48] sm:$0xff]
        %v1664 = vld [vmem:[#allocation2 + $0x50] sm:$0xff]
        %v1665 = vld [vmem:[#allocation2 + $0x58] sm:$0xff]
        %v1666 = vld [vmem:[#allocation2 + $0x60] sm:$0xff]
        %v1667 = vld [vmem:[#allocation2 + $0x68] sm:$0xff]
        %v1668 = vld [vmem:[#allocation2 + $0x70] sm:$0xff]
        %v1669 = vld [vmem:[#allocation2 + $0x78] sm:$0xff]
        %v1670 = vpack.c.bf16 %v1595, %v1592
        %v1671 = vpack.c.bf16 %v1603, %v1600
        %v1672 = vpack.c.bf16 %v1611, %v1608
        %v1673 = vpack.c.bf16 %v1619, %v1616
        %v1674 = vpack.c.bf16 %v1627, %v1624
        %v1675 = vpack.c.bf16 %v1635, %v1632
        %v1676 = vpack.c.bf16 %v1643, %v1640
        %v1677 = vpack.c.bf16 %v1651, %v1648
        %s1678 = smul.u32 %s682, 4
        %s1679 = smul.addr %s1678, 4
        %s1680 = scalar_lea.vmem %s9, %s1679
        %v1681 = vld [vmem:[%s1680] sm:$0xf]
        %v1682 = vld [vmem:[%s1680 + $0x4] sm:$0xf]
        %v1683 = vld [vmem:[%s1680 + $0x8] sm:$0xf]
        %v1684 = vld [vmem:[%s1680 + $0xc] sm:$0xf]
        %v1689 = vunpack.c.l.b16 %v1681
        %v1690 = vunpack.c.l.b16 %v1682
        %v1691 = vunpack.c.l.b16 %v1683
        %v1692 = vunpack.c.l.b16 %v1684
        %v1693 = vpack.c.b16 %v1690, %v1689
        %v1694 = vpack.c.b16 %v1692, %v1691
        %v1698 = vsel %vm1233, %v1670, 0
        %v1701 = vsel %vm1233, %v1671, 0
        %v1704 = vsel %vm1233, %v1672, 0
        %v1707 = vsel %vm1233, %v1673, 0
        %v1710 = vsel %vm1233, %v1674, 0
        %v1713 = vsel %vm1233, %v1675, 0
        %v1716 = vsel %vm1233, %v1676, 0
        %v1719 = vsel %vm1233, %v1677, 0
        %1721 = vmatprep.subr.bf16.mxu0 0
        %1722 = vmatpush1.bf16.msra.mxu0 %v1693
        %1723 = vmatprep.subr.bf16.mxu0 0
        %1724 = vmatpush1.bf16.msra.mxu0 %v1694
        %1725 = vmatprep.subr.bf16.mxu0 0
        %1726 = vmatpush1.bf16.msra.mxu0 0
        %1727 = vmatprep.subr.bf16.mxu0 0
        %1728 = vmatpush1.bf16.msra.mxu0 0
        %1729 = vmatprep.subr.bf16.mxu0 0
        %1730 = vmatpush1.bf16.msra.mxu0 0
        %1731 = vmatprep.subr.bf16.mxu0 0
        %1732 = vmatpush1.bf16.msra.mxu0 0
        %1733 = vmatprep.subr.bf16.mxu0 0
        %1734 = vmatpush1.bf16.msra.mxu0 0
        %1735 = vmatprep.subr.bf16.mxu0 0
        %1736 = vmatpush1.bf16.msra.mxu0 0
        %1737 = vmatprep.subr.bf16.mxu0 0
        %1738 = vmatpush1.bf16.msra.mxu0 0
        %1739 = vmatprep.subr.bf16.mxu0 0
        %1740 = vmatpush1.bf16.msra.mxu0 0
        %1741 = vmatprep.subr.bf16.mxu0 0
        %1742 = vmatpush1.bf16.msra.mxu0 0
        %1743 = vmatprep.subr.bf16.mxu0 0
        %1744 = vmatpush1.bf16.msra.mxu0 0
        %1745 = vmatprep.subr.bf16.mxu0 0
        %1746 = vmatpush1.bf16.msra.mxu0 0
        %1747 = vmatprep.subr.bf16.mxu0 0
        %1748 = vmatpush1.bf16.msra.mxu0 0
        %1749 = vmatprep.subr.bf16.mxu0 0
        %1750 = vmatpush1.bf16.msra.mxu0 0
        %1751 = vmatprep.subr.bf16.mxu0 0
        %1752 = vmatpush1.bf16.msra.mxu0 0
        %1753 = vmatprep.mubr.bf16.mxu0 0
        %1754 = vmatmul.mubr.bf16.gmra.mrb[0].mxu0 %v1698
        %v1755 = vpop.f32.mrb[0].mxu0
        %v1756 = vadd.f32 0.0, %v1755
        %v1757 = vpop.f32.mrb[0].mxu0
        %v1758 = vpop.f32.mrb[0].mxu0
        %v1759 = vadd.f32 0.0, %v1758
        %v1760 = vpop.f32.mrb[0].mxu0
        %1761 = vmatprep.mubr.bf16.mxu0 0
        %1762 = vmatmul.mubr.bf16.gmra.mrb[0].mxu0 %v1701
        %v1763 = vpop.f32.mrb[0].mxu0
        %v1764 = vadd.f32 0.0, %v1763
        %v1765 = vpop.f32.mrb[0].mxu0
        %v1766 = vpop.f32.mrb[0].mxu0
        %v1767 = vadd.f32 0.0, %v1766
        %v1768 = vpop.f32.mrb[0].mxu0
        %1769 = vmatprep.mubr.bf16.mxu0 0
        %1770 = vmatmul.mubr.bf16.gmra.mrb[0].mxu0 %v1704
        %v1771 = vpop.f32.mrb[0].mxu0
        %v1772 = vadd.f32 0.0, %v1771
        %v1773 = vpop.f32.mrb[0].mxu0
        %v1774 = vpop.f32.mrb[0].mxu0
        %v1775 = vadd.f32 0.0, %v1774
        %v1776 = vpop.f32.mrb[0].mxu0
        %1777 = vmatprep.mubr.bf16.mxu0 0
        %1778 = vmatmul.mubr.bf16.gmra.mrb[0].mxu0 %v1707
        %v1779 = vpop.f32.mrb[0].mxu0
        %v1780 = vadd.f32 0.0, %v1779
        %v1781 = vpop.f32.mrb[0].mxu0
        %v1782 = vpop.f32.mrb[0].mxu0
        %v1783 = vadd.f32 0.0, %v1782
        %v1784 = vpop.f32.mrb[0].mxu0
        %1785 = vmatprep.mubr.bf16.mxu0 0
        %1786 = vmatmul.mubr.bf16.gmra.mrb[0].mxu0 %v1710
        %v1787 = vpop.f32.mrb[0].mxu0
        %v1788 = vadd.f32 0.0, %v1787
        %v1789 = vpop.f32.mrb[0].mxu0
        %v1790 = vpop.f32.mrb[0].mxu0
        %v1791 = vadd.f32 0.0, %v1790
        %v1792 = vpop.f32.mrb[0].mxu0
        %1793 = vmatprep.mubr.bf16.mxu0 0
        %1794 = vmatmul.mubr.bf16.gmra.mrb[0].mxu0 %v1713
        %v1795 = vpop.f32.mrb[0].mxu0
        %v1796 = vadd.f32 0.0, %v1795
        %v1797 = vpop.f32.mrb[0].mxu0
        %v1798 = vpop.f32.mrb[0].mxu0
        %v1799 = vadd.f32 0.0, %v1798
        %v1800 = vpop.f32.mrb[0].mxu0
        %1801 = vmatprep.mubr.bf16.mxu0 0
        %1802 = vmatmul.mubr.bf16.gmra.mrb[0].mxu0 %v1716
        %v1803 = vpop.f32.mrb[0].mxu0
        %v1804 = vadd.f32 0.0, %v1803
        %v1805 = vpop.f32.mrb[0].mxu0
        %v1806 = vpop.f32.mrb[0].mxu0
        %v1807 = vadd.f32 0.0, %v1806
        %v1808 = vpop.f32.mrb[0].mxu0
        %1809 = vmatprep.mubr.bf16.mxu0 0
        %1810 = vmatmul.mubr.bf16.gmra.mrb[0].mxu0 %v1719
        %v1811 = vpop.f32.mrb[0].mxu0
        %v1812 = vadd.f32 0.0, %v1811
        %v1813 = vpop.f32.mrb[0].mxu0
        %v1814 = vpop.f32.mrb[0].mxu0
        %v1815 = vadd.f32 0.0, %v1814
        %v1816 = vpop.f32.mrb[0].mxu0
        %1817 = vdwg.mxu0
        %v1818 = vadd.f32 %v1654, %v1756
        %v1819 = vadd.f32 %v1655, %v1759
        %v1820 = vadd.f32 %v1656, %v1764
        %v1821 = vadd.f32 %v1657, %v1767
        %v1822 = vadd.f32 %v1658, %v1772
        %v1823 = vadd.f32 %v1659, %v1775
        %v1824 = vadd.f32 %v1660, %v1780
        %v1825 = vadd.f32 %v1661, %v1783
        %v1826 = vadd.f32 %v1662, %v1788
        %v1827 = vadd.f32 %v1663, %v1791
        %v1828 = vadd.f32 %v1664, %v1796
        %v1829 = vadd.f32 %v1665, %v1799
        %v1830 = vadd.f32 %v1666, %v1804
        %v1831 = vadd.f32 %v1667, %v1807
        %v1832 = vadd.f32 %v1668, %v1812
        %v1833 = vadd.f32 %v1669, %v1815
        %1834 = vst [vmem:[#allocation2] sm:$0xff] %v1818
        %1835 = vst [vmem:[#allocation2 + $0x8] sm:$0xff] %v1819
        %1836 = vst [vmem:[#allocation2 + $0x10] sm:$0xff] %v1820
        %1837 = vst [vmem:[#allocation2 + $0x18] sm:$0xff] %v1821
        %1838 = vst [vmem:[#allocation2 + $0x20] sm:$0xff] %v1822
        %1839 = vst [vmem:[#allocation2 + $0x28] sm:$0xff] %v1823
        %1840 = vst [vmem:[#allocation2 + $0x30] sm:$0xff] %v1824
        %1841 = vst [vmem:[#allocation2 + $0x38] sm:$0xff] %v1825
        %1842 = vst [vmem:[#allocation2 + $0x40] sm:$0xff] %v1826
        %1843 = vst [vmem:[#allocation2 + $0x48] sm:$0xff] %v1827
        %1844 = vst [vmem:[#allocation2 + $0x50] sm:$0xff] %v1828
        %1845 = vst [vmem:[#allocation2 + $0x58] sm:$0xff] %v1829
        %1846 = vst [vmem:[#allocation2 + $0x60] sm:$0xff] %v1830
        %1847 = vst [vmem:[#allocation2 + $0x68] sm:$0xff] %v1831
        %1848 = vst [vmem:[#allocation2 + $0x70] sm:$0xff] %v1832
        %1849 = vst [vmem:[#allocation2 + $0x78] sm:$0xff] %v1833
      $region73: #{dinov2_reg_forward.6} parent=67 // loop_footer
        %s686 = sadd.s32 1, %s682
      $region74: #{dinov2_reg_forward.6} parent=67 // loop_footer_branch
        %681 = sbr.rel target = $region70
      $region75: #{dinov2_reg_forward.6} parent=67 // loop_exit
        _
      %v1850 = vld [vmem:[%s11] sm:$0x1]
      %v1851 = vld [vmem:[#allocation2] sm:$0xff]
      %v1852 = vld [vmem:[#allocation2 + $0x8] sm:$0xff]
      %v1853 = vld [vmem:[#allocation2 + $0x10] sm:$0xff]
      %v1854 = vld [vmem:[#allocation2 + $0x18] sm:$0xff]
      %v1855 = vld [vmem:[#allocation2 + $0x20] sm:$0xff]
      %v1856 = vld [vmem:[#allocation2 + $0x28] sm:$0xff]
      %v1857 = vld [vmem:[#allocation2 + $0x30] sm:$0xff]
      %v1858 = vld [vmem:[#allocation2 + $0x38] sm:$0xff]
      %v1859 = vld [vmem:[#allocation2 + $0x40] sm:$0xff]
      %v1860 = vld [vmem:[#allocation2 + $0x48] sm:$0xff]
      %v1861 = vld [vmem:[#allocation2 + $0x50] sm:$0xff]
      %v1862 = vld [vmem:[#allocation2 + $0x58] sm:$0xff]
      %v1863 = vld [vmem:[#allocation2 + $0x60] sm:$0xff]
      %v1864 = vld [vmem:[#allocation2 + $0x68] sm:$0xff]
      %v1865 = vld [vmem:[#allocation2 + $0x70] sm:$0xff]
      %v1866 = vld [vmem:[#allocation2 + $0x78] sm:$0xff]
      %v1867 = vld [vmem:[%s10] sm:$0x1]
      %v1869 = vlaneseq
      %v1870 = vshrl.u32 %v1869, 7
      %v1871 = vsub.s32 0, %v1870
      %v1872 = vrot.slane %v1867, %v1871
      %v1874 = vadd.f32 %v1851, %v1872
      %v1875 = vadd.f32 %v1852, %v1872
      %v1876 = vadd.f32 %v1853, %v1872
      %v1877 = vadd.f32 %v1854, %v1872
      %v1878 = vadd.f32 %v1855, %v1872
      %v1879 = vadd.f32 %v1856, %v1872
      %v1880 = vadd.f32 %v1857, %v1872
      %v1881 = vadd.f32 %v1858, %v1872
      %v1882 = vadd.f32 %v1859, %v1872
      %v1883 = vadd.f32 %v1860, %v1872
      %v1884 = vadd.f32 %v1861, %v1872
      %v1885 = vadd.f32 %v1862, %v1872
      %v1886 = vadd.f32 %v1863, %v1872
      %v1887 = vadd.f32 %v1864, %v1872
      %v1888 = vadd.f32 %v1865, %v1872
      %v1889 = vadd.f32 %v1866, %v1872
      %v1891 = vlaneseq
      %v1892 = vshrl.u32 %v1891, 7
      %v1893 = vsub.s32 0, %v1892
      %v1894 = vrot.slane %v1850, %v1893
      %v1896 = vmul.f32 %v1894, %v1874
      %v1897 = vmul.f32 %v1894, %v1875
      %v1898 = vmul.f32 %v1894, %v1876
      %v1899 = vmul.f32 %v1894, %v1877
      %v1900 = vmul.f32 %v1894, %v1878
      %v1901 = vmul.f32 %v1894, %v1879
      %v1902 = vmul.f32 %v1894, %v1880
      %v1903 = vmul.f32 %v1894, %v1881
      %v1904 = vmul.f32 %v1894, %v1882
      %v1905 = vmul.f32 %v1894, %v1883
      %v1906 = vmul.f32 %v1894, %v1884
      %v1907 = vmul.f32 %v1894, %v1885
      %v1908 = vmul.f32 %v1894, %v1886
      %v1909 = vmul.f32 %v1894, %v1887
      %v1910 = vmul.f32 %v1894, %v1888
      %v1911 = vmul.f32 %v1894, %v1889
      %v1912 = vadd.f32 %v415, %v1896
      %v1913 = vadd.f32 %v416, %v1897
      %v1914 = vadd.f32 %v417, %v1898
      %v1915 = vadd.f32 %v418, %v1899
      %v1916 = vadd.f32 %v419, %v1900
      %v1917 = vadd.f32 %v420, %v1901
      %v1918 = vadd.f32 %v421, %v1902
      %v1919 = vadd.f32 %v422, %v1903
      %v1920 = vadd.f32 %v423, %v1904
      %v1921 = vadd.f32 %v424, %v1905
      %v1922 = vadd.f32 %v425, %v1906
      %v1923 = vadd.f32 %v426, %v1907
      %v1924 = vadd.f32 %v427, %v1908
      %v1925 = vadd.f32 %v428, %v1909
      %v1926 = vadd.f32 %v429, %v1910
      %v1927 = vadd.f32 %v430, %v1911
      %1928 = vst [vmem:[%s413] sm:$0xff] %v1912
      %1929 = vst [vmem:[%s413 + $0x8] sm:$0xff] %v1913
      %1930 = vst [vmem:[%s413 + $0x10] sm:$0xff] %v1914
      %1931 = vst [vmem:[%s413 + $0x18] sm:$0xff] %v1915
      %1932 = vst [vmem:[%s413 + $0x20] sm:$0xff] %v1916
      %1933 = vst [vmem:[%s413 + $0x28] sm:$0xff] %v1917
      %1934 = vst [vmem:[%s413 + $0x30] sm:$0xff] %v1918
      %1935 = vst [vmem:[%s413 + $0x38] sm:$0xff] %v1919
      %1936 = vst [vmem:[%s413 + $0x40] sm:$0xff] %v1920
      %1937 = vst [vmem:[%s413 + $0x48] sm:$0xff] %v1921
      %1938 = vst [vmem:[%s413 + $0x50] sm:$0xff] %v1922
      %1939 = vst [vmem:[%s413 + $0x58] sm:$0xff] %v1923
      %1940 = vst [vmem:[%s413 + $0x60] sm:$0xff] %v1924
      %1941 = vst [vmem:[%s413 + $0x68] sm:$0xff] %v1925
      %1942 = vst [vmem:[%s413 + $0x70] sm:$0xff] %v1926
      %1943 = vst [vmem:[%s413 + $0x78] sm:$0xff] %v1927
      %p1944 = scmp.lt.s32.totalorder %s23, 1
      %s1945 = scalar_select %p1944, %s23, 1
      %s1946 = smul.addr %s1945, 16
      %s1947 = smul.addr %s1946, 8
      %s1948 = scalar_lea.vmem %s12, %s1947
      // Predicated region
      $region76: #{dinov2_reg_forward.6} parent=67 // pred_check
        %p1949 = pneg %p298
      $region77: #{dinov2_reg_forward.6} parent=67 // pred_check_branch
        %1951 = sbr.rel (%p1949) target = $region79
      $region78: #{dinov2_reg_forward.6} parent=67 // pred_region
        _
      $region79: #{dinov2_reg_forward.6} parent=67 // pred_fallthru
        _
    $region68: #{dinov2_reg_forward.6} parent=5 // pred_fallthru
      _
    %p1952 = scmp.le.s32.totalorder 2, %s18
    // Predicated region
    $region80: #{dinov2_reg_forward.6} parent=5 // pred_check
      %p1953 = pneg %p1952
    $region81: #{dinov2_reg_forward.6} parent=5 // pred_check_branch
      %1955 = sbr.rel (%p1953) target = $region83
    $region82: #{dinov2_reg_forward.6} parent=5 // pred_region
      %s1956 = ssub.s32 %s18, 2
      // Predicated region
      $region84: #{dinov2_reg_forward.6} parent=82 // pred_check
        %p1957 = pneg %p304
      $region85: #{dinov2_reg_forward.6} parent=82 // pred_check_branch
        %1959 = sbr.rel (%p1957) target = $region87
      $region86: #{dinov2_reg_forward.6} parent=82 // pred_region
        %p1960 = scmp.lt.s32.totalorder %s24, 1
        %s1961 = scalar_select %p1960, %s24, 1
        %s1962 = smul.addr %s1961, 16
        %s1963 = smul.addr %s1962, 8
        %s1964 = scalar_lea.vmem %s12, %s1963
      $region87: #{dinov2_reg_forward.6} parent=82 // pred_fallthru
        _
    $region83: #{dinov2_reg_forward.6} parent=5 // pred_fallthru
      _
  $region6: #{dinov2_reg_forward.6} parent=0 // loop_footer
    %s22 = sadd.s32 1, %s18
  $region7: #{dinov2_reg_forward.6} parent=0 // loop_footer_branch
    %17 = sbr.rel target = $region3
  $region8: #{dinov2_reg_forward.6} parent=0 // loop_exit
    _

// kernel: dinov2_reg_forward.7
$region0: #{dinov2_reg_forward.7}
  #allocation0 [shape = 'u32[]', space=smem, size = 0x4, offset = 0x4, fixed_abs, tag = 'smem constant byte address 0x4 - core index']
  #allocation1 [shape = 'u32[144,128]{1,0:T(1,128)}', space=vmem, size = 0x12000, scoped, tag = 'internal scratch']
  #allocation2 [shape = 'bf16[128,128]{1,0:T(16,128)(2,1)}', space=vmem, size = 0x8000, scoped, tag = 'scratch operand']
  #allocation3 [shape = 'f32[128,128]{1,0:T(8,128)}', space=vmem, size = 0x10000, scoped, tag = 'scratch operand']
  %s0 = inlined_call_operand.vmem [shape: f32[2,128,128], index: 0, kind: input, shape index: {}, may-alias: {0,8}]
  %s1 = inlined_call_operand.vmem [shape: f32[1,128], index: 1, kind: input, shape index: {}]
  %s2 = inlined_call_operand.vmem [shape: f32[1,128], index: 2, kind: input, shape index: {}]
  %s3 = inlined_call_operand.vmem [shape: bf16[128,512], index: 3, kind: input, shape index: {}]
  %s4 = inlined_call_operand.vmem [shape: f32[1,512], index: 4, kind: input, shape index: {}]
  %s5 = inlined_call_operand.vmem [shape: bf16[512,128], index: 5, kind: input, shape index: {}]
  %s6 = inlined_call_operand.vmem [shape: f32[1,128], index: 6, kind: input, shape index: {}]
  %s7 = inlined_call_operand.vmem [shape: f32[1,128], index: 7, kind: input, shape index: {}]
  %s8 = inlined_call_operand.vmem [shape: f32[2,128,128], index: 8, kind: output, shape index: {}, may-alias: {0,8}]
  %s9 = sld [smem:[#allocation0]]
  $region111: #{dinov2_reg_forward.7} parent=0
    _
  %s11 = ssub.s32 1, %s9
  %s12 = scalar_select 0, %s11, %s9
  $region1: #{dinov2_reg_forward.7} parent=0
    #allocation4 [shape = 'u8[131072]{0}', space=vmem, size = 0x20000, scoped, tag = 'input window, operand 3']
    loop: start=0, step=1, limit=6
    $region2: #{dinov2_reg_forward.7} parent=1 // loop_pre_header
      _
    $region3: #{dinov2_reg_forward.7} parent=1 // loop_header
      %s14 = sphi 0, %s18
      %p15 = scmp.ge.s32.totalorder %s14, 6
      %s21 = sphi 0, %s33
      %s22 = sphi 0, %s29
      %s23 = sphi 0, %s21
      %s24 = sphi 0, %s22
      %s25 = sphi 0, %s23
      %s26 = sphi 0, %s24
      %s36 = sphi 0, %s38
      %s39 = sphi 0, %s36
      %s40 = sphi 0, %s39
      %s56 = sphi 0, %s40
      %s60 = sphi 0, %s60
      %s62 = sphi 0, %s60
      %s63 = sphi 0, %s62
      %s77 = sphi 0, %s63
      %s81 = sphi 0, %s81
      %s83 = sphi 0, %s81
      %s84 = sphi 0, %s83
      %s98 = sphi 0, %s84
      %s104 = sphi 0, %s106
      %s107 = sphi 0, %s104
      %s108 = sphi 0, %s107
      %s124 = sphi 0, %s108
      %s130 = sphi 0, %s132
      %s133 = sphi 0, %s130
      %s134 = sphi 0, %s133
      %s150 = sphi 0, %s134
      %s156 = sphi 0, %s158
      %s159 = sphi 0, %s156
      %s160 = sphi 0, %s159
      %s176 = sphi 0, %s160
      %s180 = sphi 0, %s180
      %s182 = sphi 0, %s180
      %s183 = sphi 0, %s182
      %s197 = sphi 0, %s183
      %s201 = sphi 0, %s201
      %s203 = sphi 0, %s201
      %s204 = sphi 0, %s203
      %s218 = sphi 0, %s204
      %s224 = sphi 0, %s226
      %s227 = sphi 0, %s224
      %s228 = sphi 0, %s227
      %s244 = sphi 0, %s228
    $region4: #{dinov2_reg_forward.7} parent=1 // loop_header_branch
      %17 = sbr.rel (%p15) target = $region8
    $region5: #{dinov2_reg_forward.7} parent=1 // loop_body
      %s19 = ssub.s32 %s14, 1
      %s20 = ssub.s32 %s14, 2
      %s27 = sadd.s32 1, %s22
      %p28 = scmp.ge.s32.totalorder %s27, 2
      %s29 = scalar_select %p28, 0, %s27
      %s30 = sadd.s32 1, %s21
      %s31 = scalar_select %p28, %s30, %s21
      %p32 = scmp.ge.s32.totalorder %s31, 2
      %s33 = scalar_select %p32, 0, %s31
      %s34 = ssub.s32 %s21, %s33
      %p35 = scmp.eq.s32.totalorder %s34, 0
      %s37 = sadd.s32 %s36, 1
      %s38 = scalar_select %p35, %s36, %s37
      %p41 = pneg %p35
      %p42 = scmp.eq.s32.totalorder %s14, 3
      %p43 = por %p41, %p42
      %p44 = scmp.ne.s32.totalorder %s36, %s39
      %p45 = scmp.eq.s32.totalorder %s14, 0
      %p46 = por %p44, %p45
      %p47 = scmp.ne.s32.totalorder %s36, %s39
      %p48 = scmp.eq.s32.totalorder %s19, 3
      %p49 = por %p47, %p48
      %p50 = scmp.ne.s32.totalorder %s39, %s40
      %p51 = scmp.eq.s32.totalorder %s19, 0
      %p52 = por %p50, %p51
      %p53 = scmp.ne.s32.totalorder %s39, %s40
      %p54 = scmp.eq.s32.totalorder %s20, 3
      %p55 = por %p53, %p54
      %p57 = scmp.ne.s32.totalorder %s40, %s56
      %p58 = scmp.eq.s32.totalorder %s20, 0
      %p59 = por %p57, %p58
      %s61 = sadd.s32 %s60, 1
      %p64 = scmp.eq.s32.totalorder %s14, 3
      %p65 = scmp.ne.s32.totalorder %s60, %s62
      %p66 = scmp.eq.s32.totalorder %s14, 0
      %p67 = por %p65, %p66
      %p68 = scmp.ne.s32.totalorder %s60, %s62
      %p69 = scmp.eq.s32.totalorder %s19, 3
      %p70 = por %p68, %p69
      %p71 = scmp.ne.s32.totalorder %s62, %s63
      %p72 = scmp.eq.s32.totalorder %s19, 0
      %p73 = por %p71, %p72
      %p74 = scmp.ne.s32.totalorder %s62, %s63
      %p75 = scmp.eq.s32.totalorder %s20, 3
      %p76 = por %p74, %p75
      %p78 = scmp.ne.s32.totalorder %s63, %s77
      %p79 = scmp.eq.s32.totalorder %s20, 0
      %p80 = por %p78, %p79
      %s82 = sadd.s32 %s81, 1
      %p85 = scmp.eq.s32.totalorder %s14, 3
      %p86 = scmp.ne.s32.totalorder %s81, %s83
      %p87 = scmp.eq.s32.totalorder %s14, 0
      %p88 = por %p86, %p87
      %p89 = scmp.ne.s32.totalorder %s81, %s83
      %p90 = scmp.eq.s32.totalorder %s19, 3
      %p91 = por %p89, %p90
      %p92 = scmp.ne.s32.totalorder %s83, %s84
      %p93 = scmp.eq.s32.totalorder %s19, 0
      %p94 = por %p92, %p93
      %p95 = scmp.ne.s32.totalorder %s83, %s84
      %p96 = scmp.eq.s32.totalorder %s20, 3
      %p97 = por %p95, %p96
      %p99 = scmp.ne.s32.totalorder %s84, %s98
      %p100 = scmp.eq.s32.totalorder %s20, 0
      %p101 = por %p99, %p100
      %s102 = ssub.s32 %s22, %s29
      %p103 = scmp.eq.s32.totalorder %s102, 0
      %s105 = sadd.s32 %s104, 1
      %s106 = scalar_select %p103, %s104, %s105
      %p109 = pneg %p103
      %p110 = scmp.eq.s32.totalorder %s14, 3
      %p111 = por %p109, %p110
      %p112 = scmp.ne.s32.totalorder %s104, %s107
      %p113 = scmp.eq.s32.totalorder %s14, 0
      %p114 = por %p112, %p113
      %p115 = scmp.ne.s32.totalorder %s104, %s107
      %p116 = scmp.eq.s32.totalorder %s19, 3
      %p117 = por %p115, %p116
      %p118 = scmp.ne.s32.totalorder %s107, %s108
      %p119 = scmp.eq.s32.totalorder %s19, 0
      %p120 = por %p118, %p119
      %p121 = scmp.ne.s32.totalorder %s107, %s108
      %p122 = scmp.eq.s32.totalorder %s20, 3
      %p123 = por %p121, %p122
      %p125 = scmp.ne.s32.totalorder %s108, %s124
      %p126 = scmp.eq.s32.totalorder %s20, 0
      %p127 = por %p125, %p126
      %s128 = ssub.s32 %s22, %s29
      %p129 = scmp.eq.s32.totalorder %s128, 0
      %s131 = sadd.s32 %s130, 1
      %s132 = scalar_select %p129, %s130, %s131
      %p135 = pneg %p129
      %p136 = scmp.eq.s32.totalorder %s14, 3
      %p137 = por %p135, %p136
      %p138 = scmp.ne.s32.totalorder %s130, %s133
      %p139 = scmp.eq.s32.totalorder %s14, 0
      %p140 = por %p138, %p139
      %p141 = scmp.ne.s32.totalorder %s130, %s133
      %p142 = scmp.eq.s32.totalorder %s19, 3
      %p143 = por %p141, %p142
      %p144 = scmp.ne.s32.totalorder %s133, %s134
      %p145 = scmp.eq.s32.totalorder %s19, 0
      %p146 = por %p144, %p145
      %p147 = scmp.ne.s32.totalorder %s133, %s134
      %p148 = scmp.eq.s32.totalorder %s20, 3
      %p149 = por %p147, %p148
      %p151 = scmp.ne.s32.totalorder %s134, %s150
      %p152 = scmp.eq.s32.totalorder %s20, 0
      %p153 = por %p151, %p152
      %s154 = ssub.s32 %s22, %s29
      %p155 = scmp.eq.s32.totalorder %s154, 0
      %s157 = sadd.s32 %s156, 1
      %s158 = scalar_select %p155, %s156, %s157
      %p161 = pneg %p155
      %p162 = scmp.eq.s32.totalorder %s14, 3
      %p163 = por %p161, %p162
      %p164 = scmp.ne.s32.totalorder %s156, %s159
      %p165 = scmp.eq.s32.totalorder %s14, 0
      %p166 = por %p164, %p165
      %p167 = scmp.ne.s32.totalorder %s156, %s159
      %p168 = scmp.eq.s32.totalorder %s19, 3
      %p169 = por %p167, %p168
      %p170 = scmp.ne.s32.totalorder %s159, %s160
      %p171 = scmp.eq.s32.totalorder %s19, 0
      %p172 = por %p170, %p171
      %p173 = scmp.ne.s32.totalorder %s159, %s160
      %p174 = scmp.eq.s32.totalorder %s20, 3
      %p175 = por %p173, %p174
      %p177 = scmp.ne.s32.totalorder %s160, %s176
      %p178 = scmp.eq.s32.totalorder %s20, 0
      %p179 = por %p177, %p178
      %s181 = sadd.s32 %s180, 1
      %p184 = scmp.eq.s32.totalorder %s14, 3
      %p185 = scmp.ne.s32.totalorder %s180, %s182
      %p186 = scmp.eq.s32.totalorder %s14, 0
      %p187 = por %p185, %p186
      %p188 = scmp.ne.s32.totalorder %s180, %s182
      %p189 = scmp.eq.s32.totalorder %s19, 3
      %p190 = por %p188, %p189
      %p191 = scmp.ne.s32.totalorder %s182, %s183
      %p192 = scmp.eq.s32.totalorder %s19, 0
      %p193 = por %p191, %p192
      %p194 = scmp.ne.s32.totalorder %s182, %s183
      %p195 = scmp.eq.s32.totalorder %s20, 3
      %p196 = por %p194, %p195
      %p198 = scmp.ne.s32.totalorder %s183, %s197
      %p199 = scmp.eq.s32.totalorder %s20, 0
      %p200 = por %p198, %p199
      %s202 = sadd.s32 %s201, 1
      %p205 = scmp.eq.s32.totalorder %s14, 3
      %p206 = scmp.ne.s32.totalorder %s201, %s203
      %p207 = scmp.eq.s32.totalorder %s14, 0
      %p208 = por %p206, %p207
      %p209 = scmp.ne.s32.totalorder %s201, %s203
      %p210 = scmp.eq.s32.totalorder %s19, 3
      %p211 = por %p209, %p210
      %p212 = scmp.ne.s32.totalorder %s203, %s204
      %p213 = scmp.eq.s32.totalorder %s19, 0
      %p214 = por %p212, %p213
      %p215 = scmp.ne.s32.totalorder %s203, %s204
      %p216 = scmp.eq.s32.totalorder %s20, 3
      %p217 = por %p215, %p216
      %p219 = scmp.ne.s32.totalorder %s204, %s218
      %p220 = scmp.eq.s32.totalorder %s20, 0
      %p221 = por %p219, %p220
      %s222 = ssub.s32 %s21, %s33
      %p223 = scmp.eq.s32.totalorder %s222, 0
      %s225 = sadd.s32 %s224, 1
      %s226 = scalar_select %p223, %s224, %s225
      %p229 = pneg %p223
      %p230 = scmp.eq.s32.totalorder %s14, 3
      %p231 = por %p229, %p230
      %p232 = scmp.ne.s32.totalorder %s224, %s227
      %p233 = scmp.eq.s32.totalorder %s14, 0
      %p234 = por %p232, %p233
      %p235 = scmp.ne.s32.totalorder %s224, %s227
      %p236 = scmp.eq.s32.totalorder %s19, 3
      %p237 = por %p235, %p236
      %p238 = scmp.ne.s32.totalorder %s227, %s228
      %p239 = scmp.eq.s32.totalorder %s19, 0
      %p240 = por %p238, %p239
      %p241 = scmp.ne.s32.totalorder %s227, %s228
      %p242 = scmp.eq.s32.totalorder %s20, 3
      %p243 = por %p241, %p242
      %p245 = scmp.ne.s32.totalorder %s228, %s244
      %p246 = scmp.eq.s32.totalorder %s20, 0
      %p247 = por %p245, %p246
      %p248 = scmp.le.s32.totalorder 1, %s14
      %p249 = scmp.lt.s32.totalorder %s14, 5
      %p250 = pnand %p248, %p249
      %p251 = pneg %p250
      // Predicated region
      $region9: #{dinov2_reg_forward.7} parent=5 // pred_check
        _
      $region10: #{dinov2_reg_forward.7} parent=5 // pred_check_branch
        %253 = sbr.rel (%p250) target = $region12
      $region11: #{dinov2_reg_forward.7} parent=5 // pred_region
        %s254 = ssub.s32 %s14, 1
        // Predicated region
        $region13: #{dinov2_reg_forward.7} parent=11 // pred_check
          %p255 = pneg %p73
        $region14: #{dinov2_reg_forward.7} parent=11 // pred_check_branch
          %257 = sbr.rel (%p255) target = $region16
        $region15: #{dinov2_reg_forward.7} parent=11 // pred_region
          _
        $region16: #{dinov2_reg_forward.7} parent=11 // pred_fallthru
          _
        // Predicated region
        $region17: #{dinov2_reg_forward.7} parent=11 // pred_check
          %p258 = pneg %p94
        $region18: #{dinov2_reg_forward.7} parent=11 // pred_check_branch
          %260 = sbr.rel (%p258) target = $region20
        $region19: #{dinov2_reg_forward.7} parent=11 // pred_region
          _
        $region20: #{dinov2_reg_forward.7} parent=11 // pred_fallthru
          _
        // Predicated region
        $region21: #{dinov2_reg_forward.7} parent=11 // pred_check
          %p261 = pneg %p193
        $region22: #{dinov2_reg_forward.7} parent=11 // pred_check_branch
          %263 = sbr.rel (%p261) target = $region24
        $region23: #{dinov2_reg_forward.7} parent=11 // pred_region
          _
        $region24: #{dinov2_reg_forward.7} parent=11 // pred_fallthru
          _
        // Predicated region
        $region25: #{dinov2_reg_forward.7} parent=11 // pred_check
          %p264 = pneg %p214
        $region26: #{dinov2_reg_forward.7} parent=11 // pred_check_branch
          %266 = sbr.rel (%p264) target = $region28
        $region27: #{dinov2_reg_forward.7} parent=11 // pred_region
          _
        $region28: #{dinov2_reg_forward.7} parent=11 // pred_fallthru
          _
      $region12: #{dinov2_reg_forward.7} parent=5 // pred_fallthru
        _
      %p267 = scmp.lt.s32.totalorder %s14, 4
      // Predicated region
      $region29: #{dinov2_reg_forward.7} parent=5 // pred_check
        %p268 = pneg %p267
      $region30: #{dinov2_reg_forward.7} parent=5 // pred_check_branch
        %270 = sbr.rel (%p268) target = $region32
      $region31: #{dinov2_reg_forward.7} parent=5 // pred_region
        // Predicated region
        $region33: #{dinov2_reg_forward.7} parent=31 // pred_check
          %p271 = pneg %p46
        $region34: #{dinov2_reg_forward.7} parent=31 // pred_check_branch
          %273 = sbr.rel (%p271) target = $region36
        $region35: #{dinov2_reg_forward.7} parent=31 // pred_region
          %p274 = scmp.lt.s32.totalorder %s21, 1
          %s275 = scalar_select %p274, %s21, 1
          %s276 = smul.addr %s275, 16
          %s277 = smul.addr %s276, 8
          %s278 = scalar_lea.vmem %s0, %s277
        $region36: #{dinov2_reg_forward.7} parent=31 // pred_fallthru
          _
        // Predicated region
        $region37: #{dinov2_reg_forward.7} parent=31 // pred_check
          %p279 = pneg %p114
        $region38: #{dinov2_reg_forward.7} parent=31 // pred_check_branch
          %281 = sbr.rel (%p279) target = $region40
        $region39: #{dinov2_reg_forward.7} parent=31 // pred_region
          %s282 = sand.u32 %s104, 1
          %s283 = sand.u32 %s104, 1
          %s284 = smul.addr %s283, 128
          %s285 = scalar_lea.vmem [#allocation4], %s284
          %s286 = smul.u32 2, %s22
          %s287 = smul.addr %s286, 4
          %s288 = scalar_lea.vmem %s3, %s287
          // Predicated region
          $region41: #{dinov2_reg_forward.7} parent=39 // pred_check
            _
          $region42: #{dinov2_reg_forward.7} parent=39 // pred_check_branch
            %290 = sbr.rel (0) target = $region44
          $region43: #{dinov2_reg_forward.7} parent=39 // pred_region
            // Predicated region
            $region45: #{dinov2_reg_forward.7} parent=43 // pred_check
              _
            $region46: #{dinov2_reg_forward.7} parent=43 // pred_check_branch
              %292 = sbr.rel (0) target = $region48
            $region47: #{dinov2_reg_forward.7} parent=43 // pred_region
              // Predicated region
              $region60: #{dinov2_reg_forward.7} parent=47 // pred_check
                _
              $region61: #{dinov2_reg_forward.7} parent=47 // pred_check_branch
                %337 = sbr.rel (0) target = $region63
              $region62: #{dinov2_reg_forward.7} parent=47 // pred_region
                loop: start=0, step=1, limit=1
                $region64: #{dinov2_reg_forward.7} parent=62 // loop_pre_header
                  _
                $region65: #{dinov2_reg_forward.7} parent=62 // loop_header
                  %s339 = sphi 0, %s343
                  %p340 = scmp.ge.s32.totalorder %s339, 1
                  %s344 = sphi %s288, %s288
                  %s345 = sphi %s285, %s285
                $region66: #{dinov2_reg_forward.7} parent=62 // loop_header_branch
                  %342 = sbr.rel (%p340) target = $region70
                $region67: #{dinov2_reg_forward.7} parent=62 // loop_body
                  %v346 = vld [vmem:[%s344] sm:$0xff]
                  %347 = vst [vmem:[%s345] sm:$0xff] %v346
                  %v348 = vld [vmem:[%s344 + $0x10] sm:$0xff]
                  %349 = vst [vmem:[%s345 + $0x8] sm:$0xff] %v348
                  %v350 = vld [vmem:[%s344 + $0x20] sm:$0xff]
                  %351 = vst [vmem:[%s345 + $0x10] sm:$0xff] %v350
                  %v352 = vld [vmem:[%s344 + $0x30] sm:$0xff]
                  %353 = vst [vmem:[%s345 + $0x18] sm:$0xff] %v352
                  %v354 = vld [vmem:[%s344 + $0x40] sm:$0xff]
                  %355 = vst [vmem:[%s345 + $0x20] sm:$0xff] %v354
                  %v356 = vld [vmem:[%s344 + $0x50] sm:$0xff]
                  %357 = vst [vmem:[%s345 + $0x28] sm:$0xff] %v356
                  %v358 = vld [vmem:[%s344 + $0x60] sm:$0xff]
                  %359 = vst [vmem:[%s345 + $0x30] sm:$0xff] %v358
                  %v360 = vld [vmem:[%s344 + $0x70] sm:$0xff]
                  %361 = vst [vmem:[%s345 + $0x38] sm:$0xff] %v360
                  %v362 = vld [vmem:[%s344 + $0x80] sm:$0xff]
                  %363 = vst [vmem:[%s345 + $0x40] sm:$0xff] %v362
                  %v364 = vld [vmem:[%s344 + $0x90] sm:$0xff]
                  %365 = vst [vmem:[%s345 + $0x48] sm:$0xff] %v364
                  %v366 = vld [vmem:[%s344 + $0xa0] sm:$0xff]
                  %367 = vst [vmem:[%s345 + $0x50] sm:$0xff] %v366
                  %v368 = vld [vmem:[%s344 + $0xb0] sm:$0xff]
                  %369 = vst [vmem:[%s345 + $0x58] sm:$0xff] %v368
                  %v370 = vld [vmem:[%s344 + $0xc0] sm:$0xff]
                  %371 = vst [vmem:[%s345 + $0x60] sm:$0xff] %v370
                  %v372 = vld [vmem:[%s344 + $0xd0] sm:$0xff]
                  %373 = vst [vmem:[%s345 + $0x68] sm:$0xff] %v372
                  %v374 = vld [vmem:[%s344 + $0xe0] sm:$0xff]
                  %375 = vst [vmem:[%s345 + $0x70] sm:$0xff] %v374
                  %v376 = vld [vmem:[%s344 + $0xf0] sm:$0xff]
                  %377 = vst [vmem:[%s345 + $0x78] sm:$0xff] %v376
                $region68: #{dinov2_reg_forward.7} parent=62 // loop_footer
                  %s343 = sadd.s32 1, %s339
                $region69: #{dinov2_reg_forward.7} parent=62 // loop_footer_branch
                  %338 = sbr.rel target = $region65
                $region70: #{dinov2_reg_forward.7} parent=62 // loop_exit
                  _
              $region63: #{dinov2_reg_forward.7} parent=47 // pred_fallthru
                _
              // Predicated region
              $region71: #{dinov2_reg_forward.7} parent=47 // pred_check
                _
              $region72: #{dinov2_reg_forward.7} parent=47 // pred_check_branch
                %379 = sbr.rel target = $region74
              $region73: #{dinov2_reg_forward.7} parent=47 // pred_region
                _
              $region74: #{dinov2_reg_forward.7} parent=47 // pred_fallthru
                _
            $region48: #{dinov2_reg_forward.7} parent=43 // pred_fallthru
              _
            // Predicated region
            $region49: #{dinov2_reg_forward.7} parent=43 // pred_check
              _
            $region50: #{dinov2_reg_forward.7} parent=43 // pred_check_branch
              %294 = sbr.rel target = $region52
            $region51: #{dinov2_reg_forward.7} parent=43 // pred_region
              loop: start=0, step=1, limit=1
              $region53: #{dinov2_reg_forward.7} parent=51 // loop_pre_header
                _
              $region54: #{dinov2_reg_forward.7} parent=51 // loop_header
                %s297 = sphi 0, %s301
                %p298 = scmp.ge.s32.totalorder %s297, 1
                %s302 = sphi %s288, %s288
                %s303 = sphi %s285, %s285
              $region55: #{dinov2_reg_forward.7} parent=51 // loop_header_branch
                %300 = sbr.rel (%p298) target = $region59
              $region56: #{dinov2_reg_forward.7} parent=51 // loop_body
                %v304 = vld [vmem:[%s302] sm:$0xff]
                %305 = vst [vmem:[%s303] sm:$0xff] %v304
                %v306 = vld [vmem:[%s302 + $0x10] sm:$0xff]
                %307 = vst [vmem:[%s303 + $0x8] sm:$0xff] %v306
                %v308 = vld [vmem:[%s302 + $0x20] sm:$0xff]
                %309 = vst [vmem:[%s303 + $0x10] sm:$0xff] %v308
                %v310 = vld [vmem:[%s302 + $0x30] sm:$0xff]
                %311 = vst [vmem:[%s303 + $0x18] sm:$0xff] %v310
                %v312 = vld [vmem:[%s302 + $0x40] sm:$0xff]
                %313 = vst [vmem:[%s303 + $0x20] sm:$0xff] %v312
                %v314 = vld [vmem:[%s302 + $0x50] sm:$0xff]
                %315 = vst [vmem:[%s303 + $0x28] sm:$0xff] %v314
                %v316 = vld [vmem:[%s302 + $0x60] sm:$0xff]
                %317 = vst [vmem:[%s303 + $0x30] sm:$0xff] %v316
                %v318 = vld [vmem:[%s302 + $0x70] sm:$0xff]
                %319 = vst [vmem:[%s303 + $0x38] sm:$0xff] %v318
                %v320 = vld [vmem:[%s302 + $0x80] sm:$0xff]
                %321 = vst [vmem:[%s303 + $0x40] sm:$0xff] %v320
                %v322 = vld [vmem:[%s302 + $0x90] sm:$0xff]
                %323 = vst [vmem:[%s303 + $0x48] sm:$0xff] %v322
                %v324 = vld [vmem:[%s302 + $0xa0] sm:$0xff]
                %325 = vst [vmem:[%s303 + $0x50] sm:$0xff] %v324
                %v326 = vld [vmem:[%s302 + $0xb0] sm:$0xff]
                %327 = vst [vmem:[%s303 + $0x58] sm:$0xff] %v326
                %v328 = vld [vmem:[%s302 + $0xc0] sm:$0xff]
                %329 = vst [vmem:[%s303 + $0x60] sm:$0xff] %v328
                %v330 = vld [vmem:[%s302 + $0xd0] sm:$0xff]
                %331 = vst [vmem:[%s303 + $0x68] sm:$0xff] %v330
                %v332 = vld [vmem:[%s302 + $0xe0] sm:$0xff]
                %333 = vst [vmem:[%s303 + $0x70] sm:$0xff] %v332
                %v334 = vld [vmem:[%s302 + $0xf0] sm:$0xff]
                %335 = vst [vmem:[%s303 + $0x78] sm:$0xff] %v334
              $region57: #{dinov2_reg_forward.7} parent=51 // loop_footer
                %s301 = sadd.s32 1, %s297
              $region58: #{dinov2_reg_forward.7} parent=51 // loop_footer_branch
                %296 = sbr.rel target = $region54
              $region59: #{dinov2_reg_forward.7} parent=51 // loop_exit
                _
            $region52: #{dinov2_reg_forward.7} parent=43 // pred_fallthru
              _
          $region44: #{dinov2_reg_forward.7} parent=39 // pred_fallthru
            _
          %380 = vnop
        $region40: #{dinov2_reg_forward.7} parent=31 // pred_fallthru
          _
        // Predicated region
        $region75: #{dinov2_reg_forward.7} parent=31 // pred_check
          %p381 = pneg %p140
        $region76: #{dinov2_reg_forward.7} parent=31 // pred_check_branch
          %383 = sbr.rel (%p381) target = $region78
        $region77: #{dinov2_reg_forward.7} parent=31 // pred_region
          %s384 = smul.u32 2, %s22
          %p385 = scmp.lt.s32.totalorder %s384, 3
          %s386 = scalar_select %p385, %s384, 3
          %s387 = scalar_lea.vmem %s4, %s386
          %s388 = smul.u32 2, %s22
        $region78: #{dinov2_reg_forward.7} parent=31 // pred_fallthru
          _
        // Predicated region
        $region79: #{dinov2_reg_forward.7} parent=31 // pred_check
          %p389 = pneg %p166
        $region80: #{dinov2_reg_forward.7} parent=31 // pred_check_branch
          %391 = sbr.rel (%p389) target = $region82
        $region81: #{dinov2_reg_forward.7} parent=31 // pred_region
          %s392 = smul.u32 32, %s22
          %p393 = scmp.lt.s32.totalorder %s392, 63
          %s394 = scalar_select %p393, %s392, 63
          %s395 = smul.addr %s394, 4
          %s396 = scalar_lea.vmem %s5, %s395
          %s397 = smul.u32 32, %s22
        $region82: #{dinov2_reg_forward.7} parent=31 // pred_fallthru
          _
      $region32: #{dinov2_reg_forward.7} parent=5 // pred_fallthru
        _
      %p398 = scmp.le.s32.totalorder 1, %s14
      %p399 = scmp.lt.s32.totalorder %s14, 5
      %p400 = pnand %p398, %p399
      %p401 = pneg %p400
      // Predicated region
      $region83: #{dinov2_reg_forward.7} parent=5 // pred_check
        _
      $region84: #{dinov2_reg_forward.7} parent=5 // pred_check_branch
        %403 = sbr.rel (%p400) target = $region86
      $region85: #{dinov2_reg_forward.7} parent=5 // pred_region
        %s404 = ssub.s32 %s14, 1
        %s405 = sand.u32 %s107, 1
        %s406 = sand.u32 %s107, 1
        %s407 = smul.addr %s406, 128
        %s408 = scalar_lea.vmem [#allocation4], %s407
        // Predicated region
        $region87: #{dinov2_reg_forward.7} parent=85 // pred_check
          %p409 = pneg %p120
        $region88: #{dinov2_reg_forward.7} parent=85 // pred_check_branch
          %411 = sbr.rel (%p409) target = $region90
        $region89: #{dinov2_reg_forward.7} parent=85 // pred_region
          _
        $region90: #{dinov2_reg_forward.7} parent=85 // pred_fallthru
          _
        %p412 = scmp.lt.s32.totalorder %s23, 1
        %s413 = scalar_select %p412, %s23, 1
        %s414 = smul.addr %s413, 16
        %s415 = smul.addr %s414, 8
        %s416 = scalar_lea.vmem %s0, %s415
        %p417 = pneg %p52
        %p418 = pneg %p49
        %p419 = pneg %p73
        %p420 = pneg %p70
        %p421 = pneg %p94
        %p422 = pneg %p91
        %s423 = sand.u32 %s107, 1
        %s424 = sand.u32 %s107, 1
        %s425 = smul.addr %s424, 128
        %s426 = scalar_lea.vmem [#allocation4], %s425
        %p427 = pneg %p120
        %p428 = pneg %p117
        %s429 = smul.u32 2, %s24
        %p430 = scmp.lt.s32.totalorder %s429, 3
        %s431 = scalar_select %p430, %s429, 3
        %s432 = scalar_lea.vmem %s4, %s431
        %p433 = pneg %p146
        %p434 = pneg %p143
        %s435 = smul.u32 32, %s24
        %p436 = scmp.lt.s32.totalorder %s435, 63
        %s437 = scalar_select %p436, %s435, 63
        %s438 = smul.addr %s437, 4
        %s439 = scalar_lea.vmem %s5, %s438
        %p440 = pneg %p172
        %p441 = pneg %p169
        %p442 = pneg %p193
        %p443 = pneg %p190
        %p444 = pneg %p214
        %p445 = pneg %p211
        %p446 = pneg %p240
        %p447 = pneg %p237
        %p448 = scmp.lt.s32.totalorder %s23, 1
        %s449 = scalar_select %p448, %s23, 1
        %s450 = smul.addr %s449, 16
        %s451 = smul.addr %s450, 8
        %s452 = scalar_lea.vmem %s8, %s451
        %p453 = scmp.lt.s32.totalorder %s23, 1
        %s454 = scalar_select %p453, %s23, 1
        %s455 = smul.addr %s454, 16
        %s456 = smul.addr %s455, 8
        %s457 = scalar_lea.vmem %s0, %s456
        %s458 = smul.u32 2, %s24
        %s459 = smul.u32 2, %s24
        %p460 = scmp.lt.s32.totalorder %s459, 3
        %s461 = scalar_select %p460, %s459, 3
        %s462 = scalar_lea.vmem %s4, %s461
        %s463 = smul.u32 2, %s24
        %s464 = smul.u32 32, %s24
        %p465 = scmp.lt.s32.totalorder %s464, 63
        %s466 = scalar_select %p465, %s464, 63
        %s467 = smul.addr %s466, 4
        %s468 = scalar_lea.vmem %s5, %s467
        %s469 = smul.u32 32, %s24
        %p470 = scmp.lt.s32.totalorder %s23, 1
        %s471 = scalar_select %p470, %s23, 1
        %s472 = smul.addr %s471, 16
        %s473 = smul.addr %s472, 8
        %s474 = scalar_lea.vmem %s8, %s473
        %p476 = scmp.eq.s32.totalorder %s24, 0
        // Predicated region
        $region91: #{dinov2_reg_forward.7} parent=85 // pred_check
          %p477 = pneg %p476
        $region92: #{dinov2_reg_forward.7} parent=85 // pred_check_branch
          %479 = sbr.rel (%p477) target = $region94
        $region93: #{dinov2_reg_forward.7} parent=85 // pred_region
          %v480 = vld [vmem:[%s457] sm:$0xff]
          %v481 = vld [vmem:[%s457 + $0x8] sm:$0xff]
          %v482 = vld [vmem:[%s457 + $0x10] sm:$0xff]
          %v483 = vld [vmem:[%s457 + $0x18] sm:$0xff]
          %v484 = vld [vmem:[%s457 + $0x20] sm:$0xff]
          %v485 = vld [vmem:[%s457 + $0x28] sm:$0xff]
          %v486 = vld [vmem:[%s457 + $0x30] sm:$0xff]
          %v487 = vld [vmem:[%s457 + $0x38] sm:$0xff]
          %v488 = vld [vmem:[%s457 + $0x40] sm:$0xff]
          %v489 = vld [vmem:[%s457 + $0x48] sm:$0xff]
          %v490 = vld [vmem:[%s457 + $0x50] sm:$0xff]
          %v491 = vld [vmem:[%s457 + $0x58] sm:$0xff]
          %v492 = vld [vmem:[%s457 + $0x60] sm:$0xff]
          %v493 = vld [vmem:[%s457 + $0x68] sm:$0xff]
          %v494 = vld [vmem:[%s457 + $0x70] sm:$0xff]
          %v495 = vld [vmem:[%s457 + $0x78] sm:$0xff]
          %v496 = vld [vmem:[%s1] sm:$0x1]
          %v497 = vld [vmem:[%s2] sm:$0x1]
          %498 = vadd.xlane.f32.xlu0 %v480
          %v499 = vpop.xlane.xlu0 %498
          %500 = vadd.xlane.f32.xlu0 %v481
          %v501 = vpop.xlane.xlu0 %500
          %502 = vadd.xlane.f32.xlu0 %v482
          %v503 = vpop.xlane.xlu0 %502
          %504 = vadd.xlane.f32.xlu0 %v483
          %v505 = vpop.xlane.xlu0 %504
          %506 = vadd.xlane.f32.xlu0 %v484
          %v507 = vpop.xlane.xlu0 %506
          %508 = vadd.xlane.f32.xlu0 %v485
          %v509 = vpop.xlane.xlu0 %508
          %510 = vadd.xlane.f32.xlu0 %v486
          %v511 = vpop.xlane.xlu0 %510
          %512 = vadd.xlane.f32.xlu0 %v487
          %v513 = vpop.xlane.xlu0 %512
          %514 = vadd.xlane.f32.xlu0 %v488
          %v515 = vpop.xlane.xlu0 %514
          %516 = vadd.xlane.f32.xlu0 %v489
          %v517 = vpop.xlane.xlu0 %516
          %518 = vadd.xlane.f32.xlu0 %v490
          %v519 = vpop.xlane.xlu0 %518
          %520 = vadd.xlane.f32.xlu0 %v491
          %v521 = vpop.xlane.xlu0 %520
          %522 = vadd.xlane.f32.xlu0 %v492
          %v523 = vpop.xlane.xlu0 %522
          %524 = vadd.xlane.f32.xlu0 %v493
          %v525 = vpop.xlane.xlu0 %524
          %526 = vadd.xlane.f32.xlu0 %v494
          %v527 = vpop.xlane.xlu0 %526
          %528 = vadd.xlane.f32.xlu0 %v495
          %v529 = vpop.xlane.xlu0 %528
          %v530 = vrcp.pop 128.0
          %v531 = vmul.f32 %v499, %v530
          %v532 = vmul.f32 %v501, %v530
          %v533 = vmul.f32 %v503, %v530
          %v534 = vmul.f32 %v505, %v530
          %v535 = vmul.f32 %v507, %v530
          %v536 = vmul.f32 %v509, %v530
          %v537 = vmul.f32 %v511, %v530
          %v538 = vmul.f32 %v513, %v530
          %v539 = vmul.f32 %v515, %v530
          %v540 = vmul.f32 %v517, %v530
          %v541 = vmul.f32 %v519, %v530
          %v542 = vmul.f32 %v521, %v530
          %v543 = vmul.f32 %v523, %v530
          %v544 = vmul.f32 %v525, %v530
          %v545 = vmul.f32 %v527, %v530
          %v546 = vmul.f32 %v529, %v530
          %v547 = vsub.f32 %v480, %v531
          %v548 = vsub.f32 %v481, %v532
          %v549 = vsub.f32 %v482, %v533
          %v550 = vsub.f32 %v483, %v534
          %v551 = vsub.f32 %v484, %v535
          %v552 = vsub.f32 %v485, %v536
          %v553 = vsub.f32 %v486, %v537
          %v554 = vsub.f32 %v487, %v538
          %v555 = vsub.f32 %v488, %v539
          %v556 = vsub.f32 %v489, %v540
          %v557 = vsub.f32 %v490, %v541
          %v558 = vsub.f32 %v491, %v542
          %v559 = vsub.f32 %v492, %v543
          %v560 = vsub.f32 %v493, %v544
          %v561 = vsub.f32 %v494, %v545
          %v562 = vsub.f32 %v495, %v546
          %v563 = vmul.f32 %v547, %v547
          %v564 = vmul.f32 %v548, %v548
          %v565 = vmul.f32 %v549, %v549
          %v566 = vmul.f32 %v550, %v550
          %v567 = vmul.f32 %v551, %v551
          %v568 = vmul.f32 %v552, %v552
          %v569 = vmul.f32 %v553, %v553
          %v570 = vmul.f32 %v554, %v554
          %v571 = vmul.f32 %v555, %v555
          %v572 = vmul.f32 %v556, %v556
          %v573 = vmul.f32 %v557, %v557
          %v574 = vmul.f32 %v558, %v558
          %v575 = vmul.f32 %v559, %v559
          %v576 = vmul.f32 %v560, %v560
          %v577 = vmul.f32 %v561, %v561
          %v578 = vmul.f32 %v562, %v562
          %579 = vadd.xlane.f32.xlu0 %v563
          %v580 = vpop.xlane.xlu0 %579
          %581 = vadd.xlane.f32.xlu0 %v564
          %v582 = vpop.xlane.xlu0 %581
          %583 = vadd.xlane.f32.xlu0 %v565
          %v584 = vpop.xlane.xlu0 %583
          %585 = vadd.xlane.f32.xlu0 %v566
          %v586 = vpop.xlane.xlu0 %585
          %587 = vadd.xlane.f32.xlu0 %v567
          %v588 = vpop.xlane.xlu0 %587
          %589 = vadd.xlane.f32.xlu0 %v568
          %v590 = vpop.xlane.xlu0 %589
          %591 = vadd.xlane.f32.xlu0 %v569
          %v592 = vpop.xlane.xlu0 %591
          %593 = vadd.xlane.f32.xlu0 %v570
          %v594 = vpop.xlane.xlu0 %593
          %595 = vadd.xlane.f32.xlu0 %v571
          %v596 = vpop.xlane.xlu0 %595
          %597 = vadd.xlane.f32.xlu0 %v572
          %v598 = vpop.xlane.xlu0 %597
          %599 = vadd.xlane.f32.xlu0 %v573
          %v600 = vpop.xlane.xlu0 %599
          %601 = vadd.xlane.f32.xlu0 %v574
          %v602 = vpop.xlane.xlu0 %601
          %603 = vadd.xlane.f32.xlu0 %v575
          %v604 = vpop.xlane.xlu0 %603
          %605 = vadd.xlane.f32.xlu0 %v576
          %v606 = vpop.xlane.xlu0 %605
          %607 = vadd.xlane.f32.xlu0 %v577
          %v608 = vpop.xlane.xlu0 %607
          %609 = vadd.xlane.f32.xlu0 %v578
          %v610 = vpop.xlane.xlu0 %609
          %v611 = vmul.f32 %v580, %v530
          %v612 = vmul.f32 %v582, %v530
          %v613 = vmul.f32 %v584, %v530
          %v614 = vmul.f32 %v586, %v530
          %v615 = vmul.f32 %v588, %v530
          %v616 = vmul.f32 %v590, %v530
          %v617 = vmul.f32 %v592, %v530
          %v618 = vmul.f32 %v594, %v530
          %v619 = vmul.f32 %v596, %v530
          %v620 = vmul.f32 %v598, %v530
          %v621 = vmul.f32 %v600, %v530
          %v622 = vmul.f32 %v602, %v530
          %v623 = vmul.f32 %v604, %v530
          %v624 = vmul.f32 %v606, %v530
          %v625 = vmul.f32 %v608, %v530
          %v626 = vmul.f32 %v610, %v530
          %v627 = vadd.f32 %v611, 1e-06
          %v628 = vadd.f32 %v612, 1e-06
          %v629 = vadd.f32 %v613, 1e-06
          %v630 = vadd.f32 %v614, 1e-06
          %v631 = vadd.f32 %v615, 1e-06
          %v632 = vadd.f32 %v616, 1e-06
          %v633 = vadd.f32 %v617, 1e-06
          %v634 = vadd.f32 %v618, 1e-06
          %v635 = vadd.f32 %v619, 1e-06
          %v636 = vadd.f32 %v620, 1e-06
          %v637 = vadd.f32 %v621, 1e-06
          %v638 = vadd.f32 %v622, 1e-06
          %v639 = vadd.f32 %v623, 1e-06
          %v640 = vadd.f32 %v624, 1e-06
          %v641 = vadd.f32 %v625, 1e-06
          %v642 = vadd.f32 %v626, 1e-06
          %v643 = vrsqrt.pop %v627
          %v644 = vrsqrt.pop %v628
          %v645 = vrsqrt.pop %v629
          %v646 = vrsqrt.pop %v630
          %v647 = vrsqrt.pop %v631
          %v648 = vrsqrt.pop %v632
          %v649 = vrsqrt.pop %v633
          %v650 = vrsqrt.pop %v634
          %v651 = vrsqrt.pop %v635
          %v652 = vrsqrt.pop %v636
          %v653 = vrsqrt.pop %v637
          %v654 = vrsqrt.pop %v638
          %v655 = vrsqrt.pop %v639
          %v656 = vrsqrt.pop %v640
          %v657 = vrsqrt.pop %v641
          %v658 = vrsqrt.pop %v642
          %v659 = vmul.f32 %v547, %v643
          %v660 = vmul.f32 %v548, %v644
          %v661 = vmul.f32 %v549, %v645
          %v662 = vmul.f32 %v550, %v646
          %v663 = vmul.f32 %v551, %v647
          %v664 = vmul.f32 %v552, %v648
          %v665 = vmul.f32 %v553, %v649
          %v666 = vmul.f32 %v554, %v650
          %v667 = vmul.f32 %v555, %v651
          %v668 = vmul.f32 %v556, %v652
          %v669 = vmul.f32 %v557, %v653
          %v670 = vmul.f32 %v558, %v654
          %v671 = vmul.f32 %v559, %v655
          %v672 = vmul.f32 %v560, %v656
          %v673 = vmul.f32 %v561, %v657
          %v674 = vmul.f32 %v562, %v658
          %v676 = vlaneseq
          %v677 = vshrl.u32 %v676, 7
          %v678 = vsub.s32 0, %v677
          %v679 = vrot.slane %v496, %v678
          %v681 = vmul.f32 %v659, %v679
          %v682 = vmul.f32 %v660, %v679
          %v683 = vmul.f32 %v661, %v679
          %v684 = vmul.f32 %v662, %v679
          %v685 = vmul.f32 %v663, %v679
          %v686 = vmul.f32 %v664, %v679
          %v687 = vmul.f32 %v665, %v679
          %v688 = vmul.f32 %v666, %v679
          %v689 = vmul.f32 %v667, %v679
          %v690 = vmul.f32 %v668, %v679
          %v691 = vmul.f32 %v669, %v679
          %v692 = vmul.f32 %v670, %v679
          %v693 = vmul.f32 %v671, %v679
          %v694 = vmul.f32 %v672, %v679
          %v695 = vmul.f32 %v673, %v679
          %v696 = vmul.f32 %v674, %v679
          %v698 = vlaneseq
          %v699 = vshrl.u32 %v698, 7
          %v700 = vsub.s32 0, %v699
          %v701 = vrot.slane %v497, %v700
          %v703 = vadd.f32 %v681, %v701
          %v704 = vadd.f32 %v682, %v701
          %v705 = vadd.f32 %v683, %v701
          %v706 = vadd.f32 %v684, %v701
          %v707 = vadd.f32 %v685, %v701
          %v708 = vadd.f32 %v686, %v701
          %v709 = vadd.f32 %v687, %v701
          %v710 = vadd.f32 %v688, %v701
          %v711 = vadd.f32 %v689, %v701
          %v712 = vadd.f32 %v690, %v701
          %v713 = vadd.f32 %v691, %v701
          %v714 = vadd.f32 %v692, %v701
          %v715 = vadd.f32 %v693, %v701
          %v716 = vadd.f32 %v694, %v701
          %v717 = vadd.f32 %v695, %v701
          %v718 = vadd.f32 %v696, %v701
          %v719 = vpack.c.bf16 %v704, %v703
          %v720 = vpack.c.bf16 %v706, %v705
          %v721 = vpack.c.bf16 %v708, %v707
          %v722 = vpack.c.bf16 %v710, %v709
          %v723 = vpack.c.bf16 %v712, %v711
          %v724 = vpack.c.bf16 %v714, %v713
          %v725 = vpack.c.bf16 %v716, %v715
          %v726 = vpack.c.bf16 %v718, %v717
          %727 = vst [vmem:[#allocation2] sm:$0xff] %v719
          %728 = vst [vmem:[#allocation2 + $0x8] sm:$0xff] %v720
          %729 = vst [vmem:[#allocation2 + $0x10] sm:$0xff] %v721
          %730 = vst [vmem:[#allocation2 + $0x18] sm:$0xff] %v722
          %731 = vst [vmem:[#allocation2 + $0x20] sm:$0xff] %v723
          %732 = vst [vmem:[#allocation2 + $0x28] sm:$0xff] %v724
          %733 = vst [vmem:[#allocation2 + $0x30] sm:$0xff] %v725
          %734 = vst [vmem:[#allocation2 + $0x38] sm:$0xff] %v726
          %735 = vst [vmem:[#allocation3] sm:$0xff] 0.0
          %736 = vst [vmem:[#allocation3 + $0x8] sm:$0xff] 0.0
          %737 = vst [vmem:[#allocation3 + $0x10] sm:$0xff] 0.0
          %738 = vst [vmem:[#allocation3 + $0x18] sm:$0xff] 0.0
          %739 = vst [vmem:[#allocation3 + $0x20] sm:$0xff] 0.0
          %740 = vst [vmem:[#allocation3 + $0x28] sm:$0xff] 0.0
          %741 = vst [vmem:[#allocation3 + $0x30] sm:$0xff] 0.0
          %742 = vst [vmem:[#allocation3 + $0x38] sm:$0xff] 0.0
          %743 = vst [vmem:[#allocation3 + $0x40] sm:$0xff] 0.0
          %744 = vst [vmem:[#allocation3 + $0x48] sm:$0xff] 0.0
          %745 = vst [vmem:[#allocation3 + $0x50] sm:$0xff] 0.0
          %746 = vst [vmem:[#allocation3 + $0x58] sm:$0xff] 0.0
          %747 = vst [vmem:[#allocation3 + $0x60] sm:$0xff] 0.0
          %748 = vst [vmem:[#allocation3 + $0x68] sm:$0xff] 0.0
          %749 = vst [vmem:[#allocation3 + $0x70] sm:$0xff] 0.0
          %750 = vst [vmem:[#allocation3 + $0x78] sm:$0xff] 0.0
        $region94: #{dinov2_reg_forward.7} parent=85 // pred_fallthru
          _
        %v751 = vld [vmem:[#allocation2] sm:$0xff]
        %v752 = vld [vmem:[#allocation2 + $0x8] sm:$0xff]
        %v753 = vld [vmem:[#allocation2 + $0x10] sm:$0xff]
        %v754 = vld [vmem:[#allocation2 + $0x18] sm:$0xff]
        %v755 = vld [vmem:[#allocation2 + $0x20] sm:$0xff]
        %v756 = vld [vmem:[#allocation2 + $0x28] sm:$0xff]
        %v757 = vld [vmem:[#allocation2 + $0x30] sm:$0xff]
        %v758 = vld [vmem:[#allocation2 + $0x38] sm:$0xff]
        %v759 = vld [vmem:[%s408] sm:$0xff]
        %v760 = vld [vmem:[%s408 + $0x8] sm:$0xff]
        %v761 = vld [vmem:[%s408 + $0x10] sm:$0xff]
        %v762 = vld [vmem:[%s408 + $0x18] sm:$0xff]
        %v763 = vld [vmem:[%s408 + $0x20] sm:$0xff]
        %v764 = vld [vmem:[%s408 + $0x28] sm:$0xff]
        %v765 = vld [vmem:[%s408 + $0x30] sm:$0xff]
        %v766 = vld [vmem:[%s408 + $0x38] sm:$0xff]
        %v767 = vld [vmem:[%s408 + $0x40] sm:$0xff]
        %v768 = vld [vmem:[%s408 + $0x48] sm:$0xff]
        %v769 = vld [vmem:[%s408 + $0x50] sm:$0xff]
        %v770 = vld [vmem:[%s408 + $0x58] sm:$0xff]
        %v771 = vld [vmem:[%s408 + $0x60] sm:$0xff]
        %v772 = vld [vmem:[%s408 + $0x68] sm:$0xff]
        %v773 = vld [vmem:[%s408 + $0x70] sm:$0xff]
        %v774 = vld [vmem:[%s408 + $0x78] sm:$0xff]
        %v775 = vld [vmem:[%s462] sm:$0x3]
        %v777 = vlaneseq
        %v778 = vshrl.u32 %v777, 7
        %v779 = vsub.s32 0, %v778
        %v780 = vrot.slane %v775, %v779
        %v781 = vlaneseq
        %v782 = vshrl.u32 %v781, 7
        %v783 = vsub.s32 1, %v782
        %v784 = vrot.slane %v775, %v783
        %v803 = vunpack.c.l.b16 %v759
        %v804 = vunpack.c.h.b16 %v759
        %v805 = vunpack.c.l.b16 %v760
        %v806 = vunpack.c.h.b16 %v760
        %v807 = vunpack.c.l.b16 %v761
        %v808 = vunpack.c.h.b16 %v761
        %v809 = vunpack.c.l.b16 %v762
        %v810 = vunpack.c.h.b16 %v762
        %v811 = vunpack.c.l.b16 %v763
        %v812 = vunpack.c.h.b16 %v763
        %v813 = vunpack.c.l.b16 %v764
        %v814 = vunpack.c.h.b16 %v764
        %v815 = vunpack.c.l.b16 %v765
        %v816 = vunpack.c.h.b16 %v765
        %v817 = vunpack.c.l.b16 %v766
        %v818 = vunpack.c.h.b16 %v766
        %v819 = vunpack.c.l.b16 %v767
        %v820 = vunpack.c.h.b16 %v767
        %v821 = vunpack.c.l.b16 %v768
        %v822 = vunpack.c.h.b16 %v768
        %v823 = vunpack.c.l.b16 %v769
        %v824 = vunpack.c.h.b16 %v769
        %v825 = vunpack.c.l.b16 %v770
        %v826 = vunpack.c.h.b16 %v770
        %v827 = vunpack.c.l.b16 %v771
        %v828 = vunpack.c.h.b16 %v771
        %v829 = vunpack.c.l.b16 %v772
        %v830 = vunpack.c.h.b16 %v772
        %v831 = vunpack.c.l.b16 %v773
        %v832 = vunpack.c.h.b16 %v773
        %v833 = vunpack.c.l.b16 %v774
        %v834 = vunpack.c.h.b16 %v774
        %v835 = vpack.c.b16 %v805, %v803
        %v836 = vpack.c.b16 %v806, %v804
        %v837 = vpack.c.b16 %v809, %v807
        %v838 = vpack.c.b16 %v810, %v808
        %v839 = vpack.c.b16 %v813, %v811
        %v840 = vpack.c.b16 %v814, %v812
        %v841 = vpack.c.b16 %v817, %v815
        %v842 = vpack.c.b16 %v818, %v816
        %v843 = vpack.c.b16 %v821, %v819
        %v844 = vpack.c.b16 %v822, %v820
        %v845 = vpack.c.b16 %v825, %v823
        %v846 = vpack.c.b16 %v826, %v824
        %v847 = vpack.c.b16 %v829, %v827
        %v848 = vpack.c.b16 %v830, %v828
        %v849 = vpack.c.b16 %v833, %v831
        %v850 = vpack.c.b16 %v834, %v832
        %867 = vmatprep.subr.bf16.mxu0 %v836
        %868 = vmatpush1.bf16.msra.mxu0 %v835
        %869 = vmatprep.subr.bf16.mxu0 %v838
        %870 = vmatpush1.bf16.msra.mxu0 %v837
        %871 = vmatprep.subr.bf16.mxu0 %v840
        %872 = vmatpush1.bf16.msra.mxu0 %v839
        %873 = vmatprep.subr.bf16.mxu0 %v842
        %874 = vmatpush1.bf16.msra.mxu0 %v841
        %875 = vmatprep.subr.bf16.mxu0 %v844
        %876 = vmatpush1.bf16.msra.mxu0 %v843
        %877 = vmatprep.subr.bf16.mxu0 %v846
        %878 = vmatpush1.bf16.msra.mxu0 %v845
        %879 = vmatprep.subr.bf16.mxu0 %v848
        %880 = vmatpush1.bf16.msra.mxu0 %v847
        %881 = vmatprep.subr.bf16.mxu0 %v850
        %882 = vmatpush1.bf16.msra.mxu0 %v849
        %883 = vmatprep.subr.bf16.mxu0 0
        %884 = vmatpush1.bf16.msra.mxu0 0
        %885 = vmatprep.subr.bf16.mxu0 0
        %886 = vmatpush1.bf16.msra.mxu0 0
        %887 = vmatprep.subr.bf16.mxu0 0
        %888 = vmatpush1.bf16.msra.mxu0 0
        %889 = vmatprep.subr.bf16.mxu0 0
        %890 = vmatpush1.bf16.msra.mxu0 0
        %891 = vmatprep.subr.bf16.mxu0 0
        %892 = vmatpush1.bf16.msra.mxu0 0
        %893 = vmatprep.subr.bf16.mxu0 0
        %894 = vmatpush1.bf16.msra.mxu0 0
        %895 = vmatprep.subr.bf16.mxu0 0
        %896 = vmatpush1.bf16.msra.mxu0 0
        %897 = vmatprep.subr.bf16.mxu0 0
        %898 = vmatpush1.bf16.msra.mxu0 0
        %899 = vmatprep.mubr.bf16.mxu0 0
        %900 = vmatmul.mubr.bf16.gmra.mrb[0].mxu0 %v751
        %v901 = vpop.f32.mrb[0].mxu0
        %v902 = vadd.f32 %v780, %v901
        %v903 = vpop.f32.mrb[0].mxu0
        %v904 = vadd.f32 %v784, %v903
        %v905 = vpop.f32.mrb[0].mxu0
        %v906 = vadd.f32 %v780, %v905
        %v907 = vpop.f32.mrb[0].mxu0
        %v908 = vadd.f32 %v784, %v907
        %909 = vmatprep.mubr.bf16.mxu0 0
        %910 = vmatmul.mubr.bf16.gmra.mrb[0].mxu0 %v752
        %v911 = vpop.f32.mrb[0].mxu0
        %v912 = vadd.f32 %v780, %v911
        %v913 = vpop.f32.mrb[0].mxu0
        %v914 = vadd.f32 %v784, %v913
        %v915 = vpop.f32.mrb[0].mxu0
        %v916 = vadd.f32 %v780, %v915
        %v917 = vpop.f32.mrb[0].mxu0
        %v918 = vadd.f32 %v784, %v917
        %919 = vmatprep.mubr.bf16.mxu0 0
        %920 = vmatmul.mubr.bf16.gmra.mrb[0].mxu0 %v753
        %v921 = vpop.f32.mrb[0].mxu0
        %v922 = vadd.f32 %v780, %v921
        %v923 = vpop.f32.mrb[0].mxu0
        %v924 = vadd.f32 %v784, %v923
        %v925 = vpop.f32.mrb[0].mxu0
        %v926 = vadd.f32 %v780, %v925
        %v927 = vpop.f32.mrb[0].mxu0
        %v928 = vadd.f32 %v784, %v927
        %929 = vmatprep.mubr.bf16.mxu0 0
        %930 = vmatmul.mubr.bf16.gmra.mrb[0].mxu0 %v754
        %v931 = vpop.f32.mrb[0].mxu0
        %v932 = vadd.f32 %v780, %v931
        %v933 = vpop.f32.mrb[0].mxu0
        %v934 = vadd.f32 %v784, %v933
        %v935 = vpop.f32.mrb[0].mxu0
        %v936 = vadd.f32 %v780, %v935
        %v937 = vpop.f32.mrb[0].mxu0
        %v938 = vadd.f32 %v784, %v937
        %939 = vmatprep.mubr.bf16.mxu0 0
        %940 = vmatmul.mubr.bf16.gmra.mrb[0].mxu0 %v755
        %v941 = vpop.f32.mrb[0].mxu0
        %v942 = vadd.f32 %v780, %v941
        %v943 = vpop.f32.mrb[0].mxu0
        %v944 = vadd.f32 %v784, %v943
        %v945 = vpop.f32.mrb[0].mxu0
        %v946 = vadd.f32 %v780, %v945
        %v947 = vpop.f32.mrb[0].mxu0
        %v948 = vadd.f32 %v784, %v947
        %949 = vmatprep.mubr.bf16.mxu0 0
        %950 = vmatmul.mubr.bf16.gmra.mrb[0].mxu0 %v756
        %v951 = vpop.f32.mrb[0].mxu0
        %v952 = vadd.f32 %v780, %v951
        %v953 = vpop.f32.mrb[0].mxu0
        %v954 = vadd.f32 %v784, %v953
        %v955 = vpop.f32.mrb[0].mxu0
        %v956 = vadd.f32 %v780, %v955
        %v957 = vpop.f32.mrb[0].mxu0
        %v958 = vadd.f32 %v784, %v957
        %959 = vmatprep.mubr.bf16.mxu0 0
        %960 = vmatmul.mubr.bf16.gmra.mrb[0].mxu0 %v757
        %v961 = vpop.f32.mrb[0].mxu0
        %v962 = vadd.f32 %v780, %v961
        %v963 = vpop.f32.mrb[0].mxu0
        %v964 = vadd.f32 %v784, %v963
        %v965 = vpop.f32.mrb[0].mxu0
        %v966 = vadd.f32 %v780, %v965
        %v967 = vpop.f32.mrb[0].mxu0
        %v968 = vadd.f32 %v784, %v967
        %969 = vmatprep.mubr.bf16.mxu0 0
        %970 = vmatmul.mubr.bf16.gmra.mrb[0].mxu0 %v758
        %v971 = vpop.f32.mrb[0].mxu0
        %v972 = vadd.f32 %v780, %v971
        %v973 = vpop.f32.mrb[0].mxu0
        %v974 = vadd.f32 %v784, %v973
        %v975 = vpop.f32.mrb[0].mxu0
        %v976 = vadd.f32 %v780, %v975
        %v977 = vpop.f32.mrb[0].mxu0
        %v978 = vadd.f32 %v784, %v977
        %979 = vdwg.mxu0
        %v980 = vmul.f32 %v902, 0.5
        %v981 = vmul.f32 %v904, 0.5
        %v982 = vmul.f32 %v906, 0.5
        %v983 = vmul.f32 %v908, 0.5
        %v984 = vmul.f32 %v912, 0.5
        %v985 = vmul.f32 %v914, 0.5
        %v986 = vmul.f32 %v916, 0.5
        %v987 = vmul.f32 %v918, 0.5
        %v988 = vmul.f32 %v922, 0.5
        %v989 = vmul.f32 %v924, 0.5
        %v990 = vmul.f32 %v926, 0.5
        %v991 = vmul.f32 %v928, 0.5
        %v992 = vmul.f32 %v932, 0.5
        %v993 = vmul.f32 %v934, 0.5
        %v994 = vmul.f32 %v936, 0.5
        %v995 = vmul.f32 %v938, 0.5
        %v996 = vmul.f32 %v942, 0.5
        %v997 = vmul.f32 %v944, 0.5
        %v998 = vmul.f32 %v946, 0.5
        %v999 = vmul.f32 %v948, 0.5
        %v1000 = vmul.f32 %v952, 0.5
        %v1001 = vmul.f32 %v954, 0.5
        %v1002 = vmul.f32 %v956, 0.5
        %v1003 = vmul.f32 %v958, 0.5
        %v1004 = vmul.f32 %v962, 0.5
        %v1005 = vmul.f32 %v964, 0.5
        %v1006 = vmul.f32 %v966, 0.5
        %v1007 = vmul.f32 %v968, 0.5
        %v1008 = vmul.f32 %v972, 0.5
        %v1009 = vmul.f32 %v974, 0.5
        %v1010 = vmul.f32 %v976, 0.5
        %v1011 = vmul.f32 %v978, 0.5
        %v1012 = vmul.f32 %v902, 0.70710677
        %v1013 = vmul.f32 %v904, 0.70710677
        %v1014 = vmul.f32 %v906, 0.70710677
        %v1015 = vmul.f32 %v908, 0.70710677
        %v1016 = vmul.f32 %v912, 0.70710677
        %v1017 = vmul.f32 %v914, 0.70710677
        %v1018 = vmul.f32 %v916, 0.70710677
        %v1019 = vmul.f32 %v918, 0.70710677
        %v1020 = vmul.f32 %v922, 0.70710677
        %v1021 = vmul.f32 %v924, 0.70710677
        %v1022 = vmul.f32 %v926, 0.70710677
        %v1023 = vmul.f32 %v928, 0.70710677
        %v1024 = vmul.f32 %v932, 0.70710677
        %v1025 = vmul.f32 %v934, 0.70710677
        %v1026 = vmul.f32 %v936, 0.70710677
        %v1027 = vmul.f32 %v938, 0.70710677
        %v1028 = vmul.f32 %v942, 0.70710677
        %v1029 = vmul.f32 %v944, 0.70710677
        %v1030 = vmul.f32 %v946, 0.70710677
        %v1031 = vmul.f32 %v948, 0.70710677
        %v1032 = vmul.f32 %v952, 0.70710677
        %v1033 = vmul.f32 %v954, 0.70710677
        %v1034 = vmul.f32 %v956, 0.70710677
        %v1035 = vmul.f32 %v958, 0.70710677
        %v1036 = vmul.f32 %v962, 0.70710677
        %v1037 = vmul.f32 %v964, 0.70710677
        %v1038 = vmul.f32 %v966, 0.70710677
        %v1039 = vmul.f32 %v968, 0.70710677
        %v1040 = vmul.f32 %v972, 0.70710677
        %v1041 = vmul.f32 %v974, 0.70710677
        %v1042 = vmul.f32 %v976, 0.70710677
        %v1043 = vmul.f32 %v978, 0.70710677
        %v1044 = vand.u32 2147483647, %v1012
        %v1045 = vand.u32 2147483647, %v1013
        %v1046 = vand.u32 2147483647, %v1014
        %v1047 = vand.u32 2147483647, %v1015
        %v1048 = vand.u32 2147483647, %v1016
        %v1049 = vand.u32 2147483647, %v1017
        %v1050 = vand.u32 2147483647, %v1018
        %v1051 = vand.u32 2147483647, %v1019
        %v1052 = vand.u32 2147483647, %v1020
        %v1053 = vand.u32 2147483647, %v1021
        %v1054 = vand.u32 2147483647, %v1022
        %v1055 = vand.u32 2147483647, %v1023
        %v1056 = vand.u32 2147483647, %v1024
        %v1057 = vand.u32 2147483647, %v1025
        %v1058 = vand.u32 2147483647, %v1026
        %v1059 = vand.u32 2147483647, %v1027
        %v1060 = vand.u32 2147483647, %v1028
        %v1061 = vand.u32 2147483647, %v1029
        %v1062 = vand.u32 2147483647, %v1030
        %v1063 = vand.u32 2147483647, %v1031
        %v1064 = vand.u32 2147483647, %v1032
        %v1065 = vand.u32 2147483647, %v1033
        %v1066 = vand.u32 2147483647, %v1034
        %v1067 = vand.u32 2147483647, %v1035
        %v1068 = vand.u32 2147483647, %v1036
        %v1069 = vand.u32 2147483647, %v1037
        %v1070 = vand.u32 2147483647, %v1038
        %v1071 = vand.u32 2147483647, %v1039
        %v1072 = vand.u32 2147483647, %v1040
        %v1073 = vand.u32 2147483647, %v1041
        %v1074 = vand.u32 2147483647, %v1042
        %v1075 = vand.u32 2147483647, %v1043
        %v1076 = vmul.f32 %v1044, 0.3275911
        %v1077 = vmul.f32 %v1045, 0.3275911
        %v1078 = vmul.f32 %v1046, 0.3275911
        %v1079 = vmul.f32 %v1047, 0.3275911
        %v1080 = vmul.f32 %v1048, 0.3275911
        %v1081 = vmul.f32 %v1049, 0.3275911
        %v1082 = vmul.f32 %v1050, 0.3275911
        %v1083 = vmul.f32 %v1051, 0.3275911
        %v1084 = vmul.f32 %v1052, 0.3275911
        %v1085 = vmul.f32 %v1053, 0.3275911
        %v1086 = vmul.f32 %v1054, 0.3275911
        %v1087 = vmul.f32 %v1055, 0.3275911
        %v1088 = vmul.f32 %v1056, 0.3275911
        %v1089 = vmul.f32 %v1057, 0.3275911
        %v1090 = vmul.f32 %v1058, 0.3275911
        %v1091 = vmul.f32 %v1059, 0.3275911
        %v1092 = vmul.f32 %v1060, 0.3275911
        %v1093 = vmul.f32 %v1061, 0.3275911
        %v1094 = vmul.f32 %v1062, 0.3275911
        %v1095 = vmul.f32 %v1063, 0.3275911
        %v1096 = vmul.f32 %v1064, 0.3275911
        %v1097 = vmul.f32 %v1065, 0.3275911
        %v1098 = vmul.f32 %v1066, 0.3275911
        %v1099 = vmul.f32 %v1067, 0.3275911
        %v1100 = vmul.f32 %v1068, 0.3275911
        %v1101 = vmul.f32 %v1069, 0.3275911
        %v1102 = vmul.f32 %v1070, 0.3275911
        %v1103 = vmul.f32 %v1071, 0.3275911
        %v1104 = vmul.f32 %v1072, 0.3275911
        %v1105 = vmul.f32 %v1073, 0.3275911
        %v1106 = vmul.f32 %v1074, 0.3275911
        %v1107 = vmul.f32 %v1075, 0.3275911
        %v1108 = vadd.f32 %v1076, 1.0
        %v1109 = vadd.f32 %v1077, 1.0
        %v1110 = vadd.f32 %v1078, 1.0
        %v1111 = vadd.f32 %v1079, 1.0
        %v1112 = vadd.f32 %v1080, 1.0
        %v1113 = vadd.f32 %v1081, 1.0
        %v1114 = vadd.f32 %v1082, 1.0
        %v1115 = vadd.f32 %v1083, 1.0
        %v1116 = vadd.f32 %v1084, 1.0
        %v1117 = vadd.f32 %v1085, 1.0
        %v1118 = vadd.f32 %v1086, 1.0
        %v1119 = vadd.f32 %v1087, 1.0
        %v1120 = vadd.f32 %v1088, 1.0
        %v1121 = vadd.f32 %v1089, 1.0
        %v1122 = vadd.f32 %v1090, 1.0
        %v1123 = vadd.f32 %v1091, 1.0
        %v1124 = vadd.f32 %v1092, 1.0
        %v1125 = vadd.f32 %v1093, 1.0
        %v1126 = vadd.f32 %v1094, 1.0
        %v1127 = vadd.f32 %v1095, 1.0
        %v1128 = vadd.f32 %v1096, 1.0
        %v1129 = vadd.f32 %v1097, 1.0
        %v1130 = vadd.f32 %v1098, 1.0
        %v1131 = vadd.f32 %v1099, 1.0
        %v1132 = vadd.f32 %v1100, 1.0
        %v1133 = vadd.f32 %v1101, 1.0
        %v1134 = vadd.f32 %v1102, 1.0
        %v1135 = vadd.f32 %v1103, 1.0
        %v1136 = vadd.f32 %v1104, 1.0
        %v1137 = vadd.f32 %v1105, 1.0
        %v1138 = vadd.f32 %v1106, 1.0
        %v1139 = vadd.f32 %v1107, 1.0
        %v1140 = vrcp.pop %v1108
        %v1141 = vmul.f32 1.0, %v1140
        %v1142 = vrcp.pop %v1109
        %v1143 = vmul.f32 1.0, %v1142
        %v1144 = vrcp.pop %v1110
        %v1145 = vmul.f32 1.0, %v1144
        %v1146 = vrcp.pop %v1111
        %v1147 = vmul.f32 1.0, %v1146
        %v1148 = vrcp.pop %v1112
        %v1149 = vmul.f32 1.0, %v1148
        %v1150 = vrcp.pop %v1113
        %v1151 = vmul.f32 1.0, %v1150
        %v1152 = vrcp.pop %v1114
        %v1153 = vmul.f32 1.0, %v1152
        %v1154 = vrcp.pop %v1115
        %v1155 = vmul.f32 1.0, %v1154
        %v1156 = vrcp.pop %v1116
        %v1157 = vmul.f32 1.0, %v1156
        %v1158 = vrcp.pop %v1117
        %v1159 = vmul.f32 1.0, %v1158
        %v1160 = vrcp.pop %v1118
        %v1161 = vmul.f32 1.0, %v1160
        %v1162 = vrcp.pop %v1119
        %v1163 = vmul.f32 1.0, %v1162
        %v1164 = vrcp.pop %v1120
        %v1165 = vmul.f32 1.0, %v1164
        %v1166 = vrcp.pop %v1121
        %v1167 = vmul.f32 1.0, %v1166
        %v1168 = vrcp.pop %v1122
        %v1169 = vmul.f32 1.0, %v1168
        %v1170 = vrcp.pop %v1123
        %v1171 = vmul.f32 1.0, %v1170
        %v1172 = vrcp.pop %v1124
        %v1173 = vmul.f32 1.0, %v1172
        %v1174 = vrcp.pop %v1125
        %v1175 = vmul.f32 1.0, %v1174
        %v1176 = vrcp.pop %v1126
        %v1177 = vmul.f32 1.0, %v1176
        %v1178 = vrcp.pop %v1127
        %v1179 = vmul.f32 1.0, %v1178
        %v1180 = vrcp.pop %v1128
        %v1181 = vmul.f32 1.0, %v1180
        %v1182 = vrcp.pop %v1129
        %v1183 = vmul.f32 1.0, %v1182
        %v1184 = vrcp.pop %v1130
        %v1185 = vmul.f32 1.0, %v1184
        %v1186 = vrcp.pop %v1131
        %v1187 = vmul.f32 1.0, %v1186
        %v1188 = vrcp.pop %v1132
        %v1189 = vmul.f32 1.0, %v1188
        %v1190 = vrcp.pop %v1133
        %v1191 = vmul.f32 1.0, %v1190
        %v1192 = vrcp.pop %v1134
        %v1193 = vmul.f32 1.0, %v1192
        %v1194 = vrcp.pop %v1135
        %v1195 = vmul.f32 1.0, %v1194
        %v1196 = vrcp.pop %v1136
        %v1197 = vmul.f32 1.0, %v1196
        %v1198 = vrcp.pop %v1137
        %v1199 = vmul.f32 1.0, %v1198
        %v1200 = vrcp.pop %v1138
        %v1201 = vmul.f32 1.0, %v1200
        %v1202 = vrcp.pop %v1139
        %v1203 = vmul.f32 1.0, %v1202
        %v1204 = vmul.f32 %v1141, 1.0614054
        %v1205 = vmul.f32 %v1143, 1.0614054
        %v1206 = vmul.f32 %v1145, 1.0614054
        %v1207 = vmul.f32 %v1147, 1.0614054
        %v1208 = vmul.f32 %v1149, 1.0614054
        %v1209 = vmul.f32 %v1151, 1.0614054
        %v1210 = vmul.f32 %v1153, 1.0614054
        %v1211 = vmul.f32 %v1155, 1.0614054
        %v1212 = vmul.f32 %v1157, 1.0614054
        %v1213 = vmul.f32 %v1159, 1.0614054
        %v1214 = vmul.f32 %v1161, 1.0614054
        %v1215 = vmul.f32 %v1163, 1.0614054
        %v1216 = vmul.f32 %v1165, 1.0614054
        %v1217 = vmul.f32 %v1167, 1.0614054
        %v1218 = vmul.f32 %v1169, 1.0614054
        %v1219 = vmul.f32 %v1171, 1.0614054
        %v1220 = vmul.f32 %v1173, 1.0614054
        %v1221 = vmul.f32 %v1175, 1.0614054
        %v1222 = vmul.f32 %v1177, 1.0614054
        %v1223 = vmul.f32 %v1179, 1.0614054
        %v1224 = vmul.f32 %v1181, 1.0614054
        %v1225 = vmul.f32 %v1183, 1.0614054
        %v1226 = vmul.f32 %v1185, 1.0614054
        %v1227 = vmul.f32 %v1187, 1.0614054
        %v1228 = vmul.f32 %v1189, 1.0614054
        %v1229 = vmul.f32 %v1191, 1.0614054
        %v1230 = vmul.f32 %v1193, 1.0614054
        %v1231 = vmul.f32 %v1195, 1.0614054
        %v1232 = vmul.f32 %v1197, 1.0614054
        %v1233 = vmul.f32 %v1199, 1.0614054
        %v1234 = vmul.f32 %v1201, 1.0614054
        %v1235 = vmul.f32 %v1203, 1.0614054
        %v1236 = vadd.f32 %v1204, -1.4531521
        %v1237 = vadd.f32 %v1205, -1.4531521
        %v1238 = vadd.f32 %v1206, -1.4531521
        %v1239 = vadd.f32 %v1207, -1.4531521
        %v1240 = vadd.f32 %v1208, -1.4531521
        %v1241 = vadd.f32 %v1209, -1.4531521
        %v1242 = vadd.f32 %v1210, -1.4531521
        %v1243 = vadd.f32 %v1211, -1.4531521
        %v1244 = vadd.f32 %v1212, -1.4531521
        %v1245 = vadd.f32 %v1213, -1.4531521
        %v1246 = vadd.f32 %v1214, -1.4531521
        %v1247 = vadd.f32 %v1215, -1.4531521
        %v1248 = vadd.f32 %v1216, -1.4531521
        %v1249 = vadd.f32 %v1217, -1.4531521
        %v1250 = vadd.f32 %v1218, -1.4531521
        %v1251 = vadd.f32 %v1219, -1.4531521
        %v1252 = vadd.f32 %v1220, -1.4531521
        %v1253 = vadd.f32 %v1221, -1.4531521
        %v1254 = vadd.f32 %v1222, -1.4531521
        %v1255 = vadd.f32 %v1223, -1.4531521
        %v1256 = vadd.f32 %v1224, -1.4531521
        %v1257 = vadd.f32 %v1225, -1.4531521
        %v1258 = vadd.f32 %v1226, -1.4531521
        %v1259 = vadd.f32 %v1227, -1.4531521
        %v1260 = vadd.f32 %v1228, -1.4531521
        %v1261 = vadd.f32 %v1229, -1.4531521
        %v1262 = vadd.f32 %v1230, -1.4531521
        %v1263 = vadd.f32 %v1231, -1.4531521
        %v1264 = vadd.f32 %v1232, -1.4531521
        %v1265 = vadd.f32 %v1233, -1.4531521
        %v1266 = vadd.f32 %v1234, -1.4531521
        %v1267 = vadd.f32 %v1235, -1.4531521
        %v1268 = vmul.f32 %v1141, %v1236
        %v1269 = vmul.f32 %v1143, %v1237
        %v1270 = vmul.f32 %v1145, %v1238
        %v1271 = vmul.f32 %v1147, %v1239
        %v1272 = vmul.f32 %v1149, %v1240
        %v1273 = vmul.f32 %v1151, %v1241
        %v1274 = vmul.f32 %v1153, %v1242
        %v1275 = vmul.f32 %v1155, %v1243
        %v1276 = vmul.f32 %v1157, %v1244
        %v1277 = vmul.f32 %v1159, %v1245
        %v1278 = vmul.f32 %v1161, %v1246
        %v1279 = vmul.f32 %v1163, %v1247
        %v1280 = vmul.f32 %v1165, %v1248
        %v1281 = vmul.f32 %v1167, %v1249
        %v1282 = vmul.f32 %v1169, %v1250
        %v1283 = vmul.f32 %v1171, %v1251
        %v1284 = vmul.f32 %v1173, %v1252
        %v1285 = vmul.f32 %v1175, %v1253
        %v1286 = vmul.f32 %v1177, %v1254
        %v1287 = vmul.f32 %v1179, %v1255
        %v1288 = vmul.f32 %v1181, %v1256
        %v1289 = vmul.f32 %v1183, %v1257
        %v1290 = vmul.f32 %v1185, %v1258
        %v1291 = vmul.f32 %v1187, %v1259
        %v1292 = vmul.f32 %v1189, %v1260
        %v1293 = vmul.f32 %v1191, %v1261
        %v1294 = vmul.f32 %v1193, %v1262
        %v1295 = vmul.f32 %v1195, %v1263
        %v1296 = vmul.f32 %v1197, %v1264
        %v1297 = vmul.f32 %v1199, %v1265
        %v1298 = vmul.f32 %v1201, %v1266
        %v1299 = vmul.f32 %v1203, %v1267
        %v1300 = vadd.f32 %v1268, 1.4214138
        %v1301 = vadd.f32 %v1269, 1.4214138
        %v1302 = vadd.f32 %v1270, 1.4214138
        %v1303 = vadd.f32 %v1271, 1.4214138
        %v1304 = vadd.f32 %v1272, 1.4214138
        %v1305 = vadd.f32 %v1273, 1.4214138
        %v1306 = vadd.f32 %v1274, 1.4214138
        %v1307 = vadd.f32 %v1275, 1.4214138
        %v1308 = vadd.f32 %v1276, 1.4214138
        %v1309 = vadd.f32 %v1277, 1.4214138
        %v1310 = vadd.f32 %v1278, 1.4214138
        %v1311 = vadd.f32 %v1279, 1.4214138
        %v1312 = vadd.f32 %v1280, 1.4214138
        %v1313 = vadd.f32 %v1281, 1.4214138
        %v1314 = vadd.f32 %v1282, 1.4214138
        %v1315 = vadd.f32 %v1283, 1.4214138
        %v1316 = vadd.f32 %v1284, 1.4214138
        %v1317 = vadd.f32 %v1285, 1.4214138
        %v1318 = vadd.f32 %v1286, 1.4214138
        %v1319 = vadd.f32 %v1287, 1.4214138
        %v1320 = vadd.f32 %v1288, 1.4214138
        %v1321 = vadd.f32 %v1289, 1.4214138
        %v1322 = vadd.f32 %v1290, 1.4214138
        %v1323 = vadd.f32 %v1291, 1.4214138
        %v1324 = vadd.f32 %v1292, 1.4214138
        %v1325 = vadd.f32 %v1293, 1.4214138
        %v1326 = vadd.f32 %v1294, 1.4214138
        %v1327 = vadd.f32 %v1295, 1.4214138
        %v1328 = vadd.f32 %v1296, 1.4214138
        %v1329 = vadd.f32 %v1297, 1.4214138
        %v1330 = vadd.f32 %v1298, 1.4214138
        %v1331 = vadd.f32 %v1299, 1.4214138
        %v1332 = vmul.f32 %v1141, %v1300
        %v1333 = vmul.f32 %v1143, %v1301
        %v1334 = vmul.f32 %v1145, %v1302
        %v1335 = vmul.f32 %v1147, %v1303
        %v1336 = vmul.f32 %v1149, %v1304
        %v1337 = vmul.f32 %v1151, %v1305
        %v1338 = vmul.f32 %v1153, %v1306
        %v1339 = vmul.f32 %v1155, %v1307
        %v1340 = vmul.f32 %v1157, %v1308
        %v1341 = vmul.f32 %v1159, %v1309
        %v1342 = vmul.f32 %v1161, %v1310
        %v1343 = vmul.f32 %v1163, %v1311
        %v1344 = vmul.f32 %v1165, %v1312
        %v1345 = vmul.f32 %v1167, %v1313
        %v1346 = vmul.f32 %v1169, %v1314
        %v1347 = vmul.f32 %v1171, %v1315
        %v1348 = vmul.f32 %v1173, %v1316
        %v1349 = vmul.f32 %v1175, %v1317
        %v1350 = vmul.f32 %v1177, %v1318
        %v1351 = vmul.f32 %v1179, %v1319
        %v1352 = vmul.f32 %v1181, %v1320
        %v1353 = vmul.f32 %v1183, %v1321
        %v1354 = vmul.f32 %v1185, %v1322
        %v1355 = vmul.f32 %v1187, %v1323
        %v1356 = vmul.f32 %v1189, %v1324
        %v1357 = vmul.f32 %v1191, %v1325
        %v1358 = vmul.f32 %v1193, %v1326
        %v1359 = vmul.f32 %v1195, %v1327
        %v1360 = vmul.f32 %v1197, %v1328
        %v1361 = vmul.f32 %v1199, %v1329
        %v1362 = vmul.f32 %v1201, %v1330
        %v1363 = vmul.f32 %v1203, %v1331
        %v1364 = vadd.f32 %v1332, -0.28449672
        %v1365 = vadd.f32 %v1333, -0.28449672
        %v1366 = vadd.f32 %v1334, -0.28449672
        %v1367 = vadd.f32 %v1335, -0.28449672
        %v1368 = vadd.f32 %v1336, -0.28449672
        %v1369 = vadd.f32 %v1337, -0.28449672
        %v1370 = vadd.f32 %v1338, -0.28449672
        %v1371 = vadd.f32 %v1339, -0.28449672
        %v1372 = vadd.f32 %v1340, -0.28449672
        %v1373 = vadd.f32 %v1341, -0.28449672
        %v1374 = vadd.f32 %v1342, -0.28449672
        %v1375 = vadd.f32 %v1343, -0.28449672
        %v1376 = vadd.f32 %v1344, -0.28449672
        %v1377 = vadd.f32 %v1345, -0.28449672
        %v1378 = vadd.f32 %v1346, -0.28449672
        %v1379 = vadd.f32 %v1347, -0.28449672
        %v1380 = vadd.f32 %v1348, -0.28449672
        %v1381 = vadd.f32 %v1349, -0.28449672
        %v1382 = vadd.f32 %v1350, -0.28449672
        %v1383 = vadd.f32 %v1351, -0.28449672
        %v1384 = vadd.f32 %v1352, -0.28449672
        %v1385 = vadd.f32 %v1353, -0.28449672
        %v1386 = vadd.f32 %v1354, -0.28449672
        %v1387 = vadd.f32 %v1355, -0.28449672
        %v1388 = vadd.f32 %v1356, -0.28449672
        %v1389 = vadd.f32 %v1357, -0.28449672
        %v1390 = vadd.f32 %v1358, -0.28449672
        %v1391 = vadd.f32 %v1359, -0.28449672
        %v1392 = vadd.f32 %v1360, -0.28449672
        %v1393 = vadd.f32 %v1361, -0.28449672
        %v1394 = vadd.f32 %v1362, -0.28449672
        %v1395 = vadd.f32 %v1363, -0.28449672
        %v1396 = vmul.f32 %v1141, %v1364
        %v1397 = vmul.f32 %v1143, %v1365
        %v1398 = vmul.f32 %v1145, %v1366
        %v1399 = vmul.f32 %v1147, %v1367
        %v1400 = vmul.f32 %v1149, %v1368
        %v1401 = vmul.f32 %v1151, %v1369
        %v1402 = vmul.f32 %v1153, %v1370
        %v1403 = vmul.f32 %v1155, %v1371
        %v1404 = vmul.f32 %v1157, %v1372
        %v1405 = vmul.f32 %v1159, %v1373
        %v1406 = vmul.f32 %v1161, %v1374
        %v1407 = vmul.f32 %v1163, %v1375
        %v1408 = vmul.f32 %v1165, %v1376
        %v1409 = vmul.f32 %v1167, %v1377
        %v1410 = vmul.f32 %v1169, %v1378
        %v1411 = vmul.f32 %v1171, %v1379
        %v1412 = vmul.f32 %v1173, %v1380
        %v1413 = vmul.f32 %v1175, %v1381
        %v1414 = vmul.f32 %v1177, %v1382
        %v1415 = vmul.f32 %v1179, %v1383
        %v1416 = vmul.f32 %v1181, %v1384
        %v1417 = vmul.f32 %v1183, %v1385
        %v1418 = vmul.f32 %v1185, %v1386
        %v1419 = vmul.f32 %v1187, %v1387
        %v1420 = vmul.f32 %v1189, %v1388
        %v1421 = vmul.f32 %v1191, %v1389
        %v1422 = vmul.f32 %v1193, %v1390
        %v1423 = vmul.f32 %v1195, %v1391
        %v1424 = vmul.f32 %v1197, %v1392
        %v1425 = vmul.f32 %v1199, %v1393
        %v1426 = vmul.f32 %v1201, %v1394
        %v1427 = vmul.f32 %v1203, %v1395
        %v1428 = vadd.f32 %v1396, 0.2548296
        %v1429 = vadd.f32 %v1397, 0.2548296
        %v1430 = vadd.f32 %v1398, 0.2548296
        %v1431 = vadd.f32 %v1399, 0.2548296
        %v1432 = vadd.f32 %v1400, 0.2548296
        %v1433 = vadd.f32 %v1401, 0.2548296
        %v1434 = vadd.f32 %v1402, 0.2548296
        %v1435 = vadd.f32 %v1403, 0.2548296
        %v1436 = vadd.f32 %v1404, 0.2548296
        %v1437 = vadd.f32 %v1405, 0.2548296
        %v1438 = vadd.f32 %v1406, 0.2548296
        %v1439 = vadd.f32 %v1407, 0.2548296
        %v1440 = vadd.f32 %v1408, 0.2548296
        %v1441 = vadd.f32 %v1409, 0.2548296
        %v1442 = vadd.f32 %v1410, 0.2548296
        %v1443 = vadd.f32 %v1411, 0.2548296
        %v1444 = vadd.f32 %v1412, 0.2548296
        %v1445 = vadd.f32 %v1413, 0.2548296
        %v1446 = vadd.f32 %v1414, 0.2548296
        %v1447 = vadd.f32 %v1415, 0.2548296
        %v1448 = vadd.f32 %v1416, 0.2548296
        %v1449 = vadd.f32 %v1417, 0.2548296
        %v1450 = vadd.f32 %v1418, 0.2548296
        %v1451 = vadd.f32 %v1419, 0.2548296
        %v1452 = vadd.f32 %v1420, 0.2548296
        %v1453 = vadd.f32 %v1421, 0.2548296
        %v1454 = vadd.f32 %v1422, 0.2548296
        %v1455 = vadd.f32 %v1423, 0.2548296
        %v1456 = vadd.f32 %v1424, 0.2548296
        %v1457 = vadd.f32 %v1425, 0.2548296
        %v1458 = vadd.f32 %v1426, 0.2548296
        %v1459 = vadd.f32 %v1427, 0.2548296
        %v1460 = vmul.f32 %v1141, %v1428
        %v1461 = vmul.f32 %v1143, %v1429
        %v1462 = vmul.f32 %v1145, %v1430
        %v1463 = vmul.f32 %v1147, %v1431
        %v1464 = vmul.f32 %v1149, %v1432
        %v1465 = vmul.f32 %v1151, %v1433
        %v1466 = vmul.f32 %v1153, %v1434
        %v1467 = vmul.f32 %v1155, %v1435
        %v1468 = vmul.f32 %v1157, %v1436
        %v1469 = vmul.f32 %v1159, %v1437
        %v1470 = vmul.f32 %v1161, %v1438
        %v1471 = vmul.f32 %v1163, %v1439
        %v1472 = vmul.f32 %v1165, %v1440
        %v1473 = vmul.f32 %v1167, %v1441
        %v1474 = vmul.f32 %v1169, %v1442
        %v1475 = vmul.f32 %v1171, %v1443
        %v1476 = vmul.f32 %v1173, %v1444
        %v1477 = vmul.f32 %v1175, %v1445
        %v1478 = vmul.f32 %v1177, %v1446
        %v1479 = vmul.f32 %v1179, %v1447
        %v1480 = vmul.f32 %v1181, %v1448
        %v1481 = vmul.f32 %v1183, %v1449
        %v1482 = vmul.f32 %v1185, %v1450
        %v1483 = vmul.f32 %v1187, %v1451
        %v1484 = vmul.f32 %v1189, %v1452
        %v1485 = vmul.f32 %v1191, %v1453
        %v1486 = vmul.f32 %v1193, %v1454
        %v1487 = vmul.f32 %v1195, %v1455
        %v1488 = vmul.f32 %v1197, %v1456
        %v1489 = vmul.f32 %v1199, %v1457
        %v1490 = vmul.f32 %v1201, %v1458
        %v1491 = vmul.f32 %v1203, %v1459
        %v1492 = vsub.f32 0.0, %v1044
        %v1493 = vsub.f32 0.0, %v1045
        %v1494 = vsub.f32 0.0, %v1046
        %v1495 = vsub.f32 0.0, %v1047
        %v1496 = vsub.f32 0.0, %v1048
        %v1497 = vsub.f32 0.0, %v1049
        %v1498 = vsub.f32 0.0, %v1050
        %v1499 = vsub.f32 0.0, %v1051
        %v1500 = vsub.f32 0.0, %v1052
        %v1501 = vsub.f32 0.0, %v1053
        %v1502 = vsub.f32 0.0, %v1054
        %v1503 = vsub.f32 0.0, %v1055
        %v1504 = vsub.f32 0.0, %v1056
        %v1505 = vsub.f32 0.0, %v1057
        %v1506 = vsub.f32 0.0, %v1058
        %v1507 = vsub.f32 0.0, %v1059
        %v1508 = vsub.f32 0.0, %v1060
        %v1509 = vsub.f32 0.0, %v1061
        %v1510 = vsub.f32 0.0, %v1062
        %v1511 = vsub.f32 0.0, %v1063
        %v1512 = vsub.f32 0.0, %v1064
        %v1513 = vsub.f32 0.0, %v1065
        %v1514 = vsub.f32 0.0, %v1066
        %v1515 = vsub.f32 0.0, %v1067
        %v1516 = vsub.f32 0.0, %v1068
        %v1517 = vsub.f32 0.0, %v1069
        %v1518 = vsub.f32 0.0, %v1070
        %v1519 = vsub.f32 0.0, %v1071
        %v1520 = vsub.f32 0.0, %v1072
        %v1521 = vsub.f32 0.0, %v1073
        %v1522 = vsub.f32 0.0, %v1074
        %v1523 = vsub.f32 0.0, %v1075
        %v1524 = vmul.f32 %v1492, %v1044
        %v1525 = vmul.f32 %v1493, %v1045
        %v1526 = vmul.f32 %v1494, %v1046
        %v1527 = vmul.f32 %v1495, %v1047
        %v1528 = vmul.f32 %v1496, %v1048
        %v1529 = vmul.f32 %v1497, %v1049
        %v1530 = vmul.f32 %v1498, %v1050
        %v1531 = vmul.f32 %v1499, %v1051
        %v1532 = vmul.f32 %v1500, %v1052
        %v1533 = vmul.f32 %v1501, %v1053
        %v1534 = vmul.f32 %v1502, %v1054
        %v1535 = vmul.f32 %v1503, %v1055
        %v1536 = vmul.f32 %v1504, %v1056
        %v1537 = vmul.f32 %v1505, %v1057
        %v1538 = vmul.f32 %v1506, %v1058
        %v1539 = vmul.f32 %v1507, %v1059
        %v1540 = vmul.f32 %v1508, %v1060
        %v1541 = vmul.f32 %v1509, %v1061
        %v1542 = vmul.f32 %v1510, %v1062
        %v1543 = vmul.f32 %v1511, %v1063
        %v1544 = vmul.f32 %v1512, %v1064
        %v1545 = vmul.f32 %v1513, %v1065
        %v1546 = vmul.f32 %v1514, %v1066
        %v1547 = vmul.f32 %v1515, %v1067
        %v1548 = vmul.f32 %v1516, %v1068
        %v1549 = vmul.f32 %v1517, %v1069
        %v1550 = vmul.f32 %v1518, %v1070
        %v1551 = vmul.f32 %v1519, %v1071
        %v1552 = vmul.f32 %v1520, %v1072
        %v1553 = vmul.f32 %v1521, %v1073
        %v1554 = vmul.f32 %v1522, %v1074
        %v1555 = vmul.f32 %v1523, %v1075
        %v1556 = vmul.f32 %v1524, 1.442695
        %v1557 = vpow.pop %v1556
        %v1558 = vmul.f32 %v1525, 1.442695
        %v1559 = vpow.pop %v1558
        %v1560 = vmul.f32 %v1526, 1.442695
        %v1561 = vpow.pop %v1560
        %v1562 = vmul.f32 %v1527, 1.442695
        %v1563 = vpow.pop %v1562
        %v1564 = vmul.f32 %v1528, 1.442695
        %v1565 = vpow.pop %v1564
        %v1566 = vmul.f32 %v1529, 1.442695
        %v1567 = vpow.pop %v1566
        %v1568 = vmul.f32 %v1530, 1.442695
        %v1569 = vpow.pop %v1568
        %v1570 = vmul.f32 %v1531, 1.442695
        %v1571 = vpow.pop %v1570
        %v1572 = vmul.f32 %v1532, 1.442695
        %v1573 = vpow.pop %v1572
        %v1574 = vmul.f32 %v1533, 1.442695
        %v1575 = vpow.pop %v1574
        %v1576 = vmul.f32 %v1534, 1.442695
        %v1577 = vpow.pop %v1576
        %v1578 = vmul.f32 %v1535, 1.442695
        %v1579 = vpow.pop %v1578
        %v1580 = vmul.f32 %v1536, 1.442695
        %v1581 = vpow.pop %v1580
        %v1582 = vmul.f32 %v1537, 1.442695
        %v1583 = vpow.pop %v1582
        %v1584 = vmul.f32 %v1538, 1.442695
        %v1585 = vpow.pop %v1584
        %v1586 = vmul.f32 %v1539, 1.442695
        %v1587 = vpow.pop %v1586
        %v1588 = vmul.f32 %v1540, 1.442695
        %v1589 = vpow.pop %v1588
        %v1590 = vmul.f32 %v1541, 1.442695
        %v1591 = vpow.pop %v1590
        %v1592 = vmul.f32 %v1542, 1.442695
        %v1593 = vpow.pop %v1592
        %v1594 = vmul.f32 %v1543, 1.442695
        %v1595 = vpow.pop %v1594
        %v1596 = vmul.f32 %v1544, 1.442695
        %v1597 = vpow.pop %v1596
        %v1598 = vmul.f32 %v1545, 1.442695
        %v1599 = vpow.pop %v1598
        %v1600 = vmul.f32 %v1546, 1.442695
        %v1601 = vpow.pop %v1600
        %v1602 = vmul.f32 %v1547, 1.442695
        %v1603 = vpow.pop %v1602
        %v1604 = vmul.f32 %v1548, 1.442695
        %v1605 = vpow.pop %v1604
        %v1606 = vmul.f32 %v1549, 1.442695
        %v1607 = vpow.pop %v1606
        %v1608 = vmul.f32 %v1550, 1.442695
        %v1609 = vpow.pop %v1608
        %v1610 = vmul.f32 %v1551, 1.442695
        %v1611 = vpow.pop %v1610
        %v1612 = vmul.f32 %v1552, 1.442695
        %v1613 = vpow.pop %v1612
        %v1614 = vmul.f32 %v1553, 1.442695
        %v1615 = vpow.pop %v1614
        %v1616 = vmul.f32 %v1554, 1.442695
        %v1617 = vpow.pop %v1616
        %v1618 = vmul.f32 %v1555, 1.442695
        %v1619 = vpow.pop %v1618
        %v1620 = vmul.f32 %v1460, %v1557
        %v1621 = vmul.f32 %v1461, %v1559
        %v1622 = vmul.f32 %v1462, %v1561
        %v1623 = vmul.f32 %v1463, %v1563
        %v1624 = vmul.f32 %v1464, %v1565
        %v1625 = vmul.f32 %v1465, %v1567
        %v1626 = vmul.f32 %v1466, %v1569
        %v1627 = vmul.f32 %v1467, %v1571
        %v1628 = vmul.f32 %v1468, %v1573
        %v1629 = vmul.f32 %v1469, %v1575
        %v1630 = vmul.f32 %v1470, %v1577
        %v1631 = vmul.f32 %v1471, %v1579
        %v1632 = vmul.f32 %v1472, %v1581
        %v1633 = vmul.f32 %v1473, %v1583
        %v1634 = vmul.f32 %v1474, %v1585
        %v1635 = vmul.f32 %v1475, %v1587
        %v1636 = vmul.f32 %v1476, %v1589
        %v1637 = vmul.f32 %v1477, %v1591
        %v1638 = vmul.f32 %v1478, %v1593
        %v1639 = vmul.f32 %v1479, %v1595
        %v1640 = vmul.f32 %v1480, %v1597
        %v1641 = vmul.f32 %v1481, %v1599
        %v1642 = vmul.f32 %v1482, %v1601
        %v1643 = vmul.f32 %v1483, %v1603
        %v1644 = vmul.f32 %v1484, %v1605
        %v1645 = vmul.f32 %v1485, %v1607
        %v1646 = vmul.f32 %v1486, %v1609
        %v1647 = vmul.f32 %v1487, %v1611
        %v1648 = vmul.f32 %v1488, %v1613
        %v1649 = vmul.f32 %v1489, %v1615
        %v1650 = vmul.f32 %v1490, %v1617
        %v1651 = vmul.f32 %v1491, %v1619
        %v1652 = vsub.f32 1.0, %v1620
        %v1653 = vsub.f32 1.0, %v1621
        %v1654 = vsub.f32 1.0, %v1622
        %v1655 = vsub.f32 1.0, %v1623
        %v1656 = vsub.f32 1.0, %v1624
        %v1657 = vsub.f32 1.0, %v1625
        %v1658 = vsub.f32 1.0, %v1626
        %v1659 = vsub.f32 1.0, %v1627
        %v1660 = vsub.f32 1.0, %v1628
        %v1661 = vsub.f32 1.0, %v1629
        %v1662 = vsub.f32 1.0, %v1630
        %v1663 = vsub.f32 1.0, %v1631
        %v1664 = vsub.f32 1.0, %v1632
        %v1665 = vsub.f32 1.0, %v1633
        %v1666 = vsub.f32 1.0, %v1634
        %v1667 = vsub.f32 1.0, %v1635
        %v1668 = vsub.f32 1.0, %v1636
        %v1669 = vsub.f32 1.0, %v1637
        %v1670 = vsub.f32 1.0, %v1638
        %v1671 = vsub.f32 1.0, %v1639
        %v1672 = vsub.f32 1.0, %v1640
        %v1673 = vsub.f32 1.0, %v1641
        %v1674 = vsub.f32 1.0, %v1642
        %v1675 = vsub.f32 1.0, %v1643
        %v1676 = vsub.f32 1.0, %v1644
        %v1677 = vsub.f32 1.0, %v1645
        %v1678 = vsub.f32 1.0, %v1646
        %v1679 = vsub.f32 1.0, %v1647
        %v1680 = vsub.f32 1.0, %v1648
        %v1681 = vsub.f32 1.0, %v1649
        %v1682 = vsub.f32 1.0, %v1650
        %v1683 = vsub.f32 1.0, %v1651
        %vm1684 = vcmp.ge.f32.partialorder %v1012, 0.0
        %vm1685 = vcmp.ge.f32.partialorder %v1013, 0.0
        %vm1686 = vcmp.ge.f32.partialorder %v1014, 0.0
        %vm1687 = vcmp.ge.f32.partialorder %v1015, 0.0
        %vm1688 = vcmp.ge.f32.partialorder %v1016, 0.0
        %vm1689 = vcmp.ge.f32.partialorder %v1017, 0.0
        %vm1690 = vcmp.ge.f32.partialorder %v1018, 0.0
        %vm1691 = vcmp.ge.f32.partialorder %v1019, 0.0
        %vm1692 = vcmp.ge.f32.partialorder %v1020, 0.0
        %vm1693 = vcmp.ge.f32.partialorder %v1021, 0.0
        %vm1694 = vcmp.ge.f32.partialorder %v1022, 0.0
        %vm1695 = vcmp.ge.f32.partialorder %v1023, 0.0
        %vm1696 = vcmp.ge.f32.partialorder %v1024, 0.0
        %vm1697 = vcmp.ge.f32.partialorder %v1025, 0.0
        %vm1698 = vcmp.ge.f32.partialorder %v1026, 0.0
        %vm1699 = vcmp.ge.f32.partialorder %v1027, 0.0
        %vm1700 = vcmp.ge.f32.partialorder %v1028, 0.0
        %vm1701 = vcmp.ge.f32.partialorder %v1029, 0.0
        %vm1702 = vcmp.ge.f32.partialorder %v1030, 0.0
        %vm1703 = vcmp.ge.f32.partialorder %v1031, 0.0
        %vm1704 = vcmp.ge.f32.partialorder %v1032, 0.0
        %vm1705 = vcmp.ge.f32.partialorder %v1033, 0.0
        %vm1706 = vcmp.ge.f32.partialorder %v1034, 0.0
        %vm1707 = vcmp.ge.f32.partialorder %v1035, 0.0
        %vm1708 = vcmp.ge.f32.partialorder %v1036, 0.0
        %vm1709 = vcmp.ge.f32.partialorder %v1037, 0.0
        %vm1710 = vcmp.ge.f32.partialorder %v1038, 0.0
        %vm1711 = vcmp.ge.f32.partialorder %v1039, 0.0
        %vm1712 = vcmp.ge.f32.partialorder %v1040, 0.0
        %vm1713 = vcmp.ge.f32.partialorder %v1041, 0.0
        %vm1714 = vcmp.ge.f32.partialorder %v1042, 0.0
        %vm1715 = vcmp.ge.f32.partialorder %v1043, 0.0
        %v1716 = vsub.f32 0.0, %v1652
        %v1717 = vsub.f32 0.0, %v1653
        %v1718 = vsub.f32 0.0, %v1654
        %v1719 = vsub.f32 0.0, %v1655
        %v1720 = vsub.f32 0.0, %v1656
        %v1721 = vsub.f32 0.0, %v1657
        %v1722 = vsub.f32 0.0, %v1658
        %v1723 = vsub.f32 0.0, %v1659
        %v1724 = vsub.f32 0.0, %v1660
        %v1725 = vsub.f32 0.0, %v1661
        %v1726 = vsub.f32 0.0, %v1662
        %v1727 = vsub.f32 0.0, %v1663
        %v1728 = vsub.f32 0.0, %v1664
        %v1729 = vsub.f32 0.0, %v1665
        %v1730 = vsub.f32 0.0, %v1666
        %v1731 = vsub.f32 0.0, %v1667
        %v1732 = vsub.f32 0.0, %v1668
        %v1733 = vsub.f32 0.0, %v1669
        %v1734 = vsub.f32 0.0, %v1670
        %v1735 = vsub.f32 0.0, %v1671
        %v1736 = vsub.f32 0.0, %v1672
        %v1737 = vsub.f32 0.0, %v1673
        %v1738 = vsub.f32 0.0, %v1674
        %v1739 = vsub.f32 0.0, %v1675
        %v1740 = vsub.f32 0.0, %v1676
        %v1741 = vsub.f32 0.0, %v1677
        %v1742 = vsub.f32 0.0, %v1678
        %v1743 = vsub.f32 0.0, %v1679
        %v1744 = vsub.f32 0.0, %v1680
        %v1745 = vsub.f32 0.0, %v1681
        %v1746 = vsub.f32 0.0, %v1682
        %v1747 = vsub.f32 0.0, %v1683
        %v1748 = vsel %vm1684, %v1652, %v1716
        %v1749 = vsel %vm1685, %v1653, %v1717
        %v1750 = vsel %vm1686, %v1654, %v1718
        %v1751 = vsel %vm1687, %v1655, %v1719
        %v1752 = vsel %vm1688, %v1656, %v1720
        %v1753 = vsel %vm1689, %v1657, %v1721
        %v1754 = vsel %vm1690, %v1658, %v1722
        %v1755 = vsel %vm1691, %v1659, %v1723
        %v1756 = vsel %vm1692, %v1660, %v1724
        %v1757 = vsel %vm1693, %v1661, %v1725
        %v1758 = vsel %vm1694, %v1662, %v1726
        %v1759 = vsel %vm1695, %v1663, %v1727
        %v1760 = vsel %vm1696, %v1664, %v1728
        %v1761 = vsel %vm1697, %v1665, %v1729
        %v1762 = vsel %vm1698, %v1666, %v1730
        %v1763 = vsel %vm1699, %v1667, %v1731
        %v1764 = vsel %vm1700, %v1668, %v1732
        %v1765 = vsel %vm1701, %v1669, %v1733
        %v1766 = vsel %vm1702, %v1670, %v1734
        %v1767 = vsel %vm1703, %v1671, %v1735
        %v1768 = vsel %vm1704, %v1672, %v1736
        %v1769 = vsel %vm1705, %v1673, %v1737
        %v1770 = vsel %vm1706, %v1674, %v1738
        %v1771 = vsel %vm1707, %v1675, %v1739
        %v1772 = vsel %vm1708, %v1676, %v1740
        %v1773 = vsel %vm1709, %v1677, %v1741
        %v1774 = vsel %vm1710, %v1678, %v1742
        %v1775 = vsel %vm1711, %v1679, %v1743
        %v1776 = vsel %vm1712, %v1680, %v1744
        %v1777 = vsel %vm1713, %v1681, %v1745
        %v1778 = vsel %vm1714, %v1682, %v1746
        %v1779 = vsel %vm1715, %v1683, %v1747
        %v1780 = vadd.f32 %v1748, 1.0
        %v1781 = vadd.f32 %v1749, 1.0
        %v1782 = vadd.f32 %v1750, 1.0
        %v1783 = vadd.f32 %v1751, 1.0
        %v1784 = vadd.f32 %v1752, 1.0
        %v1785 = vadd.f32 %v1753, 1.0
        %v1786 = vadd.f32 %v1754, 1.0
        %v1787 = vadd.f32 %v1755, 1.0
        %v1788 = vadd.f32 %v1756, 1.0
        %v1789 = vadd.f32 %v1757, 1.0
        %v1790 = vadd.f32 %v1758, 1.0
        %v1791 = vadd.f32 %v1759, 1.0
        %v1792 = vadd.f32 %v1760, 1.0
        %v1793 = vadd.f32 %v1761, 1.0
        %v1794 = vadd.f32 %v1762, 1.0
        %v1795 = vadd.f32 %v1763, 1.0
        %v1796 = vadd.f32 %v1764, 1.0
        %v1797 = vadd.f32 %v1765, 1.0
        %v1798 = vadd.f32 %v1766, 1.0
        %v1799 = vadd.f32 %v1767, 1.0
        %v1800 = vadd.f32 %v1768, 1.0
        %v1801 = vadd.f32 %v1769, 1.0
        %v1802 = vadd.f32 %v1770, 1.0
        %v1803 = vadd.f32 %v1771, 1.0
        %v1804 = vadd.f32 %v1772, 1.0
        %v1805 = vadd.f32 %v1773, 1.0
        %v1806 = vadd.f32 %v1774, 1.0
        %v1807 = vadd.f32 %v1775, 1.0
        %v1808 = vadd.f32 %v1776, 1.0
        %v1809 = vadd.f32 %v1777, 1.0
        %v1810 = vadd.f32 %v1778, 1.0
        %v1811 = vadd.f32 %v1779, 1.0
        %v1812 = vmul.f32 %v980, %v1780
        %v1813 = vmul.f32 %v981, %v1781
        %v1814 = vmul.f32 %v982, %v1782
        %v1815 = vmul.f32 %v983, %v1783
        %v1816 = vmul.f32 %v984, %v1784
        %v1817 = vmul.f32 %v985, %v1785
        %v1818 = vmul.f32 %v986, %v1786
        %v1819 = vmul.f32 %v987, %v1787
        %v1820 = vmul.f32 %v988, %v1788
        %v1821 = vmul.f32 %v989, %v1789
        %v1822 = vmul.f32 %v990, %v1790
        %v1823 = vmul.f32 %v991, %v1791
        %v1824 = vmul.f32 %v992, %v1792
        %v1825 = vmul.f32 %v993, %v1793
        %v1826 = vmul.f32 %v994, %v1794
        %v1827 = vmul.f32 %v995, %v1795
        %v1828 = vmul.f32 %v996, %v1796
        %v1829 = vmul.f32 %v997, %v1797
        %v1830 = vmul.f32 %v998, %v1798
        %v1831 = vmul.f32 %v999, %v1799
        %v1832 = vmul.f32 %v1000, %v1800
        %v1833 = vmul.f32 %v1001, %v1801
        %v1834 = vmul.f32 %v1002, %v1802
        %v1835 = vmul.f32 %v1003, %v1803
        %v1836 = vmul.f32 %v1004, %v1804
        %v1837 = vmul.f32 %v1005, %v1805
        %v1838 = vmul.f32 %v1006, %v1806
        %v1839 = vmul.f32 %v1007, %v1807
        %v1840 = vmul.f32 %v1008, %v1808
        %v1841 = vmul.f32 %v1009, %v1809
        %v1842 = vmul.f32 %v1010, %v1810
        %v1843 = vmul.f32 %v1011, %v1811
        %v1844 = vpack.c.bf16 %v1814, %v1812
        %v1845 = vpack.c.bf16 %v1815, %v1813
        %v1846 = vpack.c.bf16 %v1818, %v1816
        %v1847 = vpack.c.bf16 %v1819, %v1817
        %v1848 = vpack.c.bf16 %v1822, %v1820
        %v1849 = vpack.c.bf16 %v1823, %v1821
        %v1850 = vpack.c.bf16 %v1826, %v1824
        %v1851 = vpack.c.bf16 %v1827, %v1825
        %v1852 = vpack.c.bf16 %v1830, %v1828
        %v1853 = vpack.c.bf16 %v1831, %v1829
        %v1854 = vpack.c.bf16 %v1834, %v1832
        %v1855 = vpack.c.bf16 %v1835, %v1833
        %v1856 = vpack.c.bf16 %v1838, %v1836
        %v1857 = vpack.c.bf16 %v1839, %v1837
        %v1858 = vpack.c.bf16 %v1842, %v1840
        %v1859 = vpack.c.bf16 %v1843, %v1841
        %v1860 = vld [vmem:[#allocation3] sm:$0xff]
        %v1861 = vld [vmem:[#allocation3 + $0x8] sm:$0xff]
        %v1862 = vld [vmem:[#allocation3 + $0x10] sm:$0xff]
        %v1863 = vld [vmem:[#allocation3 + $0x18] sm:$0xff]
        %v1864 = vld [vmem:[#allocation3 + $0x20] sm:$0xff]
        %v1865 = vld [vmem:[#allocation3 + $0x28] sm:$0xff]
        %v1866 = vld [vmem:[#allocation3 + $0x30] sm:$0xff]
        %v1867 = vld [vmem:[#allocation3 + $0x38] sm:$0xff]
        %v1868 = vld [vmem:[#allocation3 + $0x40] sm:$0xff]
        %v1869 = vld [vmem:[#allocation3 + $0x48] sm:$0xff]
        %v1870 = vld [vmem:[#allocation3 + $0x50] sm:$0xff]
        %v1871 = vld [vmem:[#allocation3 + $0x58] sm:$0xff]
        %v1872 = vld [vmem:[#allocation3 + $0x60] sm:$0xff]
        %v1873 = vld [vmem:[#allocation3 + $0x68] sm:$0xff]
        %v1874 = vld [vmem:[#allocation3 + $0x70] sm:$0xff]
        %v1875 = vld [vmem:[#allocation3 + $0x78] sm:$0xff]
        %v1876 = vld [vmem:[%s468] sm:$0xf]
        %v1877 = vld [vmem:[%s468 + $0x4] sm:$0xf]
        %v1878 = vld [vmem:[%s468 + $0x8] sm:$0xf]
        %v1879 = vld [vmem:[%s468 + $0xc] sm:$0xf]
        %v1880 = vld [vmem:[%s468 + $0x10] sm:$0xf]
        %v1881 = vld [vmem:[%s468 + $0x14] sm:$0xf]
        %v1882 = vld [vmem:[%s468 + $0x18] sm:$0xf]
        %v1883 = vld [vmem:[%s468 + $0x1c] sm:$0xf]
        %v1884 = vld [vmem:[%s468 + $0x20] sm:$0xf]
        %v1885 = vld [vmem:[%s468 + $0x24] sm:$0xf]
        %v1886 = vld [vmem:[%s468 + $0x28] sm:$0xf]
        %v1887 = vld [vmem:[%s468 + $0x2c] sm:$0xf]
        %v1888 = vld [vmem:[%s468 + $0x30] sm:$0xf]
        %v1889 = vld [vmem:[%s468 + $0x34] sm:$0xf]
        %v1890 = vld [vmem:[%s468 + $0x38] sm:$0xf]
        %v1891 = vld [vmem:[%s468 + $0x3c] sm:$0xf]
        %v1892 = vld [vmem:[%s468 + $0x40] sm:$0xf]
        %v1893 = vld [vmem:[%s468 + $0x44] sm:$0xf]
        %v1894 = vld [vmem:[%s468 + $0x48] sm:$0xf]
        %v1895 = vld [vmem:[%s468 + $0x4c] sm:$0xf]
        %v1896 = vld [vmem:[%s468 + $0x50] sm:$0xf]
        %v1897 = vld [vmem:[%s468 + $0x54] sm:$0xf]
        %v1898 = vld [vmem:[%s468 + $0x58] sm:$0xf]
        %v1899 = vld [vmem:[%s468 + $0x5c] sm:$0xf]
        %v1900 = vld [vmem:[%s468 + $0x60] sm:$0xf]
        %v1901 = vld [vmem:[%s468 + $0x64] sm:$0xf]
        %v1902 = vld [vmem:[%s468 + $0x68] sm:$0xf]
        %v1903 = vld [vmem:[%s468 + $0x6c] sm:$0xf]
        %v1904 = vld [vmem:[%s468 + $0x70] sm:$0xf]
        %v1905 = vld [vmem:[%s468 + $0x74] sm:$0xf]
        %v1906 = vld [vmem:[%s468 + $0x78] sm:$0xf]
        %v1907 = vld [vmem:[%s468 + $0x7c] sm:$0xf]
        %v1940 = vunpack.c.l.b16 %v1876
        %v1941 = vunpack.c.l.b16 %v1877
        %v1942 = vunpack.c.l.b16 %v1878
        %v1943 = vunpack.c.l.b16 %v1879
        %v1944 = vunpack.c.l.b16 %v1880
        %v1945 = vunpack.c.l.b16 %v1881
        %v1946 = vunpack.c.l.b16 %v1882
        %v1947 = vunpack.c.l.b16 %v1883
        %v1948 = vunpack.c.l.b16 %v1884
        %v1949 = vunpack.c.l.b16 %v1885
        %v1950 = vunpack.c.l.b16 %v1886
        %v1951 = vunpack.c.l.b16 %v1887
        %v1952 = vunpack.c.l.b16 %v1888
        %v1953 = vunpack.c.l.b16 %v1889
        %v1954 = vunpack.c.l.b16 %v1890
        %v1955 = vunpack.c.l.b16 %v1891
        %v1956 = vunpack.c.l.b16 %v1892
        %v1957 = vunpack.c.l.b16 %v1893
        %v1958 = vunpack.c.l.b16 %v1894
        %v1959 = vunpack.c.l.b16 %v1895
        %v1960 = vunpack.c.l.b16 %v1896
        %v1961 = vunpack.c.l.b16 %v1897
        %v1962 = vunpack.c.l.b16 %v1898
        %v1963 = vunpack.c.l.b16 %v1899
        %v1964 = vunpack.c.l.b16 %v1900
        %v1965 = vunpack.c.l.b16 %v1901
        %v1966 = vunpack.c.l.b16 %v1902
        %v1967 = vunpack.c.l.b16 %v1903
        %v1968 = vunpack.c.l.b16 %v1904
        %v1969 = vunpack.c.l.b16 %v1905
        %v1970 = vunpack.c.l.b16 %v1906
        %v1971 = vunpack.c.l.b16 %v1907
        %v1972 = vpack.c.b16 %v1941, %v1940
        %v1973 = vpack.c.b16 %v1943, %v1942
        %v1974 = vpack.c.b16 %v1945, %v1944
        %v1975 = vpack.c.b16 %v1947, %v1946
        %v1976 = vpack.c.b16 %v1949, %v1948
        %v1977 = vpack.c.b16 %v1951, %v1950
        %v1978 = vpack.c.b16 %v1953, %v1952
        %v1979 = vpack.c.b16 %v1955, %v1954
        %v1980 = vpack.c.b16 %v1957, %v1956
        %v1981 = vpack.c.b16 %v1959, %v1958
        %v1982 = vpack.c.b16 %v1961, %v1960
        %v1983 = vpack.c.b16 %v1963, %v1962
        %v1984 = vpack.c.b16 %v1965, %v1964
        %v1985 = vpack.c.b16 %v1967, %v1966
        %v1986 = vpack.c.b16 %v1969, %v1968
        %v1987 = vpack.c.b16 %v1971, %v1970
        %2004 = vmatprep.subr.bf16.mxu0 0
        %2005 = vmatpush1.bf16.msra.mxu0 %v1972
        %2006 = vmatprep.subr.bf16.mxu0 0
        %2007 = vmatpush1.bf16.msra.mxu0 %v1973
        %2008 = vmatprep.subr.bf16.mxu0 0
        %2009 = vmatpush1.bf16.msra.mxu0 %v1974
        %2010 = vmatprep.subr.bf16.mxu0 0
        %2011 = vmatpush1.bf16.msra.mxu0 %v1975
        %2012 = vmatprep.subr.bf16.mxu0 0
        %2013 = vmatpush1.bf16.msra.mxu0 %v1976
        %2014 = vmatprep.subr.bf16.mxu0 0
        %2015 = vmatpush1.bf16.msra.mxu0 %v1977
        %2016 = vmatprep.subr.bf16.mxu0 0
        %2017 = vmatpush1.bf16.msra.mxu0 %v1978
        %2018 = vmatprep.subr.bf16.mxu0 0
        %2019 = vmatpush1.bf16.msra.mxu0 %v1979
        %2020 = vmatprep.subr.bf16.mxu0 0
        %2021 = vmatpush1.bf16.msra.mxu0 %v1980
        %2022 = vmatprep.subr.bf16.mxu0 0
        %2023 = vmatpush1.bf16.msra.mxu0 %v1981
        %2024 = vmatprep.subr.bf16.mxu0 0
        %2025 = vmatpush1.bf16.msra.mxu0 %v1982
        %2026 = vmatprep.subr.bf16.mxu0 0
        %2027 = vmatpush1.bf16.msra.mxu0 %v1983
        %2028 = vmatprep.subr.bf16.mxu0 0
        %2029 = vmatpush1.bf16.msra.mxu0 %v1984
        %2030 = vmatprep.subr.bf16.mxu0 0
        %2031 = vmatpush1.bf16.msra.mxu0 %v1985
        %2032 = vmatprep.subr.bf16.mxu0 0
        %2033 = vmatpush1.bf16.msra.mxu0 %v1986
        %2034 = vmatprep.subr.bf16.mxu0 0
        %2035 = vmatpush1.bf16.msra.mxu0 %v1987
        %2036 = vmatprep.mubr.bf16.mxu0 %v1845
        %2037 = vmatmul.mubr.bf16.gmra.mrb[0].mxu0 %v1844
        %v2038 = vpop.f32.mrb[0].mxu0
        %v2039 = vadd.f32 0.0, %v2038
        %v2040 = vpop.f32.mrb[0].mxu0
        %v2041 = vpop.f32.mrb[0].mxu0
        %v2042 = vadd.f32 0.0, %v2041
        %v2043 = vpop.f32.mrb[0].mxu0
        %2044 = vmatprep.mubr.bf16.mxu0 %v1847
        %2045 = vmatmul.mubr.bf16.gmra.mrb[0].mxu0 %v1846
        %v2046 = vpop.f32.mrb[0].mxu0
        %v2047 = vadd.f32 0.0, %v2046
        %v2048 = vpop.f32.mrb[0].mxu0
        %v2049 = vpop.f32.mrb[0].mxu0
        %v2050 = vadd.f32 0.0, %v2049
        %v2051 = vpop.f32.mrb[0].mxu0
        %2052 = vmatprep.mubr.bf16.mxu0 %v1849
        %2053 = vmatmul.mubr.bf16.gmra.mrb[0].mxu0 %v1848
        %v2054 = vpop.f32.mrb[0].mxu0
        %v2055 = vadd.f32 0.0, %v2054
        %v2056 = vpop.f32.mrb[0].mxu0
        %v2057 = vpop.f32.mrb[0].mxu0
        %v2058 = vadd.f32 0.0, %v2057
        %v2059 = vpop.f32.mrb[0].mxu0
        %2060 = vmatprep.mubr.bf16.mxu0 %v1851
        %2061 = vmatmul.mubr.bf16.gmra.mrb[0].mxu0 %v1850
        %v2062 = vpop.f32.mrb[0].mxu0
        %v2063 = vadd.f32 0.0, %v2062
        %v2064 = vpop.f32.mrb[0].mxu0
        %v2065 = vpop.f32.mrb[0].mxu0
        %v2066 = vadd.f32 0.0, %v2065
        %v2067 = vpop.f32.mrb[0].mxu0
        %2068 = vmatprep.mubr.bf16.mxu0 %v1853
        %2069 = vmatmul.mubr.bf16.gmra.mrb[0].mxu0 %v1852
        %v2070 = vpop.f32.mrb[0].mxu0
        %v2071 = vadd.f32 0.0, %v2070
        %v2072 = vpop.f32.mrb[0].mxu0
        %v2073 = vpop.f32.mrb[0].mxu0
        %v2074 = vadd.f32 0.0, %v2073
        %v2075 = vpop.f32.mrb[0].mxu0
        %2076 = vmatprep.mubr.bf16.mxu0 %v1855
        %2077 = vmatmul.mubr.bf16.gmra.mrb[0].mxu0 %v1854
        %v2078 = vpop.f32.mrb[0].mxu0
        %v2079 = vadd.f32 0.0, %v2078
        %v2080 = vpop.f32.mrb[0].mxu0
        %v2081 = vpop.f32.mrb[0].mxu0
        %v2082 = vadd.f32 0.0, %v2081
        %v2083 = vpop.f32.mrb[0].mxu0
        %2084 = vmatprep.mubr.bf16.mxu0 %v1857
        %2085 = vmatmul.mubr.bf16.gmra.mrb[0].mxu0 %v1856
        %v2086 = vpop.f32.mrb[0].mxu0
        %v2087 = vadd.f32 0.0, %v2086
        %v2088 = vpop.f32.mrb[0].mxu0
        %v2089 = vpop.f32.mrb[0].mxu0
        %v2090 = vadd.f32 0.0, %v2089
        %v2091 = vpop.f32.mrb[0].mxu0
        %2092 = vmatprep.mubr.bf16.mxu0 %v1859
        %2093 = vmatmul.mubr.bf16.gmra.mrb[0].mxu0 %v1858
        %v2094 = vpop.f32.mrb[0].mxu0
        %v2095 = vadd.f32 0.0, %v2094
        %v2096 = vpop.f32.mrb[0].mxu0
        %v2097 = vpop.f32.mrb[0].mxu0
        %v2098 = vadd.f32 0.0, %v2097
        %v2099 = vpop.f32.mrb[0].mxu0
        %2100 = vdwg.mxu0
        %v2101 = vadd.f32 %v1860, %v2039
        %v2102 = vadd.f32 %v1861, %v2042
        %v2103 = vadd.f32 %v1862, %v2047
        %v2104 = vadd.f32 %v1863, %v2050
        %v2105 = vadd.f32 %v1864, %v2055
        %v2106 = vadd.f32 %v1865, %v2058
        %v2107 = vadd.f32 %v1866, %v2063
        %v2108 = vadd.f32 %v1867, %v2066
        %v2109 = vadd.f32 %v1868, %v2071
        %v2110 = vadd.f32 %v1869, %v2074
        %v2111 = vadd.f32 %v1870, %v2079
        %v2112 = vadd.f32 %v1871, %v2082
        %v2113 = vadd.f32 %v1872, %v2087
        %v2114 = vadd.f32 %v1873, %v2090
        %v2115 = vadd.f32 %v1874, %v2095
        %v2116 = vadd.f32 %v1875, %v2098
        %2117 = vst [vmem:[#allocation3] sm:$0xff] %v2101
        %2118 = vst [vmem:[#allocation3 + $0x8] sm:$0xff] %v2102
        %2119 = vst [vmem:[#allocation3 + $0x10] sm:$0xff] %v2103
        %2120 = vst [vmem:[#allocation3 + $0x18] sm:$0xff] %v2104
        %2121 = vst [vmem:[#allocation3 + $0x20] sm:$0xff] %v2105
        %2122 = vst [vmem:[#allocation3 + $0x28] sm:$0xff] %v2106
        %2123 = vst [vmem:[#allocation3 + $0x30] sm:$0xff] %v2107
        %2124 = vst [vmem:[#allocation3 + $0x38] sm:$0xff] %v2108
        %2125 = vst [vmem:[#allocation3 + $0x40] sm:$0xff] %v2109
        %2126 = vst [vmem:[#allocation3 + $0x48] sm:$0xff] %v2110
        %2127 = vst [vmem:[#allocation3 + $0x50] sm:$0xff] %v2111
        %2128 = vst [vmem:[#allocation3 + $0x58] sm:$0xff] %v2112
        %2129 = vst [vmem:[#allocation3 + $0x60] sm:$0xff] %v2113
        %2130 = vst [vmem:[#allocation3 + $0x68] sm:$0xff] %v2114
        %2131 = vst [vmem:[#allocation3 + $0x70] sm:$0xff] %v2115
        %2132 = vst [vmem:[#allocation3 + $0x78] sm:$0xff] %v2116
        %p2133 = scmp.eq.s32.totalorder %s24, 1
        // Predicated region
        $region95: #{dinov2_reg_forward.7} parent=85 // pred_check
          %p2134 = pneg %p2133
        $region96: #{dinov2_reg_forward.7} parent=85 // pred_check_branch
          %2136 = sbr.rel (%p2134) target = $region98
        $region97: #{dinov2_reg_forward.7} parent=85 // pred_region
          %v2137 = vld [vmem:[%s457] sm:$0xff]
          %v2138 = vld [vmem:[%s457 + $0x8] sm:$0xff]
          %v2139 = vld [vmem:[%s457 + $0x10] sm:$0xff]
          %v2140 = vld [vmem:[%s457 + $0x18] sm:$0xff]
          %v2141 = vld [vmem:[%s457 + $0x20] sm:$0xff]
          %v2142 = vld [vmem:[%s457 + $0x28] sm:$0xff]
          %v2143 = vld [vmem:[%s457 + $0x30] sm:$0xff]
          %v2144 = vld [vmem:[%s457 + $0x38] sm:$0xff]
          %v2145 = vld [vmem:[%s457 + $0x40] sm:$0xff]
          %v2146 = vld [vmem:[%s457 + $0x48] sm:$0xff]
          %v2147 = vld [vmem:[%s457 + $0x50] sm:$0xff]
          %v2148 = vld [vmem:[%s457 + $0x58] sm:$0xff]
          %v2149 = vld [vmem:[%s457 + $0x60] sm:$0xff]
          %v2150 = vld [vmem:[%s457 + $0x68] sm:$0xff]
          %v2151 = vld [vmem:[%s457 + $0x70] sm:$0xff]
          %v2152 = vld [vmem:[%s457 + $0x78] sm:$0xff]
          %v2153 = vld [vmem:[%s7] sm:$0x1]
          %v2154 = vld [vmem:[#allocation3] sm:$0xff]
          %v2155 = vld [vmem:[#allocation3 + $0x8] sm:$0xff]
          %v2156 = vld [vmem:[#allocation3 + $0x10] sm:$0xff]
          %v2157 = vld [vmem:[#allocation3 + $0x18] sm:$0xff]
          %v2158 = vld [vmem:[#allocation3 + $0x20] sm:$0xff]
          %v2159 = vld [vmem:[#allocation3 + $0x28] sm:$0xff]
          %v2160 = vld [vmem:[#allocation3 + $0x30] sm:$0xff]
          %v2161 = vld [vmem:[#allocation3 + $0x38] sm:$0xff]
          %v2162 = vld [vmem:[#allocation3 + $0x40] sm:$0xff]
          %v2163 = vld [vmem:[#allocation3 + $0x48] sm:$0xff]
          %v2164 = vld [vmem:[#allocation3 + $0x50] sm:$0xff]
          %v2165 = vld [vmem:[#allocation3 + $0x58] sm:$0xff]
          %v2166 = vld [vmem:[#allocation3 + $0x60] sm:$0xff]
          %v2167 = vld [vmem:[#allocation3 + $0x68] sm:$0xff]
          %v2168 = vld [vmem:[#allocation3 + $0x70] sm:$0xff]
          %v2169 = vld [vmem:[#allocation3 + $0x78] sm:$0xff]
          %v2170 = vld [vmem:[%s6] sm:$0x1]
          %v2172 = vlaneseq
          %v2173 = vshrl.u32 %v2172, 7
          %v2174 = vsub.s32 0, %v2173
          %v2175 = vrot.slane %v2170, %v2174
          %v2177 = vadd.f32 %v2154, %v2175
          %v2178 = vadd.f32 %v2155, %v2175
          %v2179 = vadd.f32 %v2156, %v2175
          %v2180 = vadd.f32 %v2157, %v2175
          %v2181 = vadd.f32 %v2158, %v2175
          %v2182 = vadd.f32 %v2159, %v2175
          %v2183 = vadd.f32 %v2160, %v2175
          %v2184 = vadd.f32 %v2161, %v2175
          %v2185 = vadd.f32 %v2162, %v2175
          %v2186 = vadd.f32 %v2163, %v2175
          %v2187 = vadd.f32 %v2164, %v2175
          %v2188 = vadd.f32 %v2165, %v2175
          %v2189 = vadd.f32 %v2166, %v2175
          %v2190 = vadd.f32 %v2167, %v2175
          %v2191 = vadd.f32 %v2168, %v2175
          %v2192 = vadd.f32 %v2169, %v2175
          %v2194 = vlaneseq
          %v2195 = vshrl.u32 %v2194, 7
          %v2196 = vsub.s32 0, %v2195
          %v2197 = vrot.slane %v2153, %v2196
          %v2199 = vmul.f32 %v2197, %v2177
          %v2200 = vmul.f32 %v2197, %v2178
          %v2201 = vmul.f32 %v2197, %v2179
          %v2202 = vmul.f32 %v2197, %v2180
          %v2203 = vmul.f32 %v2197, %v2181
          %v2204 = vmul.f32 %v2197, %v2182
          %v2205 = vmul.f32 %v2197, %v2183
          %v2206 = vmul.f32 %v2197, %v2184
          %v2207 = vmul.f32 %v2197, %v2185
          %v2208 = vmul.f32 %v2197, %v2186
          %v2209 = vmul.f32 %v2197, %v2187
          %v2210 = vmul.f32 %v2197, %v2188
          %v2211 = vmul.f32 %v2197, %v2189
          %v2212 = vmul.f32 %v2197, %v2190
          %v2213 = vmul.f32 %v2197, %v2191
          %v2214 = vmul.f32 %v2197, %v2192
          %v2215 = vadd.f32 %v2137, %v2199
          %v2216 = vadd.f32 %v2138, %v2200
          %v2217 = vadd.f32 %v2139, %v2201
          %v2218 = vadd.f32 %v2140, %v2202
          %v2219 = vadd.f32 %v2141, %v2203
          %v2220 = vadd.f32 %v2142, %v2204
          %v2221 = vadd.f32 %v2143, %v2205
          %v2222 = vadd.f32 %v2144, %v2206
          %v2223 = vadd.f32 %v2145, %v2207
          %v2224 = vadd.f32 %v2146, %v2208
          %v2225 = vadd.f32 %v2147, %v2209
          %v2226 = vadd.f32 %v2148, %v2210
          %v2227 = vadd.f32 %v2149, %v2211
          %v2228 = vadd.f32 %v2150, %v2212
          %v2229 = vadd.f32 %v2151, %v2213
          %v2230 = vadd.f32 %v2152, %v2214
          %2231 = vst [vmem:[%s474] sm:$0xff] %v2215
          %2232 = vst [vmem:[%s474 + $0x8] sm:$0xff] %v2216
          %2233 = vst [vmem:[%s474 + $0x10] sm:$0xff] %v2217
          %2234 = vst [vmem:[%s474 + $0x18] sm:$0xff] %v2218
          %2235 = vst [vmem:[%s474 + $0x20] sm:$0xff] %v2219
          %2236 = vst [vmem:[%s474 + $0x28] sm:$0xff] %v2220
          %2237 = vst [vmem:[%s474 + $0x30] sm:$0xff] %v2221
          %2238 = vst [vmem:[%s474 + $0x38] sm:$0xff] %v2222
          %2239 = vst [vmem:[%s474 + $0x40] sm:$0xff] %v2223
          %2240 = vst [vmem:[%s474 + $0x48] sm:$0xff] %v2224
          %2241 = vst [vmem:[%s474 + $0x50] sm:$0xff] %v2225
          %2242 = vst [vmem:[%s474 + $0x58] sm:$0xff] %v2226
          %2243 = vst [vmem:[%s474 + $0x60] sm:$0xff] %v2227
          %2244 = vst [vmem:[%s474 + $0x68] sm:$0xff] %v2228
          %2245 = vst [vmem:[%s474 + $0x70] sm:$0xff] %v2229
          %2246 = vst [vmem:[%s474 + $0x78] sm:$0xff] %v2230
        $region98: #{dinov2_reg_forward.7} parent=85 // pred_fallthru
          _
        %p2247 = scmp.lt.s32.totalorder %s23, 1
        %s2248 = scalar_select %p2247, %s23, 1
        %s2249 = smul.addr %s2248, 16
        %s2250 = smul.addr %s2249, 8
        %s2251 = scalar_lea.vmem %s8, %s2250
        // Predicated region
        $region99: #{dinov2_reg_forward.7} parent=85 // pred_check
          %p2252 = pneg %p237
        $region100: #{dinov2_reg_forward.7} parent=85 // pred_check_branch
          %2254 = sbr.rel (%p2252) target = $region102
        $region101: #{dinov2_reg_forward.7} parent=85 // pred_region
          _
        $region102: #{dinov2_reg_forward.7} parent=85 // pred_fallthru
          _
      $region86: #{dinov2_reg_forward.7} parent=5 // pred_fallthru
        _
      %p2255 = scmp.le.s32.totalorder 2, %s14
      // Predicated region
      $region103: #{dinov2_reg_forward.7} parent=5 // pred_check
        %p2256 = pneg %p2255
      $region104: #{dinov2_reg_forward.7} parent=5 // pred_check_branch
        %2258 = sbr.rel (%p2256) target = $region106
      $region105: #{dinov2_reg_forward.7} parent=5 // pred_region
        %s2259 = ssub.s32 %s14, 2
        // Predicated region
        $region107: #{dinov2_reg_forward.7} parent=105 // pred_check
          %p2260 = pneg %p243
        $region108: #{dinov2_reg_forward.7} parent=105 // pred_check_branch
          %2262 = sbr.rel (%p2260) target = $region110
        $region109: #{dinov2_reg_forward.7} parent=105 // pred_region
          %p2263 = scmp.lt.s32.totalorder %s25, 1
          %s2264 = scalar_select %p2263, %s25, 1
          %s2265 = smul.addr %s2264, 16
          %s2266 = smul.addr %s2265, 8
          %s2267 = scalar_lea.vmem %s8, %s2266
        $region110: #{dinov2_reg_forward.7} parent=105 // pred_fallthru
          _
      $region106: #{dinov2_reg_forward.7} parent=5 // pred_fallthru
        _
    $region6: #{dinov2_reg_forward.7} parent=1 // loop_footer
      %s18 = sadd.s32 1, %s14
    $region7: #{dinov2_reg_forward.7} parent=1 // loop_footer_branch
      %13 = sbr.rel target = $region3
    $region8: #{dinov2_reg_forward.7} parent=1 // loop_exit
      _

// kernel: dinov2_reg_forward.9
$region0: #{dinov2_reg_forward.9}
  #allocation0 [shape = 'u32[]', space=smem, size = 0x4, offset = 0x4, fixed_abs, tag = 'smem constant byte address 0x4 - core index']
  #allocation1 [shape = 'u32[144,128]{1,0:T(1,128)}', space=vmem, size = 0x12000, scoped, tag = 'internal scratch']
  #allocation2 [shape = 'bf16[128,128]{1,0:T(16,128)(2,1)}', space=vmem, size = 0x8000, scoped, tag = 'scratch operand']
  #allocation3 [shape = 'f32[128,128]{1,0:T(8,128)}', space=vmem, size = 0x10000, scoped, tag = 'scratch operand']
  %s0 = inlined_call_operand.vmem [shape: f32[2,128,128], index: 0, kind: input, shape index: {}, may-alias: {0,10}]
  %s1 = inlined_call_operand.vmem [shape: f32[1,128], index: 1, kind: input, shape index: {}]
  %s2 = inlined_call_operand.vmem [shape: f32[1,128], index: 2, kind: input, shape index: {}]
  %s3 = inlined_call_operand.vmem [shape: bf16[128,512], index: 3, kind: input, shape index: {}]
  %s4 = inlined_call_operand.vmem [shape: f32[1,512], index: 4, kind: input, shape index: {}]
  %s5 = inlined_call_operand.vmem [shape: bf16[512,128], index: 5, kind: input, shape index: {}]
  %s6 = inlined_call_operand.vmem [shape: f32[1,128], index: 6, kind: input, shape index: {}]
  %s7 = inlined_call_operand.vmem [shape: f32[1,128], index: 7, kind: input, shape index: {}]
  %s8 = inlined_call_operand.vmem [shape: f32[1,128], index: 8, kind: input, shape index: {}]
  %s9 = inlined_call_operand.vmem [shape: f32[1,128], index: 9, kind: input, shape index: {}]
  %s10 = inlined_call_operand.vmem [shape: f32[2,128,128], index: 10, kind: output, shape index: {0}, may-alias: {0,10}]
  %s11 = inlined_call_operand.vmem [shape: f32[2,128,128], index: 11, kind: output, shape index: {1}]
  %12 = xla_tuple %s10, %s11
  %s13 = sld [smem:[#allocation0]]
  $region127: #{dinov2_reg_forward.9} parent=0
    _
  %s15 = ssub.s32 1, %s13
  %s16 = scalar_select 0, %s15, %s13
  $region1: #{dinov2_reg_forward.9} parent=0
    #allocation4 [shape = 'u8[131072]{0}', space=vmem, size = 0x20000, scoped, tag = 'input window, operand 3']
    loop: start=0, step=1, limit=6
    $region2: #{dinov2_reg_forward.9} parent=1 // loop_pre_header
      _
    $region3: #{dinov2_reg_forward.9} parent=1 // loop_header
      %s18 = sphi 0, %s22
      %p19 = scmp.ge.s32.totalorder %s18, 6
      %s25 = sphi 0, %s37
      %s26 = sphi 0, %s33
      %s27 = sphi 0, %s25
      %s28 = sphi 0, %s26
      %s29 = sphi 0, %s27
      %s30 = sphi 0, %s28
      %s40 = sphi 0, %s42
      %s43 = sphi 0, %s40
      %s44 = sphi 0, %s43
      %s60 = sphi 0, %s44
      %s64 = sphi 0, %s64
      %s66 = sphi 0, %s64
      %s67 = sphi 0, %s66
      %s81 = sphi 0, %s67
      %s85 = sphi 0, %s85
      %s87 = sphi 0, %s85
      %s88 = sphi 0, %s87
      %s102 = sphi 0, %s88
      %s108 = sphi 0, %s110
      %s111 = sphi 0, %s108
      %s112 = sphi 0, %s111
      %s128 = sphi 0, %s112
      %s134 = sphi 0, %s136
      %s137 = sphi 0, %s134
      %s138 = sphi 0, %s137
      %s154 = sphi 0, %s138
      %s160 = sphi 0, %s162
      %s163 = sphi 0, %s160
      %s164 = sphi 0, %s163
      %s180 = sphi 0, %s164
      %s184 = sphi 0, %s184
      %s186 = sphi 0, %s184
      %s187 = sphi 0, %s186
      %s201 = sphi 0, %s187
      %s205 = sphi 0, %s205
      %s207 = sphi 0, %s205
      %s208 = sphi 0, %s207
      %s222 = sphi 0, %s208
      %s226 = sphi 0, %s226
      %s228 = sphi 0, %s226
      %s229 = sphi 0, %s228
      %s243 = sphi 0, %s229
      %s247 = sphi 0, %s247
      %s249 = sphi 0, %s247
      %s250 = sphi 0, %s249
      %s264 = sphi 0, %s250
      %s270 = sphi 0, %s272
      %s273 = sphi 0, %s270
      %s274 = sphi 0, %s273
      %s290 = sphi 0, %s274
      %s296 = sphi 0, %s298
      %s299 = sphi 0, %s296
      %s300 = sphi 0, %s299
      %s316 = sphi 0, %s300
    $region4: #{dinov2_reg_forward.9} parent=1 // loop_header_branch
      %21 = sbr.rel (%p19) target = $region8
    $region5: #{dinov2_reg_forward.9} parent=1 // loop_body
      %s23 = ssub.s32 %s18, 1
      %s24 = ssub.s32 %s18, 2
      %s31 = sadd.s32 1, %s26
      %p32 = scmp.ge.s32.totalorder %s31, 2
      %s33 = scalar_select %p32, 0, %s31
      %s34 = sadd.s32 1, %s25
      %s35 = scalar_select %p32, %s34, %s25
      %p36 = scmp.ge.s32.totalorder %s35, 2
      %s37 = scalar_select %p36, 0, %s35
      %s38 = ssub.s32 %s25, %s37
      %p39 = scmp.eq.s32.totalorder %s38, 0
      %s41 = sadd.s32 %s40, 1
      %s42 = scalar_select %p39, %s40, %s41
      %p45 = pneg %p39
      %p46 = scmp.eq.s32.totalorder %s18, 3
      %p47 = por %p45, %p46
      %p48 = scmp.ne.s32.totalorder %s40, %s43
      %p49 = scmp.eq.s32.totalorder %s18, 0
      %p50 = por %p48, %p49
      %p51 = scmp.ne.s32.totalorder %s40, %s43
      %p52 = scmp.eq.s32.totalorder %s23, 3
      %p53 = por %p51, %p52
      %p54 = scmp.ne.s32.totalorder %s43, %s44
      %p55 = scmp.eq.s32.totalorder %s23, 0
      %p56 = por %p54, %p55
      %p57 = scmp.ne.s32.totalorder %s43, %s44
      %p58 = scmp.eq.s32.totalorder %s24, 3
      %p59 = por %p57, %p58
      %p61 = scmp.ne.s32.totalorder %s44, %s60
      %p62 = scmp.eq.s32.totalorder %s24, 0
      %p63 = por %p61, %p62
      %s65 = sadd.s32 %s64, 1
      %p68 = scmp.eq.s32.totalorder %s18, 3
      %p69 = scmp.ne.s32.totalorder %s64, %s66
      %p70 = scmp.eq.s32.totalorder %s18, 0
      %p71 = por %p69, %p70
      %p72 = scmp.ne.s32.totalorder %s64, %s66
      %p73 = scmp.eq.s32.totalorder %s23, 3
      %p74 = por %p72, %p73
      %p75 = scmp.ne.s32.totalorder %s66, %s67
      %p76 = scmp.eq.s32.totalorder %s23, 0
      %p77 = por %p75, %p76
      %p78 = scmp.ne.s32.totalorder %s66, %s67
      %p79 = scmp.eq.s32.totalorder %s24, 3
      %p80 = por %p78, %p79
      %p82 = scmp.ne.s32.totalorder %s67, %s81
      %p83 = scmp.eq.s32.totalorder %s24, 0
      %p84 = por %p82, %p83
      %s86 = sadd.s32 %s85, 1
      %p89 = scmp.eq.s32.totalorder %s18, 3
      %p90 = scmp.ne.s32.totalorder %s85, %s87
      %p91 = scmp.eq.s32.totalorder %s18, 0
      %p92 = por %p90, %p91
      %p93 = scmp.ne.s32.totalorder %s85, %s87
      %p94 = scmp.eq.s32.totalorder %s23, 3
      %p95 = por %p93, %p94
      %p96 = scmp.ne.s32.totalorder %s87, %s88
      %p97 = scmp.eq.s32.totalorder %s23, 0
      %p98 = por %p96, %p97
      %p99 = scmp.ne.s32.totalorder %s87, %s88
      %p100 = scmp.eq.s32.totalorder %s24, 3
      %p101 = por %p99, %p100
      %p103 = scmp.ne.s32.totalorder %s88, %s102
      %p104 = scmp.eq.s32.totalorder %s24, 0
      %p105 = por %p103, %p104
      %s106 = ssub.s32 %s26, %s33
      %p107 = scmp.eq.s32.totalorder %s106, 0
      %s109 = sadd.s32 %s108, 1
      %s110 = scalar_select %p107, %s108, %s109
      %p113 = pneg %p107
      %p114 = scmp.eq.s32.totalorder %s18, 3
      %p115 = por %p113, %p114
      %p116 = scmp.ne.s32.totalorder %s108, %s111
      %p117 = scmp.eq.s32.totalorder %s18, 0
      %p118 = por %p116, %p117
      %p119 = scmp.ne.s32.totalorder %s108, %s111
      %p120 = scmp.eq.s32.totalorder %s23, 3
      %p121 = por %p119, %p120
      %p122 = scmp.ne.s32.totalorder %s111, %s112
      %p123 = scmp.eq.s32.totalorder %s23, 0
      %p124 = por %p122, %p123
      %p125 = scmp.ne.s32.totalorder %s111, %s112
      %p126 = scmp.eq.s32.totalorder %s24, 3
      %p127 = por %p125, %p126
      %p129 = scmp.ne.s32.totalorder %s112, %s128
      %p130 = scmp.eq.s32.totalorder %s24, 0
      %p131 = por %p129, %p130
      %s132 = ssub.s32 %s26, %s33
      %p133 = scmp.eq.s32.totalorder %s132, 0
      %s135 = sadd.s32 %s134, 1
      %s136 = scalar_select %p133, %s134, %s135
      %p139 = pneg %p133
      %p140 = scmp.eq.s32.totalorder %s18, 3
      %p141 = por %p139, %p140
      %p142 = scmp.ne.s32.totalorder %s134, %s137
      %p143 = scmp.eq.s32.totalorder %s18, 0
      %p144 = por %p142, %p143
      %p145 = scmp.ne.s32.totalorder %s134, %s137
      %p146 = scmp.eq.s32.totalorder %s23, 3
      %p147 = por %p145, %p146
      %p148 = scmp.ne.s32.totalorder %s137, %s138
      %p149 = scmp.eq.s32.totalorder %s23, 0
      %p150 = por %p148, %p149
      %p151 = scmp.ne.s32.totalorder %s137, %s138
      %p152 = scmp.eq.s32.totalorder %s24, 3
      %p153 = por %p151, %p152
      %p155 = scmp.ne.s32.totalorder %s138, %s154
      %p156 = scmp.eq.s32.totalorder %s24, 0
      %p157 = por %p155, %p156
      %s158 = ssub.s32 %s26, %s33
      %p159 = scmp.eq.s32.totalorder %s158, 0
      %s161 = sadd.s32 %s160, 1
      %s162 = scalar_select %p159, %s160, %s161
      %p165 = pneg %p159
      %p166 = scmp.eq.s32.totalorder %s18, 3
      %p167 = por %p165, %p166
      %p168 = scmp.ne.s32.totalorder %s160, %s163
      %p169 = scmp.eq.s32.totalorder %s18, 0
      %p170 = por %p168, %p169
      %p171 = scmp.ne.s32.totalorder %s160, %s163
      %p172 = scmp.eq.s32.totalorder %s23, 3
      %p173 = por %p171, %p172
      %p174 = scmp.ne.s32.totalorder %s163, %s164
      %p175 = scmp.eq.s32.totalorder %s23, 0
      %p176 = por %p174, %p175
      %p177 = scmp.ne.s32.totalorder %s163, %s164
      %p178 = scmp.eq.s32.totalorder %s24, 3
      %p179 = por %p177, %p178
      %p181 = scmp.ne.s32.totalorder %s164, %s180
      %p182 = scmp.eq.s32.totalorder %s24, 0
      %p183 = por %p181, %p182
      %s185 = sadd.s32 %s184, 1
      %p188 = scmp.eq.s32.totalorder %s18, 3
      %p189 = scmp.ne.s32.totalorder %s184, %s186
      %p190 = scmp.eq.s32.totalorder %s18, 0
      %p191 = por %p189, %p190
      %p192 = scmp.ne.s32.totalorder %s184, %s186
      %p193 = scmp.eq.s32.totalorder %s23, 3
      %p194 = por %p192, %p193
      %p195 = scmp.ne.s32.totalorder %s186, %s187
      %p196 = scmp.eq.s32.totalorder %s23, 0
      %p197 = por %p195, %p196
      %p198 = scmp.ne.s32.totalorder %s186, %s187
      %p199 = scmp.eq.s32.totalorder %s24, 3
      %p200 = por %p198, %p199
      %p202 = scmp.ne.s32.totalorder %s187, %s201
      %p203 = scmp.eq.s32.totalorder %s24, 0
      %p204 = por %p202, %p203
      %s206 = sadd.s32 %s205, 1
      %p209 = scmp.eq.s32.totalorder %s18, 3
      %p210 = scmp.ne.s32.totalorder %s205, %s207
      %p211 = scmp.eq.s32.totalorder %s18, 0
      %p212 = por %p210, %p211
      %p213 = scmp.ne.s32.totalorder %s205, %s207
      %p214 = scmp.eq.s32.totalorder %s23, 3
      %p215 = por %p213, %p214
      %p216 = scmp.ne.s32.totalorder %s207, %s208
      %p217 = scmp.eq.s32.totalorder %s23, 0
      %p218 = por %p216, %p217
      %p219 = scmp.ne.s32.totalorder %s207, %s208
      %p220 = scmp.eq.s32.totalorder %s24, 3
      %p221 = por %p219, %p220
      %p223 = scmp.ne.s32.totalorder %s208, %s222
      %p224 = scmp.eq.s32.totalorder %s24, 0
      %p225 = por %p223, %p224
      %s227 = sadd.s32 %s226, 1
      %p230 = scmp.eq.s32.totalorder %s18, 3
      %p231 = scmp.ne.s32.totalorder %s226, %s228
      %p232 = scmp.eq.s32.totalorder %s18, 0
      %p233 = por %p231, %p232
      %p234 = scmp.ne.s32.totalorder %s226, %s228
      %p235 = scmp.eq.s32.totalorder %s23, 3
      %p236 = por %p234, %p235
      %p237 = scmp.ne.s32.totalorder %s228, %s229
      %p238 = scmp.eq.s32.totalorder %s23, 0
      %p239 = por %p237, %p238
      %p240 = scmp.ne.s32.totalorder %s228, %s229
      %p241 = scmp.eq.s32.totalorder %s24, 3
      %p242 = por %p240, %p241
      %p244 = scmp.ne.s32.totalorder %s229, %s243
      %p245 = scmp.eq.s32.totalorder %s24, 0
      %p246 = por %p244, %p245
      %s248 = sadd.s32 %s247, 1
      %p251 = scmp.eq.s32.totalorder %s18, 3
      %p252 = scmp.ne.s32.totalorder %s247, %s249
      %p253 = scmp.eq.s32.totalorder %s18, 0
      %p254 = por %p252, %p253
      %p255 = scmp.ne.s32.totalorder %s247, %s249
      %p256 = scmp.eq.s32.totalorder %s23, 3
      %p257 = por %p255, %p256
      %p258 = scmp.ne.s32.totalorder %s249, %s250
      %p259 = scmp.eq.s32.totalorder %s23, 0
      %p260 = por %p258, %p259
      %p261 = scmp.ne.s32.totalorder %s249, %s250
      %p262 = scmp.eq.s32.totalorder %s24, 3
      %p263 = por %p261, %p262
      %p265 = scmp.ne.s32.totalorder %s250, %s264
      %p266 = scmp.eq.s32.totalorder %s24, 0
      %p267 = por %p265, %p266
      %s268 = ssub.s32 %s25, %s37
      %p269 = scmp.eq.s32.totalorder %s268, 0
      %s271 = sadd.s32 %s270, 1
      %s272 = scalar_select %p269, %s270, %s271
      %p275 = pneg %p269
      %p276 = scmp.eq.s32.totalorder %s18, 3
      %p277 = por %p275, %p276
      %p278 = scmp.ne.s32.totalorder %s270, %s273
      %p279 = scmp.eq.s32.totalorder %s18, 0
      %p280 = por %p278, %p279
      %p281 = scmp.ne.s32.totalorder %s270, %s273
      %p282 = scmp.eq.s32.totalorder %s23, 3
      %p283 = por %p281, %p282
      %p284 = scmp.ne.s32.totalorder %s273, %s274
      %p285 = scmp.eq.s32.totalorder %s23, 0
      %p286 = por %p284, %p285
      %p287 = scmp.ne.s32.totalorder %s273, %s274
      %p288 = scmp.eq.s32.totalorder %s24, 3
      %p289 = por %p287, %p288
      %p291 = scmp.ne.s32.totalorder %s274, %s290
      %p292 = scmp.eq.s32.totalorder %s24, 0
      %p293 = por %p291, %p292
      %s294 = ssub.s32 %s25, %s37
      %p295 = scmp.eq.s32.totalorder %s294, 0
      %s297 = sadd.s32 %s296, 1
      %s298 = scalar_select %p295, %s296, %s297
      %p301 = pneg %p295
      %p302 = scmp.eq.s32.totalorder %s18, 3
      %p303 = por %p301, %p302
      %p304 = scmp.ne.s32.totalorder %s296, %s299
      %p305 = scmp.eq.s32.totalorder %s18, 0
      %p306 = por %p304, %p305
      %p307 = scmp.ne.s32.totalorder %s296, %s299
      %p308 = scmp.eq.s32.totalorder %s23, 3
      %p309 = por %p307, %p308
      %p310 = scmp.ne.s32.totalorder %s299, %s300
      %p311 = scmp.eq.s32.totalorder %s23, 0
      %p312 = por %p310, %p311
      %p313 = scmp.ne.s32.totalorder %s299, %s300
      %p314 = scmp.eq.s32.totalorder %s24, 3
      %p315 = por %p313, %p314
      %p317 = scmp.ne.s32.totalorder %s300, %s316
      %p318 = scmp.eq.s32.totalorder %s24, 0
      %p319 = por %p317, %p318
      %p320 = scmp.le.s32.totalorder 1, %s18
      %p321 = scmp.lt.s32.totalorder %s18, 5
      %p322 = pnand %p320, %p321
      %p323 = pneg %p322
      // Predicated region
      $region9: #{dinov2_reg_forward.9} parent=5 // pred_check
        _
      $region10: #{dinov2_reg_forward.9} parent=5 // pred_check_branch
        %325 = sbr.rel (%p322) target = $region12
      $region11: #{dinov2_reg_forward.9} parent=5 // pred_region
        %s326 = ssub.s32 %s18, 1
        // Predicated region
        $region13: #{dinov2_reg_forward.9} parent=11 // pred_check
          %p327 = pneg %p77
        $region14: #{dinov2_reg_forward.9} parent=11 // pred_check_branch
          %329 = sbr.rel (%p327) target = $region16
        $region15: #{dinov2_reg_forward.9} parent=11 // pred_region
          _
        $region16: #{dinov2_reg_forward.9} parent=11 // pred_fallthru
          _
        // Predicated region
        $region17: #{dinov2_reg_forward.9} parent=11 // pred_check
          %p330 = pneg %p98
        $region18: #{dinov2_reg_forward.9} parent=11 // pred_check_branch
          %332 = sbr.rel (%p330) target = $region20
        $region19: #{dinov2_reg_forward.9} parent=11 // pred_region
          _
        $region20: #{dinov2_reg_forward.9} parent=11 // pred_fallthru
          _
        // Predicated region
        $region21: #{dinov2_reg_forward.9} parent=11 // pred_check
          %p333 = pneg %p197
        $region22: #{dinov2_reg_forward.9} parent=11 // pred_check_branch
          %335 = sbr.rel (%p333) target = $region24
        $region23: #{dinov2_reg_forward.9} parent=11 // pred_region
          _
        $region24: #{dinov2_reg_forward.9} parent=11 // pred_fallthru
          _
        // Predicated region
        $region25: #{dinov2_reg_forward.9} parent=11 // pred_check
          %p336 = pneg %p218
        $region26: #{dinov2_reg_forward.9} parent=11 // pred_check_branch
          %338 = sbr.rel (%p336) target = $region28
        $region27: #{dinov2_reg_forward.9} parent=11 // pred_region
          _
        $region28: #{dinov2_reg_forward.9} parent=11 // pred_fallthru
          _
        // Predicated region
        $region29: #{dinov2_reg_forward.9} parent=11 // pred_check
          %p339 = pneg %p239
        $region30: #{dinov2_reg_forward.9} parent=11 // pred_check_branch
          %341 = sbr.rel (%p339) target = $region32
        $region31: #{dinov2_reg_forward.9} parent=11 // pred_region
          _
        $region32: #{dinov2_reg_forward.9} parent=11 // pred_fallthru
          _
        // Predicated region
        $region33: #{dinov2_reg_forward.9} parent=11 // pred_check
          %p342 = pneg %p260
        $region34: #{dinov2_reg_forward.9} parent=11 // pred_check_branch
          %344 = sbr.rel (%p342) target = $region36
        $region35: #{dinov2_reg_forward.9} parent=11 // pred_region
          _
        $region36: #{dinov2_reg_forward.9} parent=11 // pred_fallthru
          _
      $region12: #{dinov2_reg_forward.9} parent=5 // pred_fallthru
        _
      %p345 = scmp.lt.s32.totalorder %s18, 4
      // Predicated region
      $region37: #{dinov2_reg_forward.9} parent=5 // pred_check
        %p346 = pneg %p345
      $region38: #{dinov2_reg_forward.9} parent=5 // pred_check_branch
        %348 = sbr.rel (%p346) target = $region40
      $region39: #{dinov2_reg_forward.9} parent=5 // pred_region
        // Predicated region
        $region41: #{dinov2_reg_forward.9} parent=39 // pred_check
          %p349 = pneg %p50
        $region42: #{dinov2_reg_forward.9} parent=39 // pred_check_branch
          %351 = sbr.rel (%p349) target = $region44
        $region43: #{dinov2_reg_forward.9} parent=39 // pred_region
          %p352 = scmp.lt.s32.totalorder %s25, 1
          %s353 = scalar_select %p352, %s25, 1
          %s354 = smul.addr %s353, 16
          %s355 = smul.addr %s354, 8
          %s356 = scalar_lea.vmem %s0, %s355
        $region44: #{dinov2_reg_forward.9} parent=39 // pred_fallthru
          _
        // Predicated region
        $region45: #{dinov2_reg_forward.9} parent=39 // pred_check
          %p357 = pneg %p118
        $region46: #{dinov2_reg_forward.9} parent=39 // pred_check_branch
          %359 = sbr.rel (%p357) target = $region48
        $region47: #{dinov2_reg_forward.9} parent=39 // pred_region
          %s360 = sand.u32 %s108, 1
          %s361 = sand.u32 %s108, 1
          %s362 = smul.addr %s361, 128
          %s363 = scalar_lea.vmem [#allocation4], %s362
          %s364 = smul.u32 2, %s26
          %s365 = smul.addr %s364, 4
          %s366 = scalar_lea.vmem %s3, %s365
          // Predicated region
          $region49: #{dinov2_reg_forward.9} parent=47 // pred_check
            _
          $region50: #{dinov2_reg_forward.9} parent=47 // pred_check_branch
            %368 = sbr.rel (0) target = $region52
          $region51: #{dinov2_reg_forward.9} parent=47 // pred_region
            // Predicated region
            $region53: #{dinov2_reg_forward.9} parent=51 // pred_check
              _
            $region54: #{dinov2_reg_forward.9} parent=51 // pred_check_branch
              %370 = sbr.rel (0) target = $region56
            $region55: #{dinov2_reg_forward.9} parent=51 // pred_region
              // Predicated region
              $region68: #{dinov2_reg_forward.9} parent=55 // pred_check
                _
              $region69: #{dinov2_reg_forward.9} parent=55 // pred_check_branch
                %415 = sbr.rel (0) target = $region71
              $region70: #{dinov2_reg_forward.9} parent=55 // pred_region
                loop: start=0, step=1, limit=1
                $region72: #{dinov2_reg_forward.9} parent=70 // loop_pre_header
                  _
                $region73: #{dinov2_reg_forward.9} parent=70 // loop_header
                  %s417 = sphi 0, %s421
                  %p418 = scmp.ge.s32.totalorder %s417, 1
                  %s422 = sphi %s366, %s366
                  %s423 = sphi %s363, %s363
                $region74: #{dinov2_reg_forward.9} parent=70 // loop_header_branch
                  %420 = sbr.rel (%p418) target = $region78
                $region75: #{dinov2_reg_forward.9} parent=70 // loop_body
                  %v424 = vld [vmem:[%s422] sm:$0xff]
                  %425 = vst [vmem:[%s423] sm:$0xff] %v424
                  %v426 = vld [vmem:[%s422 + $0x10] sm:$0xff]
                  %427 = vst [vmem:[%s423 + $0x8] sm:$0xff] %v426
                  %v428 = vld [vmem:[%s422 + $0x20] sm:$0xff]
                  %429 = vst [vmem:[%s423 + $0x10] sm:$0xff] %v428
                  %v430 = vld [vmem:[%s422 + $0x30] sm:$0xff]
                  %431 = vst [vmem:[%s423 + $0x18] sm:$0xff] %v430
                  %v432 = vld [vmem:[%s422 + $0x40] sm:$0xff]
                  %433 = vst [vmem:[%s423 + $0x20] sm:$0xff] %v432
                  %v434 = vld [vmem:[%s422 + $0x50] sm:$0xff]
                  %435 = vst [vmem:[%s423 + $0x28] sm:$0xff] %v434
                  %v436 = vld [vmem:[%s422 + $0x60] sm:$0xff]
                  %437 = vst [vmem:[%s423 + $0x30] sm:$0xff] %v436
                  %v438 = vld [vmem:[%s422 + $0x70] sm:$0xff]
                  %439 = vst [vmem:[%s423 + $0x38] sm:$0xff] %v438
                  %v440 = vld [vmem:[%s422 + $0x80] sm:$0xff]
                  %441 = vst [vmem:[%s423 + $0x40] sm:$0xff] %v440
                  %v442 = vld [vmem:[%s422 + $0x90] sm:$0xff]
                  %443 = vst [vmem:[%s423 + $0x48] sm:$0xff] %v442
                  %v444 = vld [vmem:[%s422 + $0xa0] sm:$0xff]
                  %445 = vst [vmem:[%s423 + $0x50] sm:$0xff] %v444
                  %v446 = vld [vmem:[%s422 + $0xb0] sm:$0xff]
                  %447 = vst [vmem:[%s423 + $0x58] sm:$0xff] %v446
                  %v448 = vld [vmem:[%s422 + $0xc0] sm:$0xff]
                  %449 = vst [vmem:[%s423 + $0x60] sm:$0xff] %v448
                  %v450 = vld [vmem:[%s422 + $0xd0] sm:$0xff]
                  %451 = vst [vmem:[%s423 + $0x68] sm:$0xff] %v450
                  %v452 = vld [vmem:[%s422 + $0xe0] sm:$0xff]
                  %453 = vst [vmem:[%s423 + $0x70] sm:$0xff] %v452
                  %v454 = vld [vmem:[%s422 + $0xf0] sm:$0xff]
                  %455 = vst [vmem:[%s423 + $0x78] sm:$0xff] %v454
                $region76: #{dinov2_reg_forward.9} parent=70 // loop_footer
                  %s421 = sadd.s32 1, %s417
                $region77: #{dinov2_reg_forward.9} parent=70 // loop_footer_branch
                  %416 = sbr.rel target = $region73
                $region78: #{dinov2_reg_forward.9} parent=70 // loop_exit
                  _
              $region71: #{dinov2_reg_forward.9} parent=55 // pred_fallthru
                _
              // Predicated region
              $region79: #{dinov2_reg_forward.9} parent=55 // pred_check
                _
              $region80: #{dinov2_reg_forward.9} parent=55 // pred_check_branch
                %457 = sbr.rel target = $region82
              $region81: #{dinov2_reg_forward.9} parent=55 // pred_region
                _
              $region82: #{dinov2_reg_forward.9} parent=55 // pred_fallthru
                _
            $region56: #{dinov2_reg_forward.9} parent=51 // pred_fallthru
              _
            // Predicated region
            $region57: #{dinov2_reg_forward.9} parent=51 // pred_check
              _
            $region58: #{dinov2_reg_forward.9} parent=51 // pred_check_branch
              %372 = sbr.rel target = $region60
            $region59: #{dinov2_reg_forward.9} parent=51 // pred_region
              loop: start=0, step=1, limit=1
              $region61: #{dinov2_reg_forward.9} parent=59 // loop_pre_header
                _
              $region62: #{dinov2_reg_forward.9} parent=59 // loop_header
                %s375 = sphi 0, %s379
                %p376 = scmp.ge.s32.totalorder %s375, 1
                %s380 = sphi %s366, %s366
                %s381 = sphi %s363, %s363
              $region63: #{dinov2_reg_forward.9} parent=59 // loop_header_branch
                %378 = sbr.rel (%p376) target = $region67
              $region64: #{dinov2_reg_forward.9} parent=59 // loop_body
                %v382 = vld [vmem:[%s380] sm:$0xff]
                %383 = vst [vmem:[%s381] sm:$0xff] %v382
                %v384 = vld [vmem:[%s380 + $0x10] sm:$0xff]
                %385 = vst [vmem:[%s381 + $0x8] sm:$0xff] %v384
                %v386 = vld [vmem:[%s380 + $0x20] sm:$0xff]
                %387 = vst [vmem:[%s381 + $0x10] sm:$0xff] %v386
                %v388 = vld [vmem:[%s380 + $0x30] sm:$0xff]
                %389 = vst [vmem:[%s381 + $0x18] sm:$0xff] %v388
                %v390 = vld [vmem:[%s380 + $0x40] sm:$0xff]
                %391 = vst [vmem:[%s381 + $0x20] sm:$0xff] %v390
                %v392 = vld [vmem:[%s380 + $0x50] sm:$0xff]
                %393 = vst [vmem:[%s381 + $0x28] sm:$0xff] %v392
                %v394 = vld [vmem:[%s380 + $0x60] sm:$0xff]
                %395 = vst [vmem:[%s381 + $0x30] sm:$0xff] %v394
                %v396 = vld [vmem:[%s380 + $0x70] sm:$0xff]
                %397 = vst [vmem:[%s381 + $0x38] sm:$0xff] %v396
                %v398 = vld [vmem:[%s380 + $0x80] sm:$0xff]
                %399 = vst [vmem:[%s381 + $0x40] sm:$0xff] %v398
                %v400 = vld [vmem:[%s380 + $0x90] sm:$0xff]
                %401 = vst [vmem:[%s381 + $0x48] sm:$0xff] %v400
                %v402 = vld [vmem:[%s380 + $0xa0] sm:$0xff]
                %403 = vst [vmem:[%s381 + $0x50] sm:$0xff] %v402
                %v404 = vld [vmem:[%s380 + $0xb0] sm:$0xff]
                %405 = vst [vmem:[%s381 + $0x58] sm:$0xff] %v404
                %v406 = vld [vmem:[%s380 + $0xc0] sm:$0xff]
                %407 = vst [vmem:[%s381 + $0x60] sm:$0xff] %v406
                %v408 = vld [vmem:[%s380 + $0xd0] sm:$0xff]
                %409 = vst [vmem:[%s381 + $0x68] sm:$0xff] %v408
                %v410 = vld [vmem:[%s380 + $0xe0] sm:$0xff]
                %411 = vst [vmem:[%s381 + $0x70] sm:$0xff] %v410
                %v412 = vld [vmem:[%s380 + $0xf0] sm:$0xff]
                %413 = vst [vmem:[%s381 + $0x78] sm:$0xff] %v412
              $region65: #{dinov2_reg_forward.9} parent=59 // loop_footer
                %s379 = sadd.s32 1, %s375
              $region66: #{dinov2_reg_forward.9} parent=59 // loop_footer_branch
                %374 = sbr.rel target = $region62
              $region67: #{dinov2_reg_forward.9} parent=59 // loop_exit
                _
            $region60: #{dinov2_reg_forward.9} parent=51 // pred_fallthru
              _
          $region52: #{dinov2_reg_forward.9} parent=47 // pred_fallthru
            _
          %458 = vnop
        $region48: #{dinov2_reg_forward.9} parent=39 // pred_fallthru
          _
        // Predicated region
        $region83: #{dinov2_reg_forward.9} parent=39 // pred_check
          %p459 = pneg %p144
        $region84: #{dinov2_reg_forward.9} parent=39 // pred_check_branch
          %461 = sbr.rel (%p459) target = $region86
        $region85: #{dinov2_reg_forward.9} parent=39 // pred_region
          %s462 = smul.u32 2, %s26
          %p463 = scmp.lt.s32.totalorder %s462, 3
          %s464 = scalar_select %p463, %s462, 3
          %s465 = scalar_lea.vmem %s4, %s464
          %s466 = smul.u32 2, %s26
        $region86: #{dinov2_reg_forward.9} parent=39 // pred_fallthru
          _
        // Predicated region
        $region87: #{dinov2_reg_forward.9} parent=39 // pred_check
          %p467 = pneg %p170
        $region88: #{dinov2_reg_forward.9} parent=39 // pred_check_branch
          %469 = sbr.rel (%p467) target = $region90
        $region89: #{dinov2_reg_forward.9} parent=39 // pred_region
          %s470 = smul.u32 32, %s26
          %p471 = scmp.lt.s32.totalorder %s470, 63
          %s472 = scalar_select %p471, %s470, 63
          %s473 = smul.addr %s472, 4
          %s474 = scalar_lea.vmem %s5, %s473
          %s475 = smul.u32 32, %s26
        $region90: #{dinov2_reg_forward.9} parent=39 // pred_fallthru
          _
      $region40: #{dinov2_reg_forward.9} parent=5 // pred_fallthru
        _
      %p476 = scmp.le.s32.totalorder 1, %s18
      %p477 = scmp.lt.s32.totalorder %s18, 5
      %p478 = pnand %p476, %p477
      %p479 = pneg %p478
      // Predicated region
      $region91: #{dinov2_reg_forward.9} parent=5 // pred_check
        _
      $region92: #{dinov2_reg_forward.9} parent=5 // pred_check_branch
        %481 = sbr.rel (%p478) target = $region94
      $region93: #{dinov2_reg_forward.9} parent=5 // pred_region
        %s482 = ssub.s32 %s18, 1
        %s483 = sand.u32 %s111, 1
        %s484 = sand.u32 %s111, 1
        %s485 = smul.addr %s484, 128
        %s486 = scalar_lea.vmem [#allocation4], %s485
        // Predicated region
        $region95: #{dinov2_reg_forward.9} parent=93 // pred_check
          %p487 = pneg %p124
        $region96: #{dinov2_reg_forward.9} parent=93 // pred_check_branch
          %489 = sbr.rel (%p487) target = $region98
        $region97: #{dinov2_reg_forward.9} parent=93 // pred_region
          _
        $region98: #{dinov2_reg_forward.9} parent=93 // pred_fallthru
          _
        %p490 = scmp.lt.s32.totalorder %s27, 1
        %s491 = scalar_select %p490, %s27, 1
        %s492 = smul.addr %s491, 16
        %s493 = smul.addr %s492, 8
        %s494 = scalar_lea.vmem %s0, %s493
        %p495 = pneg %p56
        %p496 = pneg %p53
        %p497 = pneg %p77
        %p498 = pneg %p74
        %p499 = pneg %p98
        %p500 = pneg %p95
        %s501 = sand.u32 %s111, 1
        %s502 = sand.u32 %s111, 1
        %s503 = smul.addr %s502, 128
        %s504 = scalar_lea.vmem [#allocation4], %s503
        %p505 = pneg %p124
        %p506 = pneg %p121
        %s507 = smul.u32 2, %s28
        %p508 = scmp.lt.s32.totalorder %s507, 3
        %s509 = scalar_select %p508, %s507, 3
        %s510 = scalar_lea.vmem %s4, %s509
        %p511 = pneg %p150
        %p512 = pneg %p147
        %s513 = smul.u32 32, %s28
        %p514 = scmp.lt.s32.totalorder %s513, 63
        %s515 = scalar_select %p514, %s513, 63
        %s516 = smul.addr %s515, 4
        %s517 = scalar_lea.vmem %s5, %s516
        %p518 = pneg %p176
        %p519 = pneg %p173
        %p520 = pneg %p197
        %p521 = pneg %p194
        %p522 = pneg %p218
        %p523 = pneg %p215
        %p524 = pneg %p239
        %p525 = pneg %p236
        %p526 = pneg %p260
        %p527 = pneg %p257
        %p528 = pneg %p286
        %p529 = pneg %p283
        %p530 = scmp.lt.s32.totalorder %s27, 1
        %s531 = scalar_select %p530, %s27, 1
        %s532 = smul.addr %s531, 16
        %s533 = smul.addr %s532, 8
        %s534 = scalar_lea.vmem %s10, %s533
        %p535 = pneg %p312
        %p536 = pneg %p309
        %p537 = scmp.lt.s32.totalorder %s27, 1
        %s538 = scalar_select %p537, %s27, 1
        %s539 = smul.addr %s538, 16
        %s540 = smul.addr %s539, 8
        %s541 = scalar_lea.vmem %s11, %s540
        %p542 = scmp.lt.s32.totalorder %s27, 1
        %s543 = scalar_select %p542, %s27, 1
        %s544 = smul.addr %s543, 16
        %s545 = smul.addr %s544, 8
        %s546 = scalar_lea.vmem %s0, %s545
        %s547 = smul.u32 2, %s28
        %s548 = smul.u32 2, %s28
        %p549 = scmp.lt.s32.totalorder %s548, 3
        %s550 = scalar_select %p549, %s548, 3
        %s551 = scalar_lea.vmem %s4, %s550
        %s552 = smul.u32 2, %s28
        %s553 = smul.u32 32, %s28
        %p554 = scmp.lt.s32.totalorder %s553, 63
        %s555 = scalar_select %p554, %s553, 63
        %s556 = smul.addr %s555, 4
        %s557 = scalar_lea.vmem %s5, %s556
        %s558 = smul.u32 32, %s28
        %p559 = scmp.lt.s32.totalorder %s27, 1
        %s560 = scalar_select %p559, %s27, 1
        %s561 = smul.addr %s560, 16
        %s562 = smul.addr %s561, 8
        %s563 = scalar_lea.vmem %s10, %s562
        %p564 = scmp.lt.s32.totalorder %s27, 1
        %s565 = scalar_select %p564, %s27, 1
        %s566 = smul.addr %s565, 16
        %s567 = smul.addr %s566, 8
        %s568 = scalar_lea.vmem %s11, %s567
        %p570 = scmp.eq.s32.totalorder %s28, 0
        // Predicated region
        $region99: #{dinov2_reg_forward.9} parent=93 // pred_check
          %p571 = pneg %p570
        $region100: #{dinov2_reg_forward.9} parent=93 // pred_check_branch
          %573 = sbr.rel (%p571) target = $region102
        $region101: #{dinov2_reg_forward.9} parent=93 // pred_region
          %v574 = vld [vmem:[%s546] sm:$0xff]
          %v575 = vld [vmem:[%s546 + $0x8] sm:$0xff]
          %v576 = vld [vmem:[%s546 + $0x10] sm:$0xff]
          %v577 = vld [vmem:[%s546 + $0x18] sm:$0xff]
          %v578 = vld [vmem:[%s546 + $0x20] sm:$0xff]
          %v579 = vld [vmem:[%s546 + $0x28] sm:$0xff]
          %v580 = vld [vmem:[%s546 + $0x30] sm:$0xff]
          %v581 = vld [vmem:[%s546 + $0x38] sm:$0xff]
          %v582 = vld [vmem:[%s546 + $0x40] sm:$0xff]
          %v583 = vld [vmem:[%s546 + $0x48] sm:$0xff]
          %v584 = vld [vmem:[%s546 + $0x50] sm:$0xff]
          %v585 = vld [vmem:[%s546 + $0x58] sm:$0xff]
          %v586 = vld [vmem:[%s546 + $0x60] sm:$0xff]
          %v587 = vld [vmem:[%s546 + $0x68] sm:$0xff]
          %v588 = vld [vmem:[%s546 + $0x70] sm:$0xff]
          %v589 = vld [vmem:[%s546 + $0x78] sm:$0xff]
          %v590 = vld [vmem:[%s1] sm:$0x1]
          %v591 = vld [vmem:[%s2] sm:$0x1]
          %592 = vadd.xlane.f32.xlu0 %v574
          %v593 = vpop.xlane.xlu0 %592
          %594 = vadd.xlane.f32.xlu0 %v575
          %v595 = vpop.xlane.xlu0 %594
          %596 = vadd.xlane.f32.xlu0 %v576
          %v597 = vpop.xlane.xlu0 %596
          %598 = vadd.xlane.f32.xlu0 %v577
          %v599 = vpop.xlane.xlu0 %598
          %600 = vadd.xlane.f32.xlu0 %v578
          %v601 = vpop.xlane.xlu0 %600
          %602 = vadd.xlane.f32.xlu0 %v579
          %v603 = vpop.xlane.xlu0 %602
          %604 = vadd.xlane.f32.xlu0 %v580
          %v605 = vpop.xlane.xlu0 %604
          %606 = vadd.xlane.f32.xlu0 %v581
          %v607 = vpop.xlane.xlu0 %606
          %608 = vadd.xlane.f32.xlu0 %v582
          %v609 = vpop.xlane.xlu0 %608
          %610 = vadd.xlane.f32.xlu0 %v583
          %v611 = vpop.xlane.xlu0 %610
          %612 = vadd.xlane.f32.xlu0 %v584
          %v613 = vpop.xlane.xlu0 %612
          %614 = vadd.xlane.f32.xlu0 %v585
          %v615 = vpop.xlane.xlu0 %614
          %616 = vadd.xlane.f32.xlu0 %v586
          %v617 = vpop.xlane.xlu0 %616
          %618 = vadd.xlane.f32.xlu0 %v587
          %v619 = vpop.xlane.xlu0 %618
          %620 = vadd.xlane.f32.xlu0 %v588
          %v621 = vpop.xlane.xlu0 %620
          %622 = vadd.xlane.f32.xlu0 %v589
          %v623 = vpop.xlane.xlu0 %622
          %v624 = vrcp.pop 128.0
          %v625 = vmul.f32 %v593, %v624
          %v626 = vmul.f32 %v595, %v624
          %v627 = vmul.f32 %v597, %v624
          %v628 = vmul.f32 %v599, %v624
          %v629 = vmul.f32 %v601, %v624
          %v630 = vmul.f32 %v603, %v624
          %v631 = vmul.f32 %v605, %v624
          %v632 = vmul.f32 %v607, %v624
          %v633 = vmul.f32 %v609, %v624
          %v634 = vmul.f32 %v611, %v624
          %v635 = vmul.f32 %v613, %v624
          %v636 = vmul.f32 %v615, %v624
          %v637 = vmul.f32 %v617, %v624
          %v638 = vmul.f32 %v619, %v624
          %v639 = vmul.f32 %v621, %v624
          %v640 = vmul.f32 %v623, %v624
          %v641 = vsub.f32 %v574, %v625
          %v642 = vsub.f32 %v575, %v626
          %v643 = vsub.f32 %v576, %v627
          %v644 = vsub.f32 %v577, %v628
          %v645 = vsub.f32 %v578, %v629
          %v646 = vsub.f32 %v579, %v630
          %v647 = vsub.f32 %v580, %v631
          %v648 = vsub.f32 %v581, %v632
          %v649 = vsub.f32 %v582, %v633
          %v650 = vsub.f32 %v583, %v634
          %v651 = vsub.f32 %v584, %v635
          %v652 = vsub.f32 %v585, %v636
          %v653 = vsub.f32 %v586, %v637
          %v654 = vsub.f32 %v587, %v638
          %v655 = vsub.f32 %v588, %v639
          %v656 = vsub.f32 %v589, %v640
          %v657 = vmul.f32 %v641, %v641
          %v658 = vmul.f32 %v642, %v642
          %v659 = vmul.f32 %v643, %v643
          %v660 = vmul.f32 %v644, %v644
          %v661 = vmul.f32 %v645, %v645
          %v662 = vmul.f32 %v646, %v646
          %v663 = vmul.f32 %v647, %v647
          %v664 = vmul.f32 %v648, %v648
          %v665 = vmul.f32 %v649, %v649
          %v666 = vmul.f32 %v650, %v650
          %v667 = vmul.f32 %v651, %v651
          %v668 = vmul.f32 %v652, %v652
          %v669 = vmul.f32 %v653, %v653
          %v670 = vmul.f32 %v654, %v654
          %v671 = vmul.f32 %v655, %v655
          %v672 = vmul.f32 %v656, %v656
          %673 = vadd.xlane.f32.xlu0 %v657
          %v674 = vpop.xlane.xlu0 %673
          %675 = vadd.xlane.f32.xlu0 %v658
          %v676 = vpop.xlane.xlu0 %675
          %677 = vadd.xlane.f32.xlu0 %v659
          %v678 = vpop.xlane.xlu0 %677
          %679 = vadd.xlane.f32.xlu0 %v660
          %v680 = vpop.xlane.xlu0 %679
          %681 = vadd.xlane.f32.xlu0 %v661
          %v682 = vpop.xlane.xlu0 %681
          %683 = vadd.xlane.f32.xlu0 %v662
          %v684 = vpop.xlane.xlu0 %683
          %685 = vadd.xlane.f32.xlu0 %v663
          %v686 = vpop.xlane.xlu0 %685
          %687 = vadd.xlane.f32.xlu0 %v664
          %v688 = vpop.xlane.xlu0 %687
          %689 = vadd.xlane.f32.xlu0 %v665
          %v690 = vpop.xlane.xlu0 %689
          %691 = vadd.xlane.f32.xlu0 %v666
          %v692 = vpop.xlane.xlu0 %691
          %693 = vadd.xlane.f32.xlu0 %v667
          %v694 = vpop.xlane.xlu0 %693
          %695 = vadd.xlane.f32.xlu0 %v668
          %v696 = vpop.xlane.xlu0 %695
          %697 = vadd.xlane.f32.xlu0 %v669
          %v698 = vpop.xlane.xlu0 %697
          %699 = vadd.xlane.f32.xlu0 %v670
          %v700 = vpop.xlane.xlu0 %699
          %701 = vadd.xlane.f32.xlu0 %v671
          %v702 = vpop.xlane.xlu0 %701
          %703 = vadd.xlane.f32.xlu0 %v672
          %v704 = vpop.xlane.xlu0 %703
          %v705 = vmul.f32 %v674, %v624
          %v706 = vmul.f32 %v676, %v624
          %v707 = vmul.f32 %v678, %v624
          %v708 = vmul.f32 %v680, %v624
          %v709 = vmul.f32 %v682, %v624
          %v710 = vmul.f32 %v684, %v624
          %v711 = vmul.f32 %v686, %v624
          %v712 = vmul.f32 %v688, %v624
          %v713 = vmul.f32 %v690, %v624
          %v714 = vmul.f32 %v692, %v624
          %v715 = vmul.f32 %v694, %v624
          %v716 = vmul.f32 %v696, %v624
          %v717 = vmul.f32 %v698, %v624
          %v718 = vmul.f32 %v700, %v624
          %v719 = vmul.f32 %v702, %v624
          %v720 = vmul.f32 %v704, %v624
          %v721 = vadd.f32 %v705, 1e-06
          %v722 = vadd.f32 %v706, 1e-06
          %v723 = vadd.f32 %v707, 1e-06
          %v724 = vadd.f32 %v708, 1e-06
          %v725 = vadd.f32 %v709, 1e-06
          %v726 = vadd.f32 %v710, 1e-06
          %v727 = vadd.f32 %v711, 1e-06
          %v728 = vadd.f32 %v712, 1e-06
          %v729 = vadd.f32 %v713, 1e-06
          %v730 = vadd.f32 %v714, 1e-06
          %v731 = vadd.f32 %v715, 1e-06
          %v732 = vadd.f32 %v716, 1e-06
          %v733 = vadd.f32 %v717, 1e-06
          %v734 = vadd.f32 %v718, 1e-06
          %v735 = vadd.f32 %v719, 1e-06
          %v736 = vadd.f32 %v720, 1e-06
          %v737 = vrsqrt.pop %v721
          %v738 = vrsqrt.pop %v722
          %v739 = vrsqrt.pop %v723
          %v740 = vrsqrt.pop %v724
          %v741 = vrsqrt.pop %v725
          %v742 = vrsqrt.pop %v726
          %v743 = vrsqrt.pop %v727
          %v744 = vrsqrt.pop %v728
          %v745 = vrsqrt.pop %v729
          %v746 = vrsqrt.pop %v730
          %v747 = vrsqrt.pop %v731
          %v748 = vrsqrt.pop %v732
          %v749 = vrsqrt.pop %v733
          %v750 = vrsqrt.pop %v734
          %v751 = vrsqrt.pop %v735
          %v752 = vrsqrt.pop %v736
          %v753 = vmul.f32 %v641, %v737
          %v754 = vmul.f32 %v642, %v738
          %v755 = vmul.f32 %v643, %v739
          %v756 = vmul.f32 %v644, %v740
          %v757 = vmul.f32 %v645, %v741
          %v758 = vmul.f32 %v646, %v742
          %v759 = vmul.f32 %v647, %v743
          %v760 = vmul.f32 %v648, %v744
          %v761 = vmul.f32 %v649, %v745
          %v762 = vmul.f32 %v650, %v746
          %v763 = vmul.f32 %v651, %v747
          %v764 = vmul.f32 %v652, %v748
          %v765 = vmul.f32 %v653, %v749
          %v766 = vmul.f32 %v654, %v750
          %v767 = vmul.f32 %v655, %v751
          %v768 = vmul.f32 %v656, %v752
          %v770 = vlaneseq
          %v771 = vshrl.u32 %v770, 7
          %v772 = vsub.s32 0, %v771
          %v773 = vrot.slane %v590, %v772
          %v775 = vmul.f32 %v753, %v773
          %v776 = vmul.f32 %v754, %v773
          %v777 = vmul.f32 %v755, %v773
          %v778 = vmul.f32 %v756, %v773
          %v779 = vmul.f32 %v757, %v773
          %v780 = vmul.f32 %v758, %v773
          %v781 = vmul.f32 %v759, %v773
          %v782 = vmul.f32 %v760, %v773
          %v783 = vmul.f32 %v761, %v773
          %v784 = vmul.f32 %v762, %v773
          %v785 = vmul.f32 %v763, %v773
          %v786 = vmul.f32 %v764, %v773
          %v787 = vmul.f32 %v765, %v773
          %v788 = vmul.f32 %v766, %v773
          %v789 = vmul.f32 %v767, %v773
          %v790 = vmul.f32 %v768, %v773
          %v792 = vlaneseq
          %v793 = vshrl.u32 %v792, 7
          %v794 = vsub.s32 0, %v793
          %v795 = vrot.slane %v591, %v794
          %v797 = vadd.f32 %v775, %v795
          %v798 = vadd.f32 %v776, %v795
          %v799 = vadd.f32 %v777, %v795
          %v800 = vadd.f32 %v778, %v795
          %v801 = vadd.f32 %v779, %v795
          %v802 = vadd.f32 %v780, %v795
          %v803 = vadd.f32 %v781, %v795
          %v804 = vadd.f32 %v782, %v795
          %v805 = vadd.f32 %v783, %v795
          %v806 = vadd.f32 %v784, %v795
          %v807 = vadd.f32 %v785, %v795
          %v808 = vadd.f32 %v786, %v795
          %v809 = vadd.f32 %v787, %v795
          %v810 = vadd.f32 %v788, %v795
          %v811 = vadd.f32 %v789, %v795
          %v812 = vadd.f32 %v790, %v795
          %v813 = vpack.c.bf16 %v798, %v797
          %v814 = vpack.c.bf16 %v800, %v799
          %v815 = vpack.c.bf16 %v802, %v801
          %v816 = vpack.c.bf16 %v804, %v803
          %v817 = vpack.c.bf16 %v806, %v805
          %v818 = vpack.c.bf16 %v808, %v807
          %v819 = vpack.c.bf16 %v810, %v809
          %v820 = vpack.c.bf16 %v812, %v811
          %821 = vst [vmem:[#allocation2] sm:$0xff] %v813
          %822 = vst [vmem:[#allocation2 + $0x8] sm:$0xff] %v814
          %823 = vst [vmem:[#allocation2 + $0x10] sm:$0xff] %v815
          %824 = vst [vmem:[#allocation2 + $0x18] sm:$0xff] %v816
          %825 = vst [vmem:[#allocation2 + $0x20] sm:$0xff] %v817
          %826 = vst [vmem:[#allocation2 + $0x28] sm:$0xff] %v818
          %827 = vst [vmem:[#allocation2 + $0x30] sm:$0xff] %v819
          %828 = vst [vmem:[#allocation2 + $0x38] sm:$0xff] %v820
          %829 = vst [vmem:[#allocation3] sm:$0xff] 0.0
          %830 = vst [vmem:[#allocation3 + $0x8] sm:$0xff] 0.0
          %831 = vst [vmem:[#allocation3 + $0x10] sm:$0xff] 0.0
          %832 = vst [vmem:[#allocation3 + $0x18] sm:$0xff] 0.0
          %833 = vst [vmem:[#allocation3 + $0x20] sm:$0xff] 0.0
          %834 = vst [vmem:[#allocation3 + $0x28] sm:$0xff] 0.0
          %835 = vst [vmem:[#allocation3 + $0x30] sm:$0xff] 0.0
          %836 = vst [vmem:[#allocation3 + $0x38] sm:$0xff] 0.0
          %837 = vst [vmem:[#allocation3 + $0x40] sm:$0xff] 0.0
          %838 = vst [vmem:[#allocation3 + $0x48] sm:$0xff] 0.0
          %839 = vst [vmem:[#allocation3 + $0x50] sm:$0xff] 0.0
          %840 = vst [vmem:[#allocation3 + $0x58] sm:$0xff] 0.0
          %841 = vst [vmem:[#allocation3 + $0x60] sm:$0xff] 0.0
          %842 = vst [vmem:[#allocation3 + $0x68] sm:$0xff] 0.0
          %843 = vst [vmem:[#allocation3 + $0x70] sm:$0xff] 0.0
          %844 = vst [vmem:[#allocation3 + $0x78] sm:$0xff] 0.0
        $region102: #{dinov2_reg_forward.9} parent=93 // pred_fallthru
          _
        %v845 = vld [vmem:[#allocation2] sm:$0xff]
        %v846 = vld [vmem:[#allocation2 + $0x8] sm:$0xff]
        %v847 = vld [vmem:[#allocation2 + $0x10] sm:$0xff]
        %v848 = vld [vmem:[#allocation2 + $0x18] sm:$0xff]
        %v849 = vld [vmem:[#allocation2 + $0x20] sm:$0xff]
        %v850 = vld [vmem:[#allocation2 + $0x28] sm:$0xff]
        %v851 = vld [vmem:[#allocation2 + $0x30] sm:$0xff]
        %v852 = vld [vmem:[#allocation2 + $0x38] sm:$0xff]
        %v853 = vld [vmem:[%s486] sm:$0xff]
        %v854 = vld [vmem:[%s486 + $0x8] sm:$0xff]
        %v855 = vld [vmem:[%s486 + $0x10] sm:$0xff]
        %v856 = vld [vmem:[%s486 + $0x18] sm:$0xff]
        %v857 = vld [vmem:[%s486 + $0x20] sm:$0xff]
        %v858 = vld [vmem:[%s486 + $0x28] sm:$0xff]
        %v859 = vld [vmem:[%s486 + $0x30] sm:$0xff]
        %v860 = vld [vmem:[%s486 + $0x38] sm:$0xff]
        %v861 = vld [vmem:[%s486 + $0x40] sm:$0xff]
        %v862 = vld [vmem:[%s486 + $0x48] sm:$0xff]
        %v863 = vld [vmem:[%s486 + $0x50] sm:$0xff]
        %v864 = vld [vmem:[%s486 + $0x58] sm:$0xff]
        %v865 = vld [vmem:[%s486 + $0x60] sm:$0xff]
        %v866 = vld [vmem:[%s486 + $0x68] sm:$0xff]
        %v867 = vld [vmem:[%s486 + $0x70] sm:$0xff]
        %v868 = vld [vmem:[%s486 + $0x78] sm:$0xff]
        %v869 = vld [vmem:[%s551] sm:$0x3]
        %v871 = vlaneseq
        %v872 = vshrl.u32 %v871, 7
        %v873 = vsub.s32 0, %v872
        %v874 = vrot.slane %v869, %v873
        %v875 = vlaneseq
        %v876 = vshrl.u32 %v875, 7
        %v877 = vsub.s32 1, %v876
        %v878 = vrot.slane %v869, %v877
        %v897 = vunpack.c.l.b16 %v853
        %v898 = vunpack.c.h.b16 %v853
        %v899 = vunpack.c.l.b16 %v854
        %v900 = vunpack.c.h.b16 %v854
        %v901 = vunpack.c.l.b16 %v855
        %v902 = vunpack.c.h.b16 %v855
        %v903 = vunpack.c.l.b16 %v856
        %v904 = vunpack.c.h.b16 %v856
        %v905 = vunpack.c.l.b16 %v857
        %v906 = vunpack.c.h.b16 %v857
        %v907 = vunpack.c.l.b16 %v858
        %v908 = vunpack.c.h.b16 %v858
        %v909 = vunpack.c.l.b16 %v859
        %v910 = vunpack.c.h.b16 %v859
        %v911 = vunpack.c.l.b16 %v860
        %v912 = vunpack.c.h.b16 %v860
        %v913 = vunpack.c.l.b16 %v861
        %v914 = vunpack.c.h.b16 %v861
        %v915 = vunpack.c.l.b16 %v862
        %v916 = vunpack.c.h.b16 %v862
        %v917 = vunpack.c.l.b16 %v863
        %v918 = vunpack.c.h.b16 %v863
        %v919 = vunpack.c.l.b16 %v864
        %v920 = vunpack.c.h.b16 %v864
        %v921 = vunpack.c.l.b16 %v865
        %v922 = vunpack.c.h.b16 %v865
        %v923 = vunpack.c.l.b16 %v866
        %v924 = vunpack.c.h.b16 %v866
        %v925 = vunpack.c.l.b16 %v867
        %v926 = vunpack.c.h.b16 %v867
        %v927 = vunpack.c.l.b16 %v868
        %v928 = vunpack.c.h.b16 %v868
        %v929 = vpack.c.b16 %v899, %v897
        %v930 = vpack.c.b16 %v900, %v898
        %v931 = vpack.c.b16 %v903, %v901
        %v932 = vpack.c.b16 %v904, %v902
        %v933 = vpack.c.b16 %v907, %v905
        %v934 = vpack.c.b16 %v908, %v906
        %v935 = vpack.c.b16 %v911, %v909
        %v936 = vpack.c.b16 %v912, %v910
        %v937 = vpack.c.b16 %v915, %v913
        %v938 = vpack.c.b16 %v916, %v914
        %v939 = vpack.c.b16 %v919, %v917
        %v940 = vpack.c.b16 %v920, %v918
        %v941 = vpack.c.b16 %v923, %v921
        %v942 = vpack.c.b16 %v924, %v922
        %v943 = vpack.c.b16 %v927, %v925
        %v944 = vpack.c.b16 %v928, %v926
        %961 = vmatprep.subr.bf16.mxu0 %v930
        %962 = vmatpush1.bf16.msra.mxu0 %v929
        %963 = vmatprep.subr.bf16.mxu0 %v932
        %964 = vmatpush1.bf16.msra.mxu0 %v931
        %965 = vmatprep.subr.bf16.mxu0 %v934
        %966 = vmatpush1.bf16.msra.mxu0 %v933
        %967 = vmatprep.subr.bf16.mxu0 %v936
        %968 = vmatpush1.bf16.msra.mxu0 %v935
        %969 = vmatprep.subr.bf16.mxu0 %v938
        %970 = vmatpush1.bf16.msra.mxu0 %v937
        %971 = vmatprep.subr.bf16.mxu0 %v940
        %972 = vmatpush1.bf16.msra.mxu0 %v939
        %973 = vmatprep.subr.bf16.mxu0 %v942
        %974 = vmatpush1.bf16.msra.mxu0 %v941
        %975 = vmatprep.subr.bf16.mxu0 %v944
        %976 = vmatpush1.bf16.msra.mxu0 %v943
        %977 = vmatprep.subr.bf16.mxu0 0
        %978 = vmatpush1.bf16.msra.mxu0 0
        %979 = vmatprep.subr.bf16.mxu0 0
        %980 = vmatpush1.bf16.msra.mxu0 0
        %981 = vmatprep.subr.bf16.mxu0 0
        %982 = vmatpush1.bf16.msra.mxu0 0
        %983 = vmatprep.subr.bf16.mxu0 0
        %984 = vmatpush1.bf16.msra.mxu0 0
        %985 = vmatprep.subr.bf16.mxu0 0
        %986 = vmatpush1.bf16.msra.mxu0 0
        %987 = vmatprep.subr.bf16.mxu0 0
        %988 = vmatpush1.bf16.msra.mxu0 0
        %989 = vmatprep.subr.bf16.mxu0 0
        %990 = vmatpush1.bf16.msra.mxu0 0
        %991 = vmatprep.subr.bf16.mxu0 0
        %992 = vmatpush1.bf16.msra.mxu0 0
        %993 = vmatprep.mubr.bf16.mxu0 0
        %994 = vmatmul.mubr.bf16.gmra.mrb[0].mxu0 %v845
        %v995 = vpop.f32.mrb[0].mxu0
        %v996 = vadd.f32 %v874, %v995
        %v997 = vpop.f32.mrb[0].mxu0
        %v998 = vadd.f32 %v878, %v997
        %v999 = vpop.f32.mrb[0].mxu0
        %v1000 = vadd.f32 %v874, %v999
        %v1001 = vpop.f32.mrb[0].mxu0
        %v1002 = vadd.f32 %v878, %v1001
        %1003 = vmatprep.mubr.bf16.mxu0 0
        %1004 = vmatmul.mubr.bf16.gmra.mrb[0].mxu0 %v846
        %v1005 = vpop.f32.mrb[0].mxu0
        %v1006 = vadd.f32 %v874, %v1005
        %v1007 = vpop.f32.mrb[0].mxu0
        %v1008 = vadd.f32 %v878, %v1007
        %v1009 = vpop.f32.mrb[0].mxu0
        %v1010 = vadd.f32 %v874, %v1009
        %v1011 = vpop.f32.mrb[0].mxu0
        %v1012 = vadd.f32 %v878, %v1011
        %1013 = vmatprep.mubr.bf16.mxu0 0
        %1014 = vmatmul.mubr.bf16.gmra.mrb[0].mxu0 %v847
        %v1015 = vpop.f32.mrb[0].mxu0
        %v1016 = vadd.f32 %v874, %v1015
        %v1017 = vpop.f32.mrb[0].mxu0
        %v1018 = vadd.f32 %v878, %v1017
        %v1019 = vpop.f32.mrb[0].mxu0
        %v1020 = vadd.f32 %v874, %v1019
        %v1021 = vpop.f32.mrb[0].mxu0
        %v1022 = vadd.f32 %v878, %v1021
        %1023 = vmatprep.mubr.bf16.mxu0 0
        %1024 = vmatmul.mubr.bf16.gmra.mrb[0].mxu0 %v848
        %v1025 = vpop.f32.mrb[0].mxu0
        %v1026 = vadd.f32 %v874, %v1025
        %v1027 = vpop.f32.mrb[0].mxu0
        %v1028 = vadd.f32 %v878, %v1027
        %v1029 = vpop.f32.mrb[0].mxu0
        %v1030 = vadd.f32 %v874, %v1029
        %v1031 = vpop.f32.mrb[0].mxu0
        %v1032 = vadd.f32 %v878, %v1031
        %1033 = vmatprep.mubr.bf16.mxu0 0
        %1034 = vmatmul.mubr.bf16.gmra.mrb[0].mxu0 %v849
        %v1035 = vpop.f32.mrb[0].mxu0
        %v1036 = vadd.f32 %v874, %v1035
        %v1037 = vpop.f32.mrb[0].mxu0
        %v1038 = vadd.f32 %v878, %v1037
        %v1039 = vpop.f32.mrb[0].mxu0
        %v1040 = vadd.f32 %v874, %v1039
        %v1041 = vpop.f32.mrb[0].mxu0
        %v1042 = vadd.f32 %v878, %v1041
        %1043 = vmatprep.mubr.bf16.mxu0 0
        %1044 = vmatmul.mubr.bf16.gmra.mrb[0].mxu0 %v850
        %v1045 = vpop.f32.mrb[0].mxu0
        %v1046 = vadd.f32 %v874, %v1045
        %v1047 = vpop.f32.mrb[0].mxu0
        %v1048 = vadd.f32 %v878, %v1047
        %v1049 = vpop.f32.mrb[0].mxu0
        %v1050 = vadd.f32 %v874, %v1049
        %v1051 = vpop.f32.mrb[0].mxu0
        %v1052 = vadd.f32 %v878, %v1051
        %1053 = vmatprep.mubr.bf16.mxu0 0
        %1054 = vmatmul.mubr.bf16.gmra.mrb[0].mxu0 %v851
        %v1055 = vpop.f32.mrb[0].mxu0
        %v1056 = vadd.f32 %v874, %v1055
        %v1057 = vpop.f32.mrb[0].mxu0
        %v1058 = vadd.f32 %v878, %v1057
        %v1059 = vpop.f32.mrb[0].mxu0
        %v1060 = vadd.f32 %v874, %v1059
        %v1061 = vpop.f32.mrb[0].mxu0
        %v1062 = vadd.f32 %v878, %v1061
        %1063 = vmatprep.mubr.bf16.mxu0 0
        %1064 = vmatmul.mubr.bf16.gmra.mrb[0].mxu0 %v852
        %v1065 = vpop.f32.mrb[0].mxu0
        %v1066 = vadd.f32 %v874, %v1065
        %v1067 = vpop.f32.mrb[0].mxu0
        %v1068 = vadd.f32 %v878, %v1067
        %v1069 = vpop.f32.mrb[0].mxu0
        %v1070 = vadd.f32 %v874, %v1069
        %v1071 = vpop.f32.mrb[0].mxu0
        %v1072 = vadd.f32 %v878, %v1071
        %1073 = vdwg.mxu0
        %v1074 = vmul.f32 %v996, 0.5
        %v1075 = vmul.f32 %v998, 0.5
        %v1076 = vmul.f32 %v1000, 0.5
        %v1077 = vmul.f32 %v1002, 0.5
        %v1078 = vmul.f32 %v1006, 0.5
        %v1079 = vmul.f32 %v1008, 0.5
        %v1080 = vmul.f32 %v1010, 0.5
        %v1081 = vmul.f32 %v1012, 0.5
        %v1082 = vmul.f32 %v1016, 0.5
        %v1083 = vmul.f32 %v1018, 0.5
        %v1084 = vmul.f32 %v1020, 0.5
        %v1085 = vmul.f32 %v1022, 0.5
        %v1086 = vmul.f32 %v1026, 0.5
        %v1087 = vmul.f32 %v1028, 0.5
        %v1088 = vmul.f32 %v1030, 0.5
        %v1089 = vmul.f32 %v1032, 0.5
        %v1090 = vmul.f32 %v1036, 0.5
        %v1091 = vmul.f32 %v1038, 0.5
        %v1092 = vmul.f32 %v1040, 0.5
        %v1093 = vmul.f32 %v1042, 0.5
        %v1094 = vmul.f32 %v1046, 0.5
        %v1095 = vmul.f32 %v1048, 0.5
        %v1096 = vmul.f32 %v1050, 0.5
        %v1097 = vmul.f32 %v1052, 0.5
        %v1098 = vmul.f32 %v1056, 0.5
        %v1099 = vmul.f32 %v1058, 0.5
        %v1100 = vmul.f32 %v1060, 0.5
        %v1101 = vmul.f32 %v1062, 0.5
        %v1102 = vmul.f32 %v1066, 0.5
        %v1103 = vmul.f32 %v1068, 0.5
        %v1104 = vmul.f32 %v1070, 0.5
        %v1105 = vmul.f32 %v1072, 0.5
        %v1106 = vmul.f32 %v996, 0.70710677
        %v1107 = vmul.f32 %v998, 0.70710677
        %v1108 = vmul.f32 %v1000, 0.70710677
        %v1109 = vmul.f32 %v1002, 0.70710677
        %v1110 = vmul.f32 %v1006, 0.70710677
        %v1111 = vmul.f32 %v1008, 0.70710677
        %v1112 = vmul.f32 %v1010, 0.70710677
        %v1113 = vmul.f32 %v1012, 0.70710677
        %v1114 = vmul.f32 %v1016, 0.70710677
        %v1115 = vmul.f32 %v1018, 0.70710677
        %v1116 = vmul.f32 %v1020, 0.70710677
        %v1117 = vmul.f32 %v1022, 0.70710677
        %v1118 = vmul.f32 %v1026, 0.70710677
        %v1119 = vmul.f32 %v1028, 0.70710677
        %v1120 = vmul.f32 %v1030, 0.70710677
        %v1121 = vmul.f32 %v1032, 0.70710677
        %v1122 = vmul.f32 %v1036, 0.70710677
        %v1123 = vmul.f32 %v1038, 0.70710677
        %v1124 = vmul.f32 %v1040, 0.70710677
        %v1125 = vmul.f32 %v1042, 0.70710677
        %v1126 = vmul.f32 %v1046, 0.70710677
        %v1127 = vmul.f32 %v1048, 0.70710677
        %v1128 = vmul.f32 %v1050, 0.70710677
        %v1129 = vmul.f32 %v1052, 0.70710677
        %v1130 = vmul.f32 %v1056, 0.70710677
        %v1131 = vmul.f32 %v1058, 0.70710677
        %v1132 = vmul.f32 %v1060, 0.70710677
        %v1133 = vmul.f32 %v1062, 0.70710677
        %v1134 = vmul.f32 %v1066, 0.70710677
        %v1135 = vmul.f32 %v1068, 0.70710677
        %v1136 = vmul.f32 %v1070, 0.70710677
        %v1137 = vmul.f32 %v1072, 0.70710677
        %v1138 = vand.u32 2147483647, %v1106
        %v1139 = vand.u32 2147483647, %v1107
        %v1140 = vand.u32 2147483647, %v1108
        %v1141 = vand.u32 2147483647, %v1109
        %v1142 = vand.u32 2147483647, %v1110
        %v1143 = vand.u32 2147483647, %v1111
        %v1144 = vand.u32 2147483647, %v1112
        %v1145 = vand.u32 2147483647, %v1113
        %v1146 = vand.u32 2147483647, %v1114
        %v1147 = vand.u32 2147483647, %v1115
        %v1148 = vand.u32 2147483647, %v1116
        %v1149 = vand.u32 2147483647, %v1117
        %v1150 = vand.u32 2147483647, %v1118
        %v1151 = vand.u32 2147483647, %v1119
        %v1152 = vand.u32 2147483647, %v1120
        %v1153 = vand.u32 2147483647, %v1121
        %v1154 = vand.u32 2147483647, %v1122
        %v1155 = vand.u32 2147483647, %v1123
        %v1156 = vand.u32 2147483647, %v1124
        %v1157 = vand.u32 2147483647, %v1125
        %v1158 = vand.u32 2147483647, %v1126
        %v1159 = vand.u32 2147483647, %v1127
        %v1160 = vand.u32 2147483647, %v1128
        %v1161 = vand.u32 2147483647, %v1129
        %v1162 = vand.u32 2147483647, %v1130
        %v1163 = vand.u32 2147483647, %v1131
        %v1164 = vand.u32 2147483647, %v1132
        %v1165 = vand.u32 2147483647, %v1133
        %v1166 = vand.u32 2147483647, %v1134
        %v1167 = vand.u32 2147483647, %v1135
        %v1168 = vand.u32 2147483647, %v1136
        %v1169 = vand.u32 2147483647, %v1137
        %v1170 = vmul.f32 %v1138, 0.3275911
        %v1171 = vmul.f32 %v1139, 0.3275911
        %v1172 = vmul.f32 %v1140, 0.3275911
        %v1173 = vmul.f32 %v1141, 0.3275911
        %v1174 = vmul.f32 %v1142, 0.3275911
        %v1175 = vmul.f32 %v1143, 0.3275911
        %v1176 = vmul.f32 %v1144, 0.3275911
        %v1177 = vmul.f32 %v1145, 0.3275911
        %v1178 = vmul.f32 %v1146, 0.3275911
        %v1179 = vmul.f32 %v1147, 0.3275911
        %v1180 = vmul.f32 %v1148, 0.3275911
        %v1181 = vmul.f32 %v1149, 0.3275911
        %v1182 = vmul.f32 %v1150, 0.3275911
        %v1183 = vmul.f32 %v1151, 0.3275911
        %v1184 = vmul.f32 %v1152, 0.3275911
        %v1185 = vmul.f32 %v1153, 0.3275911
        %v1186 = vmul.f32 %v1154, 0.3275911
        %v1187 = vmul.f32 %v1155, 0.3275911
        %v1188 = vmul.f32 %v1156, 0.3275911
        %v1189 = vmul.f32 %v1157, 0.3275911
        %v1190 = vmul.f32 %v1158, 0.3275911
        %v1191 = vmul.f32 %v1159, 0.3275911
        %v1192 = vmul.f32 %v1160, 0.3275911
        %v1193 = vmul.f32 %v1161, 0.3275911
        %v1194 = vmul.f32 %v1162, 0.3275911
        %v1195 = vmul.f32 %v1163, 0.3275911
        %v1196 = vmul.f32 %v1164, 0.3275911
        %v1197 = vmul.f32 %v1165, 0.3275911
        %v1198 = vmul.f32 %v1166, 0.3275911
        %v1199 = vmul.f32 %v1167, 0.3275911
        %v1200 = vmul.f32 %v1168, 0.3275911
        %v1201 = vmul.f32 %v1169, 0.3275911
        %v1202 = vadd.f32 %v1170, 1.0
        %v1203 = vadd.f32 %v1171, 1.0
        %v1204 = vadd.f32 %v1172, 1.0
        %v1205 = vadd.f32 %v1173, 1.0
        %v1206 = vadd.f32 %v1174, 1.0
        %v1207 = vadd.f32 %v1175, 1.0
        %v1208 = vadd.f32 %v1176, 1.0
        %v1209 = vadd.f32 %v1177, 1.0
        %v1210 = vadd.f32 %v1178, 1.0
        %v1211 = vadd.f32 %v1179, 1.0
        %v1212 = vadd.f32 %v1180, 1.0
        %v1213 = vadd.f32 %v1181, 1.0
        %v1214 = vadd.f32 %v1182, 1.0
        %v1215 = vadd.f32 %v1183, 1.0
        %v1216 = vadd.f32 %v1184, 1.0
        %v1217 = vadd.f32 %v1185, 1.0
        %v1218 = vadd.f32 %v1186, 1.0
        %v1219 = vadd.f32 %v1187, 1.0
        %v1220 = vadd.f32 %v1188, 1.0
        %v1221 = vadd.f32 %v1189, 1.0
        %v1222 = vadd.f32 %v1190, 1.0
        %v1223 = vadd.f32 %v1191, 1.0
        %v1224 = vadd.f32 %v1192, 1.0
        %v1225 = vadd.f32 %v1193, 1.0
        %v1226 = vadd.f32 %v1194, 1.0
        %v1227 = vadd.f32 %v1195, 1.0
        %v1228 = vadd.f32 %v1196, 1.0
        %v1229 = vadd.f32 %v1197, 1.0
        %v1230 = vadd.f32 %v1198, 1.0
        %v1231 = vadd.f32 %v1199, 1.0
        %v1232 = vadd.f32 %v1200, 1.0
        %v1233 = vadd.f32 %v1201, 1.0
        %v1234 = vrcp.pop %v1202
        %v1235 = vmul.f32 1.0, %v1234
        %v1236 = vrcp.pop %v1203
        %v1237 = vmul.f32 1.0, %v1236
        %v1238 = vrcp.pop %v1204
        %v1239 = vmul.f32 1.0, %v1238
        %v1240 = vrcp.pop %v1205
        %v1241 = vmul.f32 1.0, %v1240
        %v1242 = vrcp.pop %v1206
        %v1243 = vmul.f32 1.0, %v1242
        %v1244 = vrcp.pop %v1207
        %v1245 = vmul.f32 1.0, %v1244
        %v1246 = vrcp.pop %v1208
        %v1247 = vmul.f32 1.0, %v1246
        %v1248 = vrcp.pop %v1209
        %v1249 = vmul.f32 1.0, %v1248
        %v1250 = vrcp.pop %v1210
        %v1251 = vmul.f32 1.0, %v1250
        %v1252 = vrcp.pop %v1211
        %v1253 = vmul.f32 1.0, %v1252
        %v1254 = vrcp.pop %v1212
        %v1255 = vmul.f32 1.0, %v1254
        %v1256 = vrcp.pop %v1213
        %v1257 = vmul.f32 1.0, %v1256
        %v1258 = vrcp.pop %v1214
        %v1259 = vmul.f32 1.0, %v1258
        %v1260 = vrcp.pop %v1215
        %v1261 = vmul.f32 1.0, %v1260
        %v1262 = vrcp.pop %v1216
        %v1263 = vmul.f32 1.0, %v1262
        %v1264 = vrcp.pop %v1217
        %v1265 = vmul.f32 1.0, %v1264
        %v1266 = vrcp.pop %v1218
        %v1267 = vmul.f32 1.0, %v1266
        %v1268 = vrcp.pop %v1219
        %v1269 = vmul.f32 1.0, %v1268
        %v1270 = vrcp.pop %v1220
        %v1271 = vmul.f32 1.0, %v1270
        %v1272 = vrcp.pop %v1221
        %v1273 = vmul.f32 1.0, %v1272
        %v1274 = vrcp.pop %v1222
        %v1275 = vmul.f32 1.0, %v1274
        %v1276 = vrcp.pop %v1223
        %v1277 = vmul.f32 1.0, %v1276
        %v1278 = vrcp.pop %v1224
        %v1279 = vmul.f32 1.0, %v1278
        %v1280 = vrcp.pop %v1225
        %v1281 = vmul.f32 1.0, %v1280
        %v1282 = vrcp.pop %v1226
        %v1283 = vmul.f32 1.0, %v1282
        %v1284 = vrcp.pop %v1227
        %v1285 = vmul.f32 1.0, %v1284
        %v1286 = vrcp.pop %v1228
        %v1287 = vmul.f32 1.0, %v1286
        %v1288 = vrcp.pop %v1229
        %v1289 = vmul.f32 1.0, %v1288
        %v1290 = vrcp.pop %v1230
        %v1291 = vmul.f32 1.0, %v1290
        %v1292 = vrcp.pop %v1231
        %v1293 = vmul.f32 1.0, %v1292
        %v1294 = vrcp.pop %v1232
        %v1295 = vmul.f32 1.0, %v1294
        %v1296 = vrcp.pop %v1233
        %v1297 = vmul.f32 1.0, %v1296
        %v1298 = vmul.f32 %v1235, 1.0614054
        %v1299 = vmul.f32 %v1237, 1.0614054
        %v1300 = vmul.f32 %v1239, 1.0614054
        %v1301 = vmul.f32 %v1241, 1.0614054
        %v1302 = vmul.f32 %v1243, 1.0614054
        %v1303 = vmul.f32 %v1245, 1.0614054
        %v1304 = vmul.f32 %v1247, 1.0614054
        %v1305 = vmul.f32 %v1249, 1.0614054
        %v1306 = vmul.f32 %v1251, 1.0614054
        %v1307 = vmul.f32 %v1253, 1.0614054
        %v1308 = vmul.f32 %v1255, 1.0614054
        %v1309 = vmul.f32 %v1257, 1.0614054
        %v1310 = vmul.f32 %v1259, 1.0614054
        %v1311 = vmul.f32 %v1261, 1.0614054
        %v1312 = vmul.f32 %v1263, 1.0614054
        %v1313 = vmul.f32 %v1265, 1.0614054
        %v1314 = vmul.f32 %v1267, 1.0614054
        %v1315 = vmul.f32 %v1269, 1.0614054
        %v1316 = vmul.f32 %v1271, 1.0614054
        %v1317 = vmul.f32 %v1273, 1.0614054
        %v1318 = vmul.f32 %v1275, 1.0614054
        %v1319 = vmul.f32 %v1277, 1.0614054
        %v1320 = vmul.f32 %v1279, 1.0614054
        %v1321 = vmul.f32 %v1281, 1.0614054
        %v1322 = vmul.f32 %v1283, 1.0614054
        %v1323 = vmul.f32 %v1285, 1.0614054
        %v1324 = vmul.f32 %v1287, 1.0614054
        %v1325 = vmul.f32 %v1289, 1.0614054
        %v1326 = vmul.f32 %v1291, 1.0614054
        %v1327 = vmul.f32 %v1293, 1.0614054
        %v1328 = vmul.f32 %v1295, 1.0614054
        %v1329 = vmul.f32 %v1297, 1.0614054
        %v1330 = vadd.f32 %v1298, -1.4531521
        %v1331 = vadd.f32 %v1299, -1.4531521
        %v1332 = vadd.f32 %v1300, -1.4531521
        %v1333 = vadd.f32 %v1301, -1.4531521
        %v1334 = vadd.f32 %v1302, -1.4531521
        %v1335 = vadd.f32 %v1303, -1.4531521
        %v1336 = vadd.f32 %v1304, -1.4531521
        %v1337 = vadd.f32 %v1305, -1.4531521
        %v1338 = vadd.f32 %v1306, -1.4531521
        %v1339 = vadd.f32 %v1307, -1.4531521
        %v1340 = vadd.f32 %v1308, -1.4531521
        %v1341 = vadd.f32 %v1309, -1.4531521
        %v1342 = vadd.f32 %v1310, -1.4531521
        %v1343 = vadd.f32 %v1311, -1.4531521
        %v1344 = vadd.f32 %v1312, -1.4531521
        %v1345 = vadd.f32 %v1313, -1.4531521
        %v1346 = vadd.f32 %v1314, -1.4531521
        %v1347 = vadd.f32 %v1315, -1.4531521
        %v1348 = vadd.f32 %v1316, -1.4531521
        %v1349 = vadd.f32 %v1317, -1.4531521
        %v1350 = vadd.f32 %v1318, -1.4531521
        %v1351 = vadd.f32 %v1319, -1.4531521
        %v1352 = vadd.f32 %v1320, -1.4531521
        %v1353 = vadd.f32 %v1321, -1.4531521
        %v1354 = vadd.f32 %v1322, -1.4531521
        %v1355 = vadd.f32 %v1323, -1.4531521
        %v1356 = vadd.f32 %v1324, -1.4531521
        %v1357 = vadd.f32 %v1325, -1.4531521
        %v1358 = vadd.f32 %v1326, -1.4531521
        %v1359 = vadd.f32 %v1327, -1.4531521
        %v1360 = vadd.f32 %v1328, -1.4531521
        %v1361 = vadd.f32 %v1329, -1.4531521
        %v1362 = vmul.f32 %v1235, %v1330
        %v1363 = vmul.f32 %v1237, %v1331
        %v1364 = vmul.f32 %v1239, %v1332
        %v1365 = vmul.f32 %v1241, %v1333
        %v1366 = vmul.f32 %v1243, %v1334
        %v1367 = vmul.f32 %v1245, %v1335
        %v1368 = vmul.f32 %v1247, %v1336
        %v1369 = vmul.f32 %v1249, %v1337
        %v1370 = vmul.f32 %v1251, %v1338
        %v1371 = vmul.f32 %v1253, %v1339
        %v1372 = vmul.f32 %v1255, %v1340
        %v1373 = vmul.f32 %v1257, %v1341
        %v1374 = vmul.f32 %v1259, %v1342
        %v1375 = vmul.f32 %v1261, %v1343
        %v1376 = vmul.f32 %v1263, %v1344
        %v1377 = vmul.f32 %v1265, %v1345
        %v1378 = vmul.f32 %v1267, %v1346
        %v1379 = vmul.f32 %v1269, %v1347
        %v1380 = vmul.f32 %v1271, %v1348
        %v1381 = vmul.f32 %v1273, %v1349
        %v1382 = vmul.f32 %v1275, %v1350
        %v1383 = vmul.f32 %v1277, %v1351
        %v1384 = vmul.f32 %v1279, %v1352
        %v1385 = vmul.f32 %v1281, %v1353
        %v1386 = vmul.f32 %v1283, %v1354
        %v1387 = vmul.f32 %v1285, %v1355
        %v1388 = vmul.f32 %v1287, %v1356
        %v1389 = vmul.f32 %v1289, %v1357
        %v1390 = vmul.f32 %v1291, %v1358
        %v1391 = vmul.f32 %v1293, %v1359
        %v1392 = vmul.f32 %v1295, %v1360
        %v1393 = vmul.f32 %v1297, %v1361
        %v1394 = vadd.f32 %v1362, 1.4214138
        %v1395 = vadd.f32 %v1363, 1.4214138
        %v1396 = vadd.f32 %v1364, 1.4214138
        %v1397 = vadd.f32 %v1365, 1.4214138
        %v1398 = vadd.f32 %v1366, 1.4214138
        %v1399 = vadd.f32 %v1367, 1.4214138
        %v1400 = vadd.f32 %v1368, 1.4214138
        %v1401 = vadd.f32 %v1369, 1.4214138
        %v1402 = vadd.f32 %v1370, 1.4214138
        %v1403 = vadd.f32 %v1371, 1.4214138
        %v1404 = vadd.f32 %v1372, 1.4214138
        %v1405 = vadd.f32 %v1373, 1.4214138
        %v1406 = vadd.f32 %v1374, 1.4214138
        %v1407 = vadd.f32 %v1375, 1.4214138
        %v1408 = vadd.f32 %v1376, 1.4214138
        %v1409 = vadd.f32 %v1377, 1.4214138
        %v1410 = vadd.f32 %v1378, 1.4214138
        %v1411 = vadd.f32 %v1379, 1.4214138
        %v1412 = vadd.f32 %v1380, 1.4214138
        %v1413 = vadd.f32 %v1381, 1.4214138
        %v1414 = vadd.f32 %v1382, 1.4214138
        %v1415 = vadd.f32 %v1383, 1.4214138
        %v1416 = vadd.f32 %v1384, 1.4214138
        %v1417 = vadd.f32 %v1385, 1.4214138
        %v1418 = vadd.f32 %v1386, 1.4214138
        %v1419 = vadd.f32 %v1387, 1.4214138
        %v1420 = vadd.f32 %v1388, 1.4214138
        %v1421 = vadd.f32 %v1389, 1.4214138
        %v1422 = vadd.f32 %v1390, 1.4214138
        %v1423 = vadd.f32 %v1391, 1.4214138
        %v1424 = vadd.f32 %v1392, 1.4214138
        %v1425 = vadd.f32 %v1393, 1.4214138
        %v1426 = vmul.f32 %v1235, %v1394
        %v1427 = vmul.f32 %v1237, %v1395
        %v1428 = vmul.f32 %v1239, %v1396
        %v1429 = vmul.f32 %v1241, %v1397
        %v1430 = vmul.f32 %v1243, %v1398
        %v1431 = vmul.f32 %v1245, %v1399
        %v1432 = vmul.f32 %v1247, %v1400
        %v1433 = vmul.f32 %v1249, %v1401
        %v1434 = vmul.f32 %v1251, %v1402
        %v1435 = vmul.f32 %v1253, %v1403
        %v1436 = vmul.f32 %v1255, %v1404
        %v1437 = vmul.f32 %v1257, %v1405
        %v1438 = vmul.f32 %v1259, %v1406
        %v1439 = vmul.f32 %v1261, %v1407
        %v1440 = vmul.f32 %v1263, %v1408
        %v1441 = vmul.f32 %v1265, %v1409
        %v1442 = vmul.f32 %v1267, %v1410
        %v1443 = vmul.f32 %v1269, %v1411
        %v1444 = vmul.f32 %v1271, %v1412
        %v1445 = vmul.f32 %v1273, %v1413
        %v1446 = vmul.f32 %v1275, %v1414
        %v1447 = vmul.f32 %v1277, %v1415
        %v1448 = vmul.f32 %v1279, %v1416
        %v1449 = vmul.f32 %v1281, %v1417
        %v1450 = vmul.f32 %v1283, %v1418
        %v1451 = vmul.f32 %v1285, %v1419
        %v1452 = vmul.f32 %v1287, %v1420
        %v1453 = vmul.f32 %v1289, %v1421
        %v1454 = vmul.f32 %v1291, %v1422
        %v1455 = vmul.f32 %v1293, %v1423
        %v1456 = vmul.f32 %v1295, %v1424
        %v1457 = vmul.f32 %v1297, %v1425
        %v1458 = vadd.f32 %v1426, -0.28449672
        %v1459 = vadd.f32 %v1427, -0.28449672
        %v1460 = vadd.f32 %v1428, -0.28449672
        %v1461 = vadd.f32 %v1429, -0.28449672
        %v1462 = vadd.f32 %v1430, -0.28449672
        %v1463 = vadd.f32 %v1431, -0.28449672
        %v1464 = vadd.f32 %v1432, -0.28449672
        %v1465 = vadd.f32 %v1433, -0.28449672
        %v1466 = vadd.f32 %v1434, -0.28449672
        %v1467 = vadd.f32 %v1435, -0.28449672
        %v1468 = vadd.f32 %v1436, -0.28449672
        %v1469 = vadd.f32 %v1437, -0.28449672
        %v1470 = vadd.f32 %v1438, -0.28449672
        %v1471 = vadd.f32 %v1439, -0.28449672
        %v1472 = vadd.f32 %v1440, -0.28449672
        %v1473 = vadd.f32 %v1441, -0.28449672
        %v1474 = vadd.f32 %v1442, -0.28449672
        %v1475 = vadd.f32 %v1443, -0.28449672
        %v1476 = vadd.f32 %v1444, -0.28449672
        %v1477 = vadd.f32 %v1445, -0.28449672
        %v1478 = vadd.f32 %v1446, -0.28449672
        %v1479 = vadd.f32 %v1447, -0.28449672
        %v1480 = vadd.f32 %v1448, -0.28449672
        %v1481 = vadd.f32 %v1449, -0.28449672
        %v1482 = vadd.f32 %v1450, -0.28449672
        %v1483 = vadd.f32 %v1451, -0.28449672
        %v1484 = vadd.f32 %v1452, -0.28449672
        %v1485 = vadd.f32 %v1453, -0.28449672
        %v1486 = vadd.f32 %v1454, -0.28449672
        %v1487 = vadd.f32 %v1455, -0.28449672
        %v1488 = vadd.f32 %v1456, -0.28449672
        %v1489 = vadd.f32 %v1457, -0.28449672
        %v1490 = vmul.f32 %v1235, %v1458
        %v1491 = vmul.f32 %v1237, %v1459
        %v1492 = vmul.f32 %v1239, %v1460
        %v1493 = vmul.f32 %v1241, %v1461
        %v1494 = vmul.f32 %v1243, %v1462
        %v1495 = vmul.f32 %v1245, %v1463
        %v1496 = vmul.f32 %v1247, %v1464
        %v1497 = vmul.f32 %v1249, %v1465
        %v1498 = vmul.f32 %v1251, %v1466
        %v1499 = vmul.f32 %v1253, %v1467
        %v1500 = vmul.f32 %v1255, %v1468
        %v1501 = vmul.f32 %v1257, %v1469
        %v1502 = vmul.f32 %v1259, %v1470
        %v1503 = vmul.f32 %v1261, %v1471
        %v1504 = vmul.f32 %v1263, %v1472
        %v1505 = vmul.f32 %v1265, %v1473
        %v1506 = vmul.f32 %v1267, %v1474
        %v1507 = vmul.f32 %v1269, %v1475
        %v1508 = vmul.f32 %v1271, %v1476
        %v1509 = vmul.f32 %v1273, %v1477
        %v1510 = vmul.f32 %v1275, %v1478
        %v1511 = vmul.f32 %v1277, %v1479
        %v1512 = vmul.f32 %v1279, %v1480
        %v1513 = vmul.f32 %v1281, %v1481
        %v1514 = vmul.f32 %v1283, %v1482
        %v1515 = vmul.f32 %v1285, %v1483
        %v1516 = vmul.f32 %v1287, %v1484
        %v1517 = vmul.f32 %v1289, %v1485
        %v1518 = vmul.f32 %v1291, %v1486
        %v1519 = vmul.f32 %v1293, %v1487
        %v1520 = vmul.f32 %v1295, %v1488
        %v1521 = vmul.f32 %v1297, %v1489
        %v1522 = vadd.f32 %v1490, 0.2548296
        %v1523 = vadd.f32 %v1491, 0.2548296
        %v1524 = vadd.f32 %v1492, 0.2548296
        %v1525 = vadd.f32 %v1493, 0.2548296
        %v1526 = vadd.f32 %v1494, 0.2548296
        %v1527 = vadd.f32 %v1495, 0.2548296
        %v1528 = vadd.f32 %v1496, 0.2548296
        %v1529 = vadd.f32 %v1497, 0.2548296
        %v1530 = vadd.f32 %v1498, 0.2548296
        %v1531 = vadd.f32 %v1499, 0.2548296
        %v1532 = vadd.f32 %v1500, 0.2548296
        %v1533 = vadd.f32 %v1501, 0.2548296
        %v1534 = vadd.f32 %v1502, 0.2548296
        %v1535 = vadd.f32 %v1503, 0.2548296
        %v1536 = vadd.f32 %v1504, 0.2548296
        %v1537 = vadd.f32 %v1505, 0.2548296
        %v1538 = vadd.f32 %v1506, 0.2548296
        %v1539 = vadd.f32 %v1507, 0.2548296
        %v1540 = vadd.f32 %v1508, 0.2548296
        %v1541 = vadd.f32 %v1509, 0.2548296
        %v1542 = vadd.f32 %v1510, 0.2548296
        %v1543 = vadd.f32 %v1511, 0.2548296
        %v1544 = vadd.f32 %v1512, 0.2548296
        %v1545 = vadd.f32 %v1513, 0.2548296
        %v1546 = vadd.f32 %v1514, 0.2548296
        %v1547 = vadd.f32 %v1515, 0.2548296
        %v1548 = vadd.f32 %v1516, 0.2548296
        %v1549 = vadd.f32 %v1517, 0.2548296
        %v1550 = vadd.f32 %v1518, 0.2548296
        %v1551 = vadd.f32 %v1519, 0.2548296
        %v1552 = vadd.f32 %v1520, 0.2548296
        %v1553 = vadd.f32 %v1521, 0.2548296
        %v1554 = vmul.f32 %v1235, %v1522
        %v1555 = vmul.f32 %v1237, %v1523
        %v1556 = vmul.f32 %v1239, %v1524
        %v1557 = vmul.f32 %v1241, %v1525
        %v1558 = vmul.f32 %v1243, %v1526
        %v1559 = vmul.f32 %v1245, %v1527
        %v1560 = vmul.f32 %v1247, %v1528
        %v1561 = vmul.f32 %v1249, %v1529
        %v1562 = vmul.f32 %v1251, %v1530
        %v1563 = vmul.f32 %v1253, %v1531
        %v1564 = vmul.f32 %v1255, %v1532
        %v1565 = vmul.f32 %v1257, %v1533
        %v1566 = vmul.f32 %v1259, %v1534
        %v1567 = vmul.f32 %v1261, %v1535
        %v1568 = vmul.f32 %v1263, %v1536
        %v1569 = vmul.f32 %v1265, %v1537
        %v1570 = vmul.f32 %v1267, %v1538
        %v1571 = vmul.f32 %v1269, %v1539
        %v1572 = vmul.f32 %v1271, %v1540
        %v1573 = vmul.f32 %v1273, %v1541
        %v1574 = vmul.f32 %v1275, %v1542
        %v1575 = vmul.f32 %v1277, %v1543
        %v1576 = vmul.f32 %v1279, %v1544
        %v1577 = vmul.f32 %v1281, %v1545
        %v1578 = vmul.f32 %v1283, %v1546
        %v1579 = vmul.f32 %v1285, %v1547
        %v1580 = vmul.f32 %v1287, %v1548
        %v1581 = vmul.f32 %v1289, %v1549
        %v1582 = vmul.f32 %v1291, %v1550
        %v1583 = vmul.f32 %v1293, %v1551
        %v1584 = vmul.f32 %v1295, %v1552
        %v1585 = vmul.f32 %v1297, %v1553
        %v1586 = vsub.f32 0.0, %v1138
        %v1587 = vsub.f32 0.0, %v1139
        %v1588 = vsub.f32 0.0, %v1140
        %v1589 = vsub.f32 0.0, %v1141
        %v1590 = vsub.f32 0.0, %v1142
        %v1591 = vsub.f32 0.0, %v1143
        %v1592 = vsub.f32 0.0, %v1144
        %v1593 = vsub.f32 0.0, %v1145
        %v1594 = vsub.f32 0.0, %v1146
        %v1595 = vsub.f32 0.0, %v1147
        %v1596 = vsub.f32 0.0, %v1148
        %v1597 = vsub.f32 0.0, %v1149
        %v1598 = vsub.f32 0.0, %v1150
        %v1599 = vsub.f32 0.0, %v1151
        %v1600 = vsub.f32 0.0, %v1152
        %v1601 = vsub.f32 0.0, %v1153
        %v1602 = vsub.f32 0.0, %v1154
        %v1603 = vsub.f32 0.0, %v1155
        %v1604 = vsub.f32 0.0, %v1156
        %v1605 = vsub.f32 0.0, %v1157
        %v1606 = vsub.f32 0.0, %v1158
        %v1607 = vsub.f32 0.0, %v1159
        %v1608 = vsub.f32 0.0, %v1160
        %v1609 = vsub.f32 0.0, %v1161
        %v1610 = vsub.f32 0.0, %v1162
        %v1611 = vsub.f32 0.0, %v1163
        %v1612 = vsub.f32 0.0, %v1164
        %v1613 = vsub.f32 0.0, %v1165
        %v1614 = vsub.f32 0.0, %v1166
        %v1615 = vsub.f32 0.0, %v1167
        %v1616 = vsub.f32 0.0, %v1168
        %v1617 = vsub.f32 0.0, %v1169
        %v1618 = vmul.f32 %v1586, %v1138
        %v1619 = vmul.f32 %v1587, %v1139
        %v1620 = vmul.f32 %v1588, %v1140
        %v1621 = vmul.f32 %v1589, %v1141
        %v1622 = vmul.f32 %v1590, %v1142
        %v1623 = vmul.f32 %v1591, %v1143
        %v1624 = vmul.f32 %v1592, %v1144
        %v1625 = vmul.f32 %v1593, %v1145
        %v1626 = vmul.f32 %v1594, %v1146
        %v1627 = vmul.f32 %v1595, %v1147
        %v1628 = vmul.f32 %v1596, %v1148
        %v1629 = vmul.f32 %v1597, %v1149
        %v1630 = vmul.f32 %v1598, %v1150
        %v1631 = vmul.f32 %v1599, %v1151
        %v1632 = vmul.f32 %v1600, %v1152
        %v1633 = vmul.f32 %v1601, %v1153
        %v1634 = vmul.f32 %v1602, %v1154
        %v1635 = vmul.f32 %v1603, %v1155
        %v1636 = vmul.f32 %v1604, %v1156
        %v1637 = vmul.f32 %v1605, %v1157
        %v1638 = vmul.f32 %v1606, %v1158
        %v1639 = vmul.f32 %v1607, %v1159
        %v1640 = vmul.f32 %v1608, %v1160
        %v1641 = vmul.f32 %v1609, %v1161
        %v1642 = vmul.f32 %v1610, %v1162
        %v1643 = vmul.f32 %v1611, %v1163
        %v1644 = vmul.f32 %v1612, %v1164
        %v1645 = vmul.f32 %v1613, %v1165
        %v1646 = vmul.f32 %v1614, %v1166
        %v1647 = vmul.f32 %v1615, %v1167
        %v1648 = vmul.f32 %v1616, %v1168
        %v1649 = vmul.f32 %v1617, %v1169
        %v1650 = vmul.f32 %v1618, 1.442695
        %v1651 = vpow.pop %v1650
        %v1652 = vmul.f32 %v1619, 1.442695
        %v1653 = vpow.pop %v1652
        %v1654 = vmul.f32 %v1620, 1.442695
        %v1655 = vpow.pop %v1654
        %v1656 = vmul.f32 %v1621, 1.442695
        %v1657 = vpow.pop %v1656
        %v1658 = vmul.f32 %v1622, 1.442695
        %v1659 = vpow.pop %v1658
        %v1660 = vmul.f32 %v1623, 1.442695
        %v1661 = vpow.pop %v1660
        %v1662 = vmul.f32 %v1624, 1.442695
        %v1663 = vpow.pop %v1662
        %v1664 = vmul.f32 %v1625, 1.442695
        %v1665 = vpow.pop %v1664
        %v1666 = vmul.f32 %v1626, 1.442695
        %v1667 = vpow.pop %v1666
        %v1668 = vmul.f32 %v1627, 1.442695
        %v1669 = vpow.pop %v1668
        %v1670 = vmul.f32 %v1628, 1.442695
        %v1671 = vpow.pop %v1670
        %v1672 = vmul.f32 %v1629, 1.442695
        %v1673 = vpow.pop %v1672
        %v1674 = vmul.f32 %v1630, 1.442695
        %v1675 = vpow.pop %v1674
        %v1676 = vmul.f32 %v1631, 1.442695
        %v1677 = vpow.pop %v1676
        %v1678 = vmul.f32 %v1632, 1.442695
        %v1679 = vpow.pop %v1678
        %v1680 = vmul.f32 %v1633, 1.442695
        %v1681 = vpow.pop %v1680
        %v1682 = vmul.f32 %v1634, 1.442695
        %v1683 = vpow.pop %v1682
        %v1684 = vmul.f32 %v1635, 1.442695
        %v1685 = vpow.pop %v1684
        %v1686 = vmul.f32 %v1636, 1.442695
        %v1687 = vpow.pop %v1686
        %v1688 = vmul.f32 %v1637, 1.442695
        %v1689 = vpow.pop %v1688
        %v1690 = vmul.f32 %v1638, 1.442695
        %v1691 = vpow.pop %v1690
        %v1692 = vmul.f32 %v1639, 1.442695
        %v1693 = vpow.pop %v1692
        %v1694 = vmul.f32 %v1640, 1.442695
        %v1695 = vpow.pop %v1694
        %v1696 = vmul.f32 %v1641, 1.442695
        %v1697 = vpow.pop %v1696
        %v1698 = vmul.f32 %v1642, 1.442695
        %v1699 = vpow.pop %v1698
        %v1700 = vmul.f32 %v1643, 1.442695
        %v1701 = vpow.pop %v1700
        %v1702 = vmul.f32 %v1644, 1.442695
        %v1703 = vpow.pop %v1702
        %v1704 = vmul.f32 %v1645, 1.442695
        %v1705 = vpow.pop %v1704
        %v1706 = vmul.f32 %v1646, 1.442695
        %v1707 = vpow.pop %v1706
        %v1708 = vmul.f32 %v1647, 1.442695
        %v1709 = vpow.pop %v1708
        %v1710 = vmul.f32 %v1648, 1.442695
        %v1711 = vpow.pop %v1710
        %v1712 = vmul.f32 %v1649, 1.442695
        %v1713 = vpow.pop %v1712
        %v1714 = vmul.f32 %v1554, %v1651
        %v1715 = vmul.f32 %v1555, %v1653
        %v1716 = vmul.f32 %v1556, %v1655
        %v1717 = vmul.f32 %v1557, %v1657
        %v1718 = vmul.f32 %v1558, %v1659
        %v1719 = vmul.f32 %v1559, %v1661
        %v1720 = vmul.f32 %v1560, %v1663
        %v1721 = vmul.f32 %v1561, %v1665
        %v1722 = vmul.f32 %v1562, %v1667
        %v1723 = vmul.f32 %v1563, %v1669
        %v1724 = vmul.f32 %v1564, %v1671
        %v1725 = vmul.f32 %v1565, %v1673
        %v1726 = vmul.f32 %v1566, %v1675
        %v1727 = vmul.f32 %v1567, %v1677
        %v1728 = vmul.f32 %v1568, %v1679
        %v1729 = vmul.f32 %v1569, %v1681
        %v1730 = vmul.f32 %v1570, %v1683
        %v1731 = vmul.f32 %v1571, %v1685
        %v1732 = vmul.f32 %v1572, %v1687
        %v1733 = vmul.f32 %v1573, %v1689
        %v1734 = vmul.f32 %v1574, %v1691
        %v1735 = vmul.f32 %v1575, %v1693
        %v1736 = vmul.f32 %v1576, %v1695
        %v1737 = vmul.f32 %v1577, %v1697
        %v1738 = vmul.f32 %v1578, %v1699
        %v1739 = vmul.f32 %v1579, %v1701
        %v1740 = vmul.f32 %v1580, %v1703
        %v1741 = vmul.f32 %v1581, %v1705
        %v1742 = vmul.f32 %v1582, %v1707
        %v1743 = vmul.f32 %v1583, %v1709
        %v1744 = vmul.f32 %v1584, %v1711
        %v1745 = vmul.f32 %v1585, %v1713
        %v1746 = vsub.f32 1.0, %v1714
        %v1747 = vsub.f32 1.0, %v1715
        %v1748 = vsub.f32 1.0, %v1716
        %v1749 = vsub.f32 1.0, %v1717
        %v1750 = vsub.f32 1.0, %v1718
        %v1751 = vsub.f32 1.0, %v1719
        %v1752 = vsub.f32 1.0, %v1720
        %v1753 = vsub.f32 1.0, %v1721
        %v1754 = vsub.f32 1.0, %v1722
        %v1755 = vsub.f32 1.0, %v1723
        %v1756 = vsub.f32 1.0, %v1724
        %v1757 = vsub.f32 1.0, %v1725
        %v1758 = vsub.f32 1.0, %v1726
        %v1759 = vsub.f32 1.0, %v1727
        %v1760 = vsub.f32 1.0, %v1728
        %v1761 = vsub.f32 1.0, %v1729
        %v1762 = vsub.f32 1.0, %v1730
        %v1763 = vsub.f32 1.0, %v1731
        %v1764 = vsub.f32 1.0, %v1732
        %v1765 = vsub.f32 1.0, %v1733
        %v1766 = vsub.f32 1.0, %v1734
        %v1767 = vsub.f32 1.0, %v1735
        %v1768 = vsub.f32 1.0, %v1736
        %v1769 = vsub.f32 1.0, %v1737
        %v1770 = vsub.f32 1.0, %v1738
        %v1771 = vsub.f32 1.0, %v1739
        %v1772 = vsub.f32 1.0, %v1740
        %v1773 = vsub.f32 1.0, %v1741
        %v1774 = vsub.f32 1.0, %v1742
        %v1775 = vsub.f32 1.0, %v1743
        %v1776 = vsub.f32 1.0, %v1744
        %v1777 = vsub.f32 1.0, %v1745
        %vm1778 = vcmp.ge.f32.partialorder %v1106, 0.0
        %vm1779 = vcmp.ge.f32.partialorder %v1107, 0.0
        %vm1780 = vcmp.ge.f32.partialorder %v1108, 0.0
        %vm1781 = vcmp.ge.f32.partialorder %v1109, 0.0
        %vm1782 = vcmp.ge.f32.partialorder %v1110, 0.0
        %vm1783 = vcmp.ge.f32.partialorder %v1111, 0.0
        %vm1784 = vcmp.ge.f32.partialorder %v1112, 0.0
        %vm1785 = vcmp.ge.f32.partialorder %v1113, 0.0
        %vm1786 = vcmp.ge.f32.partialorder %v1114, 0.0
        %vm1787 = vcmp.ge.f32.partialorder %v1115, 0.0
        %vm1788 = vcmp.ge.f32.partialorder %v1116, 0.0
        %vm1789 = vcmp.ge.f32.partialorder %v1117, 0.0
        %vm1790 = vcmp.ge.f32.partialorder %v1118, 0.0
        %vm1791 = vcmp.ge.f32.partialorder %v1119, 0.0
        %vm1792 = vcmp.ge.f32.partialorder %v1120, 0.0
        %vm1793 = vcmp.ge.f32.partialorder %v1121, 0.0
        %vm1794 = vcmp.ge.f32.partialorder %v1122, 0.0
        %vm1795 = vcmp.ge.f32.partialorder %v1123, 0.0
        %vm1796 = vcmp.ge.f32.partialorder %v1124, 0.0
        %vm1797 = vcmp.ge.f32.partialorder %v1125, 0.0
        %vm1798 = vcmp.ge.f32.partialorder %v1126, 0.0
        %vm1799 = vcmp.ge.f32.partialorder %v1127, 0.0
        %vm1800 = vcmp.ge.f32.partialorder %v1128, 0.0
        %vm1801 = vcmp.ge.f32.partialorder %v1129, 0.0
        %vm1802 = vcmp.ge.f32.partialorder %v1130, 0.0
        %vm1803 = vcmp.ge.f32.partialorder %v1131, 0.0
        %vm1804 = vcmp.ge.f32.partialorder %v1132, 0.0
        %vm1805 = vcmp.ge.f32.partialorder %v1133, 0.0
        %vm1806 = vcmp.ge.f32.partialorder %v1134, 0.0
        %vm1807 = vcmp.ge.f32.partialorder %v1135, 0.0
        %vm1808 = vcmp.ge.f32.partialorder %v1136, 0.0
        %vm1809 = vcmp.ge.f32.partialorder %v1137, 0.0
        %v1810 = vsub.f32 0.0, %v1746
        %v1811 = vsub.f32 0.0, %v1747
        %v1812 = vsub.f32 0.0, %v1748
        %v1813 = vsub.f32 0.0, %v1749
        %v1814 = vsub.f32 0.0, %v1750
        %v1815 = vsub.f32 0.0, %v1751
        %v1816 = vsub.f32 0.0, %v1752
        %v1817 = vsub.f32 0.0, %v1753
        %v1818 = vsub.f32 0.0, %v1754
        %v1819 = vsub.f32 0.0, %v1755
        %v1820 = vsub.f32 0.0, %v1756
        %v1821 = vsub.f32 0.0, %v1757
        %v1822 = vsub.f32 0.0, %v1758
        %v1823 = vsub.f32 0.0, %v1759
        %v1824 = vsub.f32 0.0, %v1760
        %v1825 = vsub.f32 0.0, %v1761
        %v1826 = vsub.f32 0.0, %v1762
        %v1827 = vsub.f32 0.0, %v1763
        %v1828 = vsub.f32 0.0, %v1764
        %v1829 = vsub.f32 0.0, %v1765
        %v1830 = vsub.f32 0.0, %v1766
        %v1831 = vsub.f32 0.0, %v1767
        %v1832 = vsub.f32 0.0, %v1768
        %v1833 = vsub.f32 0.0, %v1769
        %v1834 = vsub.f32 0.0, %v1770
        %v1835 = vsub.f32 0.0, %v1771
        %v1836 = vsub.f32 0.0, %v1772
        %v1837 = vsub.f32 0.0, %v1773
        %v1838 = vsub.f32 0.0, %v1774
        %v1839 = vsub.f32 0.0, %v1775
        %v1840 = vsub.f32 0.0, %v1776
        %v1841 = vsub.f32 0.0, %v1777
        %v1842 = vsel %vm1778, %v1746, %v1810
        %v1843 = vsel %vm1779, %v1747, %v1811
        %v1844 = vsel %vm1780, %v1748, %v1812
        %v1845 = vsel %vm1781, %v1749, %v1813
        %v1846 = vsel %vm1782, %v1750, %v1814
        %v1847 = vsel %vm1783, %v1751, %v1815
        %v1848 = vsel %vm1784, %v1752, %v1816
        %v1849 = vsel %vm1785, %v1753, %v1817
        %v1850 = vsel %vm1786, %v1754, %v1818
        %v1851 = vsel %vm1787, %v1755, %v1819
        %v1852 = vsel %vm1788, %v1756, %v1820
        %v1853 = vsel %vm1789, %v1757, %v1821
        %v1854 = vsel %vm1790, %v1758, %v1822
        %v1855 = vsel %vm1791, %v1759, %v1823
        %v1856 = vsel %vm1792, %v1760, %v1824
        %v1857 = vsel %vm1793, %v1761, %v1825
        %v1858 = vsel %vm1794, %v1762, %v1826
        %v1859 = vsel %vm1795, %v1763, %v1827
        %v1860 = vsel %vm1796, %v1764, %v1828
        %v1861 = vsel %vm1797, %v1765, %v1829
        %v1862 = vsel %vm1798, %v1766, %v1830
        %v1863 = vsel %vm1799, %v1767, %v1831
        %v1864 = vsel %vm1800, %v1768, %v1832
        %v1865 = vsel %vm1801, %v1769, %v1833
        %v1866 = vsel %vm1802, %v1770, %v1834
        %v1867 = vsel %vm1803, %v1771, %v1835
        %v1868 = vsel %vm1804, %v1772, %v1836
        %v1869 = vsel %vm1805, %v1773, %v1837
        %v1870 = vsel %vm1806, %v1774, %v1838
        %v1871 = vsel %vm1807, %v1775, %v1839
        %v1872 = vsel %vm1808, %v1776, %v1840
        %v1873 = vsel %vm1809, %v1777, %v1841
        %v1874 = vadd.f32 %v1842, 1.0
        %v1875 = vadd.f32 %v1843, 1.0
        %v1876 = vadd.f32 %v1844, 1.0
        %v1877 = vadd.f32 %v1845, 1.0
        %v1878 = vadd.f32 %v1846, 1.0
        %v1879 = vadd.f32 %v1847, 1.0
        %v1880 = vadd.f32 %v1848, 1.0
        %v1881 = vadd.f32 %v1849, 1.0
        %v1882 = vadd.f32 %v1850, 1.0
        %v1883 = vadd.f32 %v1851, 1.0
        %v1884 = vadd.f32 %v1852, 1.0
        %v1885 = vadd.f32 %v1853, 1.0
        %v1886 = vadd.f32 %v1854, 1.0
        %v1887 = vadd.f32 %v1855, 1.0
        %v1888 = vadd.f32 %v1856, 1.0
        %v1889 = vadd.f32 %v1857, 1.0
        %v1890 = vadd.f32 %v1858, 1.0
        %v1891 = vadd.f32 %v1859, 1.0
        %v1892 = vadd.f32 %v1860, 1.0
        %v1893 = vadd.f32 %v1861, 1.0
        %v1894 = vadd.f32 %v1862, 1.0
        %v1895 = vadd.f32 %v1863, 1.0
        %v1896 = vadd.f32 %v1864, 1.0
        %v1897 = vadd.f32 %v1865, 1.0
        %v1898 = vadd.f32 %v1866, 1.0
        %v1899 = vadd.f32 %v1867, 1.0
        %v1900 = vadd.f32 %v1868, 1.0
        %v1901 = vadd.f32 %v1869, 1.0
        %v1902 = vadd.f32 %v1870, 1.0
        %v1903 = vadd.f32 %v1871, 1.0
        %v1904 = vadd.f32 %v1872, 1.0
        %v1905 = vadd.f32 %v1873, 1.0
        %v1906 = vmul.f32 %v1074, %v1874
        %v1907 = vmul.f32 %v1075, %v1875
        %v1908 = vmul.f32 %v1076, %v1876
        %v1909 = vmul.f32 %v1077, %v1877
        %v1910 = vmul.f32 %v1078, %v1878
        %v1911 = vmul.f32 %v1079, %v1879
        %v1912 = vmul.f32 %v1080, %v1880
        %v1913 = vmul.f32 %v1081, %v1881
        %v1914 = vmul.f32 %v1082, %v1882
        %v1915 = vmul.f32 %v1083, %v1883
        %v1916 = vmul.f32 %v1084, %v1884
        %v1917 = vmul.f32 %v1085, %v1885
        %v1918 = vmul.f32 %v1086, %v1886
        %v1919 = vmul.f32 %v1087, %v1887
        %v1920 = vmul.f32 %v1088, %v1888
        %v1921 = vmul.f32 %v1089, %v1889
        %v1922 = vmul.f32 %v1090, %v1890
        %v1923 = vmul.f32 %v1091, %v1891
        %v1924 = vmul.f32 %v1092, %v1892
        %v1925 = vmul.f32 %v1093, %v1893
        %v1926 = vmul.f32 %v1094, %v1894
        %v1927 = vmul.f32 %v1095, %v1895
        %v1928 = vmul.f32 %v1096, %v1896
        %v1929 = vmul.f32 %v1097, %v1897
        %v1930 = vmul.f32 %v1098, %v1898
        %v1931 = vmul.f32 %v1099, %v1899
        %v1932 = vmul.f32 %v1100, %v1900
        %v1933 = vmul.f32 %v1101, %v1901
        %v1934 = vmul.f32 %v1102, %v1902
        %v1935 = vmul.f32 %v1103, %v1903
        %v1936 = vmul.f32 %v1104, %v1904
        %v1937 = vmul.f32 %v1105, %v1905
        %v1938 = vpack.c.bf16 %v1908, %v1906
        %v1939 = vpack.c.bf16 %v1909, %v1907
        %v1940 = vpack.c.bf16 %v1912, %v1910
        %v1941 = vpack.c.bf16 %v1913, %v1911
        %v1942 = vpack.c.bf16 %v1916, %v1914
        %v1943 = vpack.c.bf16 %v1917, %v1915
        %v1944 = vpack.c.bf16 %v1920, %v1918
        %v1945 = vpack.c.bf16 %v1921, %v1919
        %v1946 = vpack.c.bf16 %v1924, %v1922
        %v1947 = vpack.c.bf16 %v1925, %v1923
        %v1948 = vpack.c.bf16 %v1928, %v1926
        %v1949 = vpack.c.bf16 %v1929, %v1927
        %v1950 = vpack.c.bf16 %v1932, %v1930
        %v1951 = vpack.c.bf16 %v1933, %v1931
        %v1952 = vpack.c.bf16 %v1936, %v1934
        %v1953 = vpack.c.bf16 %v1937, %v1935
        %v1954 = vld [vmem:[#allocation3] sm:$0xff]
        %v1955 = vld [vmem:[#allocation3 + $0x8] sm:$0xff]
        %v1956 = vld [vmem:[#allocation3 + $0x10] sm:$0xff]
        %v1957 = vld [vmem:[#allocation3 + $0x18] sm:$0xff]
        %v1958 = vld [vmem:[#allocation3 + $0x20] sm:$0xff]
        %v1959 = vld [vmem:[#allocation3 + $0x28] sm:$0xff]
        %v1960 = vld [vmem:[#allocation3 + $0x30] sm:$0xff]
        %v1961 = vld [vmem:[#allocation3 + $0x38] sm:$0xff]
        %v1962 = vld [vmem:[#allocation3 + $0x40] sm:$0xff]
        %v1963 = vld [vmem:[#allocation3 + $0x48] sm:$0xff]
        %v1964 = vld [vmem:[#allocation3 + $0x50] sm:$0xff]
        %v1965 = vld [vmem:[#allocation3 + $0x58] sm:$0xff]
        %v1966 = vld [vmem:[#allocation3 + $0x60] sm:$0xff]
        %v1967 = vld [vmem:[#allocation3 + $0x68] sm:$0xff]
        %v1968 = vld [vmem:[#allocation3 + $0x70] sm:$0xff]
        %v1969 = vld [vmem:[#allocation3 + $0x78] sm:$0xff]
        %v1970 = vld [vmem:[%s557] sm:$0xf]
        %v1971 = vld [vmem:[%s557 + $0x4] sm:$0xf]
        %v1972 = vld [vmem:[%s557 + $0x8] sm:$0xf]
        %v1973 = vld [vmem:[%s557 + $0xc] sm:$0xf]
        %v1974 = vld [vmem:[%s557 + $0x10] sm:$0xf]
        %v1975 = vld [vmem:[%s557 + $0x14] sm:$0xf]
        %v1976 = vld [vmem:[%s557 + $0x18] sm:$0xf]
        %v1977 = vld [vmem:[%s557 + $0x1c] sm:$0xf]
        %v1978 = vld [vmem:[%s557 + $0x20] sm:$0xf]
        %v1979 = vld [vmem:[%s557 + $0x24] sm:$0xf]
        %v1980 = vld [vmem:[%s557 + $0x28] sm:$0xf]
        %v1981 = vld [vmem:[%s557 + $0x2c] sm:$0xf]
        %v1982 = vld [vmem:[%s557 + $0x30] sm:$0xf]
        %v1983 = vld [vmem:[%s557 + $0x34] sm:$0xf]
        %v1984 = vld [vmem:[%s557 + $0x38] sm:$0xf]
        %v1985 = vld [vmem:[%s557 + $0x3c] sm:$0xf]
        %v1986 = vld [vmem:[%s557 + $0x40] sm:$0xf]
        %v1987 = vld [vmem:[%s557 + $0x44] sm:$0xf]
        %v1988 = vld [vmem:[%s557 + $0x48] sm:$0xf]
        %v1989 = vld [vmem:[%s557 + $0x4c] sm:$0xf]
        %v1990 = vld [vmem:[%s557 + $0x50] sm:$0xf]
        %v1991 = vld [vmem:[%s557 + $0x54] sm:$0xf]
        %v1992 = vld [vmem:[%s557 + $0x58] sm:$0xf]
        %v1993 = vld [vmem:[%s557 + $0x5c] sm:$0xf]
        %v1994 = vld [vmem:[%s557 + $0x60] sm:$0xf]
        %v1995 = vld [vmem:[%s557 + $0x64] sm:$0xf]
        %v1996 = vld [vmem:[%s557 + $0x68] sm:$0xf]
        %v1997 = vld [vmem:[%s557 + $0x6c] sm:$0xf]
        %v1998 = vld [vmem:[%s557 + $0x70] sm:$0xf]
        %v1999 = vld [vmem:[%s557 + $0x74] sm:$0xf]
        %v2000 = vld [vmem:[%s557 + $0x78] sm:$0xf]
        %v2001 = vld [vmem:[%s557 + $0x7c] sm:$0xf]
        %v2034 = vunpack.c.l.b16 %v1970
        %v2035 = vunpack.c.l.b16 %v1971
        %v2036 = vunpack.c.l.b16 %v1972
        %v2037 = vunpack.c.l.b16 %v1973
        %v2038 = vunpack.c.l.b16 %v1974
        %v2039 = vunpack.c.l.b16 %v1975
        %v2040 = vunpack.c.l.b16 %v1976
        %v2041 = vunpack.c.l.b16 %v1977
        %v2042 = vunpack.c.l.b16 %v1978
        %v2043 = vunpack.c.l.b16 %v1979
        %v2044 = vunpack.c.l.b16 %v1980
        %v2045 = vunpack.c.l.b16 %v1981
        %v2046 = vunpack.c.l.b16 %v1982
        %v2047 = vunpack.c.l.b16 %v1983
        %v2048 = vunpack.c.l.b16 %v1984
        %v2049 = vunpack.c.l.b16 %v1985
        %v2050 = vunpack.c.l.b16 %v1986
        %v2051 = vunpack.c.l.b16 %v1987
        %v2052 = vunpack.c.l.b16 %v1988
        %v2053 = vunpack.c.l.b16 %v1989
        %v2054 = vunpack.c.l.b16 %v1990
        %v2055 = vunpack.c.l.b16 %v1991
        %v2056 = vunpack.c.l.b16 %v1992
        %v2057 = vunpack.c.l.b16 %v1993
        %v2058 = vunpack.c.l.b16 %v1994
        %v2059 = vunpack.c.l.b16 %v1995
        %v2060 = vunpack.c.l.b16 %v1996
        %v2061 = vunpack.c.l.b16 %v1997
        %v2062 = vunpack.c.l.b16 %v1998
        %v2063 = vunpack.c.l.b16 %v1999
        %v2064 = vunpack.c.l.b16 %v2000
        %v2065 = vunpack.c.l.b16 %v2001
        %v2066 = vpack.c.b16 %v2035, %v2034
        %v2067 = vpack.c.b16 %v2037, %v2036
        %v2068 = vpack.c.b16 %v2039, %v2038
        %v2069 = vpack.c.b16 %v2041, %v2040
        %v2070 = vpack.c.b16 %v2043, %v2042
        %v2071 = vpack.c.b16 %v2045, %v2044
        %v2072 = vpack.c.b16 %v2047, %v2046
        %v2073 = vpack.c.b16 %v2049, %v2048
        %v2074 = vpack.c.b16 %v2051, %v2050
        %v2075 = vpack.c.b16 %v2053, %v2052
        %v2076 = vpack.c.b16 %v2055, %v2054
        %v2077 = vpack.c.b16 %v2057, %v2056
        %v2078 = vpack.c.b16 %v2059, %v2058
        %v2079 = vpack.c.b16 %v2061, %v2060
        %v2080 = vpack.c.b16 %v2063, %v2062
        %v2081 = vpack.c.b16 %v2065, %v2064
        %2098 = vmatprep.subr.bf16.mxu0 0
        %2099 = vmatpush1.bf16.msra.mxu0 %v2066
        %2100 = vmatprep.subr.bf16.mxu0 0
        %2101 = vmatpush1.bf16.msra.mxu0 %v2067
        %2102 = vmatprep.subr.bf16.mxu0 0
        %2103 = vmatpush1.bf16.msra.mxu0 %v2068
        %2104 = vmatprep.subr.bf16.mxu0 0
        %2105 = vmatpush1.bf16.msra.mxu0 %v2069
        %2106 = vmatprep.subr.bf16.mxu0 0
        %2107 = vmatpush1.bf16.msra.mxu0 %v2070
        %2108 = vmatprep.subr.bf16.mxu0 0
        %2109 = vmatpush1.bf16.msra.mxu0 %v2071
        %2110 = vmatprep.subr.bf16.mxu0 0
        %2111 = vmatpush1.bf16.msra.mxu0 %v2072
        %2112 = vmatprep.subr.bf16.mxu0 0
        %2113 = vmatpush1.bf16.msra.mxu0 %v2073
        %2114 = vmatprep.subr.bf16.mxu0 0
        %2115 = vmatpush1.bf16.msra.mxu0 %v2074
        %2116 = vmatprep.subr.bf16.mxu0 0
        %2117 = vmatpush1.bf16.msra.mxu0 %v2075
        %2118 = vmatprep.subr.bf16.mxu0 0
        %2119 = vmatpush1.bf16.msra.mxu0 %v2076
        %2120 = vmatprep.subr.bf16.mxu0 0
        %2121 = vmatpush1.bf16.msra.mxu0 %v2077
        %2122 = vmatprep.subr.bf16.mxu0 0
        %2123 = vmatpush1.bf16.msra.mxu0 %v2078
        %2124 = vmatprep.subr.bf16.mxu0 0
        %2125 = vmatpush1.bf16.msra.mxu0 %v2079
        %2126 = vmatprep.subr.bf16.mxu0 0
        %2127 = vmatpush1.bf16.msra.mxu0 %v2080
        %2128 = vmatprep.subr.bf16.mxu0 0
        %2129 = vmatpush1.bf16.msra.mxu0 %v2081
        %2130 = vmatprep.mubr.bf16.mxu0 %v1939
        %2131 = vmatmul.mubr.bf16.gmra.mrb[0].mxu0 %v1938
        %v2132 = vpop.f32.mrb[0].mxu0
        %v2133 = vadd.f32 0.0, %v2132
        %v2134 = vpop.f32.mrb[0].mxu0
        %v2135 = vpop.f32.mrb[0].mxu0
        %v2136 = vadd.f32 0.0, %v2135
        %v2137 = vpop.f32.mrb[0].mxu0
        %2138 = vmatprep.mubr.bf16.mxu0 %v1941
        %2139 = vmatmul.mubr.bf16.gmra.mrb[0].mxu0 %v1940
        %v2140 = vpop.f32.mrb[0].mxu0
        %v2141 = vadd.f32 0.0, %v2140
        %v2142 = vpop.f32.mrb[0].mxu0
        %v2143 = vpop.f32.mrb[0].mxu0
        %v2144 = vadd.f32 0.0, %v2143
        %v2145 = vpop.f32.mrb[0].mxu0
        %2146 = vmatprep.mubr.bf16.mxu0 %v1943
        %2147 = vmatmul.mubr.bf16.gmra.mrb[0].mxu0 %v1942
        %v2148 = vpop.f32.mrb[0].mxu0
        %v2149 = vadd.f32 0.0, %v2148
        %v2150 = vpop.f32.mrb[0].mxu0
        %v2151 = vpop.f32.mrb[0].mxu0
        %v2152 = vadd.f32 0.0, %v2151
        %v2153 = vpop.f32.mrb[0].mxu0
        %2154 = vmatprep.mubr.bf16.mxu0 %v1945
        %2155 = vmatmul.mubr.bf16.gmra.mrb[0].mxu0 %v1944
        %v2156 = vpop.f32.mrb[0].mxu0
        %v2157 = vadd.f32 0.0, %v2156
        %v2158 = vpop.f32.mrb[0].mxu0
        %v2159 = vpop.f32.mrb[0].mxu0
        %v2160 = vadd.f32 0.0, %v2159
        %v2161 = vpop.f32.mrb[0].mxu0
        %2162 = vmatprep.mubr.bf16.mxu0 %v1947
        %2163 = vmatmul.mubr.bf16.gmra.mrb[0].mxu0 %v1946
        %v2164 = vpop.f32.mrb[0].mxu0
        %v2165 = vadd.f32 0.0, %v2164
        %v2166 = vpop.f32.mrb[0].mxu0
        %v2167 = vpop.f32.mrb[0].mxu0
        %v2168 = vadd.f32 0.0, %v2167
        %v2169 = vpop.f32.mrb[0].mxu0
        %2170 = vmatprep.mubr.bf16.mxu0 %v1949
        %2171 = vmatmul.mubr.bf16.gmra.mrb[0].mxu0 %v1948
        %v2172 = vpop.f32.mrb[0].mxu0
        %v2173 = vadd.f32 0.0, %v2172
        %v2174 = vpop.f32.mrb[0].mxu0
        %v2175 = vpop.f32.mrb[0].mxu0
        %v2176 = vadd.f32 0.0, %v2175
        %v2177 = vpop.f32.mrb[0].mxu0
        %2178 = vmatprep.mubr.bf16.mxu0 %v1951
        %2179 = vmatmul.mubr.bf16.gmra.mrb[0].mxu0 %v1950
        %v2180 = vpop.f32.mrb[0].mxu0
        %v2181 = vadd.f32 0.0, %v2180
        %v2182 = vpop.f32.mrb[0].mxu0
        %v2183 = vpop.f32.mrb[0].mxu0
        %v2184 = vadd.f32 0.0, %v2183
        %v2185 = vpop.f32.mrb[0].mxu0
        %2186 = vmatprep.mubr.bf16.mxu0 %v1953
        %2187 = vmatmul.mubr.bf16.gmra.mrb[0].mxu0 %v1952
        %v2188 = vpop.f32.mrb[0].mxu0
        %v2189 = vadd.f32 0.0, %v2188
        %v2190 = vpop.f32.mrb[0].mxu0
        %v2191 = vpop.f32.mrb[0].mxu0
        %v2192 = vadd.f32 0.0, %v2191
        %v2193 = vpop.f32.mrb[0].mxu0
        %2194 = vdwg.mxu0
        %v2195 = vadd.f32 %v1954, %v2133
        %v2196 = vadd.f32 %v1955, %v2136
        %v2197 = vadd.f32 %v1956, %v2141
        %v2198 = vadd.f32 %v1957, %v2144
        %v2199 = vadd.f32 %v1958, %v2149
        %v2200 = vadd.f32 %v1959, %v2152
        %v2201 = vadd.f32 %v1960, %v2157
        %v2202 = vadd.f32 %v1961, %v2160
        %v2203 = vadd.f32 %v1962, %v2165
        %v2204 = vadd.f32 %v1963, %v2168
        %v2205 = vadd.f32 %v1964, %v2173
        %v2206 = vadd.f32 %v1965, %v2176
        %v2207 = vadd.f32 %v1966, %v2181
        %v2208 = vadd.f32 %v1967, %v2184
        %v2209 = vadd.f32 %v1968, %v2189
        %v2210 = vadd.f32 %v1969, %v2192
        %2211 = vst [vmem:[#allocation3] sm:$0xff] %v2195
        %2212 = vst [vmem:[#allocation3 + $0x8] sm:$0xff] %v2196
        %2213 = vst [vmem:[#allocation3 + $0x10] sm:$0xff] %v2197
        %2214 = vst [vmem:[#allocation3 + $0x18] sm:$0xff] %v2198
        %2215 = vst [vmem:[#allocation3 + $0x20] sm:$0xff] %v2199
        %2216 = vst [vmem:[#allocation3 + $0x28] sm:$0xff] %v2200
        %2217 = vst [vmem:[#allocation3 + $0x30] sm:$0xff] %v2201
        %2218 = vst [vmem:[#allocation3 + $0x38] sm:$0xff] %v2202
        %2219 = vst [vmem:[#allocation3 + $0x40] sm:$0xff] %v2203
        %2220 = vst [vmem:[#allocation3 + $0x48] sm:$0xff] %v2204
        %2221 = vst [vmem:[#allocation3 + $0x50] sm:$0xff] %v2205
        %2222 = vst [vmem:[#allocation3 + $0x58] sm:$0xff] %v2206
        %2223 = vst [vmem:[#allocation3 + $0x60] sm:$0xff] %v2207
        %2224 = vst [vmem:[#allocation3 + $0x68] sm:$0xff] %v2208
        %2225 = vst [vmem:[#allocation3 + $0x70] sm:$0xff] %v2209
        %2226 = vst [vmem:[#allocation3 + $0x78] sm:$0xff] %v2210
        %p2227 = scmp.eq.s32.totalorder %s28, 1
        // Predicated region
        $region103: #{dinov2_reg_forward.9} parent=93 // pred_check
          %p2228 = pneg %p2227
        $region104: #{dinov2_reg_forward.9} parent=93 // pred_check_branch
          %2230 = sbr.rel (%p2228) target = $region106
        $region105: #{dinov2_reg_forward.9} parent=93 // pred_region
          %v2231 = vld [vmem:[%s546] sm:$0xff]
          %v2232 = vld [vmem:[%s546 + $0x8] sm:$0xff]
          %v2233 = vld [vmem:[%s546 + $0x10] sm:$0xff]
          %v2234 = vld [vmem:[%s546 + $0x18] sm:$0xff]
          %v2235 = vld [vmem:[%s546 + $0x20] sm:$0xff]
          %v2236 = vld [vmem:[%s546 + $0x28] sm:$0xff]
          %v2237 = vld [vmem:[%s546 + $0x30] sm:$0xff]
          %v2238 = vld [vmem:[%s546 + $0x38] sm:$0xff]
          %v2239 = vld [vmem:[%s546 + $0x40] sm:$0xff]
          %v2240 = vld [vmem:[%s546 + $0x48] sm:$0xff]
          %v2241 = vld [vmem:[%s546 + $0x50] sm:$0xff]
          %v2242 = vld [vmem:[%s546 + $0x58] sm:$0xff]
          %v2243 = vld [vmem:[%s546 + $0x60] sm:$0xff]
          %v2244 = vld [vmem:[%s546 + $0x68] sm:$0xff]
          %v2245 = vld [vmem:[%s546 + $0x70] sm:$0xff]
          %v2246 = vld [vmem:[%s546 + $0x78] sm:$0xff]
          %v2247 = vld [vmem:[%s7] sm:$0x1]
          %v2248 = vld [vmem:[#allocation3] sm:$0xff]
          %v2249 = vld [vmem:[#allocation3 + $0x8] sm:$0xff]
          %v2250 = vld [vmem:[#allocation3 + $0x10] sm:$0xff]
          %v2251 = vld [vmem:[#allocation3 + $0x18] sm:$0xff]
          %v2252 = vld [vmem:[#allocation3 + $0x20] sm:$0xff]
          %v2253 = vld [vmem:[#allocation3 + $0x28] sm:$0xff]
          %v2254 = vld [vmem:[#allocation3 + $0x30] sm:$0xff]
          %v2255 = vld [vmem:[#allocation3 + $0x38] sm:$0xff]
          %v2256 = vld [vmem:[#allocation3 + $0x40] sm:$0xff]
          %v2257 = vld [vmem:[#allocation3 + $0x48] sm:$0xff]
          %v2258 = vld [vmem:[#allocation3 + $0x50] sm:$0xff]
          %v2259 = vld [vmem:[#allocation3 + $0x58] sm:$0xff]
          %v2260 = vld [vmem:[#allocation3 + $0x60] sm:$0xff]
          %v2261 = vld [vmem:[#allocation3 + $0x68] sm:$0xff]
          %v2262 = vld [vmem:[#allocation3 + $0x70] sm:$0xff]
          %v2263 = vld [vmem:[#allocation3 + $0x78] sm:$0xff]
          %v2264 = vld [vmem:[%s6] sm:$0x1]
          %v2266 = vlaneseq
          %v2267 = vshrl.u32 %v2266, 7
          %v2268 = vsub.s32 0, %v2267
          %v2269 = vrot.slane %v2264, %v2268
          %v2271 = vadd.f32 %v2248, %v2269
          %v2272 = vadd.f32 %v2249, %v2269
          %v2273 = vadd.f32 %v2250, %v2269
          %v2274 = vadd.f32 %v2251, %v2269
          %v2275 = vadd.f32 %v2252, %v2269
          %v2276 = vadd.f32 %v2253, %v2269
          %v2277 = vadd.f32 %v2254, %v2269
          %v2278 = vadd.f32 %v2255, %v2269
          %v2279 = vadd.f32 %v2256, %v2269
          %v2280 = vadd.f32 %v2257, %v2269
          %v2281 = vadd.f32 %v2258, %v2269
          %v2282 = vadd.f32 %v2259, %v2269
          %v2283 = vadd.f32 %v2260, %v2269
          %v2284 = vadd.f32 %v2261, %v2269
          %v2285 = vadd.f32 %v2262, %v2269
          %v2286 = vadd.f32 %v2263, %v2269
          %v2288 = vlaneseq
          %v2289 = vshrl.u32 %v2288, 7
          %v2290 = vsub.s32 0, %v2289
          %v2291 = vrot.slane %v2247, %v2290
          %v2293 = vmul.f32 %v2291, %v2271
          %v2294 = vmul.f32 %v2291, %v2272
          %v2295 = vmul.f32 %v2291, %v2273
          %v2296 = vmul.f32 %v2291, %v2274
          %v2297 = vmul.f32 %v2291, %v2275
          %v2298 = vmul.f32 %v2291, %v2276
          %v2299 = vmul.f32 %v2291, %v2277
          %v2300 = vmul.f32 %v2291, %v2278
          %v2301 = vmul.f32 %v2291, %v2279
          %v2302 = vmul.f32 %v2291, %v2280
          %v2303 = vmul.f32 %v2291, %v2281
          %v2304 = vmul.f32 %v2291, %v2282
          %v2305 = vmul.f32 %v2291, %v2283
          %v2306 = vmul.f32 %v2291, %v2284
          %v2307 = vmul.f32 %v2291, %v2285
          %v2308 = vmul.f32 %v2291, %v2286
          %v2309 = vadd.f32 %v2231, %v2293
          %v2310 = vadd.f32 %v2232, %v2294
          %v2311 = vadd.f32 %v2233, %v2295
          %v2312 = vadd.f32 %v2234, %v2296
          %v2313 = vadd.f32 %v2235, %v2297
          %v2314 = vadd.f32 %v2236, %v2298
          %v2315 = vadd.f32 %v2237, %v2299
          %v2316 = vadd.f32 %v2238, %v2300
          %v2317 = vadd.f32 %v2239, %v2301
          %v2318 = vadd.f32 %v2240, %v2302
          %v2319 = vadd.f32 %v2241, %v2303
          %v2320 = vadd.f32 %v2242, %v2304
          %v2321 = vadd.f32 %v2243, %v2305
          %v2322 = vadd.f32 %v2244, %v2306
          %v2323 = vadd.f32 %v2245, %v2307
          %v2324 = vadd.f32 %v2246, %v2308
          %2325 = vst [vmem:[%s563] sm:$0xff] %v2309
          %2326 = vst [vmem:[%s563 + $0x8] sm:$0xff] %v2310
          %2327 = vst [vmem:[%s563 + $0x10] sm:$0xff] %v2311
          %2328 = vst [vmem:[%s563 + $0x18] sm:$0xff] %v2312
          %2329 = vst [vmem:[%s563 + $0x20] sm:$0xff] %v2313
          %2330 = vst [vmem:[%s563 + $0x28] sm:$0xff] %v2314
          %2331 = vst [vmem:[%s563 + $0x30] sm:$0xff] %v2315
          %2332 = vst [vmem:[%s563 + $0x38] sm:$0xff] %v2316
          %2333 = vst [vmem:[%s563 + $0x40] sm:$0xff] %v2317
          %2334 = vst [vmem:[%s563 + $0x48] sm:$0xff] %v2318
          %2335 = vst [vmem:[%s563 + $0x50] sm:$0xff] %v2319
          %2336 = vst [vmem:[%s563 + $0x58] sm:$0xff] %v2320
          %2337 = vst [vmem:[%s563 + $0x60] sm:$0xff] %v2321
          %2338 = vst [vmem:[%s563 + $0x68] sm:$0xff] %v2322
          %2339 = vst [vmem:[%s563 + $0x70] sm:$0xff] %v2323
          %2340 = vst [vmem:[%s563 + $0x78] sm:$0xff] %v2324
          %v2341 = vld [vmem:[%s8] sm:$0x1]
          %v2342 = vld [vmem:[%s9] sm:$0x1]
          %2343 = vadd.xlane.f32.xlu0 %v2309
          %v2344 = vpop.xlane.xlu0 %2343
          %2345 = vadd.xlane.f32.xlu0 %v2310
          %v2346 = vpop.xlane.xlu0 %2345
          %2347 = vadd.xlane.f32.xlu0 %v2311
          %v2348 = vpop.xlane.xlu0 %2347
          %2349 = vadd.xlane.f32.xlu0 %v2312
          %v2350 = vpop.xlane.xlu0 %2349
          %2351 = vadd.xlane.f32.xlu0 %v2313
          %v2352 = vpop.xlane.xlu0 %2351
          %2353 = vadd.xlane.f32.xlu0 %v2314
          %v2354 = vpop.xlane.xlu0 %2353
          %2355 = vadd.xlane.f32.xlu0 %v2315
          %v2356 = vpop.xlane.xlu0 %2355
          %2357 = vadd.xlane.f32.xlu0 %v2316
          %v2358 = vpop.xlane.xlu0 %2357
          %2359 = vadd.xlane.f32.xlu0 %v2317
          %v2360 = vpop.xlane.xlu0 %2359
          %2361 = vadd.xlane.f32.xlu0 %v2318
          %v2362 = vpop.xlane.xlu0 %2361
          %2363 = vadd.xlane.f32.xlu0 %v2319
          %v2364 = vpop.xlane.xlu0 %2363
          %2365 = vadd.xlane.f32.xlu0 %v2320
          %v2366 = vpop.xlane.xlu0 %2365
          %2367 = vadd.xlane.f32.xlu0 %v2321
          %v2368 = vpop.xlane.xlu0 %2367
          %2369 = vadd.xlane.f32.xlu0 %v2322
          %v2370 = vpop.xlane.xlu0 %2369
          %2371 = vadd.xlane.f32.xlu0 %v2323
          %v2372 = vpop.xlane.xlu0 %2371
          %2373 = vadd.xlane.f32.xlu0 %v2324
          %v2374 = vpop.xlane.xlu0 %2373
          %v2375 = vrcp.pop 128.0
          %v2376 = vmul.f32 %v2344, %v2375
          %v2377 = vmul.f32 %v2346, %v2375
          %v2378 = vmul.f32 %v2348, %v2375
          %v2379 = vmul.f32 %v2350, %v2375
          %v2380 = vmul.f32 %v2352, %v2375
          %v2381 = vmul.f32 %v2354, %v2375
          %v2382 = vmul.f32 %v2356, %v2375
          %v2383 = vmul.f32 %v2358, %v2375
          %v2384 = vmul.f32 %v2360, %v2375
          %v2385 = vmul.f32 %v2362, %v2375
          %v2386 = vmul.f32 %v2364, %v2375
          %v2387 = vmul.f32 %v2366, %v2375
          %v2388 = vmul.f32 %v2368, %v2375
          %v2389 = vmul.f32 %v2370, %v2375
          %v2390 = vmul.f32 %v2372, %v2375
          %v2391 = vmul.f32 %v2374, %v2375
          %v2392 = vsub.f32 %v2309, %v2376
          %v2393 = vsub.f32 %v2310, %v2377
          %v2394 = vsub.f32 %v2311, %v2378
          %v2395 = vsub.f32 %v2312, %v2379
          %v2396 = vsub.f32 %v2313, %v2380
          %v2397 = vsub.f32 %v2314, %v2381
          %v2398 = vsub.f32 %v2315, %v2382
          %v2399 = vsub.f32 %v2316, %v2383
          %v2400 = vsub.f32 %v2317, %v2384
          %v2401 = vsub.f32 %v2318, %v2385
          %v2402 = vsub.f32 %v2319, %v2386
          %v2403 = vsub.f32 %v2320, %v2387
          %v2404 = vsub.f32 %v2321, %v2388
          %v2405 = vsub.f32 %v2322, %v2389
          %v2406 = vsub.f32 %v2323, %v2390
          %v2407 = vsub.f32 %v2324, %v2391
          %v2408 = vmul.f32 %v2392, %v2392
          %v2409 = vmul.f32 %v2393, %v2393
          %v2410 = vmul.f32 %v2394, %v2394
          %v2411 = vmul.f32 %v2395, %v2395
          %v2412 = vmul.f32 %v2396, %v2396
          %v2413 = vmul.f32 %v2397, %v2397
          %v2414 = vmul.f32 %v2398, %v2398
          %v2415 = vmul.f32 %v2399, %v2399
          %v2416 = vmul.f32 %v2400, %v2400
          %v2417 = vmul.f32 %v2401, %v2401
          %v2418 = vmul.f32 %v2402, %v2402
          %v2419 = vmul.f32 %v2403, %v2403
          %v2420 = vmul.f32 %v2404, %v2404
          %v2421 = vmul.f32 %v2405, %v2405
          %v2422 = vmul.f32 %v2406, %v2406
          %v2423 = vmul.f32 %v2407, %v2407
          %2424 = vadd.xlane.f32.xlu0 %v2408
          %v2425 = vpop.xlane.xlu0 %2424
          %2426 = vadd.xlane.f32.xlu0 %v2409
          %v2427 = vpop.xlane.xlu0 %2426
          %2428 = vadd.xlane.f32.xlu0 %v2410
          %v2429 = vpop.xlane.xlu0 %2428
          %2430 = vadd.xlane.f32.xlu0 %v2411
          %v2431 = vpop.xlane.xlu0 %2430
          %2432 = vadd.xlane.f32.xlu0 %v2412
          %v2433 = vpop.xlane.xlu0 %2432
          %2434 = vadd.xlane.f32.xlu0 %v2413
          %v2435 = vpop.xlane.xlu0 %2434
          %2436 = vadd.xlane.f32.xlu0 %v2414
          %v2437 = vpop.xlane.xlu0 %2436
          %2438 = vadd.xlane.f32.xlu0 %v2415
          %v2439 = vpop.xlane.xlu0 %2438
          %2440 = vadd.xlane.f32.xlu0 %v2416
          %v2441 = vpop.xlane.xlu0 %2440
          %2442 = vadd.xlane.f32.xlu0 %v2417
          %v2443 = vpop.xlane.xlu0 %2442
          %2444 = vadd.xlane.f32.xlu0 %v2418
          %v2445 = vpop.xlane.xlu0 %2444
          %2446 = vadd.xlane.f32.xlu0 %v2419
          %v2447 = vpop.xlane.xlu0 %2446
          %2448 = vadd.xlane.f32.xlu0 %v2420
          %v2449 = vpop.xlane.xlu0 %2448
          %2450 = vadd.xlane.f32.xlu0 %v2421
          %v2451 = vpop.xlane.xlu0 %2450
          %2452 = vadd.xlane.f32.xlu0 %v2422
          %v2453 = vpop.xlane.xlu0 %2452
          %2454 = vadd.xlane.f32.xlu0 %v2423
          %v2455 = vpop.xlane.xlu0 %2454
          %v2456 = vmul.f32 %v2425, %v2375
          %v2457 = vmul.f32 %v2427, %v2375
          %v2458 = vmul.f32 %v2429, %v2375
          %v2459 = vmul.f32 %v2431, %v2375
          %v2460 = vmul.f32 %v2433, %v2375
          %v2461 = vmul.f32 %v2435, %v2375
          %v2462 = vmul.f32 %v2437, %v2375
          %v2463 = vmul.f32 %v2439, %v2375
          %v2464 = vmul.f32 %v2441, %v2375
          %v2465 = vmul.f32 %v2443, %v2375
          %v2466 = vmul.f32 %v2445, %v2375
          %v2467 = vmul.f32 %v2447, %v2375
          %v2468 = vmul.f32 %v2449, %v2375
          %v2469 = vmul.f32 %v2451, %v2375
          %v2470 = vmul.f32 %v2453, %v2375
          %v2471 = vmul.f32 %v2455, %v2375
          %v2472 = vadd.f32 %v2456, 1e-06
          %v2473 = vadd.f32 %v2457, 1e-06
          %v2474 = vadd.f32 %v2458, 1e-06
          %v2475 = vadd.f32 %v2459, 1e-06
          %v2476 = vadd.f32 %v2460, 1e-06
          %v2477 = vadd.f32 %v2461, 1e-06
          %v2478 = vadd.f32 %v2462, 1e-06
          %v2479 = vadd.f32 %v2463, 1e-06
          %v2480 = vadd.f32 %v2464, 1e-06
          %v2481 = vadd.f32 %v2465, 1e-06
          %v2482 = vadd.f32 %v2466, 1e-06
          %v2483 = vadd.f32 %v2467, 1e-06
          %v2484 = vadd.f32 %v2468, 1e-06
          %v2485 = vadd.f32 %v2469, 1e-06
          %v2486 = vadd.f32 %v2470, 1e-06
          %v2487 = vadd.f32 %v2471, 1e-06
          %v2488 = vrsqrt.pop %v2472
          %v2489 = vrsqrt.pop %v2473
          %v2490 = vrsqrt.pop %v2474
          %v2491 = vrsqrt.pop %v2475
          %v2492 = vrsqrt.pop %v2476
          %v2493 = vrsqrt.pop %v2477
          %v2494 = vrsqrt.pop %v2478
          %v2495 = vrsqrt.pop %v2479
          %v2496 = vrsqrt.pop %v2480
          %v2497 = vrsqrt.pop %v2481
          %v2498 = vrsqrt.pop %v2482
          %v2499 = vrsqrt.pop %v2483
          %v2500 = vrsqrt.pop %v2484
          %v2501 = vrsqrt.pop %v2485
          %v2502 = vrsqrt.pop %v2486
          %v2503 = vrsqrt.pop %v2487
          %v2504 = vmul.f32 %v2392, %v2488
          %v2505 = vmul.f32 %v2393, %v2489
          %v2506 = vmul.f32 %v2394, %v2490
          %v2507 = vmul.f32 %v2395, %v2491
          %v2508 = vmul.f32 %v2396, %v2492
          %v2509 = vmul.f32 %v2397, %v2493
          %v2510 = vmul.f32 %v2398, %v2494
          %v2511 = vmul.f32 %v2399, %v2495
          %v2512 = vmul.f32 %v2400, %v2496
          %v2513 = vmul.f32 %v2401, %v2497
          %v2514 = vmul.f32 %v2402, %v2498
          %v2515 = vmul.f32 %v2403, %v2499
          %v2516 = vmul.f32 %v2404, %v2500
          %v2517 = vmul.f32 %v2405, %v2501
          %v2518 = vmul.f32 %v2406, %v2502
          %v2519 = vmul.f32 %v2407, %v2503
          %v2521 = vlaneseq
          %v2522 = vshrl.u32 %v2521, 7
          %v2523 = vsub.s32 0, %v2522
          %v2524 = vrot.slane %v2341, %v2523
          %v2526 = vmul.f32 %v2504, %v2524
          %v2527 = vmul.f32 %v2505, %v2524
          %v2528 = vmul.f32 %v2506, %v2524
          %v2529 = vmul.f32 %v2507, %v2524
          %v2530 = vmul.f32 %v2508, %v2524
          %v2531 = vmul.f32 %v2509, %v2524
          %v2532 = vmul.f32 %v2510, %v2524
          %v2533 = vmul.f32 %v2511, %v2524
          %v2534 = vmul.f32 %v2512, %v2524
          %v2535 = vmul.f32 %v2513, %v2524
          %v2536 = vmul.f32 %v2514, %v2524
          %v2537 = vmul.f32 %v2515, %v2524
          %v2538 = vmul.f32 %v2516, %v2524
          %v2539 = vmul.f32 %v2517, %v2524
          %v2540 = vmul.f32 %v2518, %v2524
          %v2541 = vmul.f32 %v2519, %v2524
          %v2543 = vlaneseq
          %v2544 = vshrl.u32 %v2543, 7
          %v2545 = vsub.s32 0, %v2544
          %v2546 = vrot.slane %v2342, %v2545
          %v2548 = vadd.f32 %v2526, %v2546
          %v2549 = vadd.f32 %v2527, %v2546
          %v2550 = vadd.f32 %v2528, %v2546
          %v2551 = vadd.f32 %v2529, %v2546
          %v2552 = vadd.f32 %v2530, %v2546
          %v2553 = vadd.f32 %v2531, %v2546
          %v2554 = vadd.f32 %v2532, %v2546
          %v2555 = vadd.f32 %v2533, %v2546
          %v2556 = vadd.f32 %v2534, %v2546
          %v2557 = vadd.f32 %v2535, %v2546
          %v2558 = vadd.f32 %v2536, %v2546
          %v2559 = vadd.f32 %v2537, %v2546
          %v2560 = vadd.f32 %v2538, %v2546
          %v2561 = vadd.f32 %v2539, %v2546
          %v2562 = vadd.f32 %v2540, %v2546
          %v2563 = vadd.f32 %v2541, %v2546
          %2564 = vst [vmem:[%s568] sm:$0xff] %v2548
          %2565 = vst [vmem:[%s568 + $0x8] sm:$0xff] %v2549
          %2566 = vst [vmem:[%s568 + $0x10] sm:$0xff] %v2550
          %2567 = vst [vmem:[%s568 + $0x18] sm:$0xff] %v2551
          %2568 = vst [vmem:[%s568 + $0x20] sm:$0xff] %v2552
          %2569 = vst [vmem:[%s568 + $0x28] sm:$0xff] %v2553
          %2570 = vst [vmem:[%s568 + $0x30] sm:$0xff] %v2554
          %2571 = vst [vmem:[%s568 + $0x38] sm:$0xff] %v2555
          %2572 = vst [vmem:[%s568 + $0x40] sm:$0xff] %v2556
          %2573 = vst [vmem:[%s568 + $0x48] sm:$0xff] %v2557
          %2574 = vst [vmem:[%s568 + $0x50] sm:$0xff] %v2558
          %2575 = vst [vmem:[%s568 + $0x58] sm:$0xff] %v2559
          %2576 = vst [vmem:[%s568 + $0x60] sm:$0xff] %v2560
          %2577 = vst [vmem:[%s568 + $0x68] sm:$0xff] %v2561
          %2578 = vst [vmem:[%s568 + $0x70] sm:$0xff] %v2562
          %2579 = vst [vmem:[%s568 + $0x78] sm:$0xff] %v2563
        $region106: #{dinov2_reg_forward.9} parent=93 // pred_fallthru
          _
        %p2580 = scmp.lt.s32.totalorder %s27, 1
        %s2581 = scalar_select %p2580, %s27, 1
        %s2582 = smul.addr %s2581, 16
        %s2583 = smul.addr %s2582, 8
        %s2584 = scalar_lea.vmem %s10, %s2583
        %p2585 = scmp.lt.s32.totalorder %s27, 1
        %s2586 = scalar_select %p2585, %s27, 1
        %s2587 = smul.addr %s2586, 16
        %s2588 = smul.addr %s2587, 8
        %s2589 = scalar_lea.vmem %s11, %s2588
        // Predicated region
        $region107: #{dinov2_reg_forward.9} parent=93 // pred_check
          %p2590 = pneg %p283
        $region108: #{dinov2_reg_forward.9} parent=93 // pred_check_branch
          %2592 = sbr.rel (%p2590) target = $region110
        $region109: #{dinov2_reg_forward.9} parent=93 // pred_region
          _
        $region110: #{dinov2_reg_forward.9} parent=93 // pred_fallthru
          _
        // Predicated region
        $region111: #{dinov2_reg_forward.9} parent=93 // pred_check
          %p2593 = pneg %p309
        $region112: #{dinov2_reg_forward.9} parent=93 // pred_check_branch
          %2595 = sbr.rel (%p2593) target = $region114
        $region113: #{dinov2_reg_forward.9} parent=93 // pred_region
          _
        $region114: #{dinov2_reg_forward.9} parent=93 // pred_fallthru
          _
      $region94: #{dinov2_reg_forward.9} parent=5 // pred_fallthru
        _
      %p2596 = scmp.le.s32.totalorder 2, %s18
      // Predicated region
      $region115: #{dinov2_reg_forward.9} parent=5 // pred_check
        %p2597 = pneg %p2596
      $region116: #{dinov2_reg_forward.9} parent=5 // pred_check_branch
        %2599 = sbr.rel (%p2597) target = $region118
      $region117: #{dinov2_reg_forward.9} parent=5 // pred_region
        %s2600 = ssub.s32 %s18, 2
        // Predicated region
        $region119: #{dinov2_reg_forward.9} parent=117 // pred_check
          %p2601 = pneg %p289
        $region120: #{dinov2_reg_forward.9} parent=117 // pred_check_branch
          %2603 = sbr.rel (%p2601) target = $region122
        $region121: #{dinov2_reg_forward.9} parent=117 // pred_region
          %p2604 = scmp.lt.s32.totalorder %s29, 1
          %s2605 = scalar_select %p2604, %s29, 1
          %s2606 = smul.addr %s2605, 16
          %s2607 = smul.addr %s2606, 8
          %s2608 = scalar_lea.vmem %s10, %s2607
        $region122: #{dinov2_reg_forward.9} parent=117 // pred_fallthru
          _
        // Predicated region
        $region123: #{dinov2_reg_forward.9} parent=117 // pred_check
          %p2609 = pneg %p315
        $region124: #{dinov2_reg_forward.9} parent=117 // pred_check_branch
          %2611 = sbr.rel (%p2609) target = $region126
        $region125: #{dinov2_reg_forward.9} parent=117 // pred_region
          %p2612 = scmp.lt.s32.totalorder %s29, 1
          %s2613 = scalar_select %p2612, %s29, 1
          %s2614 = smul.addr %s2613, 16
          %s2615 = smul.addr %s2614, 8
          %s2616 = scalar_lea.vmem %s11, %s2615
        $region126: #{dinov2_reg_forward.9} parent=117 // pred_fallthru
          _
      $region118: #{dinov2_reg_forward.9} parent=5 // pred_fallthru
        _
    $region6: #{dinov2_reg_forward.9} parent=1 // loop_footer
      %s22 = sadd.s32 1, %s18
    $region7: #{dinov2_reg_forward.9} parent=1 // loop_footer_branch
      %17 = sbr.rel target = $region3
    $region8: #{dinov2_reg_forward.9} parent=1 // loop_exit
      _

</llo_original>
